<compile_context>
chip_gen: v6e
topology: v6e:2x2x1
jax: 0.10.0
libtpu: 0.0.40
codegen_flags: <defaults>
</compile_context>

<pallas_src>
import jax
import jax.numpy as jnp
from jax.experimental import pallas as pl
from jax.experimental.pallas import tpu as pltpu

# ----- scaled-down test config (real ViTBaseOver16at112 values in comments) ---
C, H, W = 3, 32, 32          # (3, 112, 112)
P = 16                       # patch size
NP = (H // P) * (W // P)     # n_embeddings        (49)  -> 4
S = NP + 1                   # seq len incl. cls   (50)  -> 5
S_PAD = ((S + 7) // 8) * 8   # pad to sublane mult (56)  -> 8
PPC = P * P * C              # p*p*c               (768)
D = 128                      # vector_size         (768)
MLP = 256                    # mlp_size            (3072)
MLP_CHUNK = min(MLP, 1024)   # FFN column chunk (limits (m, MLP) f32 temp)
NHEAD = 4                    # nhead               (12)
HEAD_DIM = D // NHEAD
NLAYERS = 2                  # n_layers            (12)
DIM_OUT = 8                  # dim_out
OUT_PAD = 128                # lane-dense padded head output width
EPS = 1e-5                   # PyTorch LayerNorm default eps


# ----------------------------- in-kernel helpers -----------------------------
def _layernorm(x, g, b):
    mu = jnp.mean(x, axis=-1, keepdims=True)
    var = jnp.mean((x - mu) ** 2, axis=-1, keepdims=True)
    return (x - mu) * jax.lax.rsqrt(var + EPS) * g + b


def _gelu_exact(x):
    # PyTorch activation='gelu' -> exact (erf-based) GELU
    return 0.5 * x * (1.0 + jax.lax.erf(x * 0.7071067811865476))


# -------------------------------- fused kernel --------------------------------
def vit_fused_kernel(
        patches_ref, pw_ref, pos_ref, eg_ref, eb_ref,                 # embed
        l1g_ref, l1b_ref, wqkv_ref, bqkv_ref, wo_ref, bo_ref,         # attn (layer)
        l2g_ref, l2b_ref, w1_ref, b1_ref, w2_ref, b2_ref,             # mlp  (layer)
        hg_ref, hb_ref, hw1_ref, hb1_ref, hw2_ref, hb2_ref,           # head
        out_ref, x_scr, attn_scr):
    layer = pl.program_id(1)
    tb = x_scr.shape[0]            # batch-tile size
    m = tb * S_PAD                 # flattened matmul M dimension
    bf16 = jnp.bfloat16
    f32 = jnp.float32

    # ---------------- patch embedding (first layer step only) ----------------
    @pl.when(layer == 0)
    def _embed():
        # patches_ref is (m, PPC) bf16; per image row 0 is a zero cls
        # placeholder and rows S..S_PAD are zero padding.  pos_ref row 0 is
        # cls + pos[0]; pad rows are zero.  Single matmul + LN, one store.
        emb = jnp.dot(patches_ref[...], pw_ref[...],
                      preferred_element_type=f32)                     # (m, D)
        tok = emb.reshape(tb, S_PAD, D) + pos_ref[...][None]
        x_scr[...] = _layernorm(tok, eg_ref[...], eb_ref[...])

    # ---------------------- transformer encoder layer ------------------------
    # norm_first: x = x + MHA(LN1(x)); x = x + FFN(LN2(x))
    x0 = x_scr[...].reshape(m, D)                                     # (m, D) f32

    h1 = _layernorm(x0, l1g_ref[...], l1b_ref[...])
    qkv = jnp.dot(h1.astype(bf16), wqkv_ref[...],
                  preferred_element_type=f32) + bqkv_ref[...]         # (m, 3D)

    # 1/sqrt(head_dim) is already folded into Wq / bq (prepare_params).
    q3 = qkv[:, 0:D].reshape(tb, S_PAD, D).astype(bf16)
    k3 = qkv[:, D:2 * D].reshape(tb, S_PAD, D).astype(bf16)
    v3 = qkv[:, 2 * D:3 * D].reshape(tb, S_PAD, D).astype(bf16)

    # mask padded key columns (>= S) out of the softmax
    kidx = jax.lax.broadcasted_iota(jnp.int32, (1, 1, S_PAD), 2)
    key_bias = jnp.where(kidx < S, 0.0, -1e30).astype(f32)            # (1,1,S_PAD)

    # Per-head loop (static unroll) batched over the whole batch tile; head
    # outputs are stored into lane slices of a bf16 scratch, followed by ONE
    # full-width Wo matmul (no per-head K=HEAD_DIM matmuls, no f32 accumulator).
    for hh in range(NHEAD):
        sl = slice(hh * HEAD_DIM, (hh + 1) * HEAD_DIM)
        s = jax.lax.dot_general(q3[:, :, sl], k3[:, :, sl],
                                (((2,), (2,)), ((0,), (0,))),
                                preferred_element_type=f32)           # (tb, Sq, Sk)
        s = s + key_bias
        s = s - jnp.max(s, axis=-1, keepdims=True)
        p = jnp.exp(s)
        p = p * pl.reciprocal(jnp.sum(p, axis=-1, keepdims=True), approx=True)
        oh = jax.lax.dot_general(p.astype(bf16), v3[:, :, sl],
                                 (((2,), (1,)), ((0,), (0,))),
                                 preferred_element_type=f32)          # (tb, Sq, HD)
        attn_scr[:, sl] = oh.reshape(m, HEAD_DIM).astype(bf16)

    attn = jnp.dot(attn_scr[...], wo_ref[...], preferred_element_type=f32)
    x1 = x0 + attn + bo_ref[...]

    # FFN, chunked along the MLP dimension to bound the f32 intermediate.
    h2 = _layernorm(x1, l2g_ref[...], l2b_ref[...]).astype(bf16)
    ff = None
    for c0 in range(0, MLP, MLP_CHUNK):
        c1 = c0 + MLP_CHUNK
        f = jnp.dot(h2, w1_ref[:, c0:c1],
                    preferred_element_type=f32) + b1_ref[:, c0:c1]
        f = _gelu_exact(f)
        part = jnp.dot(f.astype(bf16), w2_ref[c0:c1, :],
                       preferred_element_type=f32)
        ff = part if ff is None else ff + part
    x2 = x1 + ff + b2_ref[...]
    x_scr[...] = x2.reshape(tb, S_PAD, D)

    # --------------------- classification head (last step) -------------------
    @pl.when(layer == NLAYERS - 1)
    def _head():
        cls_tok = x_scr[:, 0:1, :].reshape(tb, D)                     # direct row read
        y = _layernorm(cls_tok, hg_ref[...], hb_ref[...])
        y = jnp.dot(y.astype(bf16), hw1_ref[...],
                    preferred_element_type=f32) + hb1_ref[...]
        y = jnp.dot(y.astype(bf16), hw2_ref[...],
                    preferred_element_type=f32) + hb2_ref[...]
        out_ref[...] = y                                              # (tb, OUT_PAD)


# ------------------------------- wrappers -------------------------------------
def _const_spec(shape):
    zeros = (0,) * len(shape)
    return pl.BlockSpec(shape, lambda b, l: zeros)


def _layer_spec(shape):
    # leading layer axis squeezed out of the kernel view; streamed per layer step
    zeros = (0,) * len(shape)
    return pl.BlockSpec((None,) + shape, lambda b, l: (l,) + zeros)


def rearrange_patches(x):
    # einops: 'b c (h p1) (w p2) -> b (h w) (p1 p2 c)'   (plain-JAX glue)
    B = x.shape[0]
    hh, ww = H // P, W // P
    x = x.reshape(B, C, hh, P, ww, P)
    x = x.transpose(0, 2, 4, 3, 5, 1)           # b, h, w, p1, p2, c
    return x.reshape(B, hh * ww, P * P * C)


def prepare_params(embed, layers, head):
    """Stack per-layer weights on a leading layer axis, cast MXU operands to
    bf16, fold the softmax scale into Wq/bq, build the padded pos table
    (row 0 already includes the cls token), pad the head output lanes."""
    bf16 = jnp.bfloat16
    pos = jnp.zeros((S_PAD, D), jnp.float32)
    pos = pos.at[0].set((embed["cls"] + embed["pos"][0:1])[0])
    pos = pos.at[1:S].set(embed["pos"][1:S])
    ep = dict(patch_w=embed["patch_w"].astype(bf16), pos=pos,
              ln_g=embed["ln_g"], ln_b=embed["ln_b"])

    scale = 1.0 / (HEAD_DIM ** 0.5)

    def stack(k):
        return jnp.stack([lp[k] for lp in layers], axis=0)

    wqkv = jnp.stack(
        [jnp.concatenate([lp["wq"] * scale, lp["wk"], lp["wv"]], axis=1)
         for lp in layers], 0).astype(bf16)                            # (L, D, 3D)
    bqkv = jnp.stack(
        [jnp.concatenate([lp["bq"] * scale, lp["bk"], lp["bv"]], axis=1)
         for lp in layers], 0)                                         # (L, 1, 3D)
    lw = dict(
        ln1_g=stack("ln1_g"), ln1_b=stack("ln1_b"),
        wqkv=wqkv, bqkv=bqkv,
        wo=stack("wo").astype(bf16), bo=stack("bo"),
        ln2_g=stack("ln2_g"), ln2_b=stack("ln2_b"),
        w1=stack("w1").astype(bf16), b1=stack("b1"),
        w2=stack("w2").astype(bf16), b2=stack("b2"))

    w2p = jnp.zeros((MLP, OUT_PAD), jnp.float32).at[:, :DIM_OUT].set(head["w2"])
    b2p = jnp.zeros((1, OUT_PAD), jnp.float32).at[:, :DIM_OUT].set(head["b2"])
    hp = dict(ln_g=head["ln_g"], ln_b=head["ln_b"],
              w1=head["w1"].astype(bf16), b1=head["b1"],
              w2=w2p.astype(bf16), b2=b2p)
    return ep, lw, hp


def _vmem_limit_bytes():
    # ~3/4 of physical VMEM, capped at 100 MB: ~96 MB on v5e/v6e (128 MiB),
    # ~48 MB on v7x (64 MiB).  Falls back to 48 MB if the query fails.
    try:
        cap = pltpu.get_tpu_info().vmem_capacity_bytes
    except Exception:
        cap = 64 * 1024 * 1024
    return int(min(cap * 3 // 4, 100 * 1024 * 1024))


def vit_forward(x, embed_params, layer_params, head_params, tb=None):
    B = x.shape[0]
    if tb is None:
        # Default: split the batch in two tiles so the "parallel" axis has work
        # for both v7x TensorCores.  At real ViT-B scale pick TB = 16-24
        # (multiple of 8) so m = TB*S_PAD >= ~1024 and the per-layer weight DMA
        # is hidden behind MXU compute.
        tb = B // 2 if (B % 2 == 0 and B >= 2) else B
    TB = tb
    assert B % TB == 0
    NB = B // TB

    # Patches padded to S_PAD rows per image: row 0 = zero cls placeholder,
    # rows 1..NP = patches, rest zero.  bf16 halves patch DMA bytes.
    pat = rearrange_patches(x)                                        # (B, NP, PPC)
    xp = jnp.zeros((B, S_PAD, PPC), jnp.bfloat16)
    xp = xp.at[:, 1:1 + NP, :].set(pat.astype(jnp.bfloat16))
    xp = xp.reshape(B * S_PAD, PPC)

    ep, lw, hp = prepare_params(embed_params, layer_params, head_params)

    in_specs = [
        pl.BlockSpec((TB * S_PAD, PPC), lambda b, l: (b, 0)),         # patches (bf16)
        _const_spec((PPC, D)), _const_spec((S_PAD, D)),               # patch_w, pos
        _const_spec((1, D)), _const_spec((1, D)),                     # embed LN g/b
        _layer_spec((1, D)), _layer_spec((1, D)),                     # ln1 g/b
        _layer_spec((D, 3 * D)), _layer_spec((1, 3 * D)),             # wqkv, bqkv
        _layer_spec((D, D)), _layer_spec((1, D)),                     # wo, bo
        _layer_spec((1, D)), _layer_spec((1, D)),                     # ln2 g/b
        _layer_spec((D, MLP)), _layer_spec((1, MLP)),                 # w1, b1
        _layer_spec((MLP, D)), _layer_spec((1, D)),                   # w2, b2
        _const_spec((1, D)), _const_spec((1, D)),                     # head LN g/b
        _const_spec((D, MLP)), _const_spec((1, MLP)),                 # head w1, b1
        _const_spec((MLP, OUT_PAD)), _const_spec((1, OUT_PAD)),       # head w2, b2
    ]

    out = pl.pallas_call(
        vit_fused_kernel,
        out_shape=jax.ShapeDtypeStruct((B, OUT_PAD), jnp.float32),
        grid=(NB, NLAYERS),
        in_specs=in_specs,
        out_specs=pl.BlockSpec((TB, OUT_PAD), lambda b, l: (b, 0)),
        scratch_shapes=[pltpu.VMEM((TB, S_PAD, D), jnp.float32),      # activations
                        pltpu.VMEM((TB * S_PAD, D), jnp.bfloat16)],   # head outputs
        compiler_params=pltpu.CompilerParams(
            dimension_semantics=("parallel", "arbitrary"),
            vmem_limit_bytes=_vmem_limit_bytes()),
    )(xp, ep["patch_w"], ep["pos"], ep["ln_g"], ep["ln_b"],
      lw["ln1_g"], lw["ln1_b"], lw["wqkv"], lw["bqkv"], lw["wo"], lw["bo"],
      lw["ln2_g"], lw["ln2_b"], lw["w1"], lw["b1"], lw["w2"], lw["b2"],
      hp["ln_g"], hp["ln_b"], hp["w1"], hp["b1"], hp["w2"], hp["b2"])
    return out[:, :DIM_OUT]                                           # drop lane padding


# ------------------------------ parameters ------------------------------------
def init_params(key):
    keys = jax.random.split(key, 4 + NLAYERS)
    embed = {
        "patch_w": jax.random.normal(keys[0], (PPC, D), jnp.float32),   # torch.randn
        "cls": jax.random.normal(keys[1], (1, D), jnp.float32),
        "pos": jax.random.normal(keys[2], (S, D), jnp.float32),
        "ln_g": jnp.ones((1, D), jnp.float32),
        "ln_b": jnp.zeros((1, D), jnp.float32),
    }
    layers = []
    for l in range(NLAYERS):
        lk = jax.random.split(keys[3 + l], 6)
        layers.append({
            "ln1_g": jnp.ones((1, D), jnp.float32), "ln1_b": jnp.zeros((1, D), jnp.float32),
            "wq": 0.02 * jax.random.normal(lk[0], (D, D), jnp.float32),
            "wk": 0.02 * jax.random.normal(lk[1], (D, D), jnp.float32),
            "wv": 0.02 * jax.random.normal(lk[2], (D, D), jnp.float32),
            "bq": jnp.zeros((1, D), jnp.float32),
            "bk": jnp.zeros((1, D), jnp.float32),
            "bv": jnp.zeros((1, D), jnp.float32),
            "wo": 0.02 * jax.random.normal(lk[3], (D, D), jnp.float32),
            "bo": jnp.zeros((1, D), jnp.float32),
            "ln2_g": jnp.ones((1, D), jnp.float32), "ln2_b": jnp.zeros((1, D), jnp.float32),
            "w1": 0.02 * jax.random.normal(lk[4], (D, MLP), jnp.float32),
            "b1": jnp.zeros((1, MLP), jnp.float32),
            "w2": 0.02 * jax.random.normal(lk[5], (MLP, D), jnp.float32),
            "b2": jnp.zeros((1, D), jnp.float32),
        })
    hk = jax.random.split(keys[3 + NLAYERS], 2)
    head = {
        "ln_g": jnp.ones((1, D), jnp.float32), "ln_b": jnp.zeros((1, D), jnp.float32),
        "w1": 0.02 * jax.random.normal(hk[0], (D, MLP), jnp.float32),
        "b1": jnp.zeros((1, MLP), jnp.float32),
        "w2": 0.02 * jax.random.normal(hk[1], (MLP, DIM_OUT), jnp.float32),
        "b2": jnp.zeros((1, DIM_OUT), jnp.float32),
    }
    return embed, layers, head


if __name__ == "__main__":
    key = jax.random.PRNGKey(0)
    kx, kp = jax.random.split(key)
    B = 16                                              # TB=8, NB=2 (megacore-ready)
    x = jax.random.normal(kx, (B, C, H, W), jnp.float32)   # NCHW like PyTorch
    embed_params, layer_params, head_params = init_params(kp)

    out = vit_forward(x, embed_params, layer_params, head_params)
    out = jax.block_until_ready(out)
    assert out.shape == (B, DIM_OUT) and out.dtype == jnp.float32
    assert bool(jnp.all(jnp.isfinite(out)))
    print("KERNEL_OK")
</pallas_src>

<mosaic_0001>
module attributes {stable_mosaic.version = 11 : i64} {
  func.func @vit_fused_kernel(%arg0: i32, %arg1: i32, %arg2: memref<64x768xbf16, #tpu.memory_space<vmem>>, %arg3: memref<768x128xbf16, #tpu.memory_space<vmem>>, %arg4: memref<8x128xf32, #tpu.memory_space<vmem>>, %arg5: memref<1x128xf32, #tpu.memory_space<vmem>>, %arg6: memref<1x128xf32, #tpu.memory_space<vmem>>, %arg7: memref<1x1x128xf32, #tpu.memory_space<vmem>>, %arg8: memref<1x1x128xf32, #tpu.memory_space<vmem>>, %arg9: memref<1x128x384xbf16, #tpu.memory_space<vmem>>, %arg10: memref<1x1x384xf32, #tpu.memory_space<vmem>>, %arg11: memref<1x128x128xbf16, #tpu.memory_space<vmem>>, %arg12: memref<1x1x128xf32, #tpu.memory_space<vmem>>, %arg13: memref<1x1x128xf32, #tpu.memory_space<vmem>>, %arg14: memref<1x1x128xf32, #tpu.memory_space<vmem>>, %arg15: memref<1x128x256xbf16, #tpu.memory_space<vmem>>, %arg16: memref<1x1x256xf32, #tpu.memory_space<vmem>>, %arg17: memref<1x256x128xbf16, #tpu.memory_space<vmem>>, %arg18: memref<1x1x128xf32, #tpu.memory_space<vmem>>, %arg19: memref<1x128xf32, #tpu.memory_space<vmem>>, %arg20: memref<1x128xf32, #tpu.memory_space<vmem>>, %arg21: memref<128x256xbf16, #tpu.memory_space<vmem>>, %arg22: memref<1x256xf32, #tpu.memory_space<vmem>>, %arg23: memref<256x128xbf16, #tpu.memory_space<vmem>>, %arg24: memref<1x128xf32, #tpu.memory_space<vmem>>, %arg25: memref<8x128xf32, #tpu.memory_space<vmem>>, %arg26: memref<8x8x128xf32, #tpu.memory_space<vmem>>, %arg27: memref<64x128xbf16, #tpu.memory_space<vmem>>) attributes {dimension_semantics = [#tpu.dimension_semantics<parallel>, #tpu.dimension_semantics<arbitrary>], iteration_bounds = array<i64: 2, 2>, scalar_prefetch = 0 : i64, scratch_operands = 2 : i64, tpu.core_type = #tpu.core_type<tc>, window_params = [{transform_indices = @transform_0, window_bounds = array<i64: 64, 768>}, {pipeline_mode = #tpu.pipeline_mode<synchronous>, transform_indices = @transform_1, window_bounds = array<i64: 768, 128>}, {pipeline_mode = #tpu.pipeline_mode<synchronous>, transform_indices = @transform_2, window_bounds = array<i64: 8, 128>}, {pipeline_mode = #tpu.pipeline_mode<synchronous>, transform_indices = @transform_3, window_bounds = array<i64: 1, 128>}, {pipeline_mode = #tpu.pipeline_mode<synchronous>, transform_indices = @transform_4, window_bounds = array<i64: 1, 128>}, {transform_indices = @transform_5, window_bounds = array<i64: 1, 1, 128>}, {transform_indices = @transform_6, window_bounds = array<i64: 1, 1, 128>}, {transform_indices = @transform_7, window_bounds = array<i64: 1, 128, 384>}, {transform_indices = @transform_8, window_bounds = array<i64: 1, 1, 384>}, {transform_indices = @transform_9, window_bounds = array<i64: 1, 128, 128>}, {transform_indices = @transform_10, window_bounds = array<i64: 1, 1, 128>}, {transform_indices = @transform_11, window_bounds = array<i64: 1, 1, 128>}, {transform_indices = @transform_12, window_bounds = array<i64: 1, 1, 128>}, {transform_indices = @transform_13, window_bounds = array<i64: 1, 128, 256>}, {transform_indices = @transform_14, window_bounds = array<i64: 1, 1, 256>}, {transform_indices = @transform_15, window_bounds = array<i64: 1, 256, 128>}, {transform_indices = @transform_16, window_bounds = array<i64: 1, 1, 128>}, {pipeline_mode = #tpu.pipeline_mode<synchronous>, transform_indices = @transform_17, window_bounds = array<i64: 1, 128>}, {pipeline_mode = #tpu.pipeline_mode<synchronous>, transform_indices = @transform_18, window_bounds = array<i64: 1, 128>}, {pipeline_mode = #tpu.pipeline_mode<synchronous>, transform_indices = @transform_19, window_bounds = array<i64: 128, 256>}, {pipeline_mode = #tpu.pipeline_mode<synchronous>, transform_indices = @transform_20, window_bounds = array<i64: 1, 256>}, {pipeline_mode = #tpu.pipeline_mode<synchronous>, transform_indices = @transform_21, window_bounds = array<i64: 256, 128>}, {pipeline_mode = #tpu.pipeline_mode<synchronous>, transform_indices = @transform_22, window_bounds = array<i64: 1, 128>}, {transform_indices = @transform_23, window_bounds = array<i64: 8, 128>}]} {
    %c0_i32 = arith.constant 0 : i32
    %0 = arith.cmpi eq, %arg1, %c0_i32 : i32
    %1 = arith.extui %0 : i1 to i32
    %c0_i32_0 = arith.constant 0 : i32
    %2 = arith.cmpi ne, %1, %c0_i32_0 : i32
    scf.if %2 {
      %c0_84 = arith.constant 0 : index
      %c0_85 = arith.constant 0 : index
      %203 = vector.load %arg2[%c0_84, %c0_85] : memref<64x768xbf16, #tpu.memory_space<vmem>>, vector<64x768xbf16>
      %c0_86 = arith.constant 0 : index
      %c0_87 = arith.constant 0 : index
      %204 = vector.load %arg3[%c0_86, %c0_87] : memref<768x128xbf16, #tpu.memory_space<vmem>>, vector<768x128xbf16>
      %cst_88 = arith.constant dense<0.000000e+00> : vector<64x128xf32>
      %205 = tpu.matmul %203, %204, %cst_88 {dimension_numbers = #tpu.dot_dimension_numbers<[1], [0], [0], [1], [0, 0, 1, 1], [], []>} : vector<64x768xbf16>, vector<768x128xbf16>, vector<64x128xf32> -> vector<64x128xf32>
      %206 = vector.shape_cast %205 : vector<64x128xf32> to vector<8x8x128xf32>
      %c0_89 = arith.constant 0 : index
      %c0_90 = arith.constant 0 : index
      %207 = vector.load %arg4[%c0_89, %c0_90] : memref<8x128xf32, #tpu.memory_space<vmem>>, vector<8x128xf32>
      %208 = vector.shape_cast %207 : vector<8x128xf32> to vector<1x8x128xf32>
      %209 = vector.broadcast %208 : vector<1x8x128xf32> to vector<8x8x128xf32>
      %210 = arith.addf %206, %209 : vector<8x8x128xf32>
      %c0_91 = arith.constant 0 : index
      %c0_92 = arith.constant 0 : index
      %211 = vector.load %arg5[%c0_91, %c0_92] : memref<1x128xf32, #tpu.memory_space<vmem>>, vector<1x128xf32>
      %c0_93 = arith.constant 0 : index
      %c0_94 = arith.constant 0 : index
      %212 = vector.load %arg6[%c0_93, %c0_94] : memref<1x128xf32, #tpu.memory_space<vmem>>, vector<1x128xf32>
      %cst_95 = arith.constant dense<0.000000e+00> : vector<8x8xf32>
      %213 = vector.multi_reduction <add>, %210, %cst_95 [2] : vector<8x8x128xf32> to vector<8x8xf32>
      %214 = vector.shape_cast %213 : vector<8x8xf32> to vector<8x8x1xf32>
      %cst_96 = arith.constant 1.280000e+02 : f32
      %215 = vector.broadcast %cst_96 : f32 to vector<8x8x1xf32>
      %216 = arith.divf %214, %215 : vector<8x8x1xf32>
      %217 = vector.broadcast %216 : vector<8x8x1xf32> to vector<8x8x128xf32>
      %218 = arith.subf %210, %217 : vector<8x8x128xf32>
      %219 = arith.mulf %218, %218 : vector<8x8x128xf32>
      %cst_97 = arith.constant dense<0.000000e+00> : vector<8x8xf32>
      %220 = vector.multi_reduction <add>, %219, %cst_97 [2] : vector<8x8x128xf32> to vector<8x8xf32>
      %221 = vector.shape_cast %220 : vector<8x8xf32> to vector<8x8x1xf32>
      %cst_98 = arith.constant 1.280000e+02 : f32
      %222 = vector.broadcast %cst_98 : f32 to vector<8x8x1xf32>
      %223 = arith.divf %221, %222 : vector<8x8x1xf32>
      %224 = vector.broadcast %216 : vector<8x8x1xf32> to vector<8x8x128xf32>
      %225 = arith.subf %210, %224 : vector<8x8x128xf32>
      %cst_99 = arith.constant 9.99999974E-6 : f32
      %226 = vector.broadcast %cst_99 : f32 to vector<8x8x1xf32>
      %227 = arith.addf %223, %226 : vector<8x8x1xf32>
      %228 = math.rsqrt %227 : vector<8x8x1xf32>
      %229 = vector.broadcast %228 : vector<8x8x1xf32> to vector<8x8x128xf32>
      %230 = arith.mulf %225, %229 : vector<8x8x128xf32>
      %231 = vector.shape_cast %211 : vector<1x128xf32> to vector<1x1x128xf32>
      %232 = vector.broadcast %231 : vector<1x1x128xf32> to vector<8x8x128xf32>
      %233 = arith.mulf %230, %232 : vector<8x8x128xf32>
      %234 = vector.shape_cast %212 : vector<1x128xf32> to vector<1x1x128xf32>
      %235 = vector.broadcast %234 : vector<1x1x128xf32> to vector<8x8x128xf32>
      %236 = arith.addf %233, %235 : vector<8x8x128xf32>
      %c0_100 = arith.constant 0 : index
      %c0_101 = arith.constant 0 : index
      %c0_102 = arith.constant 0 : index
      %237 = vector.load %arg26[%c0_100, %c0_101, %c0_102] : memref<8x8x128xf32, #tpu.memory_space<vmem>>, vector<8x8x128xf32>
      tpu.vector_store %arg26[%c0_100, %c0_101, %c0_102], %236 {strides = array<i32>} : memref<8x8x128xf32, #tpu.memory_space<vmem>>, vector<8x8x128xf32>,
    } else {
    }
    %c0 = arith.constant 0 : index
    %c0_1 = arith.constant 0 : index
    %c0_2 = arith.constant 0 : index
    %3 = vector.load %arg26[%c0, %c0_1, %c0_2] : memref<8x8x128xf32, #tpu.memory_space<vmem>>, vector<8x8x128xf32>
    %4 = vector.shape_cast %3 : vector<8x8x128xf32> to vector<64x128xf32>
    %c0_3 = arith.constant 0 : index
    %c0_4 = arith.constant 0 : index
    %c0_5 = arith.constant 0 : index
    %5 = vector.load %arg7[%c0_3, %c0_4, %c0_5] : memref<1x1x128xf32, #tpu.memory_space<vmem>>, vector<1x1x128xf32>
    %6 = vector.shape_cast %5 : vector<1x1x128xf32> to vector<1x128xf32>
    %c0_6 = arith.constant 0 : index
    %c0_7 = arith.constant 0 : index
    %c0_8 = arith.constant 0 : index
    %7 = vector.load %arg8[%c0_6, %c0_7, %c0_8] : memref<1x1x128xf32, #tpu.memory_space<vmem>>, vector<1x1x128xf32>
    %8 = vector.shape_cast %7 : vector<1x1x128xf32> to vector<1x128xf32>
    %cst = arith.constant dense<0.000000e+00> : vector<64xf32>
    %9 = vector.multi_reduction <add>, %4, %cst [1] : vector<64x128xf32> to vector<64xf32>
    %10 = vector.shape_cast %9 : vector<64xf32> to vector<64x1xf32>
    %cst_9 = arith.constant 1.280000e+02 : f32
    %11 = vector.broadcast %cst_9 : f32 to vector<64x1xf32>
    %12 = arith.divf %10, %11 : vector<64x1xf32>
    %13 = vector.broadcast %12 : vector<64x1xf32> to vector<64x128xf32>
    %14 = arith.subf %4, %13 : vector<64x128xf32>
    %15 = arith.mulf %14, %14 : vector<64x128xf32>
    %cst_10 = arith.constant dense<0.000000e+00> : vector<64xf32>
    %16 = vector.multi_reduction <add>, %15, %cst_10 [1] : vector<64x128xf32> to vector<64xf32>
    %17 = vector.shape_cast %16 : vector<64xf32> to vector<64x1xf32>
    %cst_11 = arith.constant 1.280000e+02 : f32
    %18 = vector.broadcast %cst_11 : f32 to vector<64x1xf32>
    %19 = arith.divf %17, %18 : vector<64x1xf32>
    %20 = vector.broadcast %12 : vector<64x1xf32> to vector<64x128xf32>
    %21 = arith.subf %4, %20 : vector<64x128xf32>
    %cst_12 = arith.constant 9.99999974E-6 : f32
    %22 = vector.broadcast %cst_12 : f32 to vector<64x1xf32>
    %23 = arith.addf %19, %22 : vector<64x1xf32>
    %24 = math.rsqrt %23 : vector<64x1xf32>
    %25 = vector.broadcast %24 : vector<64x1xf32> to vector<64x128xf32>
    %26 = arith.mulf %21, %25 : vector<64x128xf32>
    %27 = vector.broadcast %6 : vector<1x128xf32> to vector<64x128xf32>
    %28 = arith.mulf %26, %27 : vector<64x128xf32>
    %29 = vector.broadcast %8 : vector<1x128xf32> to vector<64x128xf32>
    %30 = arith.addf %28, %29 : vector<64x128xf32>
    %31 = arith.truncf %30 : vector<64x128xf32> to vector<64x128xbf16>
    %c0_13 = arith.constant 0 : index
    %c0_14 = arith.constant 0 : index
    %c0_15 = arith.constant 0 : index
    %32 = vector.load %arg9[%c0_13, %c0_14, %c0_15] : memref<1x128x384xbf16, #tpu.memory_space<vmem>>, vector<1x128x384xbf16>
    %33 = vector.shape_cast %32 : vector<1x128x384xbf16> to vector<128x384xbf16>
    %cst_16 = arith.constant dense<0.000000e+00> : vector<64x384xf32>
    %34 = tpu.matmul %31, %33, %cst_16 {dimension_numbers = #tpu.dot_dimension_numbers<[1], [0], [0], [1], [0, 0, 1, 1], [], []>} : vector<64x128xbf16>, vector<128x384xbf16>, vector<64x384xf32> -> vector<64x384xf32>
    %c0_17 = arith.constant 0 : index
    %c0_18 = arith.constant 0 : index
    %c0_19 = arith.constant 0 : index
    %35 = vector.load %arg10[%c0_17, %c0_18, %c0_19] : memref<1x1x384xf32, #tpu.memory_space<vmem>>, vector<1x1x384xf32>
    %36 = vector.shape_cast %35 : vector<1x1x384xf32> to vector<1x384xf32>
    %37 = vector.broadcast %36 : vector<1x384xf32> to vector<64x384xf32>
    %38 = arith.addf %34, %37 : vector<64x384xf32>
    %39 = vector.extract_strided_slice %38 {offsets = [0, 0], sizes = [64, 128], strides = [1, 1]} : vector<64x384xf32> to vector<64x128xf32>
    %40 = vector.shape_cast %39 : vector<64x128xf32> to vector<8x8x128xf32>
    %41 = arith.truncf %40 : vector<8x8x128xf32> to vector<8x8x128xbf16>
    %42 = vector.extract_strided_slice %38 {offsets = [0, 128], sizes = [64, 128], strides = [1, 1]} : vector<64x384xf32> to vector<64x128xf32>
    %43 = vector.shape_cast %42 : vector<64x128xf32> to vector<8x8x128xf32>
    %44 = arith.truncf %43 : vector<8x8x128xf32> to vector<8x8x128xbf16>
    %45 = vector.extract_strided_slice %38 {offsets = [0, 256], sizes = [64, 128], strides = [1, 1]} : vector<64x384xf32> to vector<64x128xf32>
    %46 = vector.shape_cast %45 : vector<64x128xf32> to vector<8x8x128xf32>
    %47 = arith.truncf %46 : vector<8x8x128xf32> to vector<8x8x128xbf16>
    %48 = tpu.iota {dimensions = array<i32: 2>} : vector<1x1x8xi32>
    %c5_i32 = arith.constant 5 : i32
    %49 = vector.broadcast %c5_i32 : i32 to vector<1x1x8xi32>
    %50 = arith.cmpi slt, %48, %49 : vector<1x1x8xi32>
    %cst_20 = arith.constant 0.000000e+00 : f32
    %cst_21 = arith.constant -1.000000e+30 : f32
    %51 = vector.broadcast %cst_20 : f32 to vector<1x1x8xf32>
    %52 = vector.broadcast %cst_21 : f32 to vector<1x1x8xf32>
    %53 = arith.select %50, %51, %52 : vector<1x1x8xi1>, vector<1x1x8xf32>
    %54 = vector.extract_strided_slice %41 {offsets = [0, 0, 0], sizes = [8, 8, 32], strides = [1, 1, 1]} : vector<8x8x128xbf16> to vector<8x8x32xbf16>
    %55 = vector.extract_strided_slice %44 {offsets = [0, 0, 0], sizes = [8, 8, 32], strides = [1, 1, 1]} : vector<8x8x128xbf16> to vector<8x8x32xbf16>
    %cst_22 = arith.constant dense<0.000000e+00> : vector<8x8x8xf32>
    %56 = tpu.matmul %54, %55, %cst_22 {dimension_numbers = #tpu.dot_dimension_numbers<[2], [2], [1], [1], [0, 0, 0, 1, 1, 1], [0], [0]>} : vector<8x8x32xbf16>, vector<8x8x32xbf16>, vector<8x8x8xf32> -> vector<8x8x8xf32>
    %57 = vector.broadcast %53 : vector<1x1x8xf32> to vector<8x8x8xf32>
    %58 = arith.addf %56, %57 : vector<8x8x8xf32>
    %cst_23 = arith.constant dense<0xFF800000> : vector<8x8xf32>
    %59 = vector.multi_reduction <maximumf>, %58, %cst_23 [2] : vector<8x8x8xf32> to vector<8x8xf32>
    %60 = vector.shape_cast %59 : vector<8x8xf32> to vector<8x8x1xf32>
    %61 = vector.broadcast %60 : vector<8x8x1xf32> to vector<8x8x8xf32>
    %62 = arith.subf %58, %61 : vector<8x8x8xf32>
    %63 = math.exp %62 : vector<8x8x8xf32>
    %cst_24 = arith.constant dense<0.000000e+00> : vector<8x8xf32>
    %64 = vector.multi_reduction <add>, %63, %cst_24 [2] : vector<8x8x8xf32> to vector<8x8xf32>
    %65 = vector.shape_cast %64 : vector<8x8xf32> to vector<8x8x1xf32>
    %66 = tpu.reciprocal %65 {approx = true} : vector<8x8x1xf32> -> vector<8x8x1xf32>
    %67 = vector.broadcast %66 : vector<8x8x1xf32> to vector<8x8x8xf32>
    %68 = arith.mulf %63, %67 : vector<8x8x8xf32>
    %69 = arith.truncf %68 : vector<8x8x8xf32> to vector<8x8x8xbf16>
    %70 = vector.extract_strided_slice %47 {offsets = [0, 0, 0], sizes = [8, 8, 32], strides = [1, 1, 1]} : vector<8x8x128xbf16> to vector<8x8x32xbf16>
    %cst_25 = arith.constant dense<0.000000e+00> : vector<8x8x32xf32>
    %71 = tpu.matmul %69, %70, %cst_25 {dimension_numbers = #tpu.dot_dimension_numbers<[2], [1], [1], [2], [0, 0, 0, 1, 1, 2], [0], [0]>} : vector<8x8x8xbf16>, vector<8x8x32xbf16>, vector<8x8x32xf32> -> vector<8x8x32xf32>
    %72 = vector.shape_cast %71 : vector<8x8x32xf32> to vector<64x32xf32>
    %73 = arith.truncf %72 : vector<64x32xf32> to vector<64x32xbf16>
    %c0_26 = arith.constant 0 : index
    %c0_27 = arith.constant 0 : index
    %74 = vector.load %arg27[%c0_26, %c0_27] : memref<64x128xbf16, #tpu.memory_space<vmem>>, vector<64x32xbf16>
    tpu.vector_store %arg27[%c0_26, %c0_27], %73 {strides = array<i32>} : memref<64x128xbf16, #tpu.memory_space<vmem>>, vector<64x32xbf16>,
    %75 = vector.extract_strided_slice %41 {offsets = [0, 0, 32], sizes = [8, 8, 32], strides = [1, 1, 1]} : vector<8x8x128xbf16> to vector<8x8x32xbf16>
    %76 = vector.extract_strided_slice %44 {offsets = [0, 0, 32], sizes = [8, 8, 32], strides = [1, 1, 1]} : vector<8x8x128xbf16> to vector<8x8x32xbf16>
    %cst_28 = arith.constant dense<0.000000e+00> : vector<8x8x8xf32>
    %77 = tpu.matmul %75, %76, %cst_28 {dimension_numbers = #tpu.dot_dimension_numbers<[2], [2], [1], [1], [0, 0, 0, 1, 1, 1], [0], [0]>} : vector<8x8x32xbf16>, vector<8x8x32xbf16>, vector<8x8x8xf32> -> vector<8x8x8xf32>
    %78 = vector.broadcast %53 : vector<1x1x8xf32> to vector<8x8x8xf32>
    %79 = arith.addf %77, %78 : vector<8x8x8xf32>
    %cst_29 = arith.constant dense<0xFF800000> : vector<8x8xf32>
    %80 = vector.multi_reduction <maximumf>, %79, %cst_29 [2] : vector<8x8x8xf32> to vector<8x8xf32>
    %81 = vector.shape_cast %80 : vector<8x8xf32> to vector<8x8x1xf32>
    %82 = vector.broadcast %81 : vector<8x8x1xf32> to vector<8x8x8xf32>
    %83 = arith.subf %79, %82 : vector<8x8x8xf32>
    %84 = math.exp %83 : vector<8x8x8xf32>
    %cst_30 = arith.constant dense<0.000000e+00> : vector<8x8xf32>
    %85 = vector.multi_reduction <add>, %84, %cst_30 [2] : vector<8x8x8xf32> to vector<8x8xf32>
    %86 = vector.shape_cast %85 : vector<8x8xf32> to vector<8x8x1xf32>
    %87 = tpu.reciprocal %86 {approx = true} : vector<8x8x1xf32> -> vector<8x8x1xf32>
    %88 = vector.broadcast %87 : vector<8x8x1xf32> to vector<8x8x8xf32>
    %89 = arith.mulf %84, %88 : vector<8x8x8xf32>
    %90 = arith.truncf %89 : vector<8x8x8xf32> to vector<8x8x8xbf16>
    %91 = vector.extract_strided_slice %47 {offsets = [0, 0, 32], sizes = [8, 8, 32], strides = [1, 1, 1]} : vector<8x8x128xbf16> to vector<8x8x32xbf16>
    %cst_31 = arith.constant dense<0.000000e+00> : vector<8x8x32xf32>
    %92 = tpu.matmul %90, %91, %cst_31 {dimension_numbers = #tpu.dot_dimension_numbers<[2], [1], [1], [2], [0, 0, 0, 1, 1, 2], [0], [0]>} : vector<8x8x8xbf16>, vector<8x8x32xbf16>, vector<8x8x32xf32> -> vector<8x8x32xf32>
    %93 = vector.shape_cast %92 : vector<8x8x32xf32> to vector<64x32xf32>
    %94 = arith.truncf %93 : vector<64x32xf32> to vector<64x32xbf16>
    %c0_32 = arith.constant 0 : index
    %c32 = arith.constant 32 : index
    %95 = vector.load %arg27[%c0_32, %c32] : memref<64x128xbf16, #tpu.memory_space<vmem>>, vector<64x32xbf16>
    tpu.vector_store %arg27[%c0_32, %c32], %94 {strides = array<i32>} : memref<64x128xbf16, #tpu.memory_space<vmem>>, vector<64x32xbf16>,
    %96 = vector.extract_strided_slice %41 {offsets = [0, 0, 64], sizes = [8, 8, 32], strides = [1, 1, 1]} : vector<8x8x128xbf16> to vector<8x8x32xbf16>
    %97 = vector.extract_strided_slice %44 {offsets = [0, 0, 64], sizes = [8, 8, 32], strides = [1, 1, 1]} : vector<8x8x128xbf16> to vector<8x8x32xbf16>
    %cst_33 = arith.constant dense<0.000000e+00> : vector<8x8x8xf32>
    %98 = tpu.matmul %96, %97, %cst_33 {dimension_numbers = #tpu.dot_dimension_numbers<[2], [2], [1], [1], [0, 0, 0, 1, 1, 1], [0], [0]>} : vector<8x8x32xbf16>, vector<8x8x32xbf16>, vector<8x8x8xf32> -> vector<8x8x8xf32>
    %99 = vector.broadcast %53 : vector<1x1x8xf32> to vector<8x8x8xf32>
    %100 = arith.addf %98, %99 : vector<8x8x8xf32>
    %cst_34 = arith.constant dense<0xFF800000> : vector<8x8xf32>
    %101 = vector.multi_reduction <maximumf>, %100, %cst_34 [2] : vector<8x8x8xf32> to vector<8x8xf32>
    %102 = vector.shape_cast %101 : vector<8x8xf32> to vector<8x8x1xf32>
    %103 = vector.broadcast %102 : vector<8x8x1xf32> to vector<8x8x8xf32>
    %104 = arith.subf %100, %103 : vector<8x8x8xf32>
    %105 = math.exp %104 : vector<8x8x8xf32>
    %cst_35 = arith.constant dense<0.000000e+00> : vector<8x8xf32>
    %106 = vector.multi_reduction <add>, %105, %cst_35 [2] : vector<8x8x8xf32> to vector<8x8xf32>
    %107 = vector.shape_cast %106 : vector<8x8xf32> to vector<8x8x1xf32>
    %108 = tpu.reciprocal %107 {approx = true} : vector<8x8x1xf32> -> vector<8x8x1xf32>
    %109 = vector.broadcast %108 : vector<8x8x1xf32> to vector<8x8x8xf32>
    %110 = arith.mulf %105, %109 : vector<8x8x8xf32>
    %111 = arith.truncf %110 : vector<8x8x8xf32> to vector<8x8x8xbf16>
    %112 = vector.extract_strided_slice %47 {offsets = [0, 0, 64], sizes = [8, 8, 32], strides = [1, 1, 1]} : vector<8x8x128xbf16> to vector<8x8x32xbf16>
    %cst_36 = arith.constant dense<0.000000e+00> : vector<8x8x32xf32>
    %113 = tpu.matmul %111, %112, %cst_36 {dimension_numbers = #tpu.dot_dimension_numbers<[2], [1], [1], [2], [0, 0, 0, 1, 1, 2], [0], [0]>} : vector<8x8x8xbf16>, vector<8x8x32xbf16>, vector<8x8x32xf32> -> vector<8x8x32xf32>
    %114 = vector.shape_cast %113 : vector<8x8x32xf32> to vector<64x32xf32>
    %115 = arith.truncf %114 : vector<64x32xf32> to vector<64x32xbf16>
    %c0_37 = arith.constant 0 : index
    %c64 = arith.constant 64 : index
    %116 = vector.load %arg27[%c0_37, %c64] : memref<64x128xbf16, #tpu.memory_space<vmem>>, vector<64x32xbf16>
    tpu.vector_store %arg27[%c0_37, %c64], %115 {strides = array<i32>} : memref<64x128xbf16, #tpu.memory_space<vmem>>, vector<64x32xbf16>,
    %117 = vector.extract_strided_slice %41 {offsets = [0, 0, 96], sizes = [8, 8, 32], strides = [1, 1, 1]} : vector<8x8x128xbf16> to vector<8x8x32xbf16>
    %118 = vector.extract_strided_slice %44 {offsets = [0, 0, 96], sizes = [8, 8, 32], strides = [1, 1, 1]} : vector<8x8x128xbf16> to vector<8x8x32xbf16>
    %cst_38 = arith.constant dense<0.000000e+00> : vector<8x8x8xf32>
    %119 = tpu.matmul %117, %118, %cst_38 {dimension_numbers = #tpu.dot_dimension_numbers<[2], [2], [1], [1], [0, 0, 0, 1, 1, 1], [0], [0]>} : vector<8x8x32xbf16>, vector<8x8x32xbf16>, vector<8x8x8xf32> -> vector<8x8x8xf32>
    %120 = vector.broadcast %53 : vector<1x1x8xf32> to vector<8x8x8xf32>
    %121 = arith.addf %119, %120 : vector<8x8x8xf32>
    %cst_39 = arith.constant dense<0xFF800000> : vector<8x8xf32>
    %122 = vector.multi_reduction <maximumf>, %121, %cst_39 [2] : vector<8x8x8xf32> to vector<8x8xf32>
    %123 = vector.shape_cast %122 : vector<8x8xf32> to vector<8x8x1xf32>
    %124 = vector.broadcast %123 : vector<8x8x1xf32> to vector<8x8x8xf32>
    %125 = arith.subf %121, %124 : vector<8x8x8xf32>
    %126 = math.exp %125 : vector<8x8x8xf32>
    %cst_40 = arith.constant dense<0.000000e+00> : vector<8x8xf32>
    %127 = vector.multi_reduction <add>, %126, %cst_40 [2] : vector<8x8x8xf32> to vector<8x8xf32>
    %128 = vector.shape_cast %127 : vector<8x8xf32> to vector<8x8x1xf32>
    %129 = tpu.reciprocal %128 {approx = true} : vector<8x8x1xf32> -> vector<8x8x1xf32>
    %130 = vector.broadcast %129 : vector<8x8x1xf32> to vector<8x8x8xf32>
    %131 = arith.mulf %126, %130 : vector<8x8x8xf32>
    %132 = arith.truncf %131 : vector<8x8x8xf32> to vector<8x8x8xbf16>
    %133 = vector.extract_strided_slice %47 {offsets = [0, 0, 96], sizes = [8, 8, 32], strides = [1, 1, 1]} : vector<8x8x128xbf16> to vector<8x8x32xbf16>
    %cst_41 = arith.constant dense<0.000000e+00> : vector<8x8x32xf32>
    %134 = tpu.matmul %132, %133, %cst_41 {dimension_numbers = #tpu.dot_dimension_numbers<[2], [1], [1], [2], [0, 0, 0, 1, 1, 2], [0], [0]>} : vector<8x8x8xbf16>, vector<8x8x32xbf16>, vector<8x8x32xf32> -> vector<8x8x32xf32>
    %135 = vector.shape_cast %134 : vector<8x8x32xf32> to vector<64x32xf32>
    %136 = arith.truncf %135 : vector<64x32xf32> to vector<64x32xbf16>
    %c0_42 = arith.constant 0 : index
    %c96 = arith.constant 96 : index
    %137 = vector.load %arg27[%c0_42, %c96] : memref<64x128xbf16, #tpu.memory_space<vmem>>, vector<64x32xbf16>
    tpu.vector_store %arg27[%c0_42, %c96], %136 {strides = array<i32>} : memref<64x128xbf16, #tpu.memory_space<vmem>>, vector<64x32xbf16>,
    %c0_43 = arith.constant 0 : index
    %c0_44 = arith.constant 0 : index
    %138 = vector.load %arg27[%c0_43, %c0_44] : memref<64x128xbf16, #tpu.memory_space<vmem>>, vector<64x128xbf16>
    %c0_45 = arith.constant 0 : index
    %c0_46 = arith.constant 0 : index
    %c0_47 = arith.constant 0 : index
    %139 = vector.load %arg11[%c0_45, %c0_46, %c0_47] : memref<1x128x128xbf16, #tpu.memory_space<vmem>>, vector<1x128x128xbf16>
    %140 = vector.shape_cast %139 : vector<1x128x128xbf16> to vector<128x128xbf16>
    %cst_48 = arith.constant dense<0.000000e+00> : vector<64x128xf32>
    %141 = tpu.matmul %138, %140, %cst_48 {dimension_numbers = #tpu.dot_dimension_numbers<[1], [0], [0], [1], [0, 0, 1, 1], [], []>} : vector<64x128xbf16>, vector<128x128xbf16>, vector<64x128xf32> -> vector<64x128xf32>
    %142 = arith.addf %4, %141 : vector<64x128xf32>
    %c0_49 = arith.constant 0 : index
    %c0_50 = arith.constant 0 : index
    %c0_51 = arith.constant 0 : index
    %143 = vector.load %arg12[%c0_49, %c0_50, %c0_51] : memref<1x1x128xf32, #tpu.memory_space<vmem>>, vector<1x1x128xf32>
    %144 = vector.shape_cast %143 : vector<1x1x128xf32> to vector<1x128xf32>
    %145 = vector.broadcast %144 : vector<1x128xf32> to vector<64x128xf32>
    %146 = arith.addf %142, %145 : vector<64x128xf32>
    %c0_52 = arith.constant 0 : index
    %c0_53 = arith.constant 0 : index
    %c0_54 = arith.constant 0 : index
    %147 = vector.load %arg13[%c0_52, %c0_53, %c0_54] : memref<1x1x128xf32, #tpu.memory_space<vmem>>, vector<1x1x128xf32>
    %148 = vector.shape_cast %147 : vector<1x1x128xf32> to vector<1x128xf32>
    %c0_55 = arith.constant 0 : index
    %c0_56 = arith.constant 0 : index
    %c0_57 = arith.constant 0 : index
    %149 = vector.load %arg14[%c0_55, %c0_56, %c0_57] : memref<1x1x128xf32, #tpu.memory_space<vmem>>, vector<1x1x128xf32>
    %150 = vector.shape_cast %149 : vector<1x1x128xf32> to vector<1x128xf32>
    %cst_58 = arith.constant dense<0.000000e+00> : vector<64xf32>
    %151 = vector.multi_reduction <add>, %146, %cst_58 [1] : vector<64x128xf32> to vector<64xf32>
    %152 = vector.shape_cast %151 : vector<64xf32> to vector<64x1xf32>
    %cst_59 = arith.constant 1.280000e+02 : f32
    %153 = vector.broadcast %cst_59 : f32 to vector<64x1xf32>
    %154 = arith.divf %152, %153 : vector<64x1xf32>
    %155 = vector.broadcast %154 : vector<64x1xf32> to vector<64x128xf32>
    %156 = arith.subf %146, %155 : vector<64x128xf32>
    %157 = arith.mulf %156, %156 : vector<64x128xf32>
    %cst_60 = arith.constant dense<0.000000e+00> : vector<64xf32>
    %158 = vector.multi_reduction <add>, %157, %cst_60 [1] : vector<64x128xf32> to vector<64xf32>
    %159 = vector.shape_cast %158 : vector<64xf32> to vector<64x1xf32>
    %cst_61 = arith.constant 1.280000e+02 : f32
    %160 = vector.broadcast %cst_61 : f32 to vector<64x1xf32>
    %161 = arith.divf %159, %160 : vector<64x1xf32>
    %162 = vector.broadcast %154 : vector<64x1xf32> to vector<64x128xf32>
    %163 = arith.subf %146, %162 : vector<64x128xf32>
    %cst_62 = arith.constant 9.99999974E-6 : f32
    %164 = vector.broadcast %cst_62 : f32 to vector<64x1xf32>
    %165 = arith.addf %161, %164 : vector<64x1xf32>
    %166 = math.rsqrt %165 : vector<64x1xf32>
    %167 = vector.broadcast %166 : vector<64x1xf32> to vector<64x128xf32>
    %168 = arith.mulf %163, %167 : vector<64x128xf32>
    %169 = vector.broadcast %148 : vector<1x128xf32> to vector<64x128xf32>
    %170 = arith.mulf %168, %169 : vector<64x128xf32>
    %171 = vector.broadcast %150 : vector<1x128xf32> to vector<64x128xf32>
    %172 = arith.addf %170, %171 : vector<64x128xf32>
    %173 = arith.truncf %172 : vector<64x128xf32> to vector<64x128xbf16>
    %c0_63 = arith.constant 0 : index
    %c0_64 = arith.constant 0 : index
    %c0_65 = arith.constant 0 : index
    %174 = vector.load %arg15[%c0_63, %c0_64, %c0_65] : memref<1x128x256xbf16, #tpu.memory_space<vmem>>, vector<1x128x256xbf16>
    %175 = vector.shape_cast %174 : vector<1x128x256xbf16> to vector<128x256xbf16>
    %cst_66 = arith.constant dense<0.000000e+00> : vector<64x256xf32>
    %176 = tpu.matmul %173, %175, %cst_66 {dimension_numbers = #tpu.dot_dimension_numbers<[1], [0], [0], [1], [0, 0, 1, 1], [], []>} : vector<64x128xbf16>, vector<128x256xbf16>, vector<64x256xf32> -> vector<64x256xf32>
    %c0_67 = arith.constant 0 : index
    %c0_68 = arith.constant 0 : index
    %c0_69 = arith.constant 0 : index
    %177 = vector.load %arg16[%c0_67, %c0_68, %c0_69] : memref<1x1x256xf32, #tpu.memory_space<vmem>>, vector<1x1x256xf32>
    %178 = vector.shape_cast %177 : vector<1x1x256xf32> to vector<1x256xf32>
    %179 = vector.broadcast %178 : vector<1x256xf32> to vector<64x256xf32>
    %180 = arith.addf %176, %179 : vector<64x256xf32>
    %cst_70 = arith.constant 5.000000e-01 : f32
    %181 = vector.broadcast %cst_70 : f32 to vector<64x256xf32>
    %182 = arith.mulf %181, %180 : vector<64x256xf32>
    %cst_71 = arith.constant 0.707106769 : f32
    %183 = vector.broadcast %cst_71 : f32 to vector<64x256xf32>
    %184 = arith.mulf %180, %183 : vector<64x256xf32>
    %185 = math.erf %184 : vector<64x256xf32>
    %cst_72 = arith.constant 1.000000e+00 : f32
    %186 = vector.broadcast %cst_72 : f32 to vector<64x256xf32>
    %187 = arith.addf %186, %185 : vector<64x256xf32>
    %188 = arith.mulf %182, %187 : vector<64x256xf32>
    %189 = arith.truncf %188 : vector<64x256xf32> to vector<64x256xbf16>
    %c0_73 = arith.constant 0 : index
    %c0_74 = arith.constant 0 : index
    %c0_75 = arith.constant 0 : index
    %190 = vector.load %arg17[%c0_73, %c0_74, %c0_75] : memref<1x256x128xbf16, #tpu.memory_space<vmem>>, vector<1x256x128xbf16>
    %191 = vector.shape_cast %190 : vector<1x256x128xbf16> to vector<256x128xbf16>
    %cst_76 = arith.constant dense<0.000000e+00> : vector<64x128xf32>
    %192 = tpu.matmul %189, %191, %cst_76 {dimension_numbers = #tpu.dot_dimension_numbers<[1], [0], [0], [1], [0, 0, 1, 1], [], []>} : vector<64x256xbf16>, vector<256x128xbf16>, vector<64x128xf32> -> vector<64x128xf32>
    %193 = arith.addf %146, %192 : vector<64x128xf32>
    %c0_77 = arith.constant 0 : index
    %c0_78 = arith.constant 0 : index
    %c0_79 = arith.constant 0 : index
    %194 = vector.load %arg18[%c0_77, %c0_78, %c0_79] : memref<1x1x128xf32, #tpu.memory_space<vmem>>, vector<1x1x128xf32>
    %195 = vector.shape_cast %194 : vector<1x1x128xf32> to vector<1x128xf32>
    %196 = vector.broadcast %195 : vector<1x128xf32> to vector<64x128xf32>
    %197 = arith.addf %193, %196 : vector<64x128xf32>
    %198 = vector.shape_cast %197 : vector<64x128xf32> to vector<8x8x128xf32>
    %c0_80 = arith.constant 0 : index
    %c0_81 = arith.constant 0 : index
    %c0_82 = arith.constant 0 : index
    %199 = vector.load %arg26[%c0_80, %c0_81, %c0_82] : memref<8x8x128xf32, #tpu.memory_space<vmem>>, vector<8x8x128xf32>
    tpu.vector_store %arg26[%c0_80, %c0_81, %c0_82], %198 {strides = array<i32>} : memref<8x8x128xf32, #tpu.memory_space<vmem>>, vector<8x8x128xf32>,
    %c1_i32 = arith.constant 1 : i32
    %200 = arith.cmpi eq, %arg1, %c1_i32 : i32
    %201 = arith.extui %200 : i1 to i32
    %c0_i32_83 = arith.constant 0 : i32
    %202 = arith.cmpi ne, %201, %c0_i32_83 : i32
    scf.if %202 {
      %c0_84 = arith.constant 0 : index
      %c0_85 = arith.constant 0 : index
      %c0_86 = arith.constant 0 : index
      %203 = vector.load %arg26[%c0_84, %c0_85, %c0_86] : memref<8x8x128xf32, #tpu.memory_space<vmem>>, vector<8x1x128xf32>
      %204 = vector.shape_cast %203 : vector<8x1x128xf32> to vector<8x128xf32>
      %c0_87 = arith.constant 0 : index
      %c0_88 = arith.constant 0 : index
      %205 = vector.load %arg19[%c0_87, %c0_88] : memref<1x128xf32, #tpu.memory_space<vmem>>, vector<1x128xf32>
      %c0_89 = arith.constant 0 : index
      %c0_90 = arith.constant 0 : index
      %206 = vector.load %arg20[%c0_89, %c0_90] : memref<1x128xf32, #tpu.memory_space<vmem>>, vector<1x128xf32>
      %cst_91 = arith.constant dense<0.000000e+00> : vector<8xf32>
      %207 = vector.multi_reduction <add>, %204, %cst_91 [1] : vector<8x128xf32> to vector<8xf32>
      %208 = vector.shape_cast %207 : vector<8xf32> to vector<8x1xf32>
      %cst_92 = arith.constant 1.280000e+02 : f32
      %209 = vector.broadcast %cst_92 : f32 to vector<8x1xf32>
      %210 = arith.divf %208, %209 : vector<8x1xf32>
      %211 = vector.broadcast %210 : vector<8x1xf32> to vector<8x128xf32>
      %212 = arith.subf %204, %211 : vector<8x128xf32>
      %213 = arith.mulf %212, %212 : vector<8x128xf32>
      %cst_93 = arith.constant dense<0.000000e+00> : vector<8xf32>
      %214 = vector.multi_reduction <add>, %213, %cst_93 [1] : vector<8x128xf32> to vector<8xf32>
      %215 = vector.shape_cast %214 : vector<8xf32> to vector<8x1xf32>
      %cst_94 = arith.constant 1.280000e+02 : f32
      %216 = vector.broadcast %cst_94 : f32 to vector<8x1xf32>
      %217 = arith.divf %215, %216 : vector<8x1xf32>
      %218 = vector.broadcast %210 : vector<8x1xf32> to vector<8x128xf32>
      %219 = arith.subf %204, %218 : vector<8x128xf32>
      %cst_95 = arith.constant 9.99999974E-6 : f32
      %220 = vector.broadcast %cst_95 : f32 to vector<8x1xf32>
      %221 = arith.addf %217, %220 : vector<8x1xf32>
      %222 = math.rsqrt %221 : vector<8x1xf32>
      %223 = vector.broadcast %222 : vector<8x1xf32> to vector<8x128xf32>
      %224 = arith.mulf %219, %223 : vector<8x128xf32>
      %225 = vector.broadcast %205 : vector<1x128xf32> to vector<8x128xf32>
      %226 = arith.mulf %224, %225 : vector<8x128xf32>
      %227 = vector.broadcast %206 : vector<1x128xf32> to vector<8x128xf32>
      %228 = arith.addf %226, %227 : vector<8x128xf32>
      %229 = arith.truncf %228 : vector<8x128xf32> to vector<8x128xbf16>
      %c0_96 = arith.constant 0 : index
      %c0_97 = arith.constant 0 : index
      %230 = vector.load %arg21[%c0_96, %c0_97] : memref<128x256xbf16, #tpu.memory_space<vmem>>, vector<128x256xbf16>
      %cst_98 = arith.constant dense<0.000000e+00> : vector<8x256xf32>
      %231 = tpu.matmul %229, %230, %cst_98 {dimension_numbers = #tpu.dot_dimension_numbers<[1], [0], [0], [1], [0, 0, 1, 1], [], []>} : vector<8x128xbf16>, vector<128x256xbf16>, vector<8x256xf32> -> vector<8x256xf32>
      %c0_99 = arith.constant 0 : index
      %c0_100 = arith.constant 0 : index
      %232 = vector.load %arg22[%c0_99, %c0_100] : memref<1x256xf32, #tpu.memory_space<vmem>>, vector<1x256xf32>
      %233 = vector.broadcast %232 : vector<1x256xf32> to vector<8x256xf32>
      %234 = arith.addf %231, %233 : vector<8x256xf32>
      %235 = arith.truncf %234 : vector<8x256xf32> to vector<8x256xbf16>
      %c0_101 = arith.constant 0 : index
      %c0_102 = arith.constant 0 : index
      %236 = vector.load %arg23[%c0_101, %c0_102] : memref<256x128xbf16, #tpu.memory_space<vmem>>, vector<256x128xbf16>
      %cst_103 = arith.constant dense<0.000000e+00> : vector<8x128xf32>
      %237 = tpu.matmul %235, %236, %cst_103 {dimension_numbers = #tpu.dot_dimension_numbers<[1], [0], [0], [1], [0, 0, 1, 1], [], []>} : vector<8x256xbf16>, vector<256x128xbf16>, vector<8x128xf32> -> vector<8x128xf32>
      %c0_104 = arith.constant 0 : index
      %c0_105 = arith.constant 0 : index
      %238 = vector.load %arg24[%c0_104, %c0_105] : memref<1x128xf32, #tpu.memory_space<vmem>>, vector<1x128xf32>
      %239 = vector.broadcast %238 : vector<1x128xf32> to vector<8x128xf32>
      %240 = arith.addf %237, %239 : vector<8x128xf32>
      %c0_106 = arith.constant 0 : index
      %c0_107 = arith.constant 0 : index
      %241 = vector.load %arg25[%c0_106, %c0_107] : memref<8x128xf32, #tpu.memory_space<vmem>>, vector<8x128xf32>
      tpu.vector_store %arg25[%c0_106, %c0_107], %240 {strides = array<i32>} : memref<8x128xf32, #tpu.memory_space<vmem>>, vector<8x128xf32>,
    } else {
    }
    return
  }
  func.func @transform_0(%arg0: i32, %arg1: i32) -> (i32, i32) {
    %c0_i32 = arith.constant 0 : i32
    %c0_i32_0 = arith.constant 0 : i32
    return %arg0, %c0_i32 : i32, i32
  }
  func.func @transform_1(%arg0: i32, %arg1: i32) -> (i32, i32) {
    %c0_i32 = arith.constant 0 : i32
    %c0_i32_0 = arith.constant 0 : i32
    %c0_i32_1 = arith.constant 0 : i32
    return %c0_i32, %c0_i32_0 : i32, i32
  }
  func.func @transform_2(%arg0: i32, %arg1: i32) -> (i32, i32) {
    %c0_i32 = arith.constant 0 : i32
    %c0_i32_0 = arith.constant 0 : i32
    %c0_i32_1 = arith.constant 0 : i32
    return %c0_i32, %c0_i32_0 : i32, i32
  }
  func.func @transform_3(%arg0: i32, %arg1: i32) -> (i32, i32) {
    %c0_i32 = arith.constant 0 : i32
    %c0_i32_0 = arith.constant 0 : i32
    %c0_i32_1 = arith.constant 0 : i32
    return %c0_i32, %c0_i32_0 : i32, i32
  }
  func.func @transform_4(%arg0: i32, %arg1: i32) -> (i32, i32) {
    %c0_i32 = arith.constant 0 : i32
    %c0_i32_0 = arith.constant 0 : i32
    %c0_i32_1 = arith.constant 0 : i32
    return %c0_i32, %c0_i32_0 : i32, i32
  }
  func.func @transform_5(%arg0: i32, %arg1: i32) -> (i32, i32, i32) {
    %c0_i32 = arith.constant 0 : i32
    %c0_i32_0 = arith.constant 0 : i32
    %c0_i32_1 = arith.constant 0 : i32
    return %arg1, %c0_i32, %c0_i32_0 : i32, i32, i32
  }
  func.func @transform_6(%arg0: i32, %arg1: i32) -> (i32, i32, i32) {
    %c0_i32 = arith.constant 0 : i32
    %c0_i32_0 = arith.constant 0 : i32
    %c0_i32_1 = arith.constant 0 : i32
    return %arg1, %c0_i32, %c0_i32_0 : i32, i32, i32
  }
  func.func @transform_7(%arg0: i32, %arg1: i32) -> (i32, i32, i32) {
    %c0_i32 = arith.constant 0 : i32
    %c0_i32_0 = arith.constant 0 : i32
    %c0_i32_1 = arith.constant 0 : i32
    return %arg1, %c0_i32, %c0_i32_0 : i32, i32, i32
  }
  func.func @transform_8(%arg0: i32, %arg1: i32) -> (i32, i32, i32) {
    %c0_i32 = arith.constant 0 : i32
    %c0_i32_0 = arith.constant 0 : i32
    %c0_i32_1 = arith.constant 0 : i32
    return %arg1, %c0_i32, %c0_i32_0 : i32, i32, i32
  }
  func.func @transform_9(%arg0: i32, %arg1: i32) -> (i32, i32, i32) {
    %c0_i32 = arith.constant 0 : i32
    %c0_i32_0 = arith.constant 0 : i32
    %c0_i32_1 = arith.constant 0 : i32
    return %arg1, %c0_i32, %c0_i32_0 : i32, i32, i32
  }
  func.func @transform_10(%arg0: i32, %arg1: i32) -> (i32, i32, i32) {
    %c0_i32 = arith.constant 0 : i32
    %c0_i32_0 = arith.constant 0 : i32
    %c0_i32_1 = arith.constant 0 : i32
    return %arg1, %c0_i32, %c0_i32_0 : i32, i32, i32
  }
  func.func @transform_11(%arg0: i32, %arg1: i32) -> (i32, i32, i32) {
    %c0_i32 = arith.constant 0 : i32
    %c0_i32_0 = arith.constant 0 : i32
    %c0_i32_1 = arith.constant 0 : i32
    return %arg1, %c0_i32, %c0_i32_0 : i32, i32, i32
  }
  func.func @transform_12(%arg0: i32, %arg1: i32) -> (i32, i32, i32) {
    %c0_i32 = arith.constant 0 : i32
    %c0_i32_0 = arith.constant 0 : i32
    %c0_i32_1 = arith.constant 0 : i32
    return %arg1, %c0_i32, %c0_i32_0 : i32, i32, i32
  }
  func.func @transform_13(%arg0: i32, %arg1: i32) -> (i32, i32, i32) {
    %c0_i32 = arith.constant 0 : i32
    %c0_i32_0 = arith.constant 0 : i32
    %c0_i32_1 = arith.constant 0 : i32
    return %arg1, %c0_i32, %c0_i32_0 : i32, i32, i32
  }
  func.func @transform_14(%arg0: i32, %arg1: i32) -> (i32, i32, i32) {
    %c0_i32 = arith.constant 0 : i32
    %c0_i32_0 = arith.constant 0 : i32
    %c0_i32_1 = arith.constant 0 : i32
    return %arg1, %c0_i32, %c0_i32_0 : i32, i32, i32
  }
  func.func @transform_15(%arg0: i32, %arg1: i32) -> (i32, i32, i32) {
    %c0_i32 = arith.constant 0 : i32
    %c0_i32_0 = arith.constant 0 : i32
    %c0_i32_1 = arith.constant 0 : i32
    return %arg1, %c0_i32, %c0_i32_0 : i32, i32, i32
  }
  func.func @transform_16(%arg0: i32, %arg1: i32) -> (i32, i32, i32) {
    %c0_i32 = arith.constant 0 : i32
    %c0_i32_0 = arith.constant 0 : i32
    %c0_i32_1 = arith.constant 0 : i32
    return %arg1, %c0_i32, %c0_i32_0 : i32, i32, i32
  }
  func.func @transform_17(%arg0: i32, %arg1: i32) -> (i32, i32) {
    %c0_i32 = arith.constant 0 : i32
    %c0_i32_0 = arith.constant 0 : i32
    %c0_i32_1 = arith.constant 0 : i32
    return %c0_i32, %c0_i32_0 : i32, i32
  }
  func.func @transform_18(%arg0: i32, %arg1: i32) -> (i32, i32) {
    %c0_i32 = arith.constant 0 : i32
    %c0_i32_0 = arith.constant 0 : i32
    %c0_i32_1 = arith.constant 0 : i32
    return %c0_i32, %c0_i32_0 : i32, i32
  }
  func.func @transform_19(%arg0: i32, %arg1: i32) -> (i32, i32) {
    %c0_i32 = arith.constant 0 : i32
    %c0_i32_0 = arith.constant 0 : i32
    %c0_i32_1 = arith.constant 0 : i32
    return %c0_i32, %c0_i32_0 : i32, i32
  }
  func.func @transform_20(%arg0: i32, %arg1: i32) -> (i32, i32) {
    %c0_i32 = arith.constant 0 : i32
    %c0_i32_0 = arith.constant 0 : i32
    %c0_i32_1 = arith.constant 0 : i32
    return %c0_i32, %c0_i32_0 : i32, i32
  }
  func.func @transform_21(%arg0: i32, %arg1: i32) -> (i32, i32) {
    %c0_i32 = arith.constant 0 : i32
    %c0_i32_0 = arith.constant 0 : i32
    %c0_i32_1 = arith.constant 0 : i32
    return %c0_i32, %c0_i32_0 : i32, i32
  }
  func.func @transform_22(%arg0: i32, %arg1: i32) -> (i32, i32) {
    %c0_i32 = arith.constant 0 : i32
    %c0_i32_0 = arith.constant 0 : i32
    %c0_i32_1 = arith.constant 0 : i32
    return %c0_i32, %c0_i32_0 : i32, i32
  }
  func.func @transform_23(%arg0: i32, %arg1: i32) -> (i32, i32) {
    %c0_i32 = arith.constant 0 : i32
    %c0_i32_0 = arith.constant 0 : i32
    return %arg0, %c0_i32 : i32, i32
  }
}

</mosaic_0001>

<llo_original>
// kernel: tpu_custom_call.1
$region0: #{tpu_custom_call.1}
  #allocation0 [shape = 'u32[]', space=smem, size = 0x4, offset = 0x4, fixed_abs, tag = 'smem constant byte address 0x4 - core index']
  #allocation1 [shape = 'u32[144,128]{1,0:T(1,128)}', space=vmem, size = 0x12000, scoped, tag = 'internal scratch']
  #allocation2 [shape = 'f32[8,8,128]{2,1,0:T(8,128)}', space=vmem, size = 0x8000, scoped, tag = 'scratch operand']
  #allocation3 [shape = 'bf16[64,128]{1,0:T(8,128)(2,1)}', space=vmem, size = 0x4000, scoped, tag = 'scratch operand']
  %s0 = inlined_call_operand.hbm [shape: bf16[128,768], index: 0, kind: input, shape index: {}]
  %s1 = inlined_call_operand.hbm [shape: bf16[768,128], index: 1, kind: input, shape index: {}]
  %s2 = inlined_call_operand.hbm [shape: f32[8,128], index: 2, kind: input, shape index: {}]
  %s3 = inlined_call_operand.hbm [shape: f32[1,128], index: 3, kind: input, shape index: {}]
  %s4 = inlined_call_operand.hbm [shape: f32[1,128], index: 4, kind: input, shape index: {}]
  %s5 = inlined_call_operand.vmem [shape: f32[2,1,128], index: 5, kind: input, shape index: {}]
  %s6 = inlined_call_operand.hbm [shape: f32[2,1,128], index: 6, kind: input, shape index: {}]
  %s7 = inlined_call_operand.hbm [shape: bf16[2,128,384], index: 7, kind: input, shape index: {}]
  %s8 = inlined_call_operand.vmem [shape: f32[2,1,384], index: 8, kind: input, shape index: {}]
  %s9 = inlined_call_operand.hbm [shape: bf16[2,128,128], index: 9, kind: input, shape index: {}]
  %s10 = inlined_call_operand.vmem [shape: f32[2,1,128], index: 10, kind: input, shape index: {}]
  %s11 = inlined_call_operand.vmem [shape: f32[2,1,128], index: 11, kind: input, shape index: {}]
  %s12 = inlined_call_operand.vmem [shape: f32[2,1,128], index: 12, kind: input, shape index: {}]
  %s13 = inlined_call_operand.hbm [shape: bf16[2,128,256], index: 13, kind: input, shape index: {}]
  %s14 = inlined_call_operand.vmem [shape: f32[2,1,256], index: 14, kind: input, shape index: {}]
  %s15 = inlined_call_operand.hbm [shape: bf16[2,256,128], index: 15, kind: input, shape index: {}]
  %s16 = inlined_call_operand.vmem [shape: f32[2,1,128], index: 16, kind: input, shape index: {}]
  %s17 = inlined_call_operand.vmem [shape: f32[1,128], index: 17, kind: input, shape index: {}]
  %s18 = inlined_call_operand.vmem [shape: f32[1,128], index: 18, kind: input, shape index: {}]
  %s19 = inlined_call_operand.hbm [shape: bf16[128,256], index: 19, kind: input, shape index: {}]
  %s20 = inlined_call_operand.vmem [shape: f32[1,256], index: 20, kind: input, shape index: {}]
  %s21 = inlined_call_operand.hbm [shape: bf16[256,128], index: 21, kind: input, shape index: {}]
  %s22 = inlined_call_operand.vmem [shape: f32[1,128], index: 22, kind: input, shape index: {}]
  %s23 = inlined_call_operand.hbm [shape: f32[16,128], index: 23, kind: output, shape index: {}]
  %s24 = sld [smem:[#allocation0]]
  $region181: #{tpu_custom_call.1} parent=0
    _
  %s26 = ssub.s32 1, %s24
  %s27 = scalar_select 0, %s26, %s24
  $region1: #{tpu_custom_call.1} parent=0
    #allocation4 [shape = 'u8[196608]{0}', space=vmem, size = 0x30000, scoped, tag = 'input window, operand 0']
    #allocation5 [shape = 's32[2]{0}', space=sflag, size = 0x8, scoped, tag = 'scoped memory for tpu_custom_call.1']
    #allocation6 [shape = 's32[2]{0}', space=sflag, size = 0x8, scoped, tag = 'scoped memory for tpu_custom_call.1']
    #allocation7 [shape = 'u8[196608]{0}', space=vmem, size = 0x30000, scoped, tag = 'input window, operand 1, single buffered']
    #allocation8 [shape = 's32[1]{0}', space=sflag, size = 0x4, scoped, tag = 'scoped memory for tpu_custom_call.1']
    #allocation9 [shape = 'u8[4096]{0}', space=vmem, size = 0x1000, scoped, tag = 'input window, operand 2, single buffered']
    #allocation10 [shape = 'u8[512]{0}', space=vmem, size = 0x400, scoped, tag = 'input window, operand 3, single buffered']
    #allocation11 [shape = 's32[1]{0}', space=sflag, size = 0x4, scoped, tag = 'scoped memory for tpu_custom_call.1']
    #allocation12 [shape = 'u8[512]{0}', space=vmem, size = 0x400, scoped, tag = 'input window, operand 4, single buffered']
    #allocation13 [shape = 'u8[1024]{0}', space=vmem, size = 0x400, scoped, tag = 'input window, operand 6']
    #allocation14 [shape = 's32[2]{0}', space=sflag, size = 0x8, scoped, tag = 'scoped memory for tpu_custom_call.1']
    #allocation15 [shape = 'u8[196608]{0}', space=vmem, size = 0x30000, scoped, tag = 'input window, operand 7']
    #allocation16 [shape = 'u8[65536]{0}', space=vmem, size = 0x10000, scoped, tag = 'input window, operand 9']
    #allocation17 [shape = 's32[2]{0}', space=sflag, size = 0x8, scoped, tag = 'scoped memory for tpu_custom_call.1']
    #allocation18 [shape = 'u8[131072]{0}', space=vmem, size = 0x20000, scoped, tag = 'input window, operand 13']
    #allocation19 [shape = 'u8[131072]{0}', space=vmem, size = 0x20000, scoped, tag = 'input window, operand 15']
    #allocation20 [shape = 's32[2]{0}', space=sflag, size = 0x8, scoped, tag = 'scoped memory for tpu_custom_call.1']
    #allocation21 [shape = 'u8[65536]{0}', space=vmem, size = 0x10000, scoped, tag = 'input window, operand 19, single buffered']
    #allocation22 [shape = 'u8[65536]{0}', space=vmem, size = 0x10000, scoped, tag = 'input window, operand 21, single buffered']
    #allocation23 [shape = 's32[1]{0}', space=sflag, size = 0x4, scoped, tag = 'scoped memory for tpu_custom_call.1']
    #allocation24 [shape = 'u8[8192]{0}', space=vmem, size = 0x2000, scoped, tag = 'output window, operand 0']
    %28 = vsyncpa [#allocation5], 0
    %s29 = scalar_lea.sflag [#allocation5], 1
    %30 = vsyncpa %s29, 0
    %31 = vsyncpa [#allocation8], 0
    %32 = vsyncpa [#allocation11], 0
    %33 = vsyncpa [#allocation14], 0
    %s34 = scalar_lea.sflag [#allocation14], 1
    %35 = vsyncpa %s34, 0
    %36 = vsyncpa [#allocation17], 0
    %s37 = scalar_lea.sflag [#allocation17], 1
    %38 = vsyncpa %s37, 0
    %39 = vsyncpa [#allocation20], 0
    %s40 = scalar_lea.sflag [#allocation20], 1
    %41 = vsyncpa %s40, 0
    %42 = vsyncpa [#allocation23], 0
    %43 = vsyncpa [#allocation6], 0
    %s44 = scalar_lea.sflag [#allocation6], 1
    %45 = vsyncpa %s44, 0
    loop: start=0, step=1, limit=6
    $region2: #{tpu_custom_call.1} parent=1 // loop_pre_header
      _
    $region3: #{tpu_custom_call.1} parent=1 // loop_header
      %s47 = sphi 0, %s51
      %p48 = scmp.ge.s32.totalorder %s47, 6
      %s54 = sphi 0, %s66
      %s55 = sphi 0, %s62
      %s56 = sphi 0, %s54
      %s57 = sphi 0, %s55
      %s58 = sphi 0, %s56
      %s59 = sphi 0, %s57
      %s69 = sphi 0, %s71
      %s72 = sphi 0, %s69
      %s73 = sphi 0, %s72
      %s89 = sphi 0, %s73
      %s93 = sphi 0, %s93
      %s95 = sphi 0, %s93
      %s96 = sphi 0, %s95
      %s110 = sphi 0, %s96
      %s114 = sphi 0, %s114
      %s116 = sphi 0, %s114
      %s117 = sphi 0, %s116
      %s131 = sphi 0, %s117
      %s135 = sphi 0, %s135
      %s137 = sphi 0, %s135
      %s138 = sphi 0, %s137
      %s152 = sphi 0, %s138
      %s156 = sphi 0, %s156
      %s158 = sphi 0, %s156
      %s159 = sphi 0, %s158
      %s173 = sphi 0, %s159
      %s179 = sphi 0, %s181
      %s182 = sphi 0, %s179
      %s183 = sphi 0, %s182
      %s199 = sphi 0, %s183
      %s205 = sphi 0, %s207
      %s208 = sphi 0, %s205
      %s209 = sphi 0, %s208
      %s225 = sphi 0, %s209
      %s231 = sphi 0, %s233
      %s234 = sphi 0, %s231
      %s235 = sphi 0, %s234
      %s251 = sphi 0, %s235
      %s257 = sphi 0, %s259
      %s260 = sphi 0, %s257
      %s261 = sphi 0, %s260
      %s277 = sphi 0, %s261
      %s283 = sphi 0, %s285
      %s286 = sphi 0, %s283
      %s287 = sphi 0, %s286
      %s303 = sphi 0, %s287
      %s309 = sphi 0, %s311
      %s312 = sphi 0, %s309
      %s313 = sphi 0, %s312
      %s329 = sphi 0, %s313
      %s335 = sphi 0, %s337
      %s338 = sphi 0, %s335
      %s339 = sphi 0, %s338
      %s355 = sphi 0, %s339
      %s361 = sphi 0, %s363
      %s364 = sphi 0, %s361
      %s365 = sphi 0, %s364
      %s381 = sphi 0, %s365
      %s387 = sphi 0, %s389
      %s390 = sphi 0, %s387
      %s391 = sphi 0, %s390
      %s407 = sphi 0, %s391
      %s413 = sphi 0, %s415
      %s416 = sphi 0, %s413
      %s417 = sphi 0, %s416
      %s433 = sphi 0, %s417
      %s439 = sphi 0, %s441
      %s442 = sphi 0, %s439
      %s443 = sphi 0, %s442
      %s459 = sphi 0, %s443
      %s465 = sphi 0, %s467
      %s468 = sphi 0, %s465
      %s469 = sphi 0, %s468
      %s485 = sphi 0, %s469
      %s489 = sphi 0, %s489
      %s491 = sphi 0, %s489
      %s492 = sphi 0, %s491
      %s506 = sphi 0, %s492
      %s510 = sphi 0, %s510
      %s512 = sphi 0, %s510
      %s513 = sphi 0, %s512
      %s527 = sphi 0, %s513
      %s531 = sphi 0, %s531
      %s533 = sphi 0, %s531
      %s534 = sphi 0, %s533
      %s548 = sphi 0, %s534
      %s552 = sphi 0, %s552
      %s554 = sphi 0, %s552
      %s555 = sphi 0, %s554
      %s569 = sphi 0, %s555
      %s573 = sphi 0, %s573
      %s575 = sphi 0, %s573
      %s576 = sphi 0, %s575
      %s590 = sphi 0, %s576
      %s594 = sphi 0, %s594
      %s596 = sphi 0, %s594
      %s597 = sphi 0, %s596
      %s611 = sphi 0, %s597
      %s617 = sphi 0, %s619
      %s620 = sphi 0, %s617
      %s621 = sphi 0, %s620
      %s637 = sphi 0, %s621
    $region4: #{tpu_custom_call.1} parent=1 // loop_header_branch
      %50 = sbr.rel (%p48) target = $region8
    $region5: #{tpu_custom_call.1} parent=1 // loop_body
      %s52 = ssub.s32 %s47, 1
      %s53 = ssub.s32 %s47, 2
      %s60 = sadd.s32 1, %s55
      %p61 = scmp.ge.s32.totalorder %s60, 2
      %s62 = scalar_select %p61, 0, %s60
      %s63 = sadd.s32 1, %s54
      %s64 = scalar_select %p61, %s63, %s54
      %p65 = scmp.ge.s32.totalorder %s64, 2
      %s66 = scalar_select %p65, 0, %s64
      %s67 = ssub.s32 %s54, %s66
      %p68 = scmp.eq.s32.totalorder %s67, 0
      %s70 = sadd.s32 %s69, 1
      %s71 = scalar_select %p68, %s69, %s70
      %p74 = pneg %p68
      %p75 = scmp.eq.s32.totalorder %s47, 3
      %p76 = por %p74, %p75
      %p77 = scmp.ne.s32.totalorder %s69, %s72
      %p78 = scmp.eq.s32.totalorder %s47, 0
      %p79 = por %p77, %p78
      %p80 = scmp.ne.s32.totalorder %s69, %s72
      %p81 = scmp.eq.s32.totalorder %s52, 3
      %p82 = por %p80, %p81
      %p83 = scmp.ne.s32.totalorder %s72, %s73
      %p84 = scmp.eq.s32.totalorder %s52, 0
      %p85 = por %p83, %p84
      %p86 = scmp.ne.s32.totalorder %s72, %s73
      %p87 = scmp.eq.s32.totalorder %s53, 3
      %p88 = por %p86, %p87
      %p90 = scmp.ne.s32.totalorder %s73, %s89
      %p91 = scmp.eq.s32.totalorder %s53, 0
      %p92 = por %p90, %p91
      %s94 = sadd.s32 %s93, 1
      %p97 = scmp.eq.s32.totalorder %s47, 3
      %p98 = scmp.ne.s32.totalorder %s93, %s95
      %p99 = scmp.eq.s32.totalorder %s47, 0
      %p100 = por %p98, %p99
      %p101 = scmp.ne.s32.totalorder %s93, %s95
      %p102 = scmp.eq.s32.totalorder %s52, 3
      %p103 = por %p101, %p102
      %p104 = scmp.ne.s32.totalorder %s95, %s96
      %p105 = scmp.eq.s32.totalorder %s52, 0
      %p106 = por %p104, %p105
      %p107 = scmp.ne.s32.totalorder %s95, %s96
      %p108 = scmp.eq.s32.totalorder %s53, 3
      %p109 = por %p107, %p108
      %p111 = scmp.ne.s32.totalorder %s96, %s110
      %p112 = scmp.eq.s32.totalorder %s53, 0
      %p113 = por %p111, %p112
      %s115 = sadd.s32 %s114, 1
      %p118 = scmp.eq.s32.totalorder %s47, 3
      %p119 = scmp.ne.s32.totalorder %s114, %s116
      %p120 = scmp.eq.s32.totalorder %s47, 0
      %p121 = por %p119, %p120
      %p122 = scmp.ne.s32.totalorder %s114, %s116
      %p123 = scmp.eq.s32.totalorder %s52, 3
      %p124 = por %p122, %p123
      %p125 = scmp.ne.s32.totalorder %s116, %s117
      %p126 = scmp.eq.s32.totalorder %s52, 0
      %p127 = por %p125, %p126
      %p128 = scmp.ne.s32.totalorder %s116, %s117
      %p129 = scmp.eq.s32.totalorder %s53, 3
      %p130 = por %p128, %p129
      %p132 = scmp.ne.s32.totalorder %s117, %s131
      %p133 = scmp.eq.s32.totalorder %s53, 0
      %p134 = por %p132, %p133
      %s136 = sadd.s32 %s135, 1
      %p139 = scmp.eq.s32.totalorder %s47, 3
      %p140 = scmp.ne.s32.totalorder %s135, %s137
      %p141 = scmp.eq.s32.totalorder %s47, 0
      %p142 = por %p140, %p141
      %p143 = scmp.ne.s32.totalorder %s135, %s137
      %p144 = scmp.eq.s32.totalorder %s52, 3
      %p145 = por %p143, %p144
      %p146 = scmp.ne.s32.totalorder %s137, %s138
      %p147 = scmp.eq.s32.totalorder %s52, 0
      %p148 = por %p146, %p147
      %p149 = scmp.ne.s32.totalorder %s137, %s138
      %p150 = scmp.eq.s32.totalorder %s53, 3
      %p151 = por %p149, %p150
      %p153 = scmp.ne.s32.totalorder %s138, %s152
      %p154 = scmp.eq.s32.totalorder %s53, 0
      %p155 = por %p153, %p154
      %s157 = sadd.s32 %s156, 1
      %p160 = scmp.eq.s32.totalorder %s47, 3
      %p161 = scmp.ne.s32.totalorder %s156, %s158
      %p162 = scmp.eq.s32.totalorder %s47, 0
      %p163 = por %p161, %p162
      %p164 = scmp.ne.s32.totalorder %s156, %s158
      %p165 = scmp.eq.s32.totalorder %s52, 3
      %p166 = por %p164, %p165
      %p167 = scmp.ne.s32.totalorder %s158, %s159
      %p168 = scmp.eq.s32.totalorder %s52, 0
      %p169 = por %p167, %p168
      %p170 = scmp.ne.s32.totalorder %s158, %s159
      %p171 = scmp.eq.s32.totalorder %s53, 3
      %p172 = por %p170, %p171
      %p174 = scmp.ne.s32.totalorder %s159, %s173
      %p175 = scmp.eq.s32.totalorder %s53, 0
      %p176 = por %p174, %p175
      %s177 = ssub.s32 %s55, %s62
      %p178 = scmp.eq.s32.totalorder %s177, 0
      %s180 = sadd.s32 %s179, 1
      %s181 = scalar_select %p178, %s179, %s180
      %p184 = pneg %p178
      %p185 = scmp.eq.s32.totalorder %s47, 3
      %p186 = por %p184, %p185
      %p187 = scmp.ne.s32.totalorder %s179, %s182
      %p188 = scmp.eq.s32.totalorder %s47, 0
      %p189 = por %p187, %p188
      %p190 = scmp.ne.s32.totalorder %s179, %s182
      %p191 = scmp.eq.s32.totalorder %s52, 3
      %p192 = por %p190, %p191
      %p193 = scmp.ne.s32.totalorder %s182, %s183
      %p194 = scmp.eq.s32.totalorder %s52, 0
      %p195 = por %p193, %p194
      %p196 = scmp.ne.s32.totalorder %s182, %s183
      %p197 = scmp.eq.s32.totalorder %s53, 3
      %p198 = por %p196, %p197
      %p200 = scmp.ne.s32.totalorder %s183, %s199
      %p201 = scmp.eq.s32.totalorder %s53, 0
      %p202 = por %p200, %p201
      %s203 = ssub.s32 %s55, %s62
      %p204 = scmp.eq.s32.totalorder %s203, 0
      %s206 = sadd.s32 %s205, 1
      %s207 = scalar_select %p204, %s205, %s206
      %p210 = pneg %p204
      %p211 = scmp.eq.s32.totalorder %s47, 3
      %p212 = por %p210, %p211
      %p213 = scmp.ne.s32.totalorder %s205, %s208
      %p214 = scmp.eq.s32.totalorder %s47, 0
      %p215 = por %p213, %p214
      %p216 = scmp.ne.s32.totalorder %s205, %s208
      %p217 = scmp.eq.s32.totalorder %s52, 3
      %p218 = por %p216, %p217
      %p219 = scmp.ne.s32.totalorder %s208, %s209
      %p220 = scmp.eq.s32.totalorder %s52, 0
      %p221 = por %p219, %p220
      %p222 = scmp.ne.s32.totalorder %s208, %s209
      %p223 = scmp.eq.s32.totalorder %s53, 3
      %p224 = por %p222, %p223
      %p226 = scmp.ne.s32.totalorder %s209, %s225
      %p227 = scmp.eq.s32.totalorder %s53, 0
      %p228 = por %p226, %p227
      %s229 = ssub.s32 %s55, %s62
      %p230 = scmp.eq.s32.totalorder %s229, 0
      %s232 = sadd.s32 %s231, 1
      %s233 = scalar_select %p230, %s231, %s232
      %p236 = pneg %p230
      %p237 = scmp.eq.s32.totalorder %s47, 3
      %p238 = por %p236, %p237
      %p239 = scmp.ne.s32.totalorder %s231, %s234
      %p240 = scmp.eq.s32.totalorder %s47, 0
      %p241 = por %p239, %p240
      %p242 = scmp.ne.s32.totalorder %s231, %s234
      %p243 = scmp.eq.s32.totalorder %s52, 3
      %p244 = por %p242, %p243
      %p245 = scmp.ne.s32.totalorder %s234, %s235
      %p246 = scmp.eq.s32.totalorder %s52, 0
      %p247 = por %p245, %p246
      %p248 = scmp.ne.s32.totalorder %s234, %s235
      %p249 = scmp.eq.s32.totalorder %s53, 3
      %p250 = por %p248, %p249
      %p252 = scmp.ne.s32.totalorder %s235, %s251
      %p253 = scmp.eq.s32.totalorder %s53, 0
      %p254 = por %p252, %p253
      %s255 = ssub.s32 %s55, %s62
      %p256 = scmp.eq.s32.totalorder %s255, 0
      %s258 = sadd.s32 %s257, 1
      %s259 = scalar_select %p256, %s257, %s258
      %p262 = pneg %p256
      %p263 = scmp.eq.s32.totalorder %s47, 3
      %p264 = por %p262, %p263
      %p265 = scmp.ne.s32.totalorder %s257, %s260
      %p266 = scmp.eq.s32.totalorder %s47, 0
      %p267 = por %p265, %p266
      %p268 = scmp.ne.s32.totalorder %s257, %s260
      %p269 = scmp.eq.s32.totalorder %s52, 3
      %p270 = por %p268, %p269
      %p271 = scmp.ne.s32.totalorder %s260, %s261
      %p272 = scmp.eq.s32.totalorder %s52, 0
      %p273 = por %p271, %p272
      %p274 = scmp.ne.s32.totalorder %s260, %s261
      %p275 = scmp.eq.s32.totalorder %s53, 3
      %p276 = por %p274, %p275
      %p278 = scmp.ne.s32.totalorder %s261, %s277
      %p279 = scmp.eq.s32.totalorder %s53, 0
      %p280 = por %p278, %p279
      %s281 = ssub.s32 %s55, %s62
      %p282 = scmp.eq.s32.totalorder %s281, 0
      %s284 = sadd.s32 %s283, 1
      %s285 = scalar_select %p282, %s283, %s284
      %p288 = pneg %p282
      %p289 = scmp.eq.s32.totalorder %s47, 3
      %p290 = por %p288, %p289
      %p291 = scmp.ne.s32.totalorder %s283, %s286
      %p292 = scmp.eq.s32.totalorder %s47, 0
      %p293 = por %p291, %p292
      %p294 = scmp.ne.s32.totalorder %s283, %s286
      %p295 = scmp.eq.s32.totalorder %s52, 3
      %p296 = por %p294, %p295
      %p297 = scmp.ne.s32.totalorder %s286, %s287
      %p298 = scmp.eq.s32.totalorder %s52, 0
      %p299 = por %p297, %p298
      %p300 = scmp.ne.s32.totalorder %s286, %s287
      %p301 = scmp.eq.s32.totalorder %s53, 3
      %p302 = por %p300, %p301
      %p304 = scmp.ne.s32.totalorder %s287, %s303
      %p305 = scmp.eq.s32.totalorder %s53, 0
      %p306 = por %p304, %p305
      %s307 = ssub.s32 %s55, %s62
      %p308 = scmp.eq.s32.totalorder %s307, 0
      %s310 = sadd.s32 %s309, 1
      %s311 = scalar_select %p308, %s309, %s310
      %p314 = pneg %p308
      %p315 = scmp.eq.s32.totalorder %s47, 3
      %p316 = por %p314, %p315
      %p317 = scmp.ne.s32.totalorder %s309, %s312
      %p318 = scmp.eq.s32.totalorder %s47, 0
      %p319 = por %p317, %p318
      %p320 = scmp.ne.s32.totalorder %s309, %s312
      %p321 = scmp.eq.s32.totalorder %s52, 3
      %p322 = por %p320, %p321
      %p323 = scmp.ne.s32.totalorder %s312, %s313
      %p324 = scmp.eq.s32.totalorder %s52, 0
      %p325 = por %p323, %p324
      %p326 = scmp.ne.s32.totalorder %s312, %s313
      %p327 = scmp.eq.s32.totalorder %s53, 3
      %p328 = por %p326, %p327
      %p330 = scmp.ne.s32.totalorder %s313, %s329
      %p331 = scmp.eq.s32.totalorder %s53, 0
      %p332 = por %p330, %p331
      %s333 = ssub.s32 %s55, %s62
      %p334 = scmp.eq.s32.totalorder %s333, 0
      %s336 = sadd.s32 %s335, 1
      %s337 = scalar_select %p334, %s335, %s336
      %p340 = pneg %p334
      %p341 = scmp.eq.s32.totalorder %s47, 3
      %p342 = por %p340, %p341
      %p343 = scmp.ne.s32.totalorder %s335, %s338
      %p344 = scmp.eq.s32.totalorder %s47, 0
      %p345 = por %p343, %p344
      %p346 = scmp.ne.s32.totalorder %s335, %s338
      %p347 = scmp.eq.s32.totalorder %s52, 3
      %p348 = por %p346, %p347
      %p349 = scmp.ne.s32.totalorder %s338, %s339
      %p350 = scmp.eq.s32.totalorder %s52, 0
      %p351 = por %p349, %p350
      %p352 = scmp.ne.s32.totalorder %s338, %s339
      %p353 = scmp.eq.s32.totalorder %s53, 3
      %p354 = por %p352, %p353
      %p356 = scmp.ne.s32.totalorder %s339, %s355
      %p357 = scmp.eq.s32.totalorder %s53, 0
      %p358 = por %p356, %p357
      %s359 = ssub.s32 %s55, %s62
      %p360 = scmp.eq.s32.totalorder %s359, 0
      %s362 = sadd.s32 %s361, 1
      %s363 = scalar_select %p360, %s361, %s362
      %p366 = pneg %p360
      %p367 = scmp.eq.s32.totalorder %s47, 3
      %p368 = por %p366, %p367
      %p369 = scmp.ne.s32.totalorder %s361, %s364
      %p370 = scmp.eq.s32.totalorder %s47, 0
      %p371 = por %p369, %p370
      %p372 = scmp.ne.s32.totalorder %s361, %s364
      %p373 = scmp.eq.s32.totalorder %s52, 3
      %p374 = por %p372, %p373
      %p375 = scmp.ne.s32.totalorder %s364, %s365
      %p376 = scmp.eq.s32.totalorder %s52, 0
      %p377 = por %p375, %p376
      %p378 = scmp.ne.s32.totalorder %s364, %s365
      %p379 = scmp.eq.s32.totalorder %s53, 3
      %p380 = por %p378, %p379
      %p382 = scmp.ne.s32.totalorder %s365, %s381
      %p383 = scmp.eq.s32.totalorder %s53, 0
      %p384 = por %p382, %p383
      %s385 = ssub.s32 %s55, %s62
      %p386 = scmp.eq.s32.totalorder %s385, 0
      %s388 = sadd.s32 %s387, 1
      %s389 = scalar_select %p386, %s387, %s388
      %p392 = pneg %p386
      %p393 = scmp.eq.s32.totalorder %s47, 3
      %p394 = por %p392, %p393
      %p395 = scmp.ne.s32.totalorder %s387, %s390
      %p396 = scmp.eq.s32.totalorder %s47, 0
      %p397 = por %p395, %p396
      %p398 = scmp.ne.s32.totalorder %s387, %s390
      %p399 = scmp.eq.s32.totalorder %s52, 3
      %p400 = por %p398, %p399
      %p401 = scmp.ne.s32.totalorder %s390, %s391
      %p402 = scmp.eq.s32.totalorder %s52, 0
      %p403 = por %p401, %p402
      %p404 = scmp.ne.s32.totalorder %s390, %s391
      %p405 = scmp.eq.s32.totalorder %s53, 3
      %p406 = por %p404, %p405
      %p408 = scmp.ne.s32.totalorder %s391, %s407
      %p409 = scmp.eq.s32.totalorder %s53, 0
      %p410 = por %p408, %p409
      %s411 = ssub.s32 %s55, %s62
      %p412 = scmp.eq.s32.totalorder %s411, 0
      %s414 = sadd.s32 %s413, 1
      %s415 = scalar_select %p412, %s413, %s414
      %p418 = pneg %p412
      %p419 = scmp.eq.s32.totalorder %s47, 3
      %p420 = por %p418, %p419
      %p421 = scmp.ne.s32.totalorder %s413, %s416
      %p422 = scmp.eq.s32.totalorder %s47, 0
      %p423 = por %p421, %p422
      %p424 = scmp.ne.s32.totalorder %s413, %s416
      %p425 = scmp.eq.s32.totalorder %s52, 3
      %p426 = por %p424, %p425
      %p427 = scmp.ne.s32.totalorder %s416, %s417
      %p428 = scmp.eq.s32.totalorder %s52, 0
      %p429 = por %p427, %p428
      %p430 = scmp.ne.s32.totalorder %s416, %s417
      %p431 = scmp.eq.s32.totalorder %s53, 3
      %p432 = por %p430, %p431
      %p434 = scmp.ne.s32.totalorder %s417, %s433
      %p435 = scmp.eq.s32.totalorder %s53, 0
      %p436 = por %p434, %p435
      %s437 = ssub.s32 %s55, %s62
      %p438 = scmp.eq.s32.totalorder %s437, 0
      %s440 = sadd.s32 %s439, 1
      %s441 = scalar_select %p438, %s439, %s440
      %p444 = pneg %p438
      %p445 = scmp.eq.s32.totalorder %s47, 3
      %p446 = por %p444, %p445
      %p447 = scmp.ne.s32.totalorder %s439, %s442
      %p448 = scmp.eq.s32.totalorder %s47, 0
      %p449 = por %p447, %p448
      %p450 = scmp.ne.s32.totalorder %s439, %s442
      %p451 = scmp.eq.s32.totalorder %s52, 3
      %p452 = por %p450, %p451
      %p453 = scmp.ne.s32.totalorder %s442, %s443
      %p454 = scmp.eq.s32.totalorder %s52, 0
      %p455 = por %p453, %p454
      %p456 = scmp.ne.s32.totalorder %s442, %s443
      %p457 = scmp.eq.s32.totalorder %s53, 3
      %p458 = por %p456, %p457
      %p460 = scmp.ne.s32.totalorder %s443, %s459
      %p461 = scmp.eq.s32.totalorder %s53, 0
      %p462 = por %p460, %p461
      %s463 = ssub.s32 %s55, %s62
      %p464 = scmp.eq.s32.totalorder %s463, 0
      %s466 = sadd.s32 %s465, 1
      %s467 = scalar_select %p464, %s465, %s466
      %p470 = pneg %p464
      %p471 = scmp.eq.s32.totalorder %s47, 3
      %p472 = por %p470, %p471
      %p473 = scmp.ne.s32.totalorder %s465, %s468
      %p474 = scmp.eq.s32.totalorder %s47, 0
      %p475 = por %p473, %p474
      %p476 = scmp.ne.s32.totalorder %s465, %s468
      %p477 = scmp.eq.s32.totalorder %s52, 3
      %p478 = por %p476, %p477
      %p479 = scmp.ne.s32.totalorder %s468, %s469
      %p480 = scmp.eq.s32.totalorder %s52, 0
      %p481 = por %p479, %p480
      %p482 = scmp.ne.s32.totalorder %s468, %s469
      %p483 = scmp.eq.s32.totalorder %s53, 3
      %p484 = por %p482, %p483
      %p486 = scmp.ne.s32.totalorder %s469, %s485
      %p487 = scmp.eq.s32.totalorder %s53, 0
      %p488 = por %p486, %p487
      %s490 = sadd.s32 %s489, 1
      %p493 = scmp.eq.s32.totalorder %s47, 3
      %p494 = scmp.ne.s32.totalorder %s489, %s491
      %p495 = scmp.eq.s32.totalorder %s47, 0
      %p496 = por %p494, %p495
      %p497 = scmp.ne.s32.totalorder %s489, %s491
      %p498 = scmp.eq.s32.totalorder %s52, 3
      %p499 = por %p497, %p498
      %p500 = scmp.ne.s32.totalorder %s491, %s492
      %p501 = scmp.eq.s32.totalorder %s52, 0
      %p502 = por %p500, %p501
      %p503 = scmp.ne.s32.totalorder %s491, %s492
      %p504 = scmp.eq.s32.totalorder %s53, 3
      %p505 = por %p503, %p504
      %p507 = scmp.ne.s32.totalorder %s492, %s506
      %p508 = scmp.eq.s32.totalorder %s53, 0
      %p509 = por %p507, %p508
      %s511 = sadd.s32 %s510, 1
      %p514 = scmp.eq.s32.totalorder %s47, 3
      %p515 = scmp.ne.s32.totalorder %s510, %s512
      %p516 = scmp.eq.s32.totalorder %s47, 0
      %p517 = por %p515, %p516
      %p518 = scmp.ne.s32.totalorder %s510, %s512
      %p519 = scmp.eq.s32.totalorder %s52, 3
      %p520 = por %p518, %p519
      %p521 = scmp.ne.s32.totalorder %s512, %s513
      %p522 = scmp.eq.s32.totalorder %s52, 0
      %p523 = por %p521, %p522
      %p524 = scmp.ne.s32.totalorder %s512, %s513
      %p525 = scmp.eq.s32.totalorder %s53, 3
      %p526 = por %p524, %p525
      %p528 = scmp.ne.s32.totalorder %s513, %s527
      %p529 = scmp.eq.s32.totalorder %s53, 0
      %p530 = por %p528, %p529
      %s532 = sadd.s32 %s531, 1
      %p535 = scmp.eq.s32.totalorder %s47, 3
      %p536 = scmp.ne.s32.totalorder %s531, %s533
      %p537 = scmp.eq.s32.totalorder %s47, 0
      %p538 = por %p536, %p537
      %p539 = scmp.ne.s32.totalorder %s531, %s533
      %p540 = scmp.eq.s32.totalorder %s52, 3
      %p541 = por %p539, %p540
      %p542 = scmp.ne.s32.totalorder %s533, %s534
      %p543 = scmp.eq.s32.totalorder %s52, 0
      %p544 = por %p542, %p543
      %p545 = scmp.ne.s32.totalorder %s533, %s534
      %p546 = scmp.eq.s32.totalorder %s53, 3
      %p547 = por %p545, %p546
      %p549 = scmp.ne.s32.totalorder %s534, %s548
      %p550 = scmp.eq.s32.totalorder %s53, 0
      %p551 = por %p549, %p550
      %s553 = sadd.s32 %s552, 1
      %p556 = scmp.eq.s32.totalorder %s47, 3
      %p557 = scmp.ne.s32.totalorder %s552, %s554
      %p558 = scmp.eq.s32.totalorder %s47, 0
      %p559 = por %p557, %p558
      %p560 = scmp.ne.s32.totalorder %s552, %s554
      %p561 = scmp.eq.s32.totalorder %s52, 3
      %p562 = por %p560, %p561
      %p563 = scmp.ne.s32.totalorder %s554, %s555
      %p564 = scmp.eq.s32.totalorder %s52, 0
      %p565 = por %p563, %p564
      %p566 = scmp.ne.s32.totalorder %s554, %s555
      %p567 = scmp.eq.s32.totalorder %s53, 3
      %p568 = por %p566, %p567
      %p570 = scmp.ne.s32.totalorder %s555, %s569
      %p571 = scmp.eq.s32.totalorder %s53, 0
      %p572 = por %p570, %p571
      %s574 = sadd.s32 %s573, 1
      %p577 = scmp.eq.s32.totalorder %s47, 3
      %p578 = scmp.ne.s32.totalorder %s573, %s575
      %p579 = scmp.eq.s32.totalorder %s47, 0
      %p580 = por %p578, %p579
      %p581 = scmp.ne.s32.totalorder %s573, %s575
      %p582 = scmp.eq.s32.totalorder %s52, 3
      %p583 = por %p581, %p582
      %p584 = scmp.ne.s32.totalorder %s575, %s576
      %p585 = scmp.eq.s32.totalorder %s52, 0
      %p586 = por %p584, %p585
      %p587 = scmp.ne.s32.totalorder %s575, %s576
      %p588 = scmp.eq.s32.totalorder %s53, 3
      %p589 = por %p587, %p588
      %p591 = scmp.ne.s32.totalorder %s576, %s590
      %p592 = scmp.eq.s32.totalorder %s53, 0
      %p593 = por %p591, %p592
      %s595 = sadd.s32 %s594, 1
      %p598 = scmp.eq.s32.totalorder %s47, 3
      %p599 = scmp.ne.s32.totalorder %s594, %s596
      %p600 = scmp.eq.s32.totalorder %s47, 0
      %p601 = por %p599, %p600
      %p602 = scmp.ne.s32.totalorder %s594, %s596
      %p603 = scmp.eq.s32.totalorder %s52, 3
      %p604 = por %p602, %p603
      %p605 = scmp.ne.s32.totalorder %s596, %s597
      %p606 = scmp.eq.s32.totalorder %s52, 0
      %p607 = por %p605, %p606
      %p608 = scmp.ne.s32.totalorder %s596, %s597
      %p609 = scmp.eq.s32.totalorder %s53, 3
      %p610 = por %p608, %p609
      %p612 = scmp.ne.s32.totalorder %s597, %s611
      %p613 = scmp.eq.s32.totalorder %s53, 0
      %p614 = por %p612, %p613
      %s615 = ssub.s32 %s54, %s66
      %p616 = scmp.eq.s32.totalorder %s615, 0
      %s618 = sadd.s32 %s617, 1
      %s619 = scalar_select %p616, %s617, %s618
      %p622 = pneg %p616
      %p623 = scmp.eq.s32.totalorder %s47, 3
      %p624 = por %p622, %p623
      %p625 = scmp.ne.s32.totalorder %s617, %s620
      %p626 = scmp.eq.s32.totalorder %s47, 0
      %p627 = por %p625, %p626
      %p628 = scmp.ne.s32.totalorder %s617, %s620
      %p629 = scmp.eq.s32.totalorder %s52, 3
      %p630 = por %p628, %p629
      %p631 = scmp.ne.s32.totalorder %s620, %s621
      %p632 = scmp.eq.s32.totalorder %s52, 0
      %p633 = por %p631, %p632
      %p634 = scmp.ne.s32.totalorder %s620, %s621
      %p635 = scmp.eq.s32.totalorder %s53, 3
      %p636 = por %p634, %p635
      %p638 = scmp.ne.s32.totalorder %s621, %s637
      %p639 = scmp.eq.s32.totalorder %s53, 0
      %p640 = por %p638, %p639
      %p641 = scmp.le.s32.totalorder 1, %s47
      %p642 = scmp.lt.s32.totalorder %s47, 5
      %p643 = pnand %p641, %p642
      %p644 = pneg %p643
      // Predicated region
      $region9: #{tpu_custom_call.1} parent=5 // pred_check
        _
      $region10: #{tpu_custom_call.1} parent=5 // pred_check_branch
        %646 = sbr.rel (%p643) target = $region12
      $region11: #{tpu_custom_call.1} parent=5 // pred_region
        %s647 = ssub.s32 %s47, 1
        // Predicated region
        $region13: #{tpu_custom_call.1} parent=11 // pred_check
          %p648 = pneg %p106
        $region14: #{tpu_custom_call.1} parent=11 // pred_check_branch
          %650 = sbr.rel (%p648) target = $region16
        $region15: #{tpu_custom_call.1} parent=11 // pred_region
          %s652 = ssub.s32 6144, 6144
          %653 = vsyncadd [#allocation8], %s652
          %s654 = sshll.u32 [#allocation7], 4
          %s655 = int_to_ptr.vmem [resolvable:$true] %s654
          %660 = dma.hbm_to_vmem [thread:$0]  %s1, 6144, %s655, [#allocation8], 64, 64, 4
        $region16: #{tpu_custom_call.1} parent=11 // pred_fallthru
          _
        // Predicated region
        $region17: #{tpu_custom_call.1} parent=11 // pred_check
          %p661 = pneg %p127
        $region18: #{tpu_custom_call.1} parent=11 // pred_check_branch
          %663 = sbr.rel (%p661) target = $region20
        $region19: #{tpu_custom_call.1} parent=11 // pred_region
          %s665 = ssub.s32 128, 128
          %666 = vsyncadd [#allocation8], %s665
          %s668 = sshll.u32 [#allocation9], 4
          %s669 = int_to_ptr.vmem [resolvable:$true] %s668
          %671 = dma.hbm_to_vmem [thread:$0]  %s2, 128, %s669, [#allocation8]
        $region20: #{tpu_custom_call.1} parent=11 // pred_fallthru
          _
        // Predicated region
        $region21: #{tpu_custom_call.1} parent=11 // pred_check
          %p672 = pneg %p148
        $region22: #{tpu_custom_call.1} parent=11 // pred_check_branch
          %674 = sbr.rel (%p672) target = $region24
        $region23: #{tpu_custom_call.1} parent=11 // pred_region
          %s676 = ssub.s32 16, 16
          %677 = vsyncadd [#allocation11], %s676
          %s679 = sshll.u32 [#allocation10], 4
          %s680 = int_to_ptr.vmem [resolvable:$true] %s679
          %682 = dma.hbm_to_vmem [thread:$0]  %s3, 16, %s680, [#allocation11]
        $region24: #{tpu_custom_call.1} parent=11 // pred_fallthru
          _
        // Predicated region
        $region25: #{tpu_custom_call.1} parent=11 // pred_check
          %p683 = pneg %p169
        $region26: #{tpu_custom_call.1} parent=11 // pred_check_branch
          %685 = sbr.rel (%p683) target = $region28
        $region27: #{tpu_custom_call.1} parent=11 // pred_region
          %s687 = ssub.s32 16, 16
          %688 = vsyncadd [#allocation11], %s687
          %s690 = sshll.u32 [#allocation12], 4
          %s691 = int_to_ptr.vmem [resolvable:$true] %s690
          %693 = dma.hbm_to_vmem [thread:$0]  %s4, 16, %s691, [#allocation11]
        $region28: #{tpu_custom_call.1} parent=11 // pred_fallthru
          _
        // Predicated region
        $region29: #{tpu_custom_call.1} parent=11 // pred_check
          %p694 = pneg %p502
        $region30: #{tpu_custom_call.1} parent=11 // pred_check_branch
          %696 = sbr.rel (%p694) target = $region32
        $region31: #{tpu_custom_call.1} parent=11 // pred_region
          _
        $region32: #{tpu_custom_call.1} parent=11 // pred_fallthru
          _
        // Predicated region
        $region33: #{tpu_custom_call.1} parent=11 // pred_check
          %p697 = pneg %p523
        $region34: #{tpu_custom_call.1} parent=11 // pred_check_branch
          %699 = sbr.rel (%p697) target = $region36
        $region35: #{tpu_custom_call.1} parent=11 // pred_region
          _
        $region36: #{tpu_custom_call.1} parent=11 // pred_fallthru
          _
        // Predicated region
        $region37: #{tpu_custom_call.1} parent=11 // pred_check
          %p700 = pneg %p544
        $region38: #{tpu_custom_call.1} parent=11 // pred_check_branch
          %702 = sbr.rel (%p700) target = $region40
        $region39: #{tpu_custom_call.1} parent=11 // pred_region
          %s704 = ssub.s32 2048, 2048
          %705 = vsyncadd [#allocation20], %s704
          %s706 = sshll.u32 [#allocation21], 4
          %s707 = int_to_ptr.vmem [resolvable:$true] %s706
          %712 = dma.hbm_to_vmem [thread:$0]  %s19, 2048, %s707, [#allocation20], 128, 128, 8
        $region40: #{tpu_custom_call.1} parent=11 // pred_fallthru
          _
        // Predicated region
        $region41: #{tpu_custom_call.1} parent=11 // pred_check
          %p713 = pneg %p565
        $region42: #{tpu_custom_call.1} parent=11 // pred_check_branch
          %715 = sbr.rel (%p713) target = $region44
        $region43: #{tpu_custom_call.1} parent=11 // pred_region
          _
        $region44: #{tpu_custom_call.1} parent=11 // pred_fallthru
          _
        // Predicated region
        $region45: #{tpu_custom_call.1} parent=11 // pred_check
          %p716 = pneg %p586
        $region46: #{tpu_custom_call.1} parent=11 // pred_check_branch
          %718 = sbr.rel (%p716) target = $region48
        $region47: #{tpu_custom_call.1} parent=11 // pred_region
          %s720 = ssub.s32 2048, 2048
          %721 = vsyncadd [#allocation23], %s720
          %s722 = sshll.u32 [#allocation22], 4
          %s723 = int_to_ptr.vmem [resolvable:$true] %s722
          %728 = dma.hbm_to_vmem [thread:$0]  %s21, 2048, %s723, [#allocation23], 64, 64, 4
        $region48: #{tpu_custom_call.1} parent=11 // pred_fallthru
          _
        // Predicated region
        $region49: #{tpu_custom_call.1} parent=11 // pred_check
          %p729 = pneg %p607
        $region50: #{tpu_custom_call.1} parent=11 // pred_check_branch
          %731 = sbr.rel (%p729) target = $region52
        $region51: #{tpu_custom_call.1} parent=11 // pred_region
          _
        $region52: #{tpu_custom_call.1} parent=11 // pred_fallthru
          _
      $region12: #{tpu_custom_call.1} parent=5 // pred_fallthru
        _
      %p732 = scmp.lt.s32.totalorder %s47, 4
      // Predicated region
      $region53: #{tpu_custom_call.1} parent=5 // pred_check
        %p733 = pneg %p732
      $region54: #{tpu_custom_call.1} parent=5 // pred_check_branch
        %735 = sbr.rel (%p733) target = $region56
      $region55: #{tpu_custom_call.1} parent=5 // pred_region
        // Predicated region
        $region57: #{tpu_custom_call.1} parent=55 // pred_check
          %p736 = pneg %p79
        $region58: #{tpu_custom_call.1} parent=55 // pred_check_branch
          %738 = sbr.rel (%p736) target = $region60
        $region59: #{tpu_custom_call.1} parent=55 // pred_region
          %s739 = sand.u32 %s69, 1
          %s740 = scalar_lea.sflag [#allocation5], %s739
          %s741 = sand.u32 %s69, 1
          %s742 = smul.addr %s741, 192
          %s743 = scalar_lea.vmem [#allocation4], %s742
          %s744 = smul.u32 8, %s54
          %s746 = ssub.s32 3072, 3072
          %747 = vsyncadd %s740, %s746
          %s748 = smul.addr %s744, 6
          %s749 = smul.addr %s748, 64
          %s750 = scalar_lea.hbm %s0, %s749
          %s751 = sshll.u32 %s743, 4
          %s752 = int_to_ptr.vmem [resolvable:$true] %s751
          %757 = dma.hbm_to_vmem [thread:$0]  %s750, 3072, %s752, %s740, 384, 384, 24
        $region60: #{tpu_custom_call.1} parent=55 // pred_fallthru
          _
        // Predicated region
        $region61: #{tpu_custom_call.1} parent=55 // pred_check
          %p758 = pneg %p189
        $region62: #{tpu_custom_call.1} parent=55 // pred_check_branch
          %760 = sbr.rel (%p758) target = $region64
        $region63: #{tpu_custom_call.1} parent=55 // pred_region
          %p761 = scmp.lt.s32.totalorder %s55, 1
          %s762 = scalar_select %p761, %s55, 1
          %s763 = scalar_lea.vmem %s5, %s762
        $region64: #{tpu_custom_call.1} parent=55 // pred_fallthru
          _
        // Predicated region
        $region65: #{tpu_custom_call.1} parent=55 // pred_check
          %p764 = pneg %p215
        $region66: #{tpu_custom_call.1} parent=55 // pred_check_branch
          %766 = sbr.rel (%p764) target = $region68
        $region67: #{tpu_custom_call.1} parent=55 // pred_region
          %s767 = sand.u32 %s47, 1
          %s768 = scalar_lea.sflag [#allocation14], %s767
          %s769 = sand.u32 %s205, 1
          %s770 = scalar_lea.vmem [#allocation13], %s769
          %s772 = ssub.s32 16, 16
          %773 = vsyncadd %s768, %s772
          %s774 = smul.addr %s55, 16
          %s775 = scalar_lea.hbm %s6, %s774
          %s777 = sshll.u32 %s770, 4
          %s778 = int_to_ptr.vmem [resolvable:$true] %s777
          %780 = dma.hbm_to_vmem [thread:$0]  %s775, 16, %s778, %s768
        $region68: #{tpu_custom_call.1} parent=55 // pred_fallthru
          _
        // Predicated region
        $region69: #{tpu_custom_call.1} parent=55 // pred_check
          %p781 = pneg %p241
        $region70: #{tpu_custom_call.1} parent=55 // pred_check_branch
          %783 = sbr.rel (%p781) target = $region72
        $region71: #{tpu_custom_call.1} parent=55 // pred_region
          %s784 = sand.u32 %s47, 1
          %s785 = scalar_lea.sflag [#allocation14], %s784
          %s786 = sand.u32 %s231, 1
          %s787 = smul.addr %s786, 192
          %s788 = scalar_lea.vmem [#allocation15], %s787
          %s790 = ssub.s32 3072, 3072
          %791 = vsyncadd %s785, %s790
          %s792 = smul.addr %s55, 48
          %s793 = smul.addr %s792, 64
          %s794 = scalar_lea.hbm %s7, %s793
          %s795 = sshll.u32 %s788, 4
          %s796 = int_to_ptr.vmem [resolvable:$true] %s795
          %801 = dma.hbm_to_vmem [thread:$0]  %s794, 3072, %s796, %s785, 192, 192, 12
        $region72: #{tpu_custom_call.1} parent=55 // pred_fallthru
          _
        // Predicated region
        $region73: #{tpu_custom_call.1} parent=55 // pred_check
          %p802 = pneg %p267
        $region74: #{tpu_custom_call.1} parent=55 // pred_check_branch
          %804 = sbr.rel (%p802) target = $region76
        $region75: #{tpu_custom_call.1} parent=55 // pred_region
          %p805 = scmp.lt.s32.totalorder %s55, 1
          %s806 = scalar_select %p805, %s55, 1
          %s807 = smul.addr %s806, 3
          %s808 = scalar_lea.vmem %s8, %s807
        $region76: #{tpu_custom_call.1} parent=55 // pred_fallthru
          _
        // Predicated region
        $region77: #{tpu_custom_call.1} parent=55 // pred_check
          %p809 = pneg %p293
        $region78: #{tpu_custom_call.1} parent=55 // pred_check_branch
          %811 = sbr.rel (%p809) target = $region80
        $region79: #{tpu_custom_call.1} parent=55 // pred_region
          %s812 = sand.u32 %s47, 1
          %s813 = scalar_lea.sflag [#allocation17], %s812
          %s814 = sand.u32 %s283, 1
          %s815 = smul.addr %s814, 64
          %s816 = scalar_lea.vmem [#allocation16], %s815
          %s818 = ssub.s32 1024, 1024
          %819 = vsyncadd %s813, %s818
          %s820 = smul.addr %s55, 16
          %s821 = smul.addr %s820, 64
          %s822 = scalar_lea.hbm %s9, %s821
          %s823 = sshll.u32 %s816, 4
          %s824 = int_to_ptr.vmem [resolvable:$true] %s823
          %829 = dma.hbm_to_vmem [thread:$0]  %s822, 1024, %s824, %s813, 64, 64, 4
        $region80: #{tpu_custom_call.1} parent=55 // pred_fallthru
          _
        // Predicated region
        $region81: #{tpu_custom_call.1} parent=55 // pred_check
          %p830 = pneg %p319
        $region82: #{tpu_custom_call.1} parent=55 // pred_check_branch
          %832 = sbr.rel (%p830) target = $region84
        $region83: #{tpu_custom_call.1} parent=55 // pred_region
          %p833 = scmp.lt.s32.totalorder %s55, 1
          %s834 = scalar_select %p833, %s55, 1
          %s835 = scalar_lea.vmem %s10, %s834
        $region84: #{tpu_custom_call.1} parent=55 // pred_fallthru
          _
        // Predicated region
        $region85: #{tpu_custom_call.1} parent=55 // pred_check
          %p836 = pneg %p345
        $region86: #{tpu_custom_call.1} parent=55 // pred_check_branch
          %838 = sbr.rel (%p836) target = $region88
        $region87: #{tpu_custom_call.1} parent=55 // pred_region
          %p839 = scmp.lt.s32.totalorder %s55, 1
          %s840 = scalar_select %p839, %s55, 1
          %s841 = scalar_lea.vmem %s11, %s840
        $region88: #{tpu_custom_call.1} parent=55 // pred_fallthru
          _
        // Predicated region
        $region89: #{tpu_custom_call.1} parent=55 // pred_check
          %p842 = pneg %p371
        $region90: #{tpu_custom_call.1} parent=55 // pred_check_branch
          %844 = sbr.rel (%p842) target = $region92
        $region91: #{tpu_custom_call.1} parent=55 // pred_region
          %p845 = scmp.lt.s32.totalorder %s55, 1
          %s846 = scalar_select %p845, %s55, 1
          %s847 = scalar_lea.vmem %s12, %s846
        $region92: #{tpu_custom_call.1} parent=55 // pred_fallthru
          _
        // Predicated region
        $region93: #{tpu_custom_call.1} parent=55 // pred_check
          %p848 = pneg %p397
        $region94: #{tpu_custom_call.1} parent=55 // pred_check_branch
          %850 = sbr.rel (%p848) target = $region96
        $region95: #{tpu_custom_call.1} parent=55 // pred_region
          %s851 = sand.u32 %s47, 1
          %s852 = scalar_lea.sflag [#allocation17], %s851
          %s853 = sand.u32 %s387, 1
          %s854 = smul.addr %s853, 128
          %s855 = scalar_lea.vmem [#allocation18], %s854
          %s857 = ssub.s32 2048, 2048
          %858 = vsyncadd %s852, %s857
          %s859 = smul.addr %s55, 32
          %s860 = smul.addr %s859, 64
          %s861 = scalar_lea.hbm %s13, %s860
          %s862 = sshll.u32 %s855, 4
          %s863 = int_to_ptr.vmem [resolvable:$true] %s862
          %868 = dma.hbm_to_vmem [thread:$0]  %s861, 2048, %s863, %s852, 128, 128, 8
        $region96: #{tpu_custom_call.1} parent=55 // pred_fallthru
          _
        // Predicated region
        $region97: #{tpu_custom_call.1} parent=55 // pred_check
          %p869 = pneg %p423
        $region98: #{tpu_custom_call.1} parent=55 // pred_check_branch
          %871 = sbr.rel (%p869) target = $region100
        $region99: #{tpu_custom_call.1} parent=55 // pred_region
          %p872 = scmp.lt.s32.totalorder %s55, 1
          %s873 = scalar_select %p872, %s55, 1
          %s874 = smul.addr %s873, 2
          %s875 = scalar_lea.vmem %s14, %s874
        $region100: #{tpu_custom_call.1} parent=55 // pred_fallthru
          _
        // Predicated region
        $region101: #{tpu_custom_call.1} parent=55 // pred_check
          %p876 = pneg %p449
        $region102: #{tpu_custom_call.1} parent=55 // pred_check_branch
          %878 = sbr.rel (%p876) target = $region104
        $region103: #{tpu_custom_call.1} parent=55 // pred_region
          %s879 = sand.u32 %s47, 1
          %s880 = scalar_lea.sflag [#allocation20], %s879
          %s881 = sand.u32 %s439, 1
          %s882 = smul.addr %s881, 128
          %s883 = scalar_lea.vmem [#allocation19], %s882
          %s885 = ssub.s32 2048, 2048
          %886 = vsyncadd %s880, %s885
          %s887 = smul.addr %s55, 32
          %s888 = smul.addr %s887, 64
          %s889 = scalar_lea.hbm %s15, %s888
          %s890 = sshll.u32 %s883, 4
          %s891 = int_to_ptr.vmem [resolvable:$true] %s890
          %896 = dma.hbm_to_vmem [thread:$0]  %s889, 2048, %s891, %s880, 64, 64, 4
        $region104: #{tpu_custom_call.1} parent=55 // pred_fallthru
          _
        // Predicated region
        $region105: #{tpu_custom_call.1} parent=55 // pred_check
          %p897 = pneg %p475
        $region106: #{tpu_custom_call.1} parent=55 // pred_check_branch
          %899 = sbr.rel (%p897) target = $region108
        $region107: #{tpu_custom_call.1} parent=55 // pred_region
          %p900 = scmp.lt.s32.totalorder %s55, 1
          %s901 = scalar_select %p900, %s55, 1
          %s902 = scalar_lea.vmem %s16, %s901
        $region108: #{tpu_custom_call.1} parent=55 // pred_fallthru
          _
      $region56: #{tpu_custom_call.1} parent=5 // pred_fallthru
        _
      %p903 = scmp.le.s32.totalorder 1, %s47
      %p904 = scmp.lt.s32.totalorder %s47, 5
      %p905 = pnand %p903, %p904
      %p906 = pneg %p905
      // Predicated region
      $region109: #{tpu_custom_call.1} parent=5 // pred_check
        _
      $region110: #{tpu_custom_call.1} parent=5 // pred_check_branch
        %908 = sbr.rel (%p905) target = $region112
      $region111: #{tpu_custom_call.1} parent=5 // pred_region
        %s909 = ssub.s32 %s47, 1
        %s910 = sand.u32 %s72, 1
        %s911 = scalar_lea.sflag [#allocation5], %s910
        %s912 = sand.u32 %s72, 1
        %s913 = smul.addr %s912, 192
        %s914 = scalar_lea.vmem [#allocation4], %s913
        // Predicated region
        $region113: #{tpu_custom_call.1} parent=111 // pred_check
          %p915 = pneg %p85
        $region114: #{tpu_custom_call.1} parent=111 // pred_check_branch
          %917 = sbr.rel (%p915) target = $region116
        $region115: #{tpu_custom_call.1} parent=111 // pred_region
          %918 = dma.done %s911, 3072
        $region116: #{tpu_custom_call.1} parent=111 // pred_fallthru
          _
        // Predicated region
        $region117: #{tpu_custom_call.1} parent=111 // pred_check
          %p919 = pneg %p106
        $region118: #{tpu_custom_call.1} parent=111 // pred_check_branch
          %921 = sbr.rel (%p919) target = $region120
        $region119: #{tpu_custom_call.1} parent=111 // pred_region
          %922 = dma.done [#allocation8], 6144
        $region120: #{tpu_custom_call.1} parent=111 // pred_fallthru
          _
        // Predicated region
        $region121: #{tpu_custom_call.1} parent=111 // pred_check
          %p923 = pneg %p127
        $region122: #{tpu_custom_call.1} parent=111 // pred_check_branch
          %925 = sbr.rel (%p923) target = $region124
        $region123: #{tpu_custom_call.1} parent=111 // pred_region
          %926 = dma.done [#allocation8], 128
        $region124: #{tpu_custom_call.1} parent=111 // pred_fallthru
          _
        // Predicated region
        $region125: #{tpu_custom_call.1} parent=111 // pred_check
          %p927 = pneg %p148
        $region126: #{tpu_custom_call.1} parent=111 // pred_check_branch
          %929 = sbr.rel (%p927) target = $region128
        $region127: #{tpu_custom_call.1} parent=111 // pred_region
          %930 = dma.done [#allocation11], 16
        $region128: #{tpu_custom_call.1} parent=111 // pred_fallthru
          _
        // Predicated region
        $region129: #{tpu_custom_call.1} parent=111 // pred_check
          %p931 = pneg %p169
        $region130: #{tpu_custom_call.1} parent=111 // pred_check_branch
          %933 = sbr.rel (%p931) target = $region132
        $region131: #{tpu_custom_call.1} parent=111 // pred_region
          %934 = dma.done [#allocation11], 16
        $region132: #{tpu_custom_call.1} parent=111 // pred_fallthru
          _
        %s935 = sand.u32 %s52, 1
        %s936 = scalar_lea.sflag [#allocation14], %s935
        %s937 = sand.u32 %s208, 1
        %s938 = scalar_lea.vmem [#allocation13], %s937
        // Predicated region
        $region133: #{tpu_custom_call.1} parent=111 // pred_check
          %p939 = pneg %p221
        $region134: #{tpu_custom_call.1} parent=111 // pred_check_branch
          %941 = sbr.rel (%p939) target = $region136
        $region135: #{tpu_custom_call.1} parent=111 // pred_region
          %942 = dma.done %s936, 16
        $region136: #{tpu_custom_call.1} parent=111 // pred_fallthru
          _
        %s943 = sand.u32 %s52, 1
        %s944 = scalar_lea.sflag [#allocation14], %s943
        %s945 = sand.u32 %s234, 1
        %s946 = smul.addr %s945, 192
        %s947 = scalar_lea.vmem [#allocation15], %s946
        // Predicated region
        $region137: #{tpu_custom_call.1} parent=111 // pred_check
          %p948 = pneg %p247
        $region138: #{tpu_custom_call.1} parent=111 // pred_check_branch
          %950 = sbr.rel (%p948) target = $region140
        $region139: #{tpu_custom_call.1} parent=111 // pred_region
          %951 = dma.done %s944, 3072
        $region140: #{tpu_custom_call.1} parent=111 // pred_fallthru
          _
        %s952 = sand.u32 %s52, 1
        %s953 = scalar_lea.sflag [#allocation17], %s952
        %s954 = sand.u32 %s286, 1
        %s955 = smul.addr %s954, 64
        %s956 = scalar_lea.vmem [#allocation16], %s955
        // Predicated region
        $region141: #{tpu_custom_call.1} parent=111 // pred_check
          %p957 = pneg %p299
        $region142: #{tpu_custom_call.1} parent=111 // pred_check_branch
          %959 = sbr.rel (%p957) target = $region144
        $region143: #{tpu_custom_call.1} parent=111 // pred_region
          %960 = dma.done %s953, 1024
        $region144: #{tpu_custom_call.1} parent=111 // pred_fallthru
          _
        %s961 = sand.u32 %s52, 1
        %s962 = scalar_lea.sflag [#allocation17], %s961
        %s963 = sand.u32 %s390, 1
        %s964 = smul.addr %s963, 128
        %s965 = scalar_lea.vmem [#allocation18], %s964
        // Predicated region
        $region145: #{tpu_custom_call.1} parent=111 // pred_check
          %p966 = pneg %p403
        $region146: #{tpu_custom_call.1} parent=111 // pred_check_branch
          %968 = sbr.rel (%p966) target = $region148
        $region147: #{tpu_custom_call.1} parent=111 // pred_region
          %969 = dma.done %s962, 2048
        $region148: #{tpu_custom_call.1} parent=111 // pred_fallthru
          _
        %s970 = sand.u32 %s52, 1
        %s971 = scalar_lea.sflag [#allocation20], %s970
        %s972 = sand.u32 %s442, 1
        %s973 = smul.addr %s972, 128
        %s974 = scalar_lea.vmem [#allocation19], %s973
        // Predicated region
        $region149: #{tpu_custom_call.1} parent=111 // pred_check
          %p975 = pneg %p455
        $region150: #{tpu_custom_call.1} parent=111 // pred_check_branch
          %977 = sbr.rel (%p975) target = $region152
        $region151: #{tpu_custom_call.1} parent=111 // pred_region
          %978 = dma.done %s971, 2048
        $region152: #{tpu_custom_call.1} parent=111 // pred_fallthru
          _
        // Predicated region
        $region153: #{tpu_custom_call.1} parent=111 // pred_check
          %p979 = pneg %p544
        $region154: #{tpu_custom_call.1} parent=111 // pred_check_branch
          %981 = sbr.rel (%p979) target = $region156
        $region155: #{tpu_custom_call.1} parent=111 // pred_region
          %982 = dma.done [#allocation20], 2048
        $region156: #{tpu_custom_call.1} parent=111 // pred_fallthru
          _
        // Predicated region
        $region157: #{tpu_custom_call.1} parent=111 // pred_check
          %p983 = pneg %p586
        $region158: #{tpu_custom_call.1} parent=111 // pred_check_branch
          %985 = sbr.rel (%p983) target = $region160
        $region159: #{tpu_custom_call.1} parent=111 // pred_region
          %986 = dma.done [#allocation23], 2048
        $region160: #{tpu_custom_call.1} parent=111 // pred_fallthru
          _
        %s987 = sand.u32 %s72, 1
        %s988 = scalar_lea.sflag [#allocation5], %s987
        %s989 = sand.u32 %s72, 1
        %s990 = smul.addr %s989, 192
        %s991 = scalar_lea.vmem [#allocation4], %s990
        %p992 = pneg %p85
        %p993 = pneg %p82
        %p994 = pneg %p106
        %p995 = pneg %p103
        %p996 = pneg %p127
        %p997 = pneg %p124
        %p998 = pneg %p148
        %p999 = pneg %p145
        %p1000 = pneg %p169
        %p1001 = pneg %p166
        %p1002 = scmp.lt.s32.totalorder %s57, 1
        %s1003 = scalar_select %p1002, %s57, 1
        %s1004 = scalar_lea.vmem %s5, %s1003
        %p1005 = pneg %p195
        %p1006 = pneg %p192
        %s1007 = sand.u32 %s52, 1
        %s1008 = scalar_lea.sflag [#allocation14], %s1007
        %s1009 = sand.u32 %s208, 1
        %s1010 = scalar_lea.vmem [#allocation13], %s1009
        %p1011 = pneg %p221
        %p1012 = pneg %p218
        %s1013 = sand.u32 %s52, 1
        %s1014 = scalar_lea.sflag [#allocation14], %s1013
        %s1015 = sand.u32 %s234, 1
        %s1016 = smul.addr %s1015, 192
        %s1017 = scalar_lea.vmem [#allocation15], %s1016
        %p1018 = pneg %p247
        %p1019 = pneg %p244
        %p1020 = scmp.lt.s32.totalorder %s57, 1
        %s1021 = scalar_select %p1020, %s57, 1
        %s1022 = smul.addr %s1021, 3
        %s1023 = scalar_lea.vmem %s8, %s1022
        %p1024 = pneg %p273
        %p1025 = pneg %p270
        %s1026 = sand.u32 %s52, 1
        %s1027 = scalar_lea.sflag [#allocation17], %s1026
        %s1028 = sand.u32 %s286, 1
        %s1029 = smul.addr %s1028, 64
        %s1030 = scalar_lea.vmem [#allocation16], %s1029
        %p1031 = pneg %p299
        %p1032 = pneg %p296
        %p1033 = scmp.lt.s32.totalorder %s57, 1
        %s1034 = scalar_select %p1033, %s57, 1
        %s1035 = scalar_lea.vmem %s10, %s1034
        %p1036 = pneg %p325
        %p1037 = pneg %p322
        %p1038 = scmp.lt.s32.totalorder %s57, 1
        %s1039 = scalar_select %p1038, %s57, 1
        %s1040 = scalar_lea.vmem %s11, %s1039
        %p1041 = pneg %p351
        %p1042 = pneg %p348
        %p1043 = scmp.lt.s32.totalorder %s57, 1
        %s1044 = scalar_select %p1043, %s57, 1
        %s1045 = scalar_lea.vmem %s12, %s1044
        %p1046 = pneg %p377
        %p1047 = pneg %p374
        %s1048 = sand.u32 %s52, 1
        %s1049 = scalar_lea.sflag [#allocation17], %s1048
        %s1050 = sand.u32 %s390, 1
        %s1051 = smul.addr %s1050, 128
        %s1052 = scalar_lea.vmem [#allocation18], %s1051
        %p1053 = pneg %p403
        %p1054 = pneg %p400
        %p1055 = scmp.lt.s32.totalorder %s57, 1
        %s1056 = scalar_select %p1055, %s57, 1
        %s1057 = smul.addr %s1056, 2
        %s1058 = scalar_lea.vmem %s14, %s1057
        %p1059 = pneg %p429
        %p1060 = pneg %p426
        %s1061 = sand.u32 %s52, 1
        %s1062 = scalar_lea.sflag [#allocation20], %s1061
        %s1063 = sand.u32 %s442, 1
        %s1064 = smul.addr %s1063, 128
        %s1065 = scalar_lea.vmem [#allocation19], %s1064
        %p1066 = pneg %p455
        %p1067 = pneg %p452
        %p1068 = scmp.lt.s32.totalorder %s57, 1
        %s1069 = scalar_select %p1068, %s57, 1
        %s1070 = scalar_lea.vmem %s16, %s1069
        %p1071 = pneg %p481
        %p1072 = pneg %p478
        %p1073 = pneg %p502
        %p1074 = pneg %p499
        %p1075 = pneg %p523
        %p1076 = pneg %p520
        %p1077 = pneg %p544
        %p1078 = pneg %p541
        %p1079 = pneg %p565
        %p1080 = pneg %p562
        %p1081 = pneg %p586
        %p1082 = pneg %p583
        %p1083 = pneg %p607
        %p1084 = pneg %p604
        %p1085 = pneg %p633
        %p1086 = pneg %p630
        %s1087 = sand.u32 %s620, 1
        %s1088 = scalar_lea.sflag [#allocation6], %s1087
        %s1089 = sand.u32 %s620, 1
        %s1090 = smul.addr %s1089, 8
        %s1091 = scalar_lea.vmem [#allocation24], %s1090
        %s1092 = smul.u32 8, %s56
        %p1093 = scmp.lt.s32.totalorder %s57, 1
        %s1094 = scalar_select %p1093, %s57, 1
        %s1095 = scalar_lea.vmem %s5, %s1094
        %p1096 = scmp.lt.s32.totalorder %s57, 1
        %s1097 = scalar_select %p1096, %s57, 1
        %s1098 = smul.addr %s1097, 3
        %s1099 = scalar_lea.vmem %s8, %s1098
        %p1100 = scmp.lt.s32.totalorder %s57, 1
        %s1101 = scalar_select %p1100, %s57, 1
        %s1102 = scalar_lea.vmem %s10, %s1101
        %p1103 = scmp.lt.s32.totalorder %s57, 1
        %s1104 = scalar_select %p1103, %s57, 1
        %s1105 = scalar_lea.vmem %s11, %s1104
        %p1106 = scmp.lt.s32.totalorder %s57, 1
        %s1107 = scalar_select %p1106, %s57, 1
        %s1108 = scalar_lea.vmem %s12, %s1107
        %p1109 = scmp.lt.s32.totalorder %s57, 1
        %s1110 = scalar_select %p1109, %s57, 1
        %s1111 = smul.addr %s1110, 2
        %s1112 = scalar_lea.vmem %s14, %s1111
        %p1113 = scmp.lt.s32.totalorder %s57, 1
        %s1114 = scalar_select %p1113, %s57, 1
        %s1115 = scalar_lea.vmem %s16, %s1114
        %p1117 = scmp.eq.s32.totalorder %s57, 0
        // Predicated region
        $region161: #{tpu_custom_call.1} parent=111 // pred_check
          %p1118 = pneg %p1117
        $region162: #{tpu_custom_call.1} parent=111 // pred_check_branch
          %1120 = sbr.rel (%p1118) target = $region164
        $region163: #{tpu_custom_call.1} parent=111 // pred_region
          %v1121 = vld [vmem:[%s914] sm:$0xff]
          %v1122 = vld [vmem:[%s914 + $0x8] sm:$0xff]
          %v1123 = vld [vmem:[%s914 + $0x10] sm:$0xff]
          %v1124 = vld [vmem:[%s914 + $0x18] sm:$0xff]
          %v1125 = vld [vmem:[%s914 + $0x20] sm:$0xff]
          %v1126 = vld [vmem:[%s914 + $0x28] sm:$0xff]
          %v1127 = vld [vmem:[%s914 + $0x30] sm:$0xff]
          %v1128 = vld [vmem:[%s914 + $0x38] sm:$0xff]
          %v1129 = vld [vmem:[%s914 + $0x40] sm:$0xff]
          %v1130 = vld [vmem:[%s914 + $0x48] sm:$0xff]
          %v1131 = vld [vmem:[%s914 + $0x50] sm:$0xff]
          %v1132 = vld [vmem:[%s914 + $0x58] sm:$0xff]
          %v1133 = vld [vmem:[%s914 + $0x60] sm:$0xff]
          %v1134 = vld [vmem:[%s914 + $0x68] sm:$0xff]
          %v1135 = vld [vmem:[%s914 + $0x70] sm:$0xff]
          %v1136 = vld [vmem:[%s914 + $0x78] sm:$0xff]
          %v1137 = vld [vmem:[%s914 + $0x80] sm:$0xff]
          %v1138 = vld [vmem:[%s914 + $0x88] sm:$0xff]
          %v1139 = vld [vmem:[%s914 + $0x90] sm:$0xff]
          %v1140 = vld [vmem:[%s914 + $0x98] sm:$0xff]
          %v1141 = vld [vmem:[%s914 + $0xa0] sm:$0xff]
          %v1142 = vld [vmem:[%s914 + $0xa8] sm:$0xff]
          %v1143 = vld [vmem:[%s914 + $0xb0] sm:$0xff]
          %v1144 = vld [vmem:[%s914 + $0xb8] sm:$0xff]
          %v1145 = vld [vmem:[#allocation7] sm:$0xf]
          %v1146 = vld [vmem:[#allocation7 + $0x4] sm:$0xf]
          %v1147 = vld [vmem:[#allocation7 + $0x8] sm:$0xf]
          %v1148 = vld [vmem:[#allocation7 + $0xc] sm:$0xf]
          %v1149 = vld [vmem:[#allocation7 + $0x10] sm:$0xf]
          %v1150 = vld [vmem:[#allocation7 + $0x14] sm:$0xf]
          %v1151 = vld [vmem:[#allocation7 + $0x18] sm:$0xf]
          %v1152 = vld [vmem:[#allocation7 + $0x1c] sm:$0xf]
          %v1153 = vld [vmem:[#allocation7 + $0x20] sm:$0xf]
          %v1154 = vld [vmem:[#allocation7 + $0x24] sm:$0xf]
          %v1155 = vld [vmem:[#allocation7 + $0x28] sm:$0xf]
          %v1156 = vld [vmem:[#allocation7 + $0x2c] sm:$0xf]
          %v1157 = vld [vmem:[#allocation7 + $0x30] sm:$0xf]
          %v1158 = vld [vmem:[#allocation7 + $0x34] sm:$0xf]
          %v1159 = vld [vmem:[#allocation7 + $0x38] sm:$0xf]
          %v1160 = vld [vmem:[#allocation7 + $0x3c] sm:$0xf]
          %v1161 = vld [vmem:[#allocation7 + $0x40] sm:$0xf]
          %v1162 = vld [vmem:[#allocation7 + $0x44] sm:$0xf]
          %v1163 = vld [vmem:[#allocation7 + $0x48] sm:$0xf]
          %v1164 = vld [vmem:[#allocation7 + $0x4c] sm:$0xf]
          %v1165 = vld [vmem:[#allocation7 + $0x50] sm:$0xf]
          %v1166 = vld [vmem:[#allocation7 + $0x54] sm:$0xf]
          %v1167 = vld [vmem:[#allocation7 + $0x58] sm:$0xf]
          %v1168 = vld [vmem:[#allocation7 + $0x5c] sm:$0xf]
          %v1169 = vld [vmem:[#allocation7 + $0x60] sm:$0xf]
          %v1170 = vld [vmem:[#allocation7 + $0x64] sm:$0xf]
          %v1171 = vld [vmem:[#allocation7 + $0x68] sm:$0xf]
          %v1172 = vld [vmem:[#allocation7 + $0x6c] sm:$0xf]
          %v1173 = vld [vmem:[#allocation7 + $0x70] sm:$0xf]
          %v1174 = vld [vmem:[#allocation7 + $0x74] sm:$0xf]
          %v1175 = vld [vmem:[#allocation7 + $0x78] sm:$0xf]
          %v1176 = vld [vmem:[#allocation7 + $0x7c] sm:$0xf]
          %v1177 = vld [vmem:[#allocation7 + $0x80] sm:$0xf]
          %v1178 = vld [vmem:[#allocation7 + $0x84] sm:$0xf]
          %v1179 = vld [vmem:[#allocation7 + $0x88] sm:$0xf]
          %v1180 = vld [vmem:[#allocation7 + $0x8c] sm:$0xf]
          %v1181 = vld [vmem:[#allocation7 + $0x90] sm:$0xf]
          %v1182 = vld [vmem:[#allocation7 + $0x94] sm:$0xf]
          %v1183 = vld [vmem:[#allocation7 + $0x98] sm:$0xf]
          %v1184 = vld [vmem:[#allocation7 + $0x9c] sm:$0xf]
          %v1185 = vld [vmem:[#allocation7 + $0xa0] sm:$0xf]
          %v1186 = vld [vmem:[#allocation7 + $0xa4] sm:$0xf]
          %v1187 = vld [vmem:[#allocation7 + $0xa8] sm:$0xf]
          %v1188 = vld [vmem:[#allocation7 + $0xac] sm:$0xf]
          %v1189 = vld [vmem:[#allocation7 + $0xb0] sm:$0xf]
          %v1190 = vld [vmem:[#allocation7 + $0xb4] sm:$0xf]
          %v1191 = vld [vmem:[#allocation7 + $0xb8] sm:$0xf]
          %v1192 = vld [vmem:[#allocation7 + $0xbc] sm:$0xf]
          %v1193 = vld [vmem:[#allocation7 + $0xc0] sm:$0xf]
          %v1194 = vld [vmem:[#allocation7 + $0xc4] sm:$0xf]
          %v1195 = vld [vmem:[#allocation7 + $0xc8] sm:$0xf]
          %v1196 = vld [vmem:[#allocation7 + $0xcc] sm:$0xf]
          %v1197 = vld [vmem:[#allocation7 + $0xd0] sm:$0xf]
          %v1198 = vld [vmem:[#allocation7 + $0xd4] sm:$0xf]
          %v1199 = vld [vmem:[#allocation7 + $0xd8] sm:$0xf]
          %v1200 = vld [vmem:[#allocation7 + $0xdc] sm:$0xf]
          %v1201 = vld [vmem:[#allocation7 + $0xe0] sm:$0xf]
          %v1202 = vld [vmem:[#allocation7 + $0xe4] sm:$0xf]
          %v1203 = vld [vmem:[#allocation7 + $0xe8] sm:$0xf]
          %v1204 = vld [vmem:[#allocation7 + $0xec] sm:$0xf]
          %v1205 = vld [vmem:[#allocation7 + $0xf0] sm:$0xf]
          %v1206 = vld [vmem:[#allocation7 + $0xf4] sm:$0xf]
          %v1207 = vld [vmem:[#allocation7 + $0xf8] sm:$0xf]
          %v1208 = vld [vmem:[#allocation7 + $0xfc] sm:$0xf]
          %v1209 = vld [vmem:[#allocation7 + $0x100] sm:$0xf]
          %v1210 = vld [vmem:[#allocation7 + $0x104] sm:$0xf]
          %v1211 = vld [vmem:[#allocation7 + $0x108] sm:$0xf]
          %v1212 = vld [vmem:[#allocation7 + $0x10c] sm:$0xf]
          %v1213 = vld [vmem:[#allocation7 + $0x110] sm:$0xf]
          %v1214 = vld [vmem:[#allocation7 + $0x114] sm:$0xf]
          %v1215 = vld [vmem:[#allocation7 + $0x118] sm:$0xf]
          %v1216 = vld [vmem:[#allocation7 + $0x11c] sm:$0xf]
          %v1217 = vld [vmem:[#allocation7 + $0x120] sm:$0xf]
          %v1218 = vld [vmem:[#allocation7 + $0x124] sm:$0xf]
          %v1219 = vld [vmem:[#allocation7 + $0x128] sm:$0xf]
          %v1220 = vld [vmem:[#allocation7 + $0x12c] sm:$0xf]
          %v1221 = vld [vmem:[#allocation7 + $0x130] sm:$0xf]
          %v1222 = vld [vmem:[#allocation7 + $0x134] sm:$0xf]
          %v1223 = vld [vmem:[#allocation7 + $0x138] sm:$0xf]
          %v1224 = vld [vmem:[#allocation7 + $0x13c] sm:$0xf]
          %v1225 = vld [vmem:[#allocation7 + $0x140] sm:$0xf]
          %v1226 = vld [vmem:[#allocation7 + $0x144] sm:$0xf]
          %v1227 = vld [vmem:[#allocation7 + $0x148] sm:$0xf]
          %v1228 = vld [vmem:[#allocation7 + $0x14c] sm:$0xf]
          %v1229 = vld [vmem:[#allocation7 + $0x150] sm:$0xf]
          %v1230 = vld [vmem:[#allocation7 + $0x154] sm:$0xf]
          %v1231 = vld [vmem:[#allocation7 + $0x158] sm:$0xf]
          %v1232 = vld [vmem:[#allocation7 + $0x15c] sm:$0xf]
          %v1233 = vld [vmem:[#allocation7 + $0x160] sm:$0xf]
          %v1234 = vld [vmem:[#allocation7 + $0x164] sm:$0xf]
          %v1235 = vld [vmem:[#allocation7 + $0x168] sm:$0xf]
          %v1236 = vld [vmem:[#allocation7 + $0x16c] sm:$0xf]
          %v1237 = vld [vmem:[#allocation7 + $0x170] sm:$0xf]
          %v1238 = vld [vmem:[#allocation7 + $0x174] sm:$0xf]
          %v1239 = vld [vmem:[#allocation7 + $0x178] sm:$0xf]
          %v1240 = vld [vmem:[#allocation7 + $0x17c] sm:$0xf]
          %v1265 = vunpack.c.l.b16 %v1121
          %v1266 = vunpack.c.h.b16 %v1121
          %v1267 = vunpack.c.l.b16 %v1122
          %v1268 = vunpack.c.h.b16 %v1122
          %v1269 = vunpack.c.l.b16 %v1123
          %v1270 = vunpack.c.h.b16 %v1123
          %v1271 = vunpack.c.l.b16 %v1124
          %v1272 = vunpack.c.h.b16 %v1124
          %v1273 = vunpack.c.l.b16 %v1125
          %v1274 = vunpack.c.h.b16 %v1125
          %v1275 = vunpack.c.l.b16 %v1126
          %v1276 = vunpack.c.h.b16 %v1126
          %v1277 = vunpack.c.l.b16 %v1127
          %v1278 = vunpack.c.h.b16 %v1127
          %v1279 = vunpack.c.l.b16 %v1128
          %v1280 = vunpack.c.h.b16 %v1128
          %v1281 = vunpack.c.l.b16 %v1129
          %v1282 = vunpack.c.h.b16 %v1129
          %v1283 = vunpack.c.l.b16 %v1130
          %v1284 = vunpack.c.h.b16 %v1130
          %v1285 = vunpack.c.l.b16 %v1131
          %v1286 = vunpack.c.h.b16 %v1131
          %v1287 = vunpack.c.l.b16 %v1132
          %v1288 = vunpack.c.h.b16 %v1132
          %v1289 = vunpack.c.l.b16 %v1133
          %v1290 = vunpack.c.h.b16 %v1133
          %v1291 = vunpack.c.l.b16 %v1134
          %v1292 = vunpack.c.h.b16 %v1134
          %v1293 = vunpack.c.l.b16 %v1135
          %v1294 = vunpack.c.h.b16 %v1135
          %v1295 = vunpack.c.l.b16 %v1136
          %v1296 = vunpack.c.h.b16 %v1136
          %v1297 = vunpack.c.l.b16 %v1137
          %v1298 = vunpack.c.h.b16 %v1137
          %v1299 = vunpack.c.l.b16 %v1138
          %v1300 = vunpack.c.h.b16 %v1138
          %v1301 = vunpack.c.l.b16 %v1139
          %v1302 = vunpack.c.h.b16 %v1139
          %v1303 = vunpack.c.l.b16 %v1140
          %v1304 = vunpack.c.h.b16 %v1140
          %v1305 = vunpack.c.l.b16 %v1141
          %v1306 = vunpack.c.h.b16 %v1141
          %v1307 = vunpack.c.l.b16 %v1142
          %v1308 = vunpack.c.h.b16 %v1142
          %v1309 = vunpack.c.l.b16 %v1143
          %v1310 = vunpack.c.h.b16 %v1143
          %v1311 = vunpack.c.l.b16 %v1144
          %v1312 = vunpack.c.h.b16 %v1144
          %v1313 = vpack.c.b16 %v1271, %v1265
          %v1314 = vpack.c.b16 %v1272, %v1266
          %v1315 = vpack.c.b16 %v1273, %v1267
          %v1316 = vpack.c.b16 %v1274, %v1268
          %v1317 = vpack.c.b16 %v1275, %v1269
          %v1318 = vpack.c.b16 %v1276, %v1270
          %v1319 = vpack.c.b16 %v1283, %v1277
          %v1320 = vpack.c.b16 %v1284, %v1278
          %v1321 = vpack.c.b16 %v1285, %v1279
          %v1322 = vpack.c.b16 %v1286, %v1280
          %v1323 = vpack.c.b16 %v1287, %v1281
          %v1324 = vpack.c.b16 %v1288, %v1282
          %v1325 = vpack.c.b16 %v1295, %v1289
          %v1326 = vpack.c.b16 %v1296, %v1290
          %v1327 = vpack.c.b16 %v1297, %v1291
          %v1328 = vpack.c.b16 %v1298, %v1292
          %v1329 = vpack.c.b16 %v1299, %v1293
          %v1330 = vpack.c.b16 %v1300, %v1294
          %v1331 = vpack.c.b16 %v1307, %v1301
          %v1332 = vpack.c.b16 %v1308, %v1302
          %v1333 = vpack.c.b16 %v1309, %v1303
          %v1334 = vpack.c.b16 %v1310, %v1304
          %v1335 = vpack.c.b16 %v1311, %v1305
          %v1336 = vpack.c.b16 %v1312, %v1306
          %v1457 = vunpack.c.l.b16 %v1145
          %v1458 = vunpack.c.l.b16 %v1146
          %v1459 = vunpack.c.l.b16 %v1147
          %v1460 = vunpack.c.l.b16 %v1148
          %v1461 = vunpack.c.l.b16 %v1149
          %v1462 = vunpack.c.l.b16 %v1150
          %v1463 = vunpack.c.l.b16 %v1151
          %v1464 = vunpack.c.l.b16 %v1152
          %v1465 = vunpack.c.l.b16 %v1153
          %v1466 = vunpack.c.l.b16 %v1154
          %v1467 = vunpack.c.l.b16 %v1155
          %v1468 = vunpack.c.l.b16 %v1156
          %v1469 = vunpack.c.l.b16 %v1157
          %v1470 = vunpack.c.l.b16 %v1158
          %v1471 = vunpack.c.l.b16 %v1159
          %v1472 = vunpack.c.l.b16 %v1160
          %v1473 = vunpack.c.l.b16 %v1161
          %v1474 = vunpack.c.l.b16 %v1162
          %v1475 = vunpack.c.l.b16 %v1163
          %v1476 = vunpack.c.l.b16 %v1164
          %v1477 = vunpack.c.l.b16 %v1165
          %v1478 = vunpack.c.l.b16 %v1166
          %v1479 = vunpack.c.l.b16 %v1167
          %v1480 = vunpack.c.l.b16 %v1168
          %v1481 = vunpack.c.l.b16 %v1169
          %v1482 = vunpack.c.l.b16 %v1170
          %v1483 = vunpack.c.l.b16 %v1171
          %v1484 = vunpack.c.l.b16 %v1172
          %v1485 = vunpack.c.l.b16 %v1173
          %v1486 = vunpack.c.l.b16 %v1174
          %v1487 = vunpack.c.l.b16 %v1175
          %v1488 = vunpack.c.l.b16 %v1176
          %v1489 = vunpack.c.l.b16 %v1177
          %v1490 = vunpack.c.l.b16 %v1178
          %v1491 = vunpack.c.l.b16 %v1179
          %v1492 = vunpack.c.l.b16 %v1180
          %v1493 = vunpack.c.l.b16 %v1181
          %v1494 = vunpack.c.l.b16 %v1182
          %v1495 = vunpack.c.l.b16 %v1183
          %v1496 = vunpack.c.l.b16 %v1184
          %v1497 = vunpack.c.l.b16 %v1185
          %v1498 = vunpack.c.l.b16 %v1186
          %v1499 = vunpack.c.l.b16 %v1187
          %v1500 = vunpack.c.l.b16 %v1188
          %v1501 = vunpack.c.l.b16 %v1189
          %v1502 = vunpack.c.l.b16 %v1190
          %v1503 = vunpack.c.l.b16 %v1191
          %v1504 = vunpack.c.l.b16 %v1192
          %v1505 = vunpack.c.l.b16 %v1193
          %v1506 = vunpack.c.l.b16 %v1194
          %v1507 = vunpack.c.l.b16 %v1195
          %v1508 = vunpack.c.l.b16 %v1196
          %v1509 = vunpack.c.l.b16 %v1197
          %v1510 = vunpack.c.l.b16 %v1198
          %v1511 = vunpack.c.l.b16 %v1199
          %v1512 = vunpack.c.l.b16 %v1200
          %v1513 = vunpack.c.l.b16 %v1201
          %v1514 = vunpack.c.l.b16 %v1202
          %v1515 = vunpack.c.l.b16 %v1203
          %v1516 = vunpack.c.l.b16 %v1204
          %v1517 = vunpack.c.l.b16 %v1205
          %v1518 = vunpack.c.l.b16 %v1206
          %v1519 = vunpack.c.l.b16 %v1207
          %v1520 = vunpack.c.l.b16 %v1208
          %v1521 = vunpack.c.l.b16 %v1209
          %v1522 = vunpack.c.l.b16 %v1210
          %v1523 = vunpack.c.l.b16 %v1211
          %v1524 = vunpack.c.l.b16 %v1212
          %v1525 = vunpack.c.l.b16 %v1213
          %v1526 = vunpack.c.l.b16 %v1214
          %v1527 = vunpack.c.l.b16 %v1215
          %v1528 = vunpack.c.l.b16 %v1216
          %v1529 = vunpack.c.l.b16 %v1217
          %v1530 = vunpack.c.l.b16 %v1218
          %v1531 = vunpack.c.l.b16 %v1219
          %v1532 = vunpack.c.l.b16 %v1220
          %v1533 = vunpack.c.l.b16 %v1221
          %v1534 = vunpack.c.l.b16 %v1222
          %v1535 = vunpack.c.l.b16 %v1223
          %v1536 = vunpack.c.l.b16 %v1224
          %v1537 = vunpack.c.l.b16 %v1225
          %v1538 = vunpack.c.l.b16 %v1226
          %v1539 = vunpack.c.l.b16 %v1227
          %v1540 = vunpack.c.l.b16 %v1228
          %v1541 = vunpack.c.l.b16 %v1229
          %v1542 = vunpack.c.l.b16 %v1230
          %v1543 = vunpack.c.l.b16 %v1231
          %v1544 = vunpack.c.l.b16 %v1232
          %v1545 = vunpack.c.l.b16 %v1233
          %v1546 = vunpack.c.l.b16 %v1234
          %v1547 = vunpack.c.l.b16 %v1235
          %v1548 = vunpack.c.l.b16 %v1236
          %v1549 = vunpack.c.l.b16 %v1237
          %v1550 = vunpack.c.l.b16 %v1238
          %v1551 = vunpack.c.l.b16 %v1239
          %v1552 = vunpack.c.l.b16 %v1240
          %v1553 = vpack.c.b16 %v1458, %v1457
          %v1554 = vpack.c.b16 %v1460, %v1459
          %v1555 = vpack.c.b16 %v1462, %v1461
          %v1556 = vpack.c.b16 %v1464, %v1463
          %v1557 = vpack.c.b16 %v1466, %v1465
          %v1558 = vpack.c.b16 %v1468, %v1467
          %v1559 = vpack.c.b16 %v1470, %v1469
          %v1560 = vpack.c.b16 %v1472, %v1471
          %v1561 = vpack.c.b16 %v1474, %v1473
          %v1562 = vpack.c.b16 %v1476, %v1475
          %v1563 = vpack.c.b16 %v1478, %v1477
          %v1564 = vpack.c.b16 %v1480, %v1479
          %v1565 = vpack.c.b16 %v1482, %v1481
          %v1566 = vpack.c.b16 %v1484, %v1483
          %v1567 = vpack.c.b16 %v1486, %v1485
          %v1568 = vpack.c.b16 %v1488, %v1487
          %v1569 = vpack.c.b16 %v1490, %v1489
          %v1570 = vpack.c.b16 %v1492, %v1491
          %v1571 = vpack.c.b16 %v1494, %v1493
          %v1572 = vpack.c.b16 %v1496, %v1495
          %v1573 = vpack.c.b16 %v1498, %v1497
          %v1574 = vpack.c.b16 %v1500, %v1499
          %v1575 = vpack.c.b16 %v1502, %v1501
          %v1576 = vpack.c.b16 %v1504, %v1503
          %v1577 = vpack.c.b16 %v1506, %v1505
          %v1578 = vpack.c.b16 %v1508, %v1507
          %v1579 = vpack.c.b16 %v1510, %v1509
          %v1580 = vpack.c.b16 %v1512, %v1511
          %v1581 = vpack.c.b16 %v1514, %v1513
          %v1582 = vpack.c.b16 %v1516, %v1515
          %v1583 = vpack.c.b16 %v1518, %v1517
          %v1584 = vpack.c.b16 %v1520, %v1519
          %v1585 = vpack.c.b16 %v1522, %v1521
          %v1586 = vpack.c.b16 %v1524, %v1523
          %v1587 = vpack.c.b16 %v1526, %v1525
          %v1588 = vpack.c.b16 %v1528, %v1527
          %v1589 = vpack.c.b16 %v1530, %v1529
          %v1590 = vpack.c.b16 %v1532, %v1531
          %v1591 = vpack.c.b16 %v1534, %v1533
          %v1592 = vpack.c.b16 %v1536, %v1535
          %v1593 = vpack.c.b16 %v1538, %v1537
          %v1594 = vpack.c.b16 %v1540, %v1539
          %v1595 = vpack.c.b16 %v1542, %v1541
          %v1596 = vpack.c.b16 %v1544, %v1543
          %v1597 = vpack.c.b16 %v1546, %v1545
          %v1598 = vpack.c.b16 %v1548, %v1547
          %v1599 = vpack.c.b16 %v1550, %v1549
          %v1600 = vpack.c.b16 %v1552, %v1551
          %1649 = vmatprep.subr.bf16.mxu0 0
          %1650 = vmatpush1.bf16.msra.mxu0 %v1560
          %1651 = vmatprep.subr.bf16.mxu0 0
          %1652 = vmatpush1.bf16.msra.mxu0 %v1559
          %1653 = vmatprep.subr.bf16.mxu0 0
          %1654 = vmatpush1.bf16.msra.mxu0 %v1558
          %1655 = vmatprep.subr.bf16.mxu0 0
          %1656 = vmatpush1.bf16.msra.mxu0 %v1557
          %1657 = vmatprep.subr.bf16.mxu0 0
          %1658 = vmatpush1.bf16.msra.mxu0 %v1556
          %1659 = vmatprep.subr.bf16.mxu0 0
          %1660 = vmatpush1.bf16.msra.mxu0 %v1555
          %1661 = vmatprep.subr.bf16.mxu0 0
          %1662 = vmatpush1.bf16.msra.mxu0 %v1554
          %1663 = vmatprep.subr.bf16.mxu0 0
          %1664 = vmatpush1.bf16.msra.mxu0 %v1553
          %1665 = vmatprep.subr.bf16.mxu0 0
          %1666 = vmatpush2.bf16.msra.mxu0 %v1568
          %1667 = vmatprep.subr.bf16.mxu0 0
          %1668 = vmatpush2.bf16.msra.mxu0 %v1567
          %1669 = vmatprep.subr.bf16.mxu0 0
          %1670 = vmatpush2.bf16.msra.mxu0 %v1566
          %1671 = vmatprep.subr.bf16.mxu0 0
          %1672 = vmatpush2.bf16.msra.mxu0 %v1565
          %1673 = vmatprep.subr.bf16.mxu0 0
          %1674 = vmatpush2.bf16.msra.mxu0 %v1564
          %1675 = vmatprep.subr.bf16.mxu0 0
          %1676 = vmatpush2.bf16.msra.mxu0 %v1563
          %1677 = vmatprep.subr.bf16.mxu0 0
          %1678 = vmatpush2.bf16.msra.mxu0 %v1562
          %1679 = vmatprep.subr.bf16.mxu0 0
          %1680 = vmatpush2.bf16.msra.mxu0 %v1561
          %1681 = vmatprep.mubr.bf16.mxu0 %v1314
          %1682 = vmatmul.mubr.bf16.gmra.mxu0 %v1313
          %v1683 = vpop.f32.mrf.mxu0
          %v1684 = vadd.f32 0.0, %v1683
          %v1685 = vpop.f32.mrf.mxu0
          %v1686 = vpop.f32.mrf.mxu0
          %v1687 = vadd.f32 0.0, %v1686
          %v1688 = vpop.f32.mrf.mxu0
          %1689 = vmatprep.mubr.bf16.mxu0 %v1320
          %1690 = vmatmul.mubr.bf16.gmra.mxu0 %v1319
          %v1691 = vpop.f32.mrf.mxu0
          %v1692 = vadd.f32 0.0, %v1691
          %v1693 = vpop.f32.mrf.mxu0
          %v1694 = vpop.f32.mrf.mxu0
          %v1695 = vadd.f32 0.0, %v1694
          %v1696 = vpop.f32.mrf.mxu0
          %1697 = vmatprep.mubr.bf16.mxu0 %v1326
          %1698 = vmatmul.mubr.bf16.gmra.mxu0 %v1325
          %v1699 = vpop.f32.mrf.mxu0
          %v1700 = vadd.f32 0.0, %v1699
          %v1701 = vpop.f32.mrf.mxu0
          %v1702 = vpop.f32.mrf.mxu0
          %v1703 = vadd.f32 0.0, %v1702
          %v1704 = vpop.f32.mrf.mxu0
          %1705 = vmatprep.mubr.bf16.mxu0 %v1332
          %1706 = vmatmul.mubr.bf16.gmra.mxu0 %v1331
          %v1707 = vpop.f32.mrf.mxu0
          %v1708 = vadd.f32 0.0, %v1707
          %v1709 = vpop.f32.mrf.mxu0
          %v1710 = vpop.f32.mrf.mxu0
          %v1711 = vadd.f32 0.0, %v1710
          %v1712 = vpop.f32.mrf.mxu0
          %1713 = vdwg.mxu0
          %1714 = vmatprep.subr.bf16.mxu0 0
          %1715 = vmatpush1.bf16.msra.mxu0 %v1576
          %1716 = vmatprep.subr.bf16.mxu0 0
          %1717 = vmatpush1.bf16.msra.mxu0 %v1575
          %1718 = vmatprep.subr.bf16.mxu0 0
          %1719 = vmatpush1.bf16.msra.mxu0 %v1574
          %1720 = vmatprep.subr.bf16.mxu0 0
          %1721 = vmatpush1.bf16.msra.mxu0 %v1573
          %1722 = vmatprep.subr.bf16.mxu0 0
          %1723 = vmatpush1.bf16.msra.mxu0 %v1572
          %1724 = vmatprep.subr.bf16.mxu0 0
          %1725 = vmatpush1.bf16.msra.mxu0 %v1571
          %1726 = vmatprep.subr.bf16.mxu0 0
          %1727 = vmatpush1.bf16.msra.mxu0 %v1570
          %1728 = vmatprep.subr.bf16.mxu0 0
          %1729 = vmatpush1.bf16.msra.mxu0 %v1569
          %1730 = vmatprep.subr.bf16.mxu0 0
          %1731 = vmatpush2.bf16.msra.mxu0 %v1584
          %1732 = vmatprep.subr.bf16.mxu0 0
          %1733 = vmatpush2.bf16.msra.mxu0 %v1583
          %1734 = vmatprep.subr.bf16.mxu0 0
          %1735 = vmatpush2.bf16.msra.mxu0 %v1582
          %1736 = vmatprep.subr.bf16.mxu0 0
          %1737 = vmatpush2.bf16.msra.mxu0 %v1581
          %1738 = vmatprep.subr.bf16.mxu0 0
          %1739 = vmatpush2.bf16.msra.mxu0 %v1580
          %1740 = vmatprep.subr.bf16.mxu0 0
          %1741 = vmatpush2.bf16.msra.mxu0 %v1579
          %1742 = vmatprep.subr.bf16.mxu0 0
          %1743 = vmatpush2.bf16.msra.mxu0 %v1578
          %1744 = vmatprep.subr.bf16.mxu0 0
          %1745 = vmatpush2.bf16.msra.mxu0 %v1577
          %1746 = vmatprep.mubr.bf16.mxu0 %v1316
          %1747 = vmatmul.mubr.bf16.gmra.mxu0 %v1315
          %v1748 = vpop.f32.mrf.mxu0
          %v1749 = vadd.f32 %v1684, %v1748
          %v1750 = vpop.f32.mrf.mxu0
          %v1751 = vpop.f32.mrf.mxu0
          %v1752 = vadd.f32 %v1687, %v1751
          %v1753 = vpop.f32.mrf.mxu0
          %1754 = vmatprep.mubr.bf16.mxu0 %v1322
          %1755 = vmatmul.mubr.bf16.gmra.mxu0 %v1321
          %v1756 = vpop.f32.mrf.mxu0
          %v1757 = vadd.f32 %v1692, %v1756
          %v1758 = vpop.f32.mrf.mxu0
          %v1759 = vpop.f32.mrf.mxu0
          %v1760 = vadd.f32 %v1695, %v1759
          %v1761 = vpop.f32.mrf.mxu0
          %1762 = vmatprep.mubr.bf16.mxu0 %v1328
          %1763 = vmatmul.mubr.bf16.gmra.mxu0 %v1327
          %v1764 = vpop.f32.mrf.mxu0
          %v1765 = vadd.f32 %v1700, %v1764
          %v1766 = vpop.f32.mrf.mxu0
          %v1767 = vpop.f32.mrf.mxu0
          %v1768 = vadd.f32 %v1703, %v1767
          %v1769 = vpop.f32.mrf.mxu0
          %1770 = vmatprep.mubr.bf16.mxu0 %v1334
          %1771 = vmatmul.mubr.bf16.gmra.mxu0 %v1333
          %v1772 = vpop.f32.mrf.mxu0
          %v1773 = vadd.f32 %v1708, %v1772
          %v1774 = vpop.f32.mrf.mxu0
          %v1775 = vpop.f32.mrf.mxu0
          %v1776 = vadd.f32 %v1711, %v1775
          %v1777 = vpop.f32.mrf.mxu0
          %1778 = vdwg.mxu0
          %1779 = vmatprep.subr.bf16.mxu0 0
          %1780 = vmatpush1.bf16.msra.mxu0 %v1592
          %1781 = vmatprep.subr.bf16.mxu0 0
          %1782 = vmatpush1.bf16.msra.mxu0 %v1591
          %1783 = vmatprep.subr.bf16.mxu0 0
          %1784 = vmatpush1.bf16.msra.mxu0 %v1590
          %1785 = vmatprep.subr.bf16.mxu0 0
          %1786 = vmatpush1.bf16.msra.mxu0 %v1589
          %1787 = vmatprep.subr.bf16.mxu0 0
          %1788 = vmatpush1.bf16.msra.mxu0 %v1588
          %1789 = vmatprep.subr.bf16.mxu0 0
          %1790 = vmatpush1.bf16.msra.mxu0 %v1587
          %1791 = vmatprep.subr.bf16.mxu0 0
          %1792 = vmatpush1.bf16.msra.mxu0 %v1586
          %1793 = vmatprep.subr.bf16.mxu0 0
          %1794 = vmatpush1.bf16.msra.mxu0 %v1585
          %1795 = vmatprep.subr.bf16.mxu0 0
          %1796 = vmatpush2.bf16.msra.mxu0 %v1600
          %1797 = vmatprep.subr.bf16.mxu0 0
          %1798 = vmatpush2.bf16.msra.mxu0 %v1599
          %1799 = vmatprep.subr.bf16.mxu0 0
          %1800 = vmatpush2.bf16.msra.mxu0 %v1598
          %1801 = vmatprep.subr.bf16.mxu0 0
          %1802 = vmatpush2.bf16.msra.mxu0 %v1597
          %1803 = vmatprep.subr.bf16.mxu0 0
          %1804 = vmatpush2.bf16.msra.mxu0 %v1596
          %1805 = vmatprep.subr.bf16.mxu0 0
          %1806 = vmatpush2.bf16.msra.mxu0 %v1595
          %1807 = vmatprep.subr.bf16.mxu0 0
          %1808 = vmatpush2.bf16.msra.mxu0 %v1594
          %1809 = vmatprep.subr.bf16.mxu0 0
          %1810 = vmatpush2.bf16.msra.mxu0 %v1593
          %1811 = vmatprep.mubr.bf16.mxu0 %v1318
          %1812 = vmatmul.mubr.bf16.gmra.mxu0 %v1317
          %v1813 = vpop.f32.mrf.mxu0
          %v1814 = vadd.f32 %v1749, %v1813
          %v1815 = vpop.f32.mrf.mxu0
          %v1816 = vpop.f32.mrf.mxu0
          %v1817 = vadd.f32 %v1752, %v1816
          %v1818 = vpop.f32.mrf.mxu0
          %1819 = vmatprep.mubr.bf16.mxu0 %v1324
          %1820 = vmatmul.mubr.bf16.gmra.mxu0 %v1323
          %v1821 = vpop.f32.mrf.mxu0
          %v1822 = vadd.f32 %v1757, %v1821
          %v1823 = vpop.f32.mrf.mxu0
          %v1824 = vpop.f32.mrf.mxu0
          %v1825 = vadd.f32 %v1760, %v1824
          %v1826 = vpop.f32.mrf.mxu0
          %1827 = vmatprep.mubr.bf16.mxu0 %v1330
          %1828 = vmatmul.mubr.bf16.gmra.mxu0 %v1329
          %v1829 = vpop.f32.mrf.mxu0
          %v1830 = vadd.f32 %v1765, %v1829
          %v1831 = vpop.f32.mrf.mxu0
          %v1832 = vpop.f32.mrf.mxu0
          %v1833 = vadd.f32 %v1768, %v1832
          %v1834 = vpop.f32.mrf.mxu0
          %1835 = vmatprep.mubr.bf16.mxu0 %v1336
          %1836 = vmatmul.mubr.bf16.gmra.mxu0 %v1335
          %v1837 = vpop.f32.mrf.mxu0
          %v1838 = vadd.f32 %v1773, %v1837
          %v1839 = vpop.f32.mrf.mxu0
          %v1840 = vpop.f32.mrf.mxu0
          %v1841 = vadd.f32 %v1776, %v1840
          %v1842 = vpop.f32.mrf.mxu0
          %1843 = vdwg.mxu0
          %v1844 = vld [vmem:[#allocation9] sm:$0xff]
          %v1845 = vadd.f32 %v1814, %v1844
          %v1846 = vadd.f32 %v1817, %v1844
          %v1847 = vadd.f32 %v1822, %v1844
          %v1848 = vadd.f32 %v1825, %v1844
          %v1849 = vadd.f32 %v1830, %v1844
          %v1850 = vadd.f32 %v1833, %v1844
          %v1851 = vadd.f32 %v1838, %v1844
          %v1852 = vadd.f32 %v1841, %v1844
          %v1853 = vld [vmem:[#allocation10] sm:$0x1]
          %v1854 = vld [vmem:[#allocation12] sm:$0x1]
          %1855 = vadd.xlane.f32.xlu0 %v1845
          %v1856 = vpop.xlane.xlu0 %1855
          %1857 = vadd.xlane.f32.xlu0 %v1846
          %v1858 = vpop.xlane.xlu0 %1857
          %1859 = vadd.xlane.f32.xlu0 %v1847
          %v1860 = vpop.xlane.xlu0 %1859
          %1861 = vadd.xlane.f32.xlu0 %v1848
          %v1862 = vpop.xlane.xlu0 %1861
          %1863 = vadd.xlane.f32.xlu0 %v1849
          %v1864 = vpop.xlane.xlu0 %1863
          %1865 = vadd.xlane.f32.xlu0 %v1850
          %v1866 = vpop.xlane.xlu0 %1865
          %1867 = vadd.xlane.f32.xlu0 %v1851
          %v1868 = vpop.xlane.xlu0 %1867
          %1869 = vadd.xlane.f32.xlu0 %v1852
          %v1870 = vpop.xlane.xlu0 %1869
          %v1871 = vrcp.pop 128.0
          %v1872 = vmul.f32 %v1856, %v1871
          %v1873 = vmul.f32 %v1858, %v1871
          %v1874 = vmul.f32 %v1860, %v1871
          %v1875 = vmul.f32 %v1862, %v1871
          %v1876 = vmul.f32 %v1864, %v1871
          %v1877 = vmul.f32 %v1866, %v1871
          %v1878 = vmul.f32 %v1868, %v1871
          %v1879 = vmul.f32 %v1870, %v1871
          %v1880 = vsub.f32 %v1845, %v1872
          %v1881 = vsub.f32 %v1846, %v1873
          %v1882 = vsub.f32 %v1847, %v1874
          %v1883 = vsub.f32 %v1848, %v1875
          %v1884 = vsub.f32 %v1849, %v1876
          %v1885 = vsub.f32 %v1850, %v1877
          %v1886 = vsub.f32 %v1851, %v1878
          %v1887 = vsub.f32 %v1852, %v1879
          %v1888 = vmul.f32 %v1880, %v1880
          %v1889 = vmul.f32 %v1881, %v1881
          %v1890 = vmul.f32 %v1882, %v1882
          %v1891 = vmul.f32 %v1883, %v1883
          %v1892 = vmul.f32 %v1884, %v1884
          %v1893 = vmul.f32 %v1885, %v1885
          %v1894 = vmul.f32 %v1886, %v1886
          %v1895 = vmul.f32 %v1887, %v1887
          %1896 = vadd.xlane.f32.xlu0 %v1888
          %v1897 = vpop.xlane.xlu0 %1896
          %1898 = vadd.xlane.f32.xlu0 %v1889
          %v1899 = vpop.xlane.xlu0 %1898
          %1900 = vadd.xlane.f32.xlu0 %v1890
          %v1901 = vpop.xlane.xlu0 %1900
          %1902 = vadd.xlane.f32.xlu0 %v1891
          %v1903 = vpop.xlane.xlu0 %1902
          %1904 = vadd.xlane.f32.xlu0 %v1892
          %v1905 = vpop.xlane.xlu0 %1904
          %1906 = vadd.xlane.f32.xlu0 %v1893
          %v1907 = vpop.xlane.xlu0 %1906
          %1908 = vadd.xlane.f32.xlu0 %v1894
          %v1909 = vpop.xlane.xlu0 %1908
          %1910 = vadd.xlane.f32.xlu0 %v1895
          %v1911 = vpop.xlane.xlu0 %1910
          %v1912 = vmul.f32 %v1897, %v1871
          %v1913 = vmul.f32 %v1899, %v1871
          %v1914 = vmul.f32 %v1901, %v1871
          %v1915 = vmul.f32 %v1903, %v1871
          %v1916 = vmul.f32 %v1905, %v1871
          %v1917 = vmul.f32 %v1907, %v1871
          %v1918 = vmul.f32 %v1909, %v1871
          %v1919 = vmul.f32 %v1911, %v1871
          %v1920 = vadd.f32 %v1912, 1e-05
          %v1921 = vadd.f32 %v1913, 1e-05
          %v1922 = vadd.f32 %v1914, 1e-05
          %v1923 = vadd.f32 %v1915, 1e-05
          %v1924 = vadd.f32 %v1916, 1e-05
          %v1925 = vadd.f32 %v1917, 1e-05
          %v1926 = vadd.f32 %v1918, 1e-05
          %v1927 = vadd.f32 %v1919, 1e-05
          %v1928 = vrsqrt.pop %v1920
          %v1929 = vrsqrt.pop %v1921
          %v1930 = vrsqrt.pop %v1922
          %v1931 = vrsqrt.pop %v1923
          %v1932 = vrsqrt.pop %v1924
          %v1933 = vrsqrt.pop %v1925
          %v1934 = vrsqrt.pop %v1926
          %v1935 = vrsqrt.pop %v1927
          %v1936 = vmul.f32 %v1880, %v1928
          %v1937 = vmul.f32 %v1881, %v1929
          %v1938 = vmul.f32 %v1882, %v1930
          %v1939 = vmul.f32 %v1883, %v1931
          %v1940 = vmul.f32 %v1884, %v1932
          %v1941 = vmul.f32 %v1885, %v1933
          %v1942 = vmul.f32 %v1886, %v1934
          %v1943 = vmul.f32 %v1887, %v1935
          %v1945 = vlaneseq
          %v1946 = vshrl.u32 %v1945, 7
          %v1947 = vsub.s32 0, %v1946
          %v1948 = vrot.slane %v1853, %v1947
          %v1950 = vmul.f32 %v1936, %v1948
          %v1951 = vmul.f32 %v1937, %v1948
          %v1952 = vmul.f32 %v1938, %v1948
          %v1953 = vmul.f32 %v1939, %v1948
          %v1954 = vmul.f32 %v1940, %v1948
          %v1955 = vmul.f32 %v1941, %v1948
          %v1956 = vmul.f32 %v1942, %v1948
          %v1957 = vmul.f32 %v1943, %v1948
          %v1959 = vlaneseq
          %v1960 = vshrl.u32 %v1959, 7
          %v1961 = vsub.s32 0, %v1960
          %v1962 = vrot.slane %v1854, %v1961
          %v1964 = vadd.f32 %v1950, %v1962
          %v1965 = vadd.f32 %v1951, %v1962
          %v1966 = vadd.f32 %v1952, %v1962
          %v1967 = vadd.f32 %v1953, %v1962
          %v1968 = vadd.f32 %v1954, %v1962
          %v1969 = vadd.f32 %v1955, %v1962
          %v1970 = vadd.f32 %v1956, %v1962
          %v1971 = vadd.f32 %v1957, %v1962
          %1972 = vst [vmem:[#allocation2] sm:$0xff] %v1964
          %1973 = vst [vmem:[#allocation2 + $0x8] sm:$0xff] %v1965
          %1974 = vst [vmem:[#allocation2 + $0x10] sm:$0xff] %v1966
          %1975 = vst [vmem:[#allocation2 + $0x18] sm:$0xff] %v1967
          %1976 = vst [vmem:[#allocation2 + $0x20] sm:$0xff] %v1968
          %1977 = vst [vmem:[#allocation2 + $0x28] sm:$0xff] %v1969
          %1978 = vst [vmem:[#allocation2 + $0x30] sm:$0xff] %v1970
          %1979 = vst [vmem:[#allocation2 + $0x38] sm:$0xff] %v1971
        $region164: #{tpu_custom_call.1} parent=111 // pred_fallthru
          _
        %v1980 = vld [vmem:[#allocation2] sm:$0xff]
        %v1981 = vld [vmem:[#allocation2 + $0x8] sm:$0xff]
        %v1982 = vld [vmem:[#allocation2 + $0x10] sm:$0xff]
        %v1983 = vld [vmem:[#allocation2 + $0x18] sm:$0xff]
        %v1984 = vld [vmem:[#allocation2 + $0x20] sm:$0xff]
        %v1985 = vld [vmem:[#allocation2 + $0x28] sm:$0xff]
        %v1986 = vld [vmem:[#allocation2 + $0x30] sm:$0xff]
        %v1987 = vld [vmem:[#allocation2 + $0x38] sm:$0xff]
        %v1988 = vld [vmem:[%s1095] sm:$0x1]
        %v1989 = vld [vmem:[%s938] sm:$0x1]
        %1990 = vadd.xlane.f32.xlu0 %v1980
        %v1991 = vpop.xlane.xlu0 %1990
        %1992 = vadd.xlane.f32.xlu0 %v1981
        %v1993 = vpop.xlane.xlu0 %1992
        %1994 = vadd.xlane.f32.xlu0 %v1982
        %v1995 = vpop.xlane.xlu0 %1994
        %1996 = vadd.xlane.f32.xlu0 %v1983
        %v1997 = vpop.xlane.xlu0 %1996
        %1998 = vadd.xlane.f32.xlu0 %v1984
        %v1999 = vpop.xlane.xlu0 %1998
        %2000 = vadd.xlane.f32.xlu0 %v1985
        %v2001 = vpop.xlane.xlu0 %2000
        %2002 = vadd.xlane.f32.xlu0 %v1986
        %v2003 = vpop.xlane.xlu0 %2002
        %2004 = vadd.xlane.f32.xlu0 %v1987
        %v2005 = vpop.xlane.xlu0 %2004
        %v2006 = vrcp.pop 128.0
        %v2007 = vmul.f32 %v1991, %v2006
        %v2008 = vmul.f32 %v1993, %v2006
        %v2009 = vmul.f32 %v1995, %v2006
        %v2010 = vmul.f32 %v1997, %v2006
        %v2011 = vmul.f32 %v1999, %v2006
        %v2012 = vmul.f32 %v2001, %v2006
        %v2013 = vmul.f32 %v2003, %v2006
        %v2014 = vmul.f32 %v2005, %v2006
        %v2015 = vsub.f32 %v1980, %v2007
        %v2016 = vsub.f32 %v1981, %v2008
        %v2017 = vsub.f32 %v1982, %v2009
        %v2018 = vsub.f32 %v1983, %v2010
        %v2019 = vsub.f32 %v1984, %v2011
        %v2020 = vsub.f32 %v1985, %v2012
        %v2021 = vsub.f32 %v1986, %v2013
        %v2022 = vsub.f32 %v1987, %v2014
        %v2023 = vmul.f32 %v2015, %v2015
        %v2024 = vmul.f32 %v2016, %v2016
        %v2025 = vmul.f32 %v2017, %v2017
        %v2026 = vmul.f32 %v2018, %v2018
        %v2027 = vmul.f32 %v2019, %v2019
        %v2028 = vmul.f32 %v2020, %v2020
        %v2029 = vmul.f32 %v2021, %v2021
        %v2030 = vmul.f32 %v2022, %v2022
        %2031 = vadd.xlane.f32.xlu0 %v2023
        %v2032 = vpop.xlane.xlu0 %2031
        %2033 = vadd.xlane.f32.xlu0 %v2024
        %v2034 = vpop.xlane.xlu0 %2033
        %2035 = vadd.xlane.f32.xlu0 %v2025
        %v2036 = vpop.xlane.xlu0 %2035
        %2037 = vadd.xlane.f32.xlu0 %v2026
        %v2038 = vpop.xlane.xlu0 %2037
        %2039 = vadd.xlane.f32.xlu0 %v2027
        %v2040 = vpop.xlane.xlu0 %2039
        %2041 = vadd.xlane.f32.xlu0 %v2028
        %v2042 = vpop.xlane.xlu0 %2041
        %2043 = vadd.xlane.f32.xlu0 %v2029
        %v2044 = vpop.xlane.xlu0 %2043
        %2045 = vadd.xlane.f32.xlu0 %v2030
        %v2046 = vpop.xlane.xlu0 %2045
        %v2047 = vmul.f32 %v2032, %v2006
        %v2048 = vmul.f32 %v2034, %v2006
        %v2049 = vmul.f32 %v2036, %v2006
        %v2050 = vmul.f32 %v2038, %v2006
        %v2051 = vmul.f32 %v2040, %v2006
        %v2052 = vmul.f32 %v2042, %v2006
        %v2053 = vmul.f32 %v2044, %v2006
        %v2054 = vmul.f32 %v2046, %v2006
        %v2055 = vadd.f32 %v2047, 1e-05
        %v2056 = vadd.f32 %v2048, 1e-05
        %v2057 = vadd.f32 %v2049, 1e-05
        %v2058 = vadd.f32 %v2050, 1e-05
        %v2059 = vadd.f32 %v2051, 1e-05
        %v2060 = vadd.f32 %v2052, 1e-05
        %v2061 = vadd.f32 %v2053, 1e-05
        %v2062 = vadd.f32 %v2054, 1e-05
        %v2063 = vrsqrt.pop %v2055
        %v2064 = vrsqrt.pop %v2056
        %v2065 = vrsqrt.pop %v2057
        %v2066 = vrsqrt.pop %v2058
        %v2067 = vrsqrt.pop %v2059
        %v2068 = vrsqrt.pop %v2060
        %v2069 = vrsqrt.pop %v2061
        %v2070 = vrsqrt.pop %v2062
        %v2071 = vmul.f32 %v2015, %v2063
        %v2072 = vmul.f32 %v2016, %v2064
        %v2073 = vmul.f32 %v2017, %v2065
        %v2074 = vmul.f32 %v2018, %v2066
        %v2075 = vmul.f32 %v2019, %v2067
        %v2076 = vmul.f32 %v2020, %v2068
        %v2077 = vmul.f32 %v2021, %v2069
        %v2078 = vmul.f32 %v2022, %v2070
        %v2080 = vlaneseq
        %v2081 = vshrl.u32 %v2080, 7
        %v2082 = vsub.s32 0, %v2081
        %v2083 = vrot.slane %v1988, %v2082
        %v2085 = vmul.f32 %v2071, %v2083
        %v2086 = vmul.f32 %v2072, %v2083
        %v2087 = vmul.f32 %v2073, %v2083
        %v2088 = vmul.f32 %v2074, %v2083
        %v2089 = vmul.f32 %v2075, %v2083
        %v2090 = vmul.f32 %v2076, %v2083
        %v2091 = vmul.f32 %v2077, %v2083
        %v2092 = vmul.f32 %v2078, %v2083
        %v2094 = vlaneseq
        %v2095 = vshrl.u32 %v2094, 7
        %v2096 = vsub.s32 0, %v2095
        %v2097 = vrot.slane %v1989, %v2096
        %v2099 = vadd.f32 %v2085, %v2097
        %v2100 = vadd.f32 %v2086, %v2097
        %v2101 = vadd.f32 %v2087, %v2097
        %v2102 = vadd.f32 %v2088, %v2097
        %v2103 = vadd.f32 %v2089, %v2097
        %v2104 = vadd.f32 %v2090, %v2097
        %v2105 = vadd.f32 %v2091, %v2097
        %v2106 = vadd.f32 %v2092, %v2097
        %v2107 = vpack.c.bf16 %v2100, %v2099
        %v2108 = vpack.c.bf16 %v2102, %v2101
        %v2109 = vpack.c.bf16 %v2104, %v2103
        %v2110 = vpack.c.bf16 %v2106, %v2105
        %v2111 = vld [vmem:[%s947] sm:$0xff]
        %v2112 = vld [vmem:[%s947 + $0x8] sm:$0xf]
        %v2113 = vld [vmem:[%s947 + $0xc] sm:$0xff]
        %v2114 = vld [vmem:[%s947 + $0x14] sm:$0xf]
        %v2115 = vld [vmem:[%s947 + $0x18] sm:$0xff]
        %v2116 = vld [vmem:[%s947 + $0x20] sm:$0xf]
        %v2117 = vld [vmem:[%s947 + $0x24] sm:$0xff]
        %v2118 = vld [vmem:[%s947 + $0x2c] sm:$0xf]
        %v2119 = vld [vmem:[%s947 + $0x30] sm:$0xff]
        %v2120 = vld [vmem:[%s947 + $0x38] sm:$0xf]
        %v2121 = vld [vmem:[%s947 + $0x3c] sm:$0xff]
        %v2122 = vld [vmem:[%s947 + $0x44] sm:$0xf]
        %v2123 = vld [vmem:[%s947 + $0x48] sm:$0xff]
        %v2124 = vld [vmem:[%s947 + $0x50] sm:$0xf]
        %v2125 = vld [vmem:[%s947 + $0x54] sm:$0xff]
        %v2126 = vld [vmem:[%s947 + $0x5c] sm:$0xf]
        %v2127 = vld [vmem:[%s947 + $0x60] sm:$0xff]
        %v2128 = vld [vmem:[%s947 + $0x68] sm:$0xf]
        %v2129 = vld [vmem:[%s947 + $0x6c] sm:$0xff]
        %v2130 = vld [vmem:[%s947 + $0x74] sm:$0xf]
        %v2131 = vld [vmem:[%s947 + $0x78] sm:$0xff]
        %v2132 = vld [vmem:[%s947 + $0x80] sm:$0xf]
        %v2133 = vld [vmem:[%s947 + $0x84] sm:$0xff]
        %v2134 = vld [vmem:[%s947 + $0x8c] sm:$0xf]
        %v2135 = vld [vmem:[%s947 + $0x90] sm:$0xff]
        %v2136 = vld [vmem:[%s947 + $0x98] sm:$0xf]
        %v2137 = vld [vmem:[%s947 + $0x9c] sm:$0xff]
        %v2138 = vld [vmem:[%s947 + $0xa4] sm:$0xf]
        %v2139 = vld [vmem:[%s947 + $0xa8] sm:$0xff]
        %v2140 = vld [vmem:[%s947 + $0xb0] sm:$0xf]
        %v2141 = vld [vmem:[%s947 + $0xb4] sm:$0xff]
        %v2142 = vld [vmem:[%s947 + $0xbc] sm:$0xf]
        %v2143 = vld [vmem:[%s1099] sm:$0x7]
        %v2145 = vlaneseq
        %v2146 = vshrl.u32 %v2145, 7
        %v2147 = vsub.s32 0, %v2146
        %v2148 = vrot.slane %v2143, %v2147
        %v2149 = vlaneseq
        %v2150 = vshrl.u32 %v2149, 7
        %v2151 = vsub.s32 1, %v2150
        %v2152 = vrot.slane %v2143, %v2151
        %v2153 = vlaneseq
        %v2154 = vshrl.u32 %v2153, 7
        %v2155 = vsub.s32 2, %v2154
        %v2156 = vrot.slane %v2143, %v2155
        %v2192 = vunpack.c.l.b16 %v2111
        %v2193 = vunpack.c.h.b16 %v2111
        %v2194 = vunpack.c.l.b16 %v2112
        %v2195 = vunpack.c.l.b16 %v2113
        %v2196 = vunpack.c.h.b16 %v2113
        %v2197 = vunpack.c.l.b16 %v2114
        %v2198 = vunpack.c.l.b16 %v2115
        %v2199 = vunpack.c.h.b16 %v2115
        %v2200 = vunpack.c.l.b16 %v2116
        %v2201 = vunpack.c.l.b16 %v2117
        %v2202 = vunpack.c.h.b16 %v2117
        %v2203 = vunpack.c.l.b16 %v2118
        %v2204 = vunpack.c.l.b16 %v2119
        %v2205 = vunpack.c.h.b16 %v2119
        %v2206 = vunpack.c.l.b16 %v2120
        %v2207 = vunpack.c.l.b16 %v2121
        %v2208 = vunpack.c.h.b16 %v2121
        %v2209 = vunpack.c.l.b16 %v2122
        %v2210 = vunpack.c.l.b16 %v2123
        %v2211 = vunpack.c.h.b16 %v2123
        %v2212 = vunpack.c.l.b16 %v2124
        %v2213 = vunpack.c.l.b16 %v2125
        %v2214 = vunpack.c.h.b16 %v2125
        %v2215 = vunpack.c.l.b16 %v2126
        %v2216 = vunpack.c.l.b16 %v2127
        %v2217 = vunpack.c.h.b16 %v2127
        %v2218 = vunpack.c.l.b16 %v2128
        %v2219 = vunpack.c.l.b16 %v2129
        %v2220 = vunpack.c.h.b16 %v2129
        %v2221 = vunpack.c.l.b16 %v2130
        %v2222 = vunpack.c.l.b16 %v2131
        %v2223 = vunpack.c.h.b16 %v2131
        %v2224 = vunpack.c.l.b16 %v2132
        %v2225 = vunpack.c.l.b16 %v2133
        %v2226 = vunpack.c.h.b16 %v2133
        %v2227 = vunpack.c.l.b16 %v2134
        %v2228 = vunpack.c.l.b16 %v2135
        %v2229 = vunpack.c.h.b16 %v2135
        %v2230 = vunpack.c.l.b16 %v2136
        %v2231 = vunpack.c.l.b16 %v2137
        %v2232 = vunpack.c.h.b16 %v2137
        %v2233 = vunpack.c.l.b16 %v2138
        %v2234 = vunpack.c.l.b16 %v2139
        %v2235 = vunpack.c.h.b16 %v2139
        %v2236 = vunpack.c.l.b16 %v2140
        %v2237 = vunpack.c.l.b16 %v2141
        %v2238 = vunpack.c.h.b16 %v2141
        %v2239 = vunpack.c.l.b16 %v2142
        %v2240 = vpack.c.b16 %v2195, %v2192
        %v2241 = vpack.c.b16 %v2196, %v2193
        %v2242 = vpack.c.b16 %v2197, %v2194
        %v2243 = vpack.c.b16 %v2201, %v2198
        %v2244 = vpack.c.b16 %v2202, %v2199
        %v2245 = vpack.c.b16 %v2203, %v2200
        %v2246 = vpack.c.b16 %v2207, %v2204
        %v2247 = vpack.c.b16 %v2208, %v2205
        %v2248 = vpack.c.b16 %v2209, %v2206
        %v2249 = vpack.c.b16 %v2213, %v2210
        %v2250 = vpack.c.b16 %v2214, %v2211
        %v2251 = vpack.c.b16 %v2215, %v2212
        %v2252 = vpack.c.b16 %v2219, %v2216
        %v2253 = vpack.c.b16 %v2220, %v2217
        %v2254 = vpack.c.b16 %v2221, %v2218
        %v2255 = vpack.c.b16 %v2225, %v2222
        %v2256 = vpack.c.b16 %v2226, %v2223
        %v2257 = vpack.c.b16 %v2227, %v2224
        %v2258 = vpack.c.b16 %v2231, %v2228
        %v2259 = vpack.c.b16 %v2232, %v2229
        %v2260 = vpack.c.b16 %v2233, %v2230
        %v2261 = vpack.c.b16 %v2237, %v2234
        %v2262 = vpack.c.b16 %v2238, %v2235
        %v2263 = vpack.c.b16 %v2239, %v2236
        %2288 = vmatprep.subr.bf16.mxu0 %v2262
        %2289 = vmatpush1.bf16.msra.mxu0 %v2261
        %2290 = vmatprep.subr.bf16.mxu0 %v2259
        %2291 = vmatpush1.bf16.msra.mxu0 %v2258
        %2292 = vmatprep.subr.bf16.mxu0 %v2256
        %2293 = vmatpush1.bf16.msra.mxu0 %v2255
        %2294 = vmatprep.subr.bf16.mxu0 %v2253
        %2295 = vmatpush1.bf16.msra.mxu0 %v2252
        %2296 = vmatprep.subr.bf16.mxu0 %v2250
        %2297 = vmatpush1.bf16.msra.mxu0 %v2249
        %2298 = vmatprep.subr.bf16.mxu0 %v2247
        %2299 = vmatpush1.bf16.msra.mxu0 %v2246
        %2300 = vmatprep.subr.bf16.mxu0 %v2244
        %2301 = vmatpush1.bf16.msra.mxu0 %v2243
        %2302 = vmatprep.subr.bf16.mxu0 %v2241
        %2303 = vmatpush1.bf16.msra.mxu0 %v2240
        %2304 = vmatprep.subr.bf16.mxu0 0
        %2305 = vmatpush2.bf16.msra.mxu0 0
        %2306 = vmatprep.subr.bf16.mxu0 0
        %2307 = vmatpush2.bf16.msra.mxu0 0
        %2308 = vmatprep.subr.bf16.mxu0 0
        %2309 = vmatpush2.bf16.msra.mxu0 0
        %2310 = vmatprep.subr.bf16.mxu0 0
        %2311 = vmatpush2.bf16.msra.mxu0 0
        %2312 = vmatprep.subr.bf16.mxu0 0
        %2313 = vmatpush2.bf16.msra.mxu0 0
        %2314 = vmatprep.subr.bf16.mxu0 0
        %2315 = vmatpush2.bf16.msra.mxu0 0
        %2316 = vmatprep.subr.bf16.mxu0 0
        %2317 = vmatpush2.bf16.msra.mxu0 0
        %2318 = vmatprep.subr.bf16.mxu0 0
        %2319 = vmatpush2.bf16.msra.mxu0 0
        %2320 = vmatprep.mubr.bf16.mxu0 0
        %2321 = vmatmul.mubr.bf16.gmra.mxu0 %v2107
        %v2322 = vpop.f32.mrf.mxu0
        %v2323 = vadd.f32 %v2148, %v2322
        %v2324 = vpop.f32.mrf.mxu0
        %v2325 = vadd.f32 %v2152, %v2324
        %v2326 = vpop.f32.mrf.mxu0
        %v2327 = vadd.f32 %v2148, %v2326
        %v2328 = vpop.f32.mrf.mxu0
        %v2329 = vadd.f32 %v2152, %v2328
        %2330 = vmatprep.mubr.bf16.mxu0 0
        %2331 = vmatmul.mubr.bf16.gmra.mxu0 %v2108
        %v2332 = vpop.f32.mrf.mxu0
        %v2333 = vadd.f32 %v2148, %v2332
        %v2334 = vpop.f32.mrf.mxu0
        %v2335 = vadd.f32 %v2152, %v2334
        %v2336 = vpop.f32.mrf.mxu0
        %v2337 = vadd.f32 %v2148, %v2336
        %v2338 = vpop.f32.mrf.mxu0
        %v2339 = vadd.f32 %v2152, %v2338
        %2340 = vmatprep.mubr.bf16.mxu0 0
        %2341 = vmatmul.mubr.bf16.gmra.mxu0 %v2109
        %v2342 = vpop.f32.mrf.mxu0
        %v2343 = vadd.f32 %v2148, %v2342
        %v2344 = vpop.f32.mrf.mxu0
        %v2345 = vadd.f32 %v2152, %v2344
        %v2346 = vpop.f32.mrf.mxu0
        %v2347 = vadd.f32 %v2148, %v2346
        %v2348 = vpop.f32.mrf.mxu0
        %v2349 = vadd.f32 %v2152, %v2348
        %2350 = vmatprep.mubr.bf16.mxu0 0
        %2351 = vmatmul.mubr.bf16.gmra.mxu0 %v2110
        %v2352 = vpop.f32.mrf.mxu0
        %v2353 = vadd.f32 %v2148, %v2352
        %v2354 = vpop.f32.mrf.mxu0
        %v2355 = vadd.f32 %v2152, %v2354
        %v2356 = vpop.f32.mrf.mxu0
        %v2357 = vadd.f32 %v2148, %v2356
        %v2358 = vpop.f32.mrf.mxu0
        %v2359 = vadd.f32 %v2152, %v2358
        %2360 = vdwg.mxu0
        %2361 = vmatprep.subr.bf16.mxu0 0
        %2362 = vmatpush1.bf16.msra.mxu0 %v2263
        %2363 = vmatprep.subr.bf16.mxu0 0
        %2364 = vmatpush1.bf16.msra.mxu0 %v2260
        %2365 = vmatprep.subr.bf16.mxu0 0
        %2366 = vmatpush1.bf16.msra.mxu0 %v2257
        %2367 = vmatprep.subr.bf16.mxu0 0
        %2368 = vmatpush1.bf16.msra.mxu0 %v2254
        %2369 = vmatprep.subr.bf16.mxu0 0
        %2370 = vmatpush1.bf16.msra.mxu0 %v2251
        %2371 = vmatprep.subr.bf16.mxu0 0
        %2372 = vmatpush1.bf16.msra.mxu0 %v2248
        %2373 = vmatprep.subr.bf16.mxu0 0
        %2374 = vmatpush1.bf16.msra.mxu0 %v2245
        %2375 = vmatprep.subr.bf16.mxu0 0
        %2376 = vmatpush1.bf16.msra.mxu0 %v2242
        %2377 = vmatprep.subr.bf16.mxu0 0
        %2378 = vmatpush2.bf16.msra.mxu0 0
        %2379 = vmatprep.subr.bf16.mxu0 0
        %2380 = vmatpush2.bf16.msra.mxu0 0
        %2381 = vmatprep.subr.bf16.mxu0 0
        %2382 = vmatpush2.bf16.msra.mxu0 0
        %2383 = vmatprep.subr.bf16.mxu0 0
        %2384 = vmatpush2.bf16.msra.mxu0 0
        %2385 = vmatprep.subr.bf16.mxu0 0
        %2386 = vmatpush2.bf16.msra.mxu0 0
        %2387 = vmatprep.subr.bf16.mxu0 0
        %2388 = vmatpush2.bf16.msra.mxu0 0
        %2389 = vmatprep.subr.bf16.mxu0 0
        %2390 = vmatpush2.bf16.msra.mxu0 0
        %2391 = vmatprep.subr.bf16.mxu0 0
        %2392 = vmatpush2.bf16.msra.mxu0 0
        %2393 = vmatprep.mubr.bf16.mxu0 0
        %2394 = vmatmul.mubr.bf16.gmra.mxu0 %v2107
        %v2395 = vpop.f32.mrf.mxu0
        %v2396 = vadd.f32 %v2156, %v2395
        %v2397 = vpop.f32.mrf.mxu0
        %v2398 = vpop.f32.mrf.mxu0
        %v2399 = vadd.f32 %v2156, %v2398
        %v2400 = vpop.f32.mrf.mxu0
        %2401 = vmatprep.mubr.bf16.mxu0 0
        %2402 = vmatmul.mubr.bf16.gmra.mxu0 %v2108
        %v2403 = vpop.f32.mrf.mxu0
        %v2404 = vadd.f32 %v2156, %v2403
        %v2405 = vpop.f32.mrf.mxu0
        %v2406 = vpop.f32.mrf.mxu0
        %v2407 = vadd.f32 %v2156, %v2406
        %v2408 = vpop.f32.mrf.mxu0
        %2409 = vmatprep.mubr.bf16.mxu0 0
        %2410 = vmatmul.mubr.bf16.gmra.mxu0 %v2109
        %v2411 = vpop.f32.mrf.mxu0
        %v2412 = vadd.f32 %v2156, %v2411
        %v2413 = vpop.f32.mrf.mxu0
        %v2414 = vpop.f32.mrf.mxu0
        %v2415 = vadd.f32 %v2156, %v2414
        %v2416 = vpop.f32.mrf.mxu0
        %2417 = vmatprep.mubr.bf16.mxu0 0
        %2418 = vmatmul.mubr.bf16.gmra.mxu0 %v2110
        %v2419 = vpop.f32.mrf.mxu0
        %v2420 = vadd.f32 %v2156, %v2419
        %v2421 = vpop.f32.mrf.mxu0
        %v2422 = vpop.f32.mrf.mxu0
        %v2423 = vadd.f32 %v2156, %v2422
        %v2424 = vpop.f32.mrf.mxu0
        %2425 = vdwg.mxu0
        %v2426 = vpack.c.bf16 %v2323, %v2323
        %v2427 = vpack.c.bf16 %v2327, %v2327
        %v2428 = vpack.c.bf16 %v2333, %v2333
        %v2429 = vpack.c.bf16 %v2337, %v2337
        %v2430 = vpack.c.bf16 %v2343, %v2343
        %v2431 = vpack.c.bf16 %v2347, %v2347
        %v2432 = vpack.c.bf16 %v2353, %v2353
        %v2433 = vpack.c.bf16 %v2357, %v2357
        %v2434 = vpack.c.bf16 %v2325, %v2325
        %v2435 = vpack.c.bf16 %v2329, %v2329
        %v2436 = vpack.c.bf16 %v2335, %v2335
        %v2437 = vpack.c.bf16 %v2339, %v2339
        %v2438 = vpack.c.bf16 %v2345, %v2345
        %v2439 = vpack.c.bf16 %v2349, %v2349
        %v2440 = vpack.c.bf16 %v2355, %v2355
        %v2441 = vpack.c.bf16 %v2359, %v2359
        %v2442 = vpack.c.bf16 %v2396, %v2396
        %v2443 = vpack.c.bf16 %v2399, %v2399
        %v2444 = vpack.c.bf16 %v2404, %v2404
        %v2445 = vpack.c.bf16 %v2407, %v2407
        %v2446 = vpack.c.bf16 %v2412, %v2412
        %v2447 = vpack.c.bf16 %v2415, %v2415
        %v2448 = vpack.c.bf16 %v2420, %v2420
        %v2449 = vpack.c.bf16 %v2423, %v2423
        %v2450 = vlaneseq
        %v2451 = vand.u32 %v2450, 127
        %vm2452 = vcmp.lt.s32.totalorder %v2451, 5
        %v2453 = vsel %vm2452, 0.0, -1e+30
        %vm2454 = vcmask 261120
        %v2456 = vsel %vm2454, %v2426, 0
        %v2459 = vsel %vm2454, %v2434, 0
        %2461 = vmatprep.subr.bf16.mxu0 0
        %2462 = vmatpush1.bf16.xpose.msra.mxu0 0
        %2463 = vmatprep.subr.bf16.mxu0 0
        %2464 = vmatpush1.bf16.xpose.msra.mxu0 0
        %2465 = vmatprep.subr.bf16.mxu0 0
        %2466 = vmatpush1.bf16.xpose.msra.mxu0 0
        %2467 = vmatprep.subr.bf16.mxu0 0
        %2468 = vmatpush1.bf16.xpose.msra.mxu0 0
        %2469 = vmatprep.subr.bf16.mxu0 0
        %2470 = vmatpush1.bf16.xpose.msra.mxu0 0
        %2471 = vmatprep.subr.bf16.mxu0 0
        %2472 = vmatpush1.bf16.xpose.msra.mxu0 0
        %2473 = vmatprep.subr.bf16.mxu0 0
        %2474 = vmatpush1.bf16.xpose.msra.mxu0 0
        %2475 = vmatprep.subr.bf16.mxu0 0
        %2476 = vmatpush1.bf16.xpose.msra.mxu0 %v2459
        %2477 = vmatprep.subr.bf16.mxu0 0
        %2478 = vmatpush2.bf16.xpose.msra.mxu0 0
        %2479 = vmatprep.subr.bf16.mxu0 0
        %2480 = vmatpush2.bf16.xpose.msra.mxu0 0
        %2481 = vmatprep.subr.bf16.mxu0 0
        %2482 = vmatpush2.bf16.xpose.msra.mxu0 0
        %2483 = vmatprep.subr.bf16.mxu0 0
        %2484 = vmatpush2.bf16.xpose.msra.mxu0 0
        %2485 = vmatprep.subr.bf16.mxu0 0
        %2486 = vmatpush2.bf16.xpose.msra.mxu0 0
        %2487 = vmatprep.subr.bf16.mxu0 0
        %2488 = vmatpush2.bf16.xpose.msra.mxu0 0
        %2489 = vmatprep.subr.bf16.mxu0 0
        %2490 = vmatpush2.bf16.xpose.msra.mxu0 0
        %2491 = vmatprep.subr.bf16.mxu0 0
        %2492 = vmatpush2.bf16.xpose.msra.mxu0 0
        %2493 = vmatprep.mubr.bf16.mxu0 0
        %2494 = vmatmul.mubr.bf16.gmra.mxu0 %v2456
        %v2495 = vpop.f32.mrf.mxu0
        %v2496 = vadd.f32 %v2453, %v2495
        %v2497 = vpop.f32.mrf.mxu0
        %v2498 = vpop.f32.mrf.mxu0
        %v2499 = vpop.f32.mrf.mxu0
        %2500 = vdwg.mxu0
        %v2502 = vsel %vm2454, %v2427, 0
        %v2505 = vsel %vm2454, %v2435, 0
        %2507 = vmatprep.subr.bf16.mxu0 0
        %2508 = vmatpush1.bf16.xpose.msra.mxu0 0
        %2509 = vmatprep.subr.bf16.mxu0 0
        %2510 = vmatpush1.bf16.xpose.msra.mxu0 0
        %2511 = vmatprep.subr.bf16.mxu0 0
        %2512 = vmatpush1.bf16.xpose.msra.mxu0 0
        %2513 = vmatprep.subr.bf16.mxu0 0
        %2514 = vmatpush1.bf16.xpose.msra.mxu0 0
        %2515 = vmatprep.subr.bf16.mxu0 0
        %2516 = vmatpush1.bf16.xpose.msra.mxu0 0
        %2517 = vmatprep.subr.bf16.mxu0 0
        %2518 = vmatpush1.bf16.xpose.msra.mxu0 0
        %2519 = vmatprep.subr.bf16.mxu0 0
        %2520 = vmatpush1.bf16.xpose.msra.mxu0 0
        %2521 = vmatprep.subr.bf16.mxu0 0
        %2522 = vmatpush1.bf16.xpose.msra.mxu0 %v2505
        %2523 = vmatprep.subr.bf16.mxu0 0
        %2524 = vmatpush2.bf16.xpose.msra.mxu0 0
        %2525 = vmatprep.subr.bf16.mxu0 0
        %2526 = vmatpush2.bf16.xpose.msra.mxu0 0
        %2527 = vmatprep.subr.bf16.mxu0 0
        %2528 = vmatpush2.bf16.xpose.msra.mxu0 0
        %2529 = vmatprep.subr.bf16.mxu0 0
        %2530 = vmatpush2.bf16.xpose.msra.mxu0 0
        %2531 = vmatprep.subr.bf16.mxu0 0
        %2532 = vmatpush2.bf16.xpose.msra.mxu0 0
        %2533 = vmatprep.subr.bf16.mxu0 0
        %2534 = vmatpush2.bf16.xpose.msra.mxu0 0
        %2535 = vmatprep.subr.bf16.mxu0 0
        %2536 = vmatpush2.bf16.xpose.msra.mxu0 0
        %2537 = vmatprep.subr.bf16.mxu0 0
        %2538 = vmatpush2.bf16.xpose.msra.mxu0 0
        %2539 = vmatprep.mubr.bf16.mxu0 0
        %2540 = vmatmul.mubr.bf16.gmra.mxu0 %v2502
        %v2541 = vpop.f32.mrf.mxu0
        %v2542 = vadd.f32 %v2453, %v2541
        %v2543 = vpop.f32.mrf.mxu0
        %v2544 = vpop.f32.mrf.mxu0
        %v2545 = vpop.f32.mrf.mxu0
        %2546 = vdwg.mxu0
        %v2548 = vsel %vm2454, %v2428, 0
        %v2551 = vsel %vm2454, %v2436, 0
        %2553 = vmatprep.subr.bf16.mxu0 0
        %2554 = vmatpush1.bf16.xpose.msra.mxu0 0
        %2555 = vmatprep.subr.bf16.mxu0 0
        %2556 = vmatpush1.bf16.xpose.msra.mxu0 0
        %2557 = vmatprep.subr.bf16.mxu0 0
        %2558 = vmatpush1.bf16.xpose.msra.mxu0 0
        %2559 = vmatprep.subr.bf16.mxu0 0
        %2560 = vmatpush1.bf16.xpose.msra.mxu0 0
        %2561 = vmatprep.subr.bf16.mxu0 0
        %2562 = vmatpush1.bf16.xpose.msra.mxu0 0
        %2563 = vmatprep.subr.bf16.mxu0 0
        %2564 = vmatpush1.bf16.xpose.msra.mxu0 0
        %2565 = vmatprep.subr.bf16.mxu0 0
        %2566 = vmatpush1.bf16.xpose.msra.mxu0 0
        %2567 = vmatprep.subr.bf16.mxu0 0
        %2568 = vmatpush1.bf16.xpose.msra.mxu0 %v2551
        %2569 = vmatprep.subr.bf16.mxu0 0
        %2570 = vmatpush2.bf16.xpose.msra.mxu0 0
        %2571 = vmatprep.subr.bf16.mxu0 0
        %2572 = vmatpush2.bf16.xpose.msra.mxu0 0
        %2573 = vmatprep.subr.bf16.mxu0 0
        %2574 = vmatpush2.bf16.xpose.msra.mxu0 0
        %2575 = vmatprep.subr.bf16.mxu0 0
        %2576 = vmatpush2.bf16.xpose.msra.mxu0 0
        %2577 = vmatprep.subr.bf16.mxu0 0
        %2578 = vmatpush2.bf16.xpose.msra.mxu0 0
        %2579 = vmatprep.subr.bf16.mxu0 0
        %2580 = vmatpush2.bf16.xpose.msra.mxu0 0
        %2581 = vmatprep.subr.bf16.mxu0 0
        %2582 = vmatpush2.bf16.xpose.msra.mxu0 0
        %2583 = vmatprep.subr.bf16.mxu0 0
        %2584 = vmatpush2.bf16.xpose.msra.mxu0 0
        %2585 = vmatprep.mubr.bf16.mxu0 0
        %2586 = vmatmul.mubr.bf16.gmra.mxu0 %v2548
        %v2587 = vpop.f32.mrf.mxu0
        %v2588 = vadd.f32 %v2453, %v2587
        %v2589 = vpop.f32.mrf.mxu0
        %v2590 = vpop.f32.mrf.mxu0
        %v2591 = vpop.f32.mrf.mxu0
        %2592 = vdwg.mxu0
        %v2594 = vsel %vm2454, %v2429, 0
        %v2597 = vsel %vm2454, %v2437, 0
        %2599 = vmatprep.subr.bf16.mxu0 0
        %2600 = vmatpush1.bf16.xpose.msra.mxu0 0
        %2601 = vmatprep.subr.bf16.mxu0 0
        %2602 = vmatpush1.bf16.xpose.msra.mxu0 0
        %2603 = vmatprep.subr.bf16.mxu0 0
        %2604 = vmatpush1.bf16.xpose.msra.mxu0 0
        %2605 = vmatprep.subr.bf16.mxu0 0
        %2606 = vmatpush1.bf16.xpose.msra.mxu0 0
        %2607 = vmatprep.subr.bf16.mxu0 0
        %2608 = vmatpush1.bf16.xpose.msra.mxu0 0
        %2609 = vmatprep.subr.bf16.mxu0 0
        %2610 = vmatpush1.bf16.xpose.msra.mxu0 0
        %2611 = vmatprep.subr.bf16.mxu0 0
        %2612 = vmatpush1.bf16.xpose.msra.mxu0 0
        %2613 = vmatprep.subr.bf16.mxu0 0
        %2614 = vmatpush1.bf16.xpose.msra.mxu0 %v2597
        %2615 = vmatprep.subr.bf16.mxu0 0
        %2616 = vmatpush2.bf16.xpose.msra.mxu0 0
        %2617 = vmatprep.subr.bf16.mxu0 0
        %2618 = vmatpush2.bf16.xpose.msra.mxu0 0
        %2619 = vmatprep.subr.bf16.mxu0 0
        %2620 = vmatpush2.bf16.xpose.msra.mxu0 0
        %2621 = vmatprep.subr.bf16.mxu0 0
        %2622 = vmatpush2.bf16.xpose.msra.mxu0 0
        %2623 = vmatprep.subr.bf16.mxu0 0
        %2624 = vmatpush2.bf16.xpose.msra.mxu0 0
        %2625 = vmatprep.subr.bf16.mxu0 0
        %2626 = vmatpush2.bf16.xpose.msra.mxu0 0
        %2627 = vmatprep.subr.bf16.mxu0 0
        %2628 = vmatpush2.bf16.xpose.msra.mxu0 0
        %2629 = vmatprep.subr.bf16.mxu0 0
        %2630 = vmatpush2.bf16.xpose.msra.mxu0 0
        %2631 = vmatprep.mubr.bf16.mxu0 0
        %2632 = vmatmul.mubr.bf16.gmra.mxu0 %v2594
        %v2633 = vpop.f32.mrf.mxu0
        %v2634 = vadd.f32 %v2453, %v2633
        %v2635 = vpop.f32.mrf.mxu0
        %v2636 = vpop.f32.mrf.mxu0
        %v2637 = vpop.f32.mrf.mxu0
        %2638 = vdwg.mxu0
        %v2640 = vsel %vm2454, %v2430, 0
        %v2643 = vsel %vm2454, %v2438, 0
        %2645 = vmatprep.subr.bf16.mxu0 0
        %2646 = vmatpush1.bf16.xpose.msra.mxu0 0
        %2647 = vmatprep.subr.bf16.mxu0 0
        %2648 = vmatpush1.bf16.xpose.msra.mxu0 0
        %2649 = vmatprep.subr.bf16.mxu0 0
        %2650 = vmatpush1.bf16.xpose.msra.mxu0 0
        %2651 = vmatprep.subr.bf16.mxu0 0
        %2652 = vmatpush1.bf16.xpose.msra.mxu0 0
        %2653 = vmatprep.subr.bf16.mxu0 0
        %2654 = vmatpush1.bf16.xpose.msra.mxu0 0
        %2655 = vmatprep.subr.bf16.mxu0 0
        %2656 = vmatpush1.bf16.xpose.msra.mxu0 0
        %2657 = vmatprep.subr.bf16.mxu0 0
        %2658 = vmatpush1.bf16.xpose.msra.mxu0 0
        %2659 = vmatprep.subr.bf16.mxu0 0
        %2660 = vmatpush1.bf16.xpose.msra.mxu0 %v2643
        %2661 = vmatprep.subr.bf16.mxu0 0
        %2662 = vmatpush2.bf16.xpose.msra.mxu0 0
        %2663 = vmatprep.subr.bf16.mxu0 0
        %2664 = vmatpush2.bf16.xpose.msra.mxu0 0
        %2665 = vmatprep.subr.bf16.mxu0 0
        %2666 = vmatpush2.bf16.xpose.msra.mxu0 0
        %2667 = vmatprep.subr.bf16.mxu0 0
        %2668 = vmatpush2.bf16.xpose.msra.mxu0 0
        %2669 = vmatprep.subr.bf16.mxu0 0
        %2670 = vmatpush2.bf16.xpose.msra.mxu0 0
        %2671 = vmatprep.subr.bf16.mxu0 0
        %2672 = vmatpush2.bf16.xpose.msra.mxu0 0
        %2673 = vmatprep.subr.bf16.mxu0 0
        %2674 = vmatpush2.bf16.xpose.msra.mxu0 0
        %2675 = vmatprep.subr.bf16.mxu0 0
        %2676 = vmatpush2.bf16.xpose.msra.mxu0 0
        %2677 = vmatprep.mubr.bf16.mxu0 0
        %2678 = vmatmul.mubr.bf16.gmra.mxu0 %v2640
        %v2679 = vpop.f32.mrf.mxu0
        %v2680 = vadd.f32 %v2453, %v2679
        %v2681 = vpop.f32.mrf.mxu0
        %v2682 = vpop.f32.mrf.mxu0
        %v2683 = vpop.f32.mrf.mxu0
        %2684 = vdwg.mxu0
        %v2686 = vsel %vm2454, %v2431, 0
        %v2689 = vsel %vm2454, %v2439, 0
        %2691 = vmatprep.subr.bf16.mxu0 0
        %2692 = vmatpush1.bf16.xpose.msra.mxu0 0
        %2693 = vmatprep.subr.bf16.mxu0 0
        %2694 = vmatpush1.bf16.xpose.msra.mxu0 0
        %2695 = vmatprep.subr.bf16.mxu0 0
        %2696 = vmatpush1.bf16.xpose.msra.mxu0 0
        %2697 = vmatprep.subr.bf16.mxu0 0
        %2698 = vmatpush1.bf16.xpose.msra.mxu0 0
        %2699 = vmatprep.subr.bf16.mxu0 0
        %2700 = vmatpush1.bf16.xpose.msra.mxu0 0
        %2701 = vmatprep.subr.bf16.mxu0 0
        %2702 = vmatpush1.bf16.xpose.msra.mxu0 0
        %2703 = vmatprep.subr.bf16.mxu0 0
        %2704 = vmatpush1.bf16.xpose.msra.mxu0 0
        %2705 = vmatprep.subr.bf16.mxu0 0
        %2706 = vmatpush1.bf16.xpose.msra.mxu0 %v2689
        %2707 = vmatprep.subr.bf16.mxu0 0
        %2708 = vmatpush2.bf16.xpose.msra.mxu0 0
        %2709 = vmatprep.subr.bf16.mxu0 0
        %2710 = vmatpush2.bf16.xpose.msra.mxu0 0
        %2711 = vmatprep.subr.bf16.mxu0 0
        %2712 = vmatpush2.bf16.xpose.msra.mxu0 0
        %2713 = vmatprep.subr.bf16.mxu0 0
        %2714 = vmatpush2.bf16.xpose.msra.mxu0 0
        %2715 = vmatprep.subr.bf16.mxu0 0
        %2716 = vmatpush2.bf16.xpose.msra.mxu0 0
        %2717 = vmatprep.subr.bf16.mxu0 0
        %2718 = vmatpush2.bf16.xpose.msra.mxu0 0
        %2719 = vmatprep.subr.bf16.mxu0 0
        %2720 = vmatpush2.bf16.xpose.msra.mxu0 0
        %2721 = vmatprep.subr.bf16.mxu0 0
        %2722 = vmatpush2.bf16.xpose.msra.mxu0 0
        %2723 = vmatprep.mubr.bf16.mxu0 0
        %2724 = vmatmul.mubr.bf16.gmra.mxu0 %v2686
        %v2725 = vpop.f32.mrf.mxu0
        %v2726 = vadd.f32 %v2453, %v2725
        %v2727 = vpop.f32.mrf.mxu0
        %v2728 = vpop.f32.mrf.mxu0
        %v2729 = vpop.f32.mrf.mxu0
        %2730 = vdwg.mxu0
        %v2732 = vsel %vm2454, %v2432, 0
        %v2735 = vsel %vm2454, %v2440, 0
        %2737 = vmatprep.subr.bf16.mxu0 0
        %2738 = vmatpush1.bf16.xpose.msra.mxu0 0
        %2739 = vmatprep.subr.bf16.mxu0 0
        %2740 = vmatpush1.bf16.xpose.msra.mxu0 0
        %2741 = vmatprep.subr.bf16.mxu0 0
        %2742 = vmatpush1.bf16.xpose.msra.mxu0 0
        %2743 = vmatprep.subr.bf16.mxu0 0
        %2744 = vmatpush1.bf16.xpose.msra.mxu0 0
        %2745 = vmatprep.subr.bf16.mxu0 0
        %2746 = vmatpush1.bf16.xpose.msra.mxu0 0
        %2747 = vmatprep.subr.bf16.mxu0 0
        %2748 = vmatpush1.bf16.xpose.msra.mxu0 0
        %2749 = vmatprep.subr.bf16.mxu0 0
        %2750 = vmatpush1.bf16.xpose.msra.mxu0 0
        %2751 = vmatprep.subr.bf16.mxu0 0
        %2752 = vmatpush1.bf16.xpose.msra.mxu0 %v2735
        %2753 = vmatprep.subr.bf16.mxu0 0
        %2754 = vmatpush2.bf16.xpose.msra.mxu0 0
        %2755 = vmatprep.subr.bf16.mxu0 0
        %2756 = vmatpush2.bf16.xpose.msra.mxu0 0
        %2757 = vmatprep.subr.bf16.mxu0 0
        %2758 = vmatpush2.bf16.xpose.msra.mxu0 0
        %2759 = vmatprep.subr.bf16.mxu0 0
        %2760 = vmatpush2.bf16.xpose.msra.mxu0 0
        %2761 = vmatprep.subr.bf16.mxu0 0
        %2762 = vmatpush2.bf16.xpose.msra.mxu0 0
        %2763 = vmatprep.subr.bf16.mxu0 0
        %2764 = vmatpush2.bf16.xpose.msra.mxu0 0
        %2765 = vmatprep.subr.bf16.mxu0 0
        %2766 = vmatpush2.bf16.xpose.msra.mxu0 0
        %2767 = vmatprep.subr.bf16.mxu0 0
        %2768 = vmatpush2.bf16.xpose.msra.mxu0 0
        %2769 = vmatprep.mubr.bf16.mxu0 0
        %2770 = vmatmul.mubr.bf16.gmra.mxu0 %v2732
        %v2771 = vpop.f32.mrf.mxu0
        %v2772 = vadd.f32 %v2453, %v2771
        %v2773 = vpop.f32.mrf.mxu0
        %v2774 = vpop.f32.mrf.mxu0
        %v2775 = vpop.f32.mrf.mxu0
        %2776 = vdwg.mxu0
        %v2778 = vsel %vm2454, %v2433, 0
        %v2781 = vsel %vm2454, %v2441, 0
        %2783 = vmatprep.subr.bf16.mxu0 0
        %2784 = vmatpush1.bf16.xpose.msra.mxu0 0
        %2785 = vmatprep.subr.bf16.mxu0 0
        %2786 = vmatpush1.bf16.xpose.msra.mxu0 0
        %2787 = vmatprep.subr.bf16.mxu0 0
        %2788 = vmatpush1.bf16.xpose.msra.mxu0 0
        %2789 = vmatprep.subr.bf16.mxu0 0
        %2790 = vmatpush1.bf16.xpose.msra.mxu0 0
        %2791 = vmatprep.subr.bf16.mxu0 0
        %2792 = vmatpush1.bf16.xpose.msra.mxu0 0
        %2793 = vmatprep.subr.bf16.mxu0 0
        %2794 = vmatpush1.bf16.xpose.msra.mxu0 0
        %2795 = vmatprep.subr.bf16.mxu0 0
        %2796 = vmatpush1.bf16.xpose.msra.mxu0 0
        %2797 = vmatprep.subr.bf16.mxu0 0
        %2798 = vmatpush1.bf16.xpose.msra.mxu0 %v2781
        %2799 = vmatprep.subr.bf16.mxu0 0
        %2800 = vmatpush2.bf16.xpose.msra.mxu0 0
        %2801 = vmatprep.subr.bf16.mxu0 0
        %2802 = vmatpush2.bf16.xpose.msra.mxu0 0
        %2803 = vmatprep.subr.bf16.mxu0 0
        %2804 = vmatpush2.bf16.xpose.msra.mxu0 0
        %2805 = vmatprep.subr.bf16.mxu0 0
        %2806 = vmatpush2.bf16.xpose.msra.mxu0 0
        %2807 = vmatprep.subr.bf16.mxu0 0
        %2808 = vmatpush2.bf16.xpose.msra.mxu0 0
        %2809 = vmatprep.subr.bf16.mxu0 0
        %2810 = vmatpush2.bf16.xpose.msra.mxu0 0
        %2811 = vmatprep.subr.bf16.mxu0 0
        %2812 = vmatpush2.bf16.xpose.msra.mxu0 0
        %2813 = vmatprep.subr.bf16.mxu0 0
        %2814 = vmatpush2.bf16.xpose.msra.mxu0 0
        %2815 = vmatprep.mubr.bf16.mxu0 0
        %2816 = vmatmul.mubr.bf16.gmra.mxu0 %v2778
        %v2817 = vpop.f32.mrf.mxu0
        %v2818 = vadd.f32 %v2453, %v2817
        %v2819 = vpop.f32.mrf.mxu0
        %v2820 = vpop.f32.mrf.mxu0
        %v2821 = vpop.f32.mrf.mxu0
        %2822 = vdwg.mxu0
        %vm2823 = vcmask 64512
        %v2824 = vsel %vm2823, %v2496, -inf
        %2825 = vmax.xlane.f32.xlu0 %v2824
        %v2826 = vpop.xlane.xlu0 %2825
        %v2827 = vsel %vm2823, %v2542, -inf
        %2828 = vmax.xlane.f32.xlu0 %v2827
        %v2829 = vpop.xlane.xlu0 %2828
        %v2830 = vsel %vm2823, %v2588, -inf
        %2831 = vmax.xlane.f32.xlu0 %v2830
        %v2832 = vpop.xlane.xlu0 %2831
        %v2833 = vsel %vm2823, %v2634, -inf
        %2834 = vmax.xlane.f32.xlu0 %v2833
        %v2835 = vpop.xlane.xlu0 %2834
        %v2836 = vsel %vm2823, %v2680, -inf
        %2837 = vmax.xlane.f32.xlu0 %v2836
        %v2838 = vpop.xlane.xlu0 %2837
        %v2839 = vsel %vm2823, %v2726, -inf
        %2840 = vmax.xlane.f32.xlu0 %v2839
        %v2841 = vpop.xlane.xlu0 %2840
        %v2842 = vsel %vm2823, %v2772, -inf
        %2843 = vmax.xlane.f32.xlu0 %v2842
        %v2844 = vpop.xlane.xlu0 %2843
        %v2845 = vsel %vm2823, %v2818, -inf
        %2846 = vmax.xlane.f32.xlu0 %v2845
        %v2847 = vpop.xlane.xlu0 %2846
        %v2848 = vsub.f32 %v2496, %v2826
        %v2849 = vsub.f32 %v2542, %v2829
        %v2850 = vsub.f32 %v2588, %v2832
        %v2851 = vsub.f32 %v2634, %v2835
        %v2852 = vsub.f32 %v2680, %v2838
        %v2853 = vsub.f32 %v2726, %v2841
        %v2854 = vsub.f32 %v2772, %v2844
        %v2855 = vsub.f32 %v2818, %v2847
        %v2856 = vmul.f32 %v2848, 1.442695
        %v2857 = vpow.pop %v2856
        %v2858 = vmul.f32 %v2849, 1.442695
        %v2859 = vpow.pop %v2858
        %v2860 = vmul.f32 %v2850, 1.442695
        %v2861 = vpow.pop %v2860
        %v2862 = vmul.f32 %v2851, 1.442695
        %v2863 = vpow.pop %v2862
        %v2864 = vmul.f32 %v2852, 1.442695
        %v2865 = vpow.pop %v2864
        %v2866 = vmul.f32 %v2853, 1.442695
        %v2867 = vpow.pop %v2866
        %v2868 = vmul.f32 %v2854, 1.442695
        %v2869 = vpow.pop %v2868
        %v2870 = vmul.f32 %v2855, 1.442695
        %v2871 = vpow.pop %v2870
        %v2872 = vsel %vm2823, %v2857, 0.0
        %2873 = vadd.xlane.f32.xlu0 %v2872
        %v2874 = vpop.xlane.xlu0 %2873
        %v2875 = vsel %vm2823, %v2859, 0.0
        %2876 = vadd.xlane.f32.xlu0 %v2875
        %v2877 = vpop.xlane.xlu0 %2876
        %v2878 = vsel %vm2823, %v2861, 0.0
        %2879 = vadd.xlane.f32.xlu0 %v2878
        %v2880 = vpop.xlane.xlu0 %2879
        %v2881 = vsel %vm2823, %v2863, 0.0
        %2882 = vadd.xlane.f32.xlu0 %v2881
        %v2883 = vpop.xlane.xlu0 %2882
        %v2884 = vsel %vm2823, %v2865, 0.0
        %2885 = vadd.xlane.f32.xlu0 %v2884
        %v2886 = vpop.xlane.xlu0 %2885
        %v2887 = vsel %vm2823, %v2867, 0.0
        %2888 = vadd.xlane.f32.xlu0 %v2887
        %v2889 = vpop.xlane.xlu0 %2888
        %v2890 = vsel %vm2823, %v2869, 0.0
        %2891 = vadd.xlane.f32.xlu0 %v2890
        %v2892 = vpop.xlane.xlu0 %2891
        %v2893 = vsel %vm2823, %v2871, 0.0
        %2894 = vadd.xlane.f32.xlu0 %v2893
        %v2895 = vpop.xlane.xlu0 %2894
        %v2896 = vrcp.pop %v2874
        %v2897 = vrcp.pop %v2877
        %v2898 = vrcp.pop %v2880
        %v2899 = vrcp.pop %v2883
        %v2900 = vrcp.pop %v2886
        %v2901 = vrcp.pop %v2889
        %v2902 = vrcp.pop %v2892
        %v2903 = vrcp.pop %v2895
        %v2904 = vmul.f32 %v2857, %v2896
        %v2905 = vmul.f32 %v2859, %v2897
        %v2906 = vmul.f32 %v2861, %v2898
        %v2907 = vmul.f32 %v2863, %v2899
        %v2908 = vmul.f32 %v2865, %v2900
        %v2909 = vmul.f32 %v2867, %v2901
        %v2910 = vmul.f32 %v2869, %v2902
        %v2911 = vmul.f32 %v2871, %v2903
        %v2912 = vpack.c.bf16 %v2904, %v2904
        %v2913 = vpack.c.bf16 %v2905, %v2905
        %v2914 = vpack.c.bf16 %v2906, %v2906
        %v2915 = vpack.c.bf16 %v2907, %v2907
        %v2916 = vpack.c.bf16 %v2908, %v2908
        %v2917 = vpack.c.bf16 %v2909, %v2909
        %v2918 = vpack.c.bf16 %v2910, %v2910
        %v2919 = vpack.c.bf16 %v2911, %v2911
        %v2921 = vsel %vm2823, %v2912, 0
        %vm2923 = vcmask 1043456
        %v2925 = vsel %vm2923, %v2442, 0
        %2927 = vmatprep.subr.bf16.mxu0 0
        %2928 = vmatpush1.bf16.msra.mxu0 0
        %2929 = vmatprep.subr.bf16.mxu0 0
        %2930 = vmatpush1.bf16.msra.mxu0 0
        %2931 = vmatprep.subr.bf16.mxu0 0
        %2932 = vmatpush1.bf16.msra.mxu0 0
        %2933 = vmatprep.subr.bf16.mxu0 0
        %2934 = vmatpush1.bf16.msra.mxu0 0
        %2935 = vmatprep.subr.bf16.mxu0 0
        %2936 = vmatpush1.bf16.msra.mxu0 0
        %2937 = vmatprep.subr.bf16.mxu0 0
        %2938 = vmatpush1.bf16.msra.mxu0 0
        %2939 = vmatprep.subr.bf16.mxu0 0
        %2940 = vmatpush1.bf16.msra.mxu0 0
        %2941 = vmatprep.subr.bf16.mxu0 0
        %2942 = vmatpush1.bf16.msra.mxu0 %v2925
        %2943 = vmatprep.subr.bf16.mxu0 0
        %2944 = vmatpush2.bf16.msra.mxu0 0
        %2945 = vmatprep.subr.bf16.mxu0 0
        %2946 = vmatpush2.bf16.msra.mxu0 0
        %2947 = vmatprep.subr.bf16.mxu0 0
        %2948 = vmatpush2.bf16.msra.mxu0 0
        %2949 = vmatprep.subr.bf16.mxu0 0
        %2950 = vmatpush2.bf16.msra.mxu0 0
        %2951 = vmatprep.subr.bf16.mxu0 0
        %2952 = vmatpush2.bf16.msra.mxu0 0
        %2953 = vmatprep.subr.bf16.mxu0 0
        %2954 = vmatpush2.bf16.msra.mxu0 0
        %2955 = vmatprep.subr.bf16.mxu0 0
        %2956 = vmatpush2.bf16.msra.mxu0 0
        %2957 = vmatprep.subr.bf16.mxu0 0
        %2958 = vmatpush2.bf16.msra.mxu0 0
        %2959 = vmatprep.mubr.bf16.mxu0 0
        %2960 = vmatmul.mubr.bf16.gmra.mxu0 %v2921
        %v2961 = vpop.f32.mrf.mxu0
        %v2962 = vadd.f32 0.0, %v2961
        %v2963 = vpop.f32.mrf.mxu0
        %v2964 = vpop.f32.mrf.mxu0
        %v2965 = vpop.f32.mrf.mxu0
        %2966 = vdwg.mxu0
        %v2968 = vsel %vm2823, %v2913, 0
        %v2971 = vsel %vm2923, %v2443, 0
        %2973 = vmatprep.subr.bf16.mxu0 0
        %2974 = vmatpush1.bf16.msra.mxu0 0
        %2975 = vmatprep.subr.bf16.mxu0 0
        %2976 = vmatpush1.bf16.msra.mxu0 0
        %2977 = vmatprep.subr.bf16.mxu0 0
        %2978 = vmatpush1.bf16.msra.mxu0 0
        %2979 = vmatprep.subr.bf16.mxu0 0
        %2980 = vmatpush1.bf16.msra.mxu0 0
        %2981 = vmatprep.subr.bf16.mxu0 0
        %2982 = vmatpush1.bf16.msra.mxu0 0
        %2983 = vmatprep.subr.bf16.mxu0 0
        %2984 = vmatpush1.bf16.msra.mxu0 0
        %2985 = vmatprep.subr.bf16.mxu0 0
        %2986 = vmatpush1.bf16.msra.mxu0 0
        %2987 = vmatprep.subr.bf16.mxu0 0
        %2988 = vmatpush1.bf16.msra.mxu0 %v2971
        %2989 = vmatprep.subr.bf16.mxu0 0
        %2990 = vmatpush2.bf16.msra.mxu0 0
        %2991 = vmatprep.subr.bf16.mxu0 0
        %2992 = vmatpush2.bf16.msra.mxu0 0
        %2993 = vmatprep.subr.bf16.mxu0 0
        %2994 = vmatpush2.bf16.msra.mxu0 0
        %2995 = vmatprep.subr.bf16.mxu0 0
        %2996 = vmatpush2.bf16.msra.mxu0 0
        %2997 = vmatprep.subr.bf16.mxu0 0
        %2998 = vmatpush2.bf16.msra.mxu0 0
        %2999 = vmatprep.subr.bf16.mxu0 0
        %3000 = vmatpush2.bf16.msra.mxu0 0
        %3001 = vmatprep.subr.bf16.mxu0 0
        %3002 = vmatpush2.bf16.msra.mxu0 0
        %3003 = vmatprep.subr.bf16.mxu0 0
        %3004 = vmatpush2.bf16.msra.mxu0 0
        %3005 = vmatprep.mubr.bf16.mxu0 0
        %3006 = vmatmul.mubr.bf16.gmra.mxu0 %v2968
        %v3007 = vpop.f32.mrf.mxu0
        %v3008 = vadd.f32 0.0, %v3007
        %v3009 = vpop.f32.mrf.mxu0
        %v3010 = vpop.f32.mrf.mxu0
        %v3011 = vpop.f32.mrf.mxu0
        %3012 = vdwg.mxu0
        %v3014 = vsel %vm2823, %v2914, 0
        %v3017 = vsel %vm2923, %v2444, 0
        %3019 = vmatprep.subr.bf16.mxu0 0
        %3020 = vmatpush1.bf16.msra.mxu0 0
        %3021 = vmatprep.subr.bf16.mxu0 0
        %3022 = vmatpush1.bf16.msra.mxu0 0
        %3023 = vmatprep.subr.bf16.mxu0 0
        %3024 = vmatpush1.bf16.msra.mxu0 0
        %3025 = vmatprep.subr.bf16.mxu0 0
        %3026 = vmatpush1.bf16.msra.mxu0 0
        %3027 = vmatprep.subr.bf16.mxu0 0
        %3028 = vmatpush1.bf16.msra.mxu0 0
        %3029 = vmatprep.subr.bf16.mxu0 0
        %3030 = vmatpush1.bf16.msra.mxu0 0
        %3031 = vmatprep.subr.bf16.mxu0 0
        %3032 = vmatpush1.bf16.msra.mxu0 0
        %3033 = vmatprep.subr.bf16.mxu0 0
        %3034 = vmatpush1.bf16.msra.mxu0 %v3017
        %3035 = vmatprep.subr.bf16.mxu0 0
        %3036 = vmatpush2.bf16.msra.mxu0 0
        %3037 = vmatprep.subr.bf16.mxu0 0
        %3038 = vmatpush2.bf16.msra.mxu0 0
        %3039 = vmatprep.subr.bf16.mxu0 0
        %3040 = vmatpush2.bf16.msra.mxu0 0
        %3041 = vmatprep.subr.bf16.mxu0 0
        %3042 = vmatpush2.bf16.msra.mxu0 0
        %3043 = vmatprep.subr.bf16.mxu0 0
        %3044 = vmatpush2.bf16.msra.mxu0 0
        %3045 = vmatprep.subr.bf16.mxu0 0
        %3046 = vmatpush2.bf16.msra.mxu0 0
        %3047 = vmatprep.subr.bf16.mxu0 0
        %3048 = vmatpush2.bf16.msra.mxu0 0
        %3049 = vmatprep.subr.bf16.mxu0 0
        %3050 = vmatpush2.bf16.msra.mxu0 0
        %3051 = vmatprep.mubr.bf16.mxu0 0
        %3052 = vmatmul.mubr.bf16.gmra.mxu0 %v3014
        %v3053 = vpop.f32.mrf.mxu0
        %v3054 = vadd.f32 0.0, %v3053
        %v3055 = vpop.f32.mrf.mxu0
        %v3056 = vpop.f32.mrf.mxu0
        %v3057 = vpop.f32.mrf.mxu0
        %3058 = vdwg.mxu0
        %v3060 = vsel %vm2823, %v2915, 0
        %v3063 = vsel %vm2923, %v2445, 0
        %3065 = vmatprep.subr.bf16.mxu0 0
        %3066 = vmatpush1.bf16.msra.mxu0 0
        %3067 = vmatprep.subr.bf16.mxu0 0
        %3068 = vmatpush1.bf16.msra.mxu0 0
        %3069 = vmatprep.subr.bf16.mxu0 0
        %3070 = vmatpush1.bf16.msra.mxu0 0
        %3071 = vmatprep.subr.bf16.mxu0 0
        %3072 = vmatpush1.bf16.msra.mxu0 0
        %3073 = vmatprep.subr.bf16.mxu0 0
        %3074 = vmatpush1.bf16.msra.mxu0 0
        %3075 = vmatprep.subr.bf16.mxu0 0
        %3076 = vmatpush1.bf16.msra.mxu0 0
        %3077 = vmatprep.subr.bf16.mxu0 0
        %3078 = vmatpush1.bf16.msra.mxu0 0
        %3079 = vmatprep.subr.bf16.mxu0 0
        %3080 = vmatpush1.bf16.msra.mxu0 %v3063
        %3081 = vmatprep.subr.bf16.mxu0 0
        %3082 = vmatpush2.bf16.msra.mxu0 0
        %3083 = vmatprep.subr.bf16.mxu0 0
        %3084 = vmatpush2.bf16.msra.mxu0 0
        %3085 = vmatprep.subr.bf16.mxu0 0
        %3086 = vmatpush2.bf16.msra.mxu0 0
        %3087 = vmatprep.subr.bf16.mxu0 0
        %3088 = vmatpush2.bf16.msra.mxu0 0
        %3089 = vmatprep.subr.bf16.mxu0 0
        %3090 = vmatpush2.bf16.msra.mxu0 0
        %3091 = vmatprep.subr.bf16.mxu0 0
        %3092 = vmatpush2.bf16.msra.mxu0 0
        %3093 = vmatprep.subr.bf16.mxu0 0
        %3094 = vmatpush2.bf16.msra.mxu0 0
        %3095 = vmatprep.subr.bf16.mxu0 0
        %3096 = vmatpush2.bf16.msra.mxu0 0
        %3097 = vmatprep.mubr.bf16.mxu0 0
        %3098 = vmatmul.mubr.bf16.gmra.mxu0 %v3060
        %v3099 = vpop.f32.mrf.mxu0
        %v3100 = vadd.f32 0.0, %v3099
        %v3101 = vpop.f32.mrf.mxu0
        %v3102 = vpop.f32.mrf.mxu0
        %v3103 = vpop.f32.mrf.mxu0
        %3104 = vdwg.mxu0
        %v3106 = vsel %vm2823, %v2916, 0
        %v3109 = vsel %vm2923, %v2446, 0
        %3111 = vmatprep.subr.bf16.mxu0 0
        %3112 = vmatpush1.bf16.msra.mxu0 0
        %3113 = vmatprep.subr.bf16.mxu0 0
        %3114 = vmatpush1.bf16.msra.mxu0 0
        %3115 = vmatprep.subr.bf16.mxu0 0
        %3116 = vmatpush1.bf16.msra.mxu0 0
        %3117 = vmatprep.subr.bf16.mxu0 0
        %3118 = vmatpush1.bf16.msra.mxu0 0
        %3119 = vmatprep.subr.bf16.mxu0 0
        %3120 = vmatpush1.bf16.msra.mxu0 0
        %3121 = vmatprep.subr.bf16.mxu0 0
        %3122 = vmatpush1.bf16.msra.mxu0 0
        %3123 = vmatprep.subr.bf16.mxu0 0
        %3124 = vmatpush1.bf16.msra.mxu0 0
        %3125 = vmatprep.subr.bf16.mxu0 0
        %3126 = vmatpush1.bf16.msra.mxu0 %v3109
        %3127 = vmatprep.subr.bf16.mxu0 0
        %3128 = vmatpush2.bf16.msra.mxu0 0
        %3129 = vmatprep.subr.bf16.mxu0 0
        %3130 = vmatpush2.bf16.msra.mxu0 0
        %3131 = vmatprep.subr.bf16.mxu0 0
        %3132 = vmatpush2.bf16.msra.mxu0 0
        %3133 = vmatprep.subr.bf16.mxu0 0
        %3134 = vmatpush2.bf16.msra.mxu0 0
        %3135 = vmatprep.subr.bf16.mxu0 0
        %3136 = vmatpush2.bf16.msra.mxu0 0
        %3137 = vmatprep.subr.bf16.mxu0 0
        %3138 = vmatpush2.bf16.msra.mxu0 0
        %3139 = vmatprep.subr.bf16.mxu0 0
        %3140 = vmatpush2.bf16.msra.mxu0 0
        %3141 = vmatprep.subr.bf16.mxu0 0
        %3142 = vmatpush2.bf16.msra.mxu0 0
        %3143 = vmatprep.mubr.bf16.mxu0 0
        %3144 = vmatmul.mubr.bf16.gmra.mxu0 %v3106
        %v3145 = vpop.f32.mrf.mxu0
        %v3146 = vadd.f32 0.0, %v3145
        %v3147 = vpop.f32.mrf.mxu0
        %v3148 = vpop.f32.mrf.mxu0
        %v3149 = vpop.f32.mrf.mxu0
        %3150 = vdwg.mxu0
        %v3152 = vsel %vm2823, %v2917, 0
        %v3155 = vsel %vm2923, %v2447, 0
        %3157 = vmatprep.subr.bf16.mxu0 0
        %3158 = vmatpush1.bf16.msra.mxu0 0
        %3159 = vmatprep.subr.bf16.mxu0 0
        %3160 = vmatpush1.bf16.msra.mxu0 0
        %3161 = vmatprep.subr.bf16.mxu0 0
        %3162 = vmatpush1.bf16.msra.mxu0 0
        %3163 = vmatprep.subr.bf16.mxu0 0
        %3164 = vmatpush1.bf16.msra.mxu0 0
        %3165 = vmatprep.subr.bf16.mxu0 0
        %3166 = vmatpush1.bf16.msra.mxu0 0
        %3167 = vmatprep.subr.bf16.mxu0 0
        %3168 = vmatpush1.bf16.msra.mxu0 0
        %3169 = vmatprep.subr.bf16.mxu0 0
        %3170 = vmatpush1.bf16.msra.mxu0 0
        %3171 = vmatprep.subr.bf16.mxu0 0
        %3172 = vmatpush1.bf16.msra.mxu0 %v3155
        %3173 = vmatprep.subr.bf16.mxu0 0
        %3174 = vmatpush2.bf16.msra.mxu0 0
        %3175 = vmatprep.subr.bf16.mxu0 0
        %3176 = vmatpush2.bf16.msra.mxu0 0
        %3177 = vmatprep.subr.bf16.mxu0 0
        %3178 = vmatpush2.bf16.msra.mxu0 0
        %3179 = vmatprep.subr.bf16.mxu0 0
        %3180 = vmatpush2.bf16.msra.mxu0 0
        %3181 = vmatprep.subr.bf16.mxu0 0
        %3182 = vmatpush2.bf16.msra.mxu0 0
        %3183 = vmatprep.subr.bf16.mxu0 0
        %3184 = vmatpush2.bf16.msra.mxu0 0
        %3185 = vmatprep.subr.bf16.mxu0 0
        %3186 = vmatpush2.bf16.msra.mxu0 0
        %3187 = vmatprep.subr.bf16.mxu0 0
        %3188 = vmatpush2.bf16.msra.mxu0 0
        %3189 = vmatprep.mubr.bf16.mxu0 0
        %3190 = vmatmul.mubr.bf16.gmra.mxu0 %v3152
        %v3191 = vpop.f32.mrf.mxu0
        %v3192 = vadd.f32 0.0, %v3191
        %v3193 = vpop.f32.mrf.mxu0
        %v3194 = vpop.f32.mrf.mxu0
        %v3195 = vpop.f32.mrf.mxu0
        %3196 = vdwg.mxu0
        %v3198 = vsel %vm2823, %v2918, 0
        %v3201 = vsel %vm2923, %v2448, 0
        %3203 = vmatprep.subr.bf16.mxu0 0
        %3204 = vmatpush1.bf16.msra.mxu0 0
        %3205 = vmatprep.subr.bf16.mxu0 0
        %3206 = vmatpush1.bf16.msra.mxu0 0
        %3207 = vmatprep.subr.bf16.mxu0 0
        %3208 = vmatpush1.bf16.msra.mxu0 0
        %3209 = vmatprep.subr.bf16.mxu0 0
        %3210 = vmatpush1.bf16.msra.mxu0 0
        %3211 = vmatprep.subr.bf16.mxu0 0
        %3212 = vmatpush1.bf16.msra.mxu0 0
        %3213 = vmatprep.subr.bf16.mxu0 0
        %3214 = vmatpush1.bf16.msra.mxu0 0
        %3215 = vmatprep.subr.bf16.mxu0 0
        %3216 = vmatpush1.bf16.msra.mxu0 0
        %3217 = vmatprep.subr.bf16.mxu0 0
        %3218 = vmatpush1.bf16.msra.mxu0 %v3201
        %3219 = vmatprep.subr.bf16.mxu0 0
        %3220 = vmatpush2.bf16.msra.mxu0 0
        %3221 = vmatprep.subr.bf16.mxu0 0
        %3222 = vmatpush2.bf16.msra.mxu0 0
        %3223 = vmatprep.subr.bf16.mxu0 0
        %3224 = vmatpush2.bf16.msra.mxu0 0
        %3225 = vmatprep.subr.bf16.mxu0 0
        %3226 = vmatpush2.bf16.msra.mxu0 0
        %3227 = vmatprep.subr.bf16.mxu0 0
        %3228 = vmatpush2.bf16.msra.mxu0 0
        %3229 = vmatprep.subr.bf16.mxu0 0
        %3230 = vmatpush2.bf16.msra.mxu0 0
        %3231 = vmatprep.subr.bf16.mxu0 0
        %3232 = vmatpush2.bf16.msra.mxu0 0
        %3233 = vmatprep.subr.bf16.mxu0 0
        %3234 = vmatpush2.bf16.msra.mxu0 0
        %3235 = vmatprep.mubr.bf16.mxu0 0
        %3236 = vmatmul.mubr.bf16.gmra.mxu0 %v3198
        %v3237 = vpop.f32.mrf.mxu0
        %v3238 = vadd.f32 0.0, %v3237
        %v3239 = vpop.f32.mrf.mxu0
        %v3240 = vpop.f32.mrf.mxu0
        %v3241 = vpop.f32.mrf.mxu0
        %3242 = vdwg.mxu0
        %v3244 = vsel %vm2823, %v2919, 0
        %v3247 = vsel %vm2923, %v2449, 0
        %3249 = vmatprep.subr.bf16.mxu0 0
        %3250 = vmatpush1.bf16.msra.mxu0 0
        %3251 = vmatprep.subr.bf16.mxu0 0
        %3252 = vmatpush1.bf16.msra.mxu0 0
        %3253 = vmatprep.subr.bf16.mxu0 0
        %3254 = vmatpush1.bf16.msra.mxu0 0
        %3255 = vmatprep.subr.bf16.mxu0 0
        %3256 = vmatpush1.bf16.msra.mxu0 0
        %3257 = vmatprep.subr.bf16.mxu0 0
        %3258 = vmatpush1.bf16.msra.mxu0 0
        %3259 = vmatprep.subr.bf16.mxu0 0
        %3260 = vmatpush1.bf16.msra.mxu0 0
        %3261 = vmatprep.subr.bf16.mxu0 0
        %3262 = vmatpush1.bf16.msra.mxu0 0
        %3263 = vmatprep.subr.bf16.mxu0 0
        %3264 = vmatpush1.bf16.msra.mxu0 %v3247
        %3265 = vmatprep.subr.bf16.mxu0 0
        %3266 = vmatpush2.bf16.msra.mxu0 0
        %3267 = vmatprep.subr.bf16.mxu0 0
        %3268 = vmatpush2.bf16.msra.mxu0 0
        %3269 = vmatprep.subr.bf16.mxu0 0
        %3270 = vmatpush2.bf16.msra.mxu0 0
        %3271 = vmatprep.subr.bf16.mxu0 0
        %3272 = vmatpush2.bf16.msra.mxu0 0
        %3273 = vmatprep.subr.bf16.mxu0 0
        %3274 = vmatpush2.bf16.msra.mxu0 0
        %3275 = vmatprep.subr.bf16.mxu0 0
        %3276 = vmatpush2.bf16.msra.mxu0 0
        %3277 = vmatprep.subr.bf16.mxu0 0
        %3278 = vmatpush2.bf16.msra.mxu0 0
        %3279 = vmatprep.subr.bf16.mxu0 0
        %3280 = vmatpush2.bf16.msra.mxu0 0
        %3281 = vmatprep.mubr.bf16.mxu0 0
        %3282 = vmatmul.mubr.bf16.gmra.mxu0 %v3244
        %v3283 = vpop.f32.mrf.mxu0
        %v3284 = vadd.f32 0.0, %v3283
        %v3285 = vpop.f32.mrf.mxu0
        %v3286 = vpop.f32.mrf.mxu0
        %v3287 = vpop.f32.mrf.mxu0
        %3288 = vdwg.mxu0
        %v3289 = vpack.c.bf16 %v3008, %v2962
        %v3290 = vpack.c.bf16 %v3100, %v3054
        %v3291 = vpack.c.bf16 %v3192, %v3146
        %v3292 = vpack.c.bf16 %v3284, %v3238
        %v3297 = vunpack.c.l.b16 %v3289
        %v3298 = vunpack.c.h.b16 %v3289
        %v3299 = vunpack.c.l.b16 %v3290
        %v3300 = vunpack.c.h.b16 %v3290
        %v3301 = vunpack.c.l.b16 %v3291
        %v3302 = vunpack.c.h.b16 %v3291
        %v3303 = vunpack.c.l.b16 %v3292
        %v3304 = vunpack.c.h.b16 %v3292
        %v3305 = vpack.c.b16 %v3297, %v3297
        %v3306 = vpack.c.b16 %v3298, %v3298
        %v3307 = vpack.c.b16 %v3299, %v3299
        %v3308 = vpack.c.b16 %v3300, %v3300
        %v3309 = vpack.c.b16 %v3301, %v3301
        %v3310 = vpack.c.b16 %v3302, %v3302
        %v3311 = vpack.c.b16 %v3303, %v3303
        %v3312 = vpack.c.b16 %v3304, %v3304
        %vm3321 = vcmask 257024
        %3322 = vst.msk [vmem:[#allocation3] sm:$0xf] %vm3321, %v3305
        %3323 = vst.msk [vmem:[#allocation3 + $0x4] sm:$0xf] %vm3321, %v3306
        %3324 = vst.msk [vmem:[#allocation3 + $0x8] sm:$0xf] %vm3321, %v3307
        %3325 = vst.msk [vmem:[#allocation3 + $0xc] sm:$0xf] %vm3321, %v3308
        %3326 = vst.msk [vmem:[#allocation3 + $0x10] sm:$0xf] %vm3321, %v3309
        %3327 = vst.msk [vmem:[#allocation3 + $0x14] sm:$0xf] %vm3321, %v3310
        %3328 = vst.msk [vmem:[#allocation3 + $0x18] sm:$0xf] %vm3321, %v3311
        %3329 = vst.msk [vmem:[#allocation3 + $0x1c] sm:$0xf] %vm3321, %v3312
        %3331 = vrot.lane.b32.xlu0 %v2426, 96
        %v3332 = vpop.permute.xlu0 %3331
        %3334 = vrot.lane.b32.xlu0 %v2434, 96
        %v3335 = vpop.permute.xlu0 %3334
        %v3337 = vsel %vm2454, %v3332, 0
        %v3340 = vsel %vm2454, %v3335, 0
        %3342 = vmatprep.subr.bf16.mxu0 0
        %3343 = vmatpush1.bf16.xpose.msra.mxu0 0
        %3344 = vmatprep.subr.bf16.mxu0 0
        %3345 = vmatpush1.bf16.xpose.msra.mxu0 0
        %3346 = vmatprep.subr.bf16.mxu0 0
        %3347 = vmatpush1.bf16.xpose.msra.mxu0 0
        %3348 = vmatprep.subr.bf16.mxu0 0
        %3349 = vmatpush1.bf16.xpose.msra.mxu0 0
        %3350 = vmatprep.subr.bf16.mxu0 0
        %3351 = vmatpush1.bf16.xpose.msra.mxu0 0
        %3352 = vmatprep.subr.bf16.mxu0 0
        %3353 = vmatpush1.bf16.xpose.msra.mxu0 0
        %3354 = vmatprep.subr.bf16.mxu0 0
        %3355 = vmatpush1.bf16.xpose.msra.mxu0 0
        %3356 = vmatprep.subr.bf16.mxu0 0
        %3357 = vmatpush1.bf16.xpose.msra.mxu0 %v3340
        %3358 = vmatprep.subr.bf16.mxu0 0
        %3359 = vmatpush2.bf16.xpose.msra.mxu0 0
        %3360 = vmatprep.subr.bf16.mxu0 0
        %3361 = vmatpush2.bf16.xpose.msra.mxu0 0
        %3362 = vmatprep.subr.bf16.mxu0 0
        %3363 = vmatpush2.bf16.xpose.msra.mxu0 0
        %3364 = vmatprep.subr.bf16.mxu0 0
        %3365 = vmatpush2.bf16.xpose.msra.mxu0 0
        %3366 = vmatprep.subr.bf16.mxu0 0
        %3367 = vmatpush2.bf16.xpose.msra.mxu0 0
        %3368 = vmatprep.subr.bf16.mxu0 0
        %3369 = vmatpush2.bf16.xpose.msra.mxu0 0
        %3370 = vmatprep.subr.bf16.mxu0 0
        %3371 = vmatpush2.bf16.xpose.msra.mxu0 0
        %3372 = vmatprep.subr.bf16.mxu0 0
        %3373 = vmatpush2.bf16.xpose.msra.mxu0 0
        %3374 = vmatprep.mubr.bf16.mxu0 0
        %3375 = vmatmul.mubr.bf16.gmra.mxu0 %v3337
        %v3376 = vpop.f32.mrf.mxu0
        %v3377 = vadd.f32 %v2453, %v3376
        %v3378 = vpop.f32.mrf.mxu0
        %v3379 = vpop.f32.mrf.mxu0
        %v3380 = vpop.f32.mrf.mxu0
        %3381 = vdwg.mxu0
        %3383 = vrot.lane.b32.xlu0 %v2427, 96
        %v3384 = vpop.permute.xlu0 %3383
        %3386 = vrot.lane.b32.xlu0 %v2435, 96
        %v3387 = vpop.permute.xlu0 %3386
        %v3389 = vsel %vm2454, %v3384, 0
        %v3392 = vsel %vm2454, %v3387, 0
        %3394 = vmatprep.subr.bf16.mxu0 0
        %3395 = vmatpush1.bf16.xpose.msra.mxu0 0
        %3396 = vmatprep.subr.bf16.mxu0 0
        %3397 = vmatpush1.bf16.xpose.msra.mxu0 0
        %3398 = vmatprep.subr.bf16.mxu0 0
        %3399 = vmatpush1.bf16.xpose.msra.mxu0 0
        %3400 = vmatprep.subr.bf16.mxu0 0
        %3401 = vmatpush1.bf16.xpose.msra.mxu0 0
        %3402 = vmatprep.subr.bf16.mxu0 0
        %3403 = vmatpush1.bf16.xpose.msra.mxu0 0
        %3404 = vmatprep.subr.bf16.mxu0 0
        %3405 = vmatpush1.bf16.xpose.msra.mxu0 0
        %3406 = vmatprep.subr.bf16.mxu0 0
        %3407 = vmatpush1.bf16.xpose.msra.mxu0 0
        %3408 = vmatprep.subr.bf16.mxu0 0
        %3409 = vmatpush1.bf16.xpose.msra.mxu0 %v3392
        %3410 = vmatprep.subr.bf16.mxu0 0
        %3411 = vmatpush2.bf16.xpose.msra.mxu0 0
        %3412 = vmatprep.subr.bf16.mxu0 0
        %3413 = vmatpush2.bf16.xpose.msra.mxu0 0
        %3414 = vmatprep.subr.bf16.mxu0 0
        %3415 = vmatpush2.bf16.xpose.msra.mxu0 0
        %3416 = vmatprep.subr.bf16.mxu0 0
        %3417 = vmatpush2.bf16.xpose.msra.mxu0 0
        %3418 = vmatprep.subr.bf16.mxu0 0
        %3419 = vmatpush2.bf16.xpose.msra.mxu0 0
        %3420 = vmatprep.subr.bf16.mxu0 0
        %3421 = vmatpush2.bf16.xpose.msra.mxu0 0
        %3422 = vmatprep.subr.bf16.mxu0 0
        %3423 = vmatpush2.bf16.xpose.msra.mxu0 0
        %3424 = vmatprep.subr.bf16.mxu0 0
        %3425 = vmatpush2.bf16.xpose.msra.mxu0 0
        %3426 = vmatprep.mubr.bf16.mxu0 0
        %3427 = vmatmul.mubr.bf16.gmra.mxu0 %v3389
        %v3428 = vpop.f32.mrf.mxu0
        %v3429 = vadd.f32 %v2453, %v3428
        %v3430 = vpop.f32.mrf.mxu0
        %v3431 = vpop.f32.mrf.mxu0
        %v3432 = vpop.f32.mrf.mxu0
        %3433 = vdwg.mxu0
        %3435 = vrot.lane.b32.xlu0 %v2428, 96
        %v3436 = vpop.permute.xlu0 %3435
        %3438 = vrot.lane.b32.xlu0 %v2436, 96
        %v3439 = vpop.permute.xlu0 %3438
        %v3441 = vsel %vm2454, %v3436, 0
        %v3444 = vsel %vm2454, %v3439, 0
        %3446 = vmatprep.subr.bf16.mxu0 0
        %3447 = vmatpush1.bf16.xpose.msra.mxu0 0
        %3448 = vmatprep.subr.bf16.mxu0 0
        %3449 = vmatpush1.bf16.xpose.msra.mxu0 0
        %3450 = vmatprep.subr.bf16.mxu0 0
        %3451 = vmatpush1.bf16.xpose.msra.mxu0 0
        %3452 = vmatprep.subr.bf16.mxu0 0
        %3453 = vmatpush1.bf16.xpose.msra.mxu0 0
        %3454 = vmatprep.subr.bf16.mxu0 0
        %3455 = vmatpush1.bf16.xpose.msra.mxu0 0
        %3456 = vmatprep.subr.bf16.mxu0 0
        %3457 = vmatpush1.bf16.xpose.msra.mxu0 0
        %3458 = vmatprep.subr.bf16.mxu0 0
        %3459 = vmatpush1.bf16.xpose.msra.mxu0 0
        %3460 = vmatprep.subr.bf16.mxu0 0
        %3461 = vmatpush1.bf16.xpose.msra.mxu0 %v3444
        %3462 = vmatprep.subr.bf16.mxu0 0
        %3463 = vmatpush2.bf16.xpose.msra.mxu0 0
        %3464 = vmatprep.subr.bf16.mxu0 0
        %3465 = vmatpush2.bf16.xpose.msra.mxu0 0
        %3466 = vmatprep.subr.bf16.mxu0 0
        %3467 = vmatpush2.bf16.xpose.msra.mxu0 0
        %3468 = vmatprep.subr.bf16.mxu0 0
        %3469 = vmatpush2.bf16.xpose.msra.mxu0 0
        %3470 = vmatprep.subr.bf16.mxu0 0
        %3471 = vmatpush2.bf16.xpose.msra.mxu0 0
        %3472 = vmatprep.subr.bf16.mxu0 0
        %3473 = vmatpush2.bf16.xpose.msra.mxu0 0
        %3474 = vmatprep.subr.bf16.mxu0 0
        %3475 = vmatpush2.bf16.xpose.msra.mxu0 0
        %3476 = vmatprep.subr.bf16.mxu0 0
        %3477 = vmatpush2.bf16.xpose.msra.mxu0 0
        %3478 = vmatprep.mubr.bf16.mxu0 0
        %3479 = vmatmul.mubr.bf16.gmra.mxu0 %v3441
        %v3480 = vpop.f32.mrf.mxu0
        %v3481 = vadd.f32 %v2453, %v3480
        %v3482 = vpop.f32.mrf.mxu0
        %v3483 = vpop.f32.mrf.mxu0
        %v3484 = vpop.f32.mrf.mxu0
        %3485 = vdwg.mxu0
        %3487 = vrot.lane.b32.xlu0 %v2429, 96
        %v3488 = vpop.permute.xlu0 %3487
        %3490 = vrot.lane.b32.xlu0 %v2437, 96
        %v3491 = vpop.permute.xlu0 %3490
        %v3493 = vsel %vm2454, %v3488, 0
        %v3496 = vsel %vm2454, %v3491, 0
        %3498 = vmatprep.subr.bf16.mxu0 0
        %3499 = vmatpush1.bf16.xpose.msra.mxu0 0
        %3500 = vmatprep.subr.bf16.mxu0 0
        %3501 = vmatpush1.bf16.xpose.msra.mxu0 0
        %3502 = vmatprep.subr.bf16.mxu0 0
        %3503 = vmatpush1.bf16.xpose.msra.mxu0 0
        %3504 = vmatprep.subr.bf16.mxu0 0
        %3505 = vmatpush1.bf16.xpose.msra.mxu0 0
        %3506 = vmatprep.subr.bf16.mxu0 0
        %3507 = vmatpush1.bf16.xpose.msra.mxu0 0
        %3508 = vmatprep.subr.bf16.mxu0 0
        %3509 = vmatpush1.bf16.xpose.msra.mxu0 0
        %3510 = vmatprep.subr.bf16.mxu0 0
        %3511 = vmatpush1.bf16.xpose.msra.mxu0 0
        %3512 = vmatprep.subr.bf16.mxu0 0
        %3513 = vmatpush1.bf16.xpose.msra.mxu0 %v3496
        %3514 = vmatprep.subr.bf16.mxu0 0
        %3515 = vmatpush2.bf16.xpose.msra.mxu0 0
        %3516 = vmatprep.subr.bf16.mxu0 0
        %3517 = vmatpush2.bf16.xpose.msra.mxu0 0
        %3518 = vmatprep.subr.bf16.mxu0 0
        %3519 = vmatpush2.bf16.xpose.msra.mxu0 0
        %3520 = vmatprep.subr.bf16.mxu0 0
        %3521 = vmatpush2.bf16.xpose.msra.mxu0 0
        %3522 = vmatprep.subr.bf16.mxu0 0
        %3523 = vmatpush2.bf16.xpose.msra.mxu0 0
        %3524 = vmatprep.subr.bf16.mxu0 0
        %3525 = vmatpush2.bf16.xpose.msra.mxu0 0
        %3526 = vmatprep.subr.bf16.mxu0 0
        %3527 = vmatpush2.bf16.xpose.msra.mxu0 0
        %3528 = vmatprep.subr.bf16.mxu0 0
        %3529 = vmatpush2.bf16.xpose.msra.mxu0 0
        %3530 = vmatprep.mubr.bf16.mxu0 0
        %3531 = vmatmul.mubr.bf16.gmra.mxu0 %v3493
        %v3532 = vpop.f32.mrf.mxu0
        %v3533 = vadd.f32 %v2453, %v3532
        %v3534 = vpop.f32.mrf.mxu0
        %v3535 = vpop.f32.mrf.mxu0
        %v3536 = vpop.f32.mrf.mxu0
        %3537 = vdwg.mxu0
        %3539 = vrot.lane.b32.xlu0 %v2430, 96
        %v3540 = vpop.permute.xlu0 %3539
        %3542 = vrot.lane.b32.xlu0 %v2438, 96
        %v3543 = vpop.permute.xlu0 %3542
        %v3545 = vsel %vm2454, %v3540, 0
        %v3548 = vsel %vm2454, %v3543, 0
        %3550 = vmatprep.subr.bf16.mxu0 0
        %3551 = vmatpush1.bf16.xpose.msra.mxu0 0
        %3552 = vmatprep.subr.bf16.mxu0 0
        %3553 = vmatpush1.bf16.xpose.msra.mxu0 0
        %3554 = vmatprep.subr.bf16.mxu0 0
        %3555 = vmatpush1.bf16.xpose.msra.mxu0 0
        %3556 = vmatprep.subr.bf16.mxu0 0
        %3557 = vmatpush1.bf16.xpose.msra.mxu0 0
        %3558 = vmatprep.subr.bf16.mxu0 0
        %3559 = vmatpush1.bf16.xpose.msra.mxu0 0
        %3560 = vmatprep.subr.bf16.mxu0 0
        %3561 = vmatpush1.bf16.xpose.msra.mxu0 0
        %3562 = vmatprep.subr.bf16.mxu0 0
        %3563 = vmatpush1.bf16.xpose.msra.mxu0 0
        %3564 = vmatprep.subr.bf16.mxu0 0
        %3565 = vmatpush1.bf16.xpose.msra.mxu0 %v3548
        %3566 = vmatprep.subr.bf16.mxu0 0
        %3567 = vmatpush2.bf16.xpose.msra.mxu0 0
        %3568 = vmatprep.subr.bf16.mxu0 0
        %3569 = vmatpush2.bf16.xpose.msra.mxu0 0
        %3570 = vmatprep.subr.bf16.mxu0 0
        %3571 = vmatpush2.bf16.xpose.msra.mxu0 0
        %3572 = vmatprep.subr.bf16.mxu0 0
        %3573 = vmatpush2.bf16.xpose.msra.mxu0 0
        %3574 = vmatprep.subr.bf16.mxu0 0
        %3575 = vmatpush2.bf16.xpose.msra.mxu0 0
        %3576 = vmatprep.subr.bf16.mxu0 0
        %3577 = vmatpush2.bf16.xpose.msra.mxu0 0
        %3578 = vmatprep.subr.bf16.mxu0 0
        %3579 = vmatpush2.bf16.xpose.msra.mxu0 0
        %3580 = vmatprep.subr.bf16.mxu0 0
        %3581 = vmatpush2.bf16.xpose.msra.mxu0 0
        %3582 = vmatprep.mubr.bf16.mxu0 0
        %3583 = vmatmul.mubr.bf16.gmra.mxu0 %v3545
        %v3584 = vpop.f32.mrf.mxu0
        %v3585 = vadd.f32 %v2453, %v3584
        %v3586 = vpop.f32.mrf.mxu0
        %v3587 = vpop.f32.mrf.mxu0
        %v3588 = vpop.f32.mrf.mxu0
        %3589 = vdwg.mxu0
        %3591 = vrot.lane.b32.xlu0 %v2431, 96
        %v3592 = vpop.permute.xlu0 %3591
        %3594 = vrot.lane.b32.xlu0 %v2439, 96
        %v3595 = vpop.permute.xlu0 %3594
        %v3597 = vsel %vm2454, %v3592, 0
        %v3600 = vsel %vm2454, %v3595, 0
        %3602 = vmatprep.subr.bf16.mxu0 0
        %3603 = vmatpush1.bf16.xpose.msra.mxu0 0
        %3604 = vmatprep.subr.bf16.mxu0 0
        %3605 = vmatpush1.bf16.xpose.msra.mxu0 0
        %3606 = vmatprep.subr.bf16.mxu0 0
        %3607 = vmatpush1.bf16.xpose.msra.mxu0 0
        %3608 = vmatprep.subr.bf16.mxu0 0
        %3609 = vmatpush1.bf16.xpose.msra.mxu0 0
        %3610 = vmatprep.subr.bf16.mxu0 0
        %3611 = vmatpush1.bf16.xpose.msra.mxu0 0
        %3612 = vmatprep.subr.bf16.mxu0 0
        %3613 = vmatpush1.bf16.xpose.msra.mxu0 0
        %3614 = vmatprep.subr.bf16.mxu0 0
        %3615 = vmatpush1.bf16.xpose.msra.mxu0 0
        %3616 = vmatprep.subr.bf16.mxu0 0
        %3617 = vmatpush1.bf16.xpose.msra.mxu0 %v3600
        %3618 = vmatprep.subr.bf16.mxu0 0
        %3619 = vmatpush2.bf16.xpose.msra.mxu0 0
        %3620 = vmatprep.subr.bf16.mxu0 0
        %3621 = vmatpush2.bf16.xpose.msra.mxu0 0
        %3622 = vmatprep.subr.bf16.mxu0 0
        %3623 = vmatpush2.bf16.xpose.msra.mxu0 0
        %3624 = vmatprep.subr.bf16.mxu0 0
        %3625 = vmatpush2.bf16.xpose.msra.mxu0 0
        %3626 = vmatprep.subr.bf16.mxu0 0
        %3627 = vmatpush2.bf16.xpose.msra.mxu0 0
        %3628 = vmatprep.subr.bf16.mxu0 0
        %3629 = vmatpush2.bf16.xpose.msra.mxu0 0
        %3630 = vmatprep.subr.bf16.mxu0 0
        %3631 = vmatpush2.bf16.xpose.msra.mxu0 0
        %3632 = vmatprep.subr.bf16.mxu0 0
        %3633 = vmatpush2.bf16.xpose.msra.mxu0 0
        %3634 = vmatprep.mubr.bf16.mxu0 0
        %3635 = vmatmul.mubr.bf16.gmra.mxu0 %v3597
        %v3636 = vpop.f32.mrf.mxu0
        %v3637 = vadd.f32 %v2453, %v3636
        %v3638 = vpop.f32.mrf.mxu0
        %v3639 = vpop.f32.mrf.mxu0
        %v3640 = vpop.f32.mrf.mxu0
        %3641 = vdwg.mxu0
        %3643 = vrot.lane.b32.xlu0 %v2432, 96
        %v3644 = vpop.permute.xlu0 %3643
        %3646 = vrot.lane.b32.xlu0 %v2440, 96
        %v3647 = vpop.permute.xlu0 %3646
        %v3649 = vsel %vm2454, %v3644, 0
        %v3652 = vsel %vm2454, %v3647, 0
        %3654 = vmatprep.subr.bf16.mxu0 0
        %3655 = vmatpush1.bf16.xpose.msra.mxu0 0
        %3656 = vmatprep.subr.bf16.mxu0 0
        %3657 = vmatpush1.bf16.xpose.msra.mxu0 0
        %3658 = vmatprep.subr.bf16.mxu0 0
        %3659 = vmatpush1.bf16.xpose.msra.mxu0 0
        %3660 = vmatprep.subr.bf16.mxu0 0
        %3661 = vmatpush1.bf16.xpose.msra.mxu0 0
        %3662 = vmatprep.subr.bf16.mxu0 0
        %3663 = vmatpush1.bf16.xpose.msra.mxu0 0
        %3664 = vmatprep.subr.bf16.mxu0 0
        %3665 = vmatpush1.bf16.xpose.msra.mxu0 0
        %3666 = vmatprep.subr.bf16.mxu0 0
        %3667 = vmatpush1.bf16.xpose.msra.mxu0 0
        %3668 = vmatprep.subr.bf16.mxu0 0
        %3669 = vmatpush1.bf16.xpose.msra.mxu0 %v3652
        %3670 = vmatprep.subr.bf16.mxu0 0
        %3671 = vmatpush2.bf16.xpose.msra.mxu0 0
        %3672 = vmatprep.subr.bf16.mxu0 0
        %3673 = vmatpush2.bf16.xpose.msra.mxu0 0
        %3674 = vmatprep.subr.bf16.mxu0 0
        %3675 = vmatpush2.bf16.xpose.msra.mxu0 0
        %3676 = vmatprep.subr.bf16.mxu0 0
        %3677 = vmatpush2.bf16.xpose.msra.mxu0 0
        %3678 = vmatprep.subr.bf16.mxu0 0
        %3679 = vmatpush2.bf16.xpose.msra.mxu0 0
        %3680 = vmatprep.subr.bf16.mxu0 0
        %3681 = vmatpush2.bf16.xpose.msra.mxu0 0
        %3682 = vmatprep.subr.bf16.mxu0 0
        %3683 = vmatpush2.bf16.xpose.msra.mxu0 0
        %3684 = vmatprep.subr.bf16.mxu0 0
        %3685 = vmatpush2.bf16.xpose.msra.mxu0 0
        %3686 = vmatprep.mubr.bf16.mxu0 0
        %3687 = vmatmul.mubr.bf16.gmra.mxu0 %v3649
        %v3688 = vpop.f32.mrf.mxu0
        %v3689 = vadd.f32 %v2453, %v3688
        %v3690 = vpop.f32.mrf.mxu0
        %v3691 = vpop.f32.mrf.mxu0
        %v3692 = vpop.f32.mrf.mxu0
        %3693 = vdwg.mxu0
        %3695 = vrot.lane.b32.xlu0 %v2433, 96
        %v3696 = vpop.permute.xlu0 %3695
        %3698 = vrot.lane.b32.xlu0 %v2441, 96
        %v3699 = vpop.permute.xlu0 %3698
        %v3701 = vsel %vm2454, %v3696, 0
        %v3704 = vsel %vm2454, %v3699, 0
        %3706 = vmatprep.subr.bf16.mxu0 0
        %3707 = vmatpush1.bf16.xpose.msra.mxu0 0
        %3708 = vmatprep.subr.bf16.mxu0 0
        %3709 = vmatpush1.bf16.xpose.msra.mxu0 0
        %3710 = vmatprep.subr.bf16.mxu0 0
        %3711 = vmatpush1.bf16.xpose.msra.mxu0 0
        %3712 = vmatprep.subr.bf16.mxu0 0
        %3713 = vmatpush1.bf16.xpose.msra.mxu0 0
        %3714 = vmatprep.subr.bf16.mxu0 0
        %3715 = vmatpush1.bf16.xpose.msra.mxu0 0
        %3716 = vmatprep.subr.bf16.mxu0 0
        %3717 = vmatpush1.bf16.xpose.msra.mxu0 0
        %3718 = vmatprep.subr.bf16.mxu0 0
        %3719 = vmatpush1.bf16.xpose.msra.mxu0 0
        %3720 = vmatprep.subr.bf16.mxu0 0
        %3721 = vmatpush1.bf16.xpose.msra.mxu0 %v3704
        %3722 = vmatprep.subr.bf16.mxu0 0
        %3723 = vmatpush2.bf16.xpose.msra.mxu0 0
        %3724 = vmatprep.subr.bf16.mxu0 0
        %3725 = vmatpush2.bf16.xpose.msra.mxu0 0
        %3726 = vmatprep.subr.bf16.mxu0 0
        %3727 = vmatpush2.bf16.xpose.msra.mxu0 0
        %3728 = vmatprep.subr.bf16.mxu0 0
        %3729 = vmatpush2.bf16.xpose.msra.mxu0 0
        %3730 = vmatprep.subr.bf16.mxu0 0
        %3731 = vmatpush2.bf16.xpose.msra.mxu0 0
        %3732 = vmatprep.subr.bf16.mxu0 0
        %3733 = vmatpush2.bf16.xpose.msra.mxu0 0
        %3734 = vmatprep.subr.bf16.mxu0 0
        %3735 = vmatpush2.bf16.xpose.msra.mxu0 0
        %3736 = vmatprep.subr.bf16.mxu0 0
        %3737 = vmatpush2.bf16.xpose.msra.mxu0 0
        %3738 = vmatprep.mubr.bf16.mxu0 0
        %3739 = vmatmul.mubr.bf16.gmra.mxu0 %v3701
        %v3740 = vpop.f32.mrf.mxu0
        %v3741 = vadd.f32 %v2453, %v3740
        %v3742 = vpop.f32.mrf.mxu0
        %v3743 = vpop.f32.mrf.mxu0
        %v3744 = vpop.f32.mrf.mxu0
        %3745 = vdwg.mxu0
        %v3746 = vsel %vm2823, %v3377, -inf
        %3747 = vmax.xlane.f32.xlu0 %v3746
        %v3748 = vpop.xlane.xlu0 %3747
        %v3749 = vsel %vm2823, %v3429, -inf
        %3750 = vmax.xlane.f32.xlu0 %v3749
        %v3751 = vpop.xlane.xlu0 %3750
        %v3752 = vsel %vm2823, %v3481, -inf
        %3753 = vmax.xlane.f32.xlu0 %v3752
        %v3754 = vpop.xlane.xlu0 %3753
        %v3755 = vsel %vm2823, %v3533, -inf
        %3756 = vmax.xlane.f32.xlu0 %v3755
        %v3757 = vpop.xlane.xlu0 %3756
        %v3758 = vsel %vm2823, %v3585, -inf
        %3759 = vmax.xlane.f32.xlu0 %v3758
        %v3760 = vpop.xlane.xlu0 %3759
        %v3761 = vsel %vm2823, %v3637, -inf
        %3762 = vmax.xlane.f32.xlu0 %v3761
        %v3763 = vpop.xlane.xlu0 %3762
        %v3764 = vsel %vm2823, %v3689, -inf
        %3765 = vmax.xlane.f32.xlu0 %v3764
        %v3766 = vpop.xlane.xlu0 %3765
        %v3767 = vsel %vm2823, %v3741, -inf
        %3768 = vmax.xlane.f32.xlu0 %v3767
        %v3769 = vpop.xlane.xlu0 %3768
        %v3770 = vsub.f32 %v3377, %v3748
        %v3771 = vsub.f32 %v3429, %v3751
        %v3772 = vsub.f32 %v3481, %v3754
        %v3773 = vsub.f32 %v3533, %v3757
        %v3774 = vsub.f32 %v3585, %v3760
        %v3775 = vsub.f32 %v3637, %v3763
        %v3776 = vsub.f32 %v3689, %v3766
        %v3777 = vsub.f32 %v3741, %v3769
        %v3778 = vmul.f32 %v3770, 1.442695
        %v3779 = vpow.pop %v3778
        %v3780 = vmul.f32 %v3771, 1.442695
        %v3781 = vpow.pop %v3780
        %v3782 = vmul.f32 %v3772, 1.442695
        %v3783 = vpow.pop %v3782
        %v3784 = vmul.f32 %v3773, 1.442695
        %v3785 = vpow.pop %v3784
        %v3786 = vmul.f32 %v3774, 1.442695
        %v3787 = vpow.pop %v3786
        %v3788 = vmul.f32 %v3775, 1.442695
        %v3789 = vpow.pop %v3788
        %v3790 = vmul.f32 %v3776, 1.442695
        %v3791 = vpow.pop %v3790
        %v3792 = vmul.f32 %v3777, 1.442695
        %v3793 = vpow.pop %v3792
        %v3794 = vsel %vm2823, %v3779, 0.0
        %3795 = vadd.xlane.f32.xlu0 %v3794
        %v3796 = vpop.xlane.xlu0 %3795
        %v3797 = vsel %vm2823, %v3781, 0.0
        %3798 = vadd.xlane.f32.xlu0 %v3797
        %v3799 = vpop.xlane.xlu0 %3798
        %v3800 = vsel %vm2823, %v3783, 0.0
        %3801 = vadd.xlane.f32.xlu0 %v3800
        %v3802 = vpop.xlane.xlu0 %3801
        %v3803 = vsel %vm2823, %v3785, 0.0
        %3804 = vadd.xlane.f32.xlu0 %v3803
        %v3805 = vpop.xlane.xlu0 %3804
        %v3806 = vsel %vm2823, %v3787, 0.0
        %3807 = vadd.xlane.f32.xlu0 %v3806
        %v3808 = vpop.xlane.xlu0 %3807
        %v3809 = vsel %vm2823, %v3789, 0.0
        %3810 = vadd.xlane.f32.xlu0 %v3809
        %v3811 = vpop.xlane.xlu0 %3810
        %v3812 = vsel %vm2823, %v3791, 0.0
        %3813 = vadd.xlane.f32.xlu0 %v3812
        %v3814 = vpop.xlane.xlu0 %3813
        %v3815 = vsel %vm2823, %v3793, 0.0
        %3816 = vadd.xlane.f32.xlu0 %v3815
        %v3817 = vpop.xlane.xlu0 %3816
        %v3818 = vrcp.pop %v3796
        %v3819 = vrcp.pop %v3799
        %v3820 = vrcp.pop %v3802
        %v3821 = vrcp.pop %v3805
        %v3822 = vrcp.pop %v3808
        %v3823 = vrcp.pop %v3811
        %v3824 = vrcp.pop %v3814
        %v3825 = vrcp.pop %v3817
        %v3826 = vmul.f32 %v3779, %v3818
        %v3827 = vmul.f32 %v3781, %v3819
        %v3828 = vmul.f32 %v3783, %v3820
        %v3829 = vmul.f32 %v3785, %v3821
        %v3830 = vmul.f32 %v3787, %v3822
        %v3831 = vmul.f32 %v3789, %v3823
        %v3832 = vmul.f32 %v3791, %v3824
        %v3833 = vmul.f32 %v3793, %v3825
        %v3834 = vpack.c.bf16 %v3826, %v3826
        %v3835 = vpack.c.bf16 %v3827, %v3827
        %v3836 = vpack.c.bf16 %v3828, %v3828
        %v3837 = vpack.c.bf16 %v3829, %v3829
        %v3838 = vpack.c.bf16 %v3830, %v3830
        %v3839 = vpack.c.bf16 %v3831, %v3831
        %v3840 = vpack.c.bf16 %v3832, %v3832
        %v3841 = vpack.c.bf16 %v3833, %v3833
        %3843 = vrot.lane.b32.xlu0 %v2442, 96
        %v3844 = vpop.permute.xlu0 %3843
        %v3846 = vsel %vm2823, %v3834, 0
        %v3849 = vsel %vm2923, %v3844, 0
        %3851 = vmatprep.subr.bf16.mxu0 0
        %3852 = vmatpush1.bf16.msra.mxu0 0
        %3853 = vmatprep.subr.bf16.mxu0 0
        %3854 = vmatpush1.bf16.msra.mxu0 0
        %3855 = vmatprep.subr.bf16.mxu0 0
        %3856 = vmatpush1.bf16.msra.mxu0 0
        %3857 = vmatprep.subr.bf16.mxu0 0
        %3858 = vmatpush1.bf16.msra.mxu0 0
        %3859 = vmatprep.subr.bf16.mxu0 0
        %3860 = vmatpush1.bf16.msra.mxu0 0
        %3861 = vmatprep.subr.bf16.mxu0 0
        %3862 = vmatpush1.bf16.msra.mxu0 0
        %3863 = vmatprep.subr.bf16.mxu0 0
        %3864 = vmatpush1.bf16.msra.mxu0 0
        %3865 = vmatprep.subr.bf16.mxu0 0
        %3866 = vmatpush1.bf16.msra.mxu0 %v3849
        %3867 = vmatprep.subr.bf16.mxu0 0
        %3868 = vmatpush2.bf16.msra.mxu0 0
        %3869 = vmatprep.subr.bf16.mxu0 0
        %3870 = vmatpush2.bf16.msra.mxu0 0
        %3871 = vmatprep.subr.bf16.mxu0 0
        %3872 = vmatpush2.bf16.msra.mxu0 0
        %3873 = vmatprep.subr.bf16.mxu0 0
        %3874 = vmatpush2.bf16.msra.mxu0 0
        %3875 = vmatprep.subr.bf16.mxu0 0
        %3876 = vmatpush2.bf16.msra.mxu0 0
        %3877 = vmatprep.subr.bf16.mxu0 0
        %3878 = vmatpush2.bf16.msra.mxu0 0
        %3879 = vmatprep.subr.bf16.mxu0 0
        %3880 = vmatpush2.bf16.msra.mxu0 0
        %3881 = vmatprep.subr.bf16.mxu0 0
        %3882 = vmatpush2.bf16.msra.mxu0 0
        %3883 = vmatprep.mubr.bf16.mxu0 0
        %3884 = vmatmul.mubr.bf16.gmra.mxu0 %v3846
        %v3885 = vpop.f32.mrf.mxu0
        %v3886 = vadd.f32 0.0, %v3885
        %v3887 = vpop.f32.mrf.mxu0
        %v3888 = vpop.f32.mrf.mxu0
        %v3889 = vpop.f32.mrf.mxu0
        %3890 = vdwg.mxu0
        %3892 = vrot.lane.b32.xlu0 %v2443, 96
        %v3893 = vpop.permute.xlu0 %3892
        %v3895 = vsel %vm2823, %v3835, 0
        %v3898 = vsel %vm2923, %v3893, 0
        %3900 = vmatprep.subr.bf16.mxu0 0
        %3901 = vmatpush1.bf16.msra.mxu0 0
        %3902 = vmatprep.subr.bf16.mxu0 0
        %3903 = vmatpush1.bf16.msra.mxu0 0
        %3904 = vmatprep.subr.bf16.mxu0 0
        %3905 = vmatpush1.bf16.msra.mxu0 0
        %3906 = vmatprep.subr.bf16.mxu0 0
        %3907 = vmatpush1.bf16.msra.mxu0 0
        %3908 = vmatprep.subr.bf16.mxu0 0
        %3909 = vmatpush1.bf16.msra.mxu0 0
        %3910 = vmatprep.subr.bf16.mxu0 0
        %3911 = vmatpush1.bf16.msra.mxu0 0
        %3912 = vmatprep.subr.bf16.mxu0 0
        %3913 = vmatpush1.bf16.msra.mxu0 0
        %3914 = vmatprep.subr.bf16.mxu0 0
        %3915 = vmatpush1.bf16.msra.mxu0 %v3898
        %3916 = vmatprep.subr.bf16.mxu0 0
        %3917 = vmatpush2.bf16.msra.mxu0 0
        %3918 = vmatprep.subr.bf16.mxu0 0
        %3919 = vmatpush2.bf16.msra.mxu0 0
        %3920 = vmatprep.subr.bf16.mxu0 0
        %3921 = vmatpush2.bf16.msra.mxu0 0
        %3922 = vmatprep.subr.bf16.mxu0 0
        %3923 = vmatpush2.bf16.msra.mxu0 0
        %3924 = vmatprep.subr.bf16.mxu0 0
        %3925 = vmatpush2.bf16.msra.mxu0 0
        %3926 = vmatprep.subr.bf16.mxu0 0
        %3927 = vmatpush2.bf16.msra.mxu0 0
        %3928 = vmatprep.subr.bf16.mxu0 0
        %3929 = vmatpush2.bf16.msra.mxu0 0
        %3930 = vmatprep.subr.bf16.mxu0 0
        %3931 = vmatpush2.bf16.msra.mxu0 0
        %3932 = vmatprep.mubr.bf16.mxu0 0
        %3933 = vmatmul.mubr.bf16.gmra.mxu0 %v3895
        %v3934 = vpop.f32.mrf.mxu0
        %v3935 = vadd.f32 0.0, %v3934
        %v3936 = vpop.f32.mrf.mxu0
        %v3937 = vpop.f32.mrf.mxu0
        %v3938 = vpop.f32.mrf.mxu0
        %3939 = vdwg.mxu0
        %3941 = vrot.lane.b32.xlu0 %v2444, 96
        %v3942 = vpop.permute.xlu0 %3941
        %v3944 = vsel %vm2823, %v3836, 0
        %v3947 = vsel %vm2923, %v3942, 0
        %3949 = vmatprep.subr.bf16.mxu0 0
        %3950 = vmatpush1.bf16.msra.mxu0 0
        %3951 = vmatprep.subr.bf16.mxu0 0
        %3952 = vmatpush1.bf16.msra.mxu0 0
        %3953 = vmatprep.subr.bf16.mxu0 0
        %3954 = vmatpush1.bf16.msra.mxu0 0
        %3955 = vmatprep.subr.bf16.mxu0 0
        %3956 = vmatpush1.bf16.msra.mxu0 0
        %3957 = vmatprep.subr.bf16.mxu0 0
        %3958 = vmatpush1.bf16.msra.mxu0 0
        %3959 = vmatprep.subr.bf16.mxu0 0
        %3960 = vmatpush1.bf16.msra.mxu0 0
        %3961 = vmatprep.subr.bf16.mxu0 0
        %3962 = vmatpush1.bf16.msra.mxu0 0
        %3963 = vmatprep.subr.bf16.mxu0 0
        %3964 = vmatpush1.bf16.msra.mxu0 %v3947
        %3965 = vmatprep.subr.bf16.mxu0 0
        %3966 = vmatpush2.bf16.msra.mxu0 0
        %3967 = vmatprep.subr.bf16.mxu0 0
        %3968 = vmatpush2.bf16.msra.mxu0 0
        %3969 = vmatprep.subr.bf16.mxu0 0
        %3970 = vmatpush2.bf16.msra.mxu0 0
        %3971 = vmatprep.subr.bf16.mxu0 0
        %3972 = vmatpush2.bf16.msra.mxu0 0
        %3973 = vmatprep.subr.bf16.mxu0 0
        %3974 = vmatpush2.bf16.msra.mxu0 0
        %3975 = vmatprep.subr.bf16.mxu0 0
        %3976 = vmatpush2.bf16.msra.mxu0 0
        %3977 = vmatprep.subr.bf16.mxu0 0
        %3978 = vmatpush2.bf16.msra.mxu0 0
        %3979 = vmatprep.subr.bf16.mxu0 0
        %3980 = vmatpush2.bf16.msra.mxu0 0
        %3981 = vmatprep.mubr.bf16.mxu0 0
        %3982 = vmatmul.mubr.bf16.gmra.mxu0 %v3944
        %v3983 = vpop.f32.mrf.mxu0
        %v3984 = vadd.f32 0.0, %v3983
        %v3985 = vpop.f32.mrf.mxu0
        %v3986 = vpop.f32.mrf.mxu0
        %v3987 = vpop.f32.mrf.mxu0
        %3988 = vdwg.mxu0
        %3990 = vrot.lane.b32.xlu0 %v2445, 96
        %v3991 = vpop.permute.xlu0 %3990
        %v3993 = vsel %vm2823, %v3837, 0
        %v3996 = vsel %vm2923, %v3991, 0
        %3998 = vmatprep.subr.bf16.mxu0 0
        %3999 = vmatpush1.bf16.msra.mxu0 0
        %4000 = vmatprep.subr.bf16.mxu0 0
        %4001 = vmatpush1.bf16.msra.mxu0 0
        %4002 = vmatprep.subr.bf16.mxu0 0
        %4003 = vmatpush1.bf16.msra.mxu0 0
        %4004 = vmatprep.subr.bf16.mxu0 0
        %4005 = vmatpush1.bf16.msra.mxu0 0
        %4006 = vmatprep.subr.bf16.mxu0 0
        %4007 = vmatpush1.bf16.msra.mxu0 0
        %4008 = vmatprep.subr.bf16.mxu0 0
        %4009 = vmatpush1.bf16.msra.mxu0 0
        %4010 = vmatprep.subr.bf16.mxu0 0
        %4011 = vmatpush1.bf16.msra.mxu0 0
        %4012 = vmatprep.subr.bf16.mxu0 0
        %4013 = vmatpush1.bf16.msra.mxu0 %v3996
        %4014 = vmatprep.subr.bf16.mxu0 0
        %4015 = vmatpush2.bf16.msra.mxu0 0
        %4016 = vmatprep.subr.bf16.mxu0 0
        %4017 = vmatpush2.bf16.msra.mxu0 0
        %4018 = vmatprep.subr.bf16.mxu0 0
        %4019 = vmatpush2.bf16.msra.mxu0 0
        %4020 = vmatprep.subr.bf16.mxu0 0
        %4021 = vmatpush2.bf16.msra.mxu0 0
        %4022 = vmatprep.subr.bf16.mxu0 0
        %4023 = vmatpush2.bf16.msra.mxu0 0
        %4024 = vmatprep.subr.bf16.mxu0 0
        %4025 = vmatpush2.bf16.msra.mxu0 0
        %4026 = vmatprep.subr.bf16.mxu0 0
        %4027 = vmatpush2.bf16.msra.mxu0 0
        %4028 = vmatprep.subr.bf16.mxu0 0
        %4029 = vmatpush2.bf16.msra.mxu0 0
        %4030 = vmatprep.mubr.bf16.mxu0 0
        %4031 = vmatmul.mubr.bf16.gmra.mxu0 %v3993
        %v4032 = vpop.f32.mrf.mxu0
        %v4033 = vadd.f32 0.0, %v4032
        %v4034 = vpop.f32.mrf.mxu0
        %v4035 = vpop.f32.mrf.mxu0
        %v4036 = vpop.f32.mrf.mxu0
        %4037 = vdwg.mxu0
        %4039 = vrot.lane.b32.xlu0 %v2446, 96
        %v4040 = vpop.permute.xlu0 %4039
        %v4042 = vsel %vm2823, %v3838, 0
        %v4045 = vsel %vm2923, %v4040, 0
        %4047 = vmatprep.subr.bf16.mxu0 0
        %4048 = vmatpush1.bf16.msra.mxu0 0
        %4049 = vmatprep.subr.bf16.mxu0 0
        %4050 = vmatpush1.bf16.msra.mxu0 0
        %4051 = vmatprep.subr.bf16.mxu0 0
        %4052 = vmatpush1.bf16.msra.mxu0 0
        %4053 = vmatprep.subr.bf16.mxu0 0
        %4054 = vmatpush1.bf16.msra.mxu0 0
        %4055 = vmatprep.subr.bf16.mxu0 0
        %4056 = vmatpush1.bf16.msra.mxu0 0
        %4057 = vmatprep.subr.bf16.mxu0 0
        %4058 = vmatpush1.bf16.msra.mxu0 0
        %4059 = vmatprep.subr.bf16.mxu0 0
        %4060 = vmatpush1.bf16.msra.mxu0 0
        %4061 = vmatprep.subr.bf16.mxu0 0
        %4062 = vmatpush1.bf16.msra.mxu0 %v4045
        %4063 = vmatprep.subr.bf16.mxu0 0
        %4064 = vmatpush2.bf16.msra.mxu0 0
        %4065 = vmatprep.subr.bf16.mxu0 0
        %4066 = vmatpush2.bf16.msra.mxu0 0
        %4067 = vmatprep.subr.bf16.mxu0 0
        %4068 = vmatpush2.bf16.msra.mxu0 0
        %4069 = vmatprep.subr.bf16.mxu0 0
        %4070 = vmatpush2.bf16.msra.mxu0 0
        %4071 = vmatprep.subr.bf16.mxu0 0
        %4072 = vmatpush2.bf16.msra.mxu0 0
        %4073 = vmatprep.subr.bf16.mxu0 0
        %4074 = vmatpush2.bf16.msra.mxu0 0
        %4075 = vmatprep.subr.bf16.mxu0 0
        %4076 = vmatpush2.bf16.msra.mxu0 0
        %4077 = vmatprep.subr.bf16.mxu0 0
        %4078 = vmatpush2.bf16.msra.mxu0 0
        %4079 = vmatprep.mubr.bf16.mxu0 0
        %4080 = vmatmul.mubr.bf16.gmra.mxu0 %v4042
        %v4081 = vpop.f32.mrf.mxu0
        %v4082 = vadd.f32 0.0, %v4081
        %v4083 = vpop.f32.mrf.mxu0
        %v4084 = vpop.f32.mrf.mxu0
        %v4085 = vpop.f32.mrf.mxu0
        %4086 = vdwg.mxu0
        %4088 = vrot.lane.b32.xlu0 %v2447, 96
        %v4089 = vpop.permute.xlu0 %4088
        %v4091 = vsel %vm2823, %v3839, 0
        %v4094 = vsel %vm2923, %v4089, 0
        %4096 = vmatprep.subr.bf16.mxu0 0
        %4097 = vmatpush1.bf16.msra.mxu0 0
        %4098 = vmatprep.subr.bf16.mxu0 0
        %4099 = vmatpush1.bf16.msra.mxu0 0
        %4100 = vmatprep.subr.bf16.mxu0 0
        %4101 = vmatpush1.bf16.msra.mxu0 0
        %4102 = vmatprep.subr.bf16.mxu0 0
        %4103 = vmatpush1.bf16.msra.mxu0 0
        %4104 = vmatprep.subr.bf16.mxu0 0
        %4105 = vmatpush1.bf16.msra.mxu0 0
        %4106 = vmatprep.subr.bf16.mxu0 0
        %4107 = vmatpush1.bf16.msra.mxu0 0
        %4108 = vmatprep.subr.bf16.mxu0 0
        %4109 = vmatpush1.bf16.msra.mxu0 0
        %4110 = vmatprep.subr.bf16.mxu0 0
        %4111 = vmatpush1.bf16.msra.mxu0 %v4094
        %4112 = vmatprep.subr.bf16.mxu0 0
        %4113 = vmatpush2.bf16.msra.mxu0 0
        %4114 = vmatprep.subr.bf16.mxu0 0
        %4115 = vmatpush2.bf16.msra.mxu0 0
        %4116 = vmatprep.subr.bf16.mxu0 0
        %4117 = vmatpush2.bf16.msra.mxu0 0
        %4118 = vmatprep.subr.bf16.mxu0 0
        %4119 = vmatpush2.bf16.msra.mxu0 0
        %4120 = vmatprep.subr.bf16.mxu0 0
        %4121 = vmatpush2.bf16.msra.mxu0 0
        %4122 = vmatprep.subr.bf16.mxu0 0
        %4123 = vmatpush2.bf16.msra.mxu0 0
        %4124 = vmatprep.subr.bf16.mxu0 0
        %4125 = vmatpush2.bf16.msra.mxu0 0
        %4126 = vmatprep.subr.bf16.mxu0 0
        %4127 = vmatpush2.bf16.msra.mxu0 0
        %4128 = vmatprep.mubr.bf16.mxu0 0
        %4129 = vmatmul.mubr.bf16.gmra.mxu0 %v4091
        %v4130 = vpop.f32.mrf.mxu0
        %v4131 = vadd.f32 0.0, %v4130
        %v4132 = vpop.f32.mrf.mxu0
        %v4133 = vpop.f32.mrf.mxu0
        %v4134 = vpop.f32.mrf.mxu0
        %4135 = vdwg.mxu0
        %4137 = vrot.lane.b32.xlu0 %v2448, 96
        %v4138 = vpop.permute.xlu0 %4137
        %v4140 = vsel %vm2823, %v3840, 0
        %v4143 = vsel %vm2923, %v4138, 0
        %4145 = vmatprep.subr.bf16.mxu0 0
        %4146 = vmatpush1.bf16.msra.mxu0 0
        %4147 = vmatprep.subr.bf16.mxu0 0
        %4148 = vmatpush1.bf16.msra.mxu0 0
        %4149 = vmatprep.subr.bf16.mxu0 0
        %4150 = vmatpush1.bf16.msra.mxu0 0
        %4151 = vmatprep.subr.bf16.mxu0 0
        %4152 = vmatpush1.bf16.msra.mxu0 0
        %4153 = vmatprep.subr.bf16.mxu0 0
        %4154 = vmatpush1.bf16.msra.mxu0 0
        %4155 = vmatprep.subr.bf16.mxu0 0
        %4156 = vmatpush1.bf16.msra.mxu0 0
        %4157 = vmatprep.subr.bf16.mxu0 0
        %4158 = vmatpush1.bf16.msra.mxu0 0
        %4159 = vmatprep.subr.bf16.mxu0 0
        %4160 = vmatpush1.bf16.msra.mxu0 %v4143
        %4161 = vmatprep.subr.bf16.mxu0 0
        %4162 = vmatpush2.bf16.msra.mxu0 0
        %4163 = vmatprep.subr.bf16.mxu0 0
        %4164 = vmatpush2.bf16.msra.mxu0 0
        %4165 = vmatprep.subr.bf16.mxu0 0
        %4166 = vmatpush2.bf16.msra.mxu0 0
        %4167 = vmatprep.subr.bf16.mxu0 0
        %4168 = vmatpush2.bf16.msra.mxu0 0
        %4169 = vmatprep.subr.bf16.mxu0 0
        %4170 = vmatpush2.bf16.msra.mxu0 0
        %4171 = vmatprep.subr.bf16.mxu0 0
        %4172 = vmatpush2.bf16.msra.mxu0 0
        %4173 = vmatprep.subr.bf16.mxu0 0
        %4174 = vmatpush2.bf16.msra.mxu0 0
        %4175 = vmatprep.subr.bf16.mxu0 0
        %4176 = vmatpush2.bf16.msra.mxu0 0
        %4177 = vmatprep.mubr.bf16.mxu0 0
        %4178 = vmatmul.mubr.bf16.gmra.mxu0 %v4140
        %v4179 = vpop.f32.mrf.mxu0
        %v4180 = vadd.f32 0.0, %v4179
        %v4181 = vpop.f32.mrf.mxu0
        %v4182 = vpop.f32.mrf.mxu0
        %v4183 = vpop.f32.mrf.mxu0
        %4184 = vdwg.mxu0
        %4186 = vrot.lane.b32.xlu0 %v2449, 96
        %v4187 = vpop.permute.xlu0 %4186
        %v4189 = vsel %vm2823, %v3841, 0
        %v4192 = vsel %vm2923, %v4187, 0
        %4194 = vmatprep.subr.bf16.mxu0 0
        %4195 = vmatpush1.bf16.msra.mxu0 0
        %4196 = vmatprep.subr.bf16.mxu0 0
        %4197 = vmatpush1.bf16.msra.mxu0 0
        %4198 = vmatprep.subr.bf16.mxu0 0
        %4199 = vmatpush1.bf16.msra.mxu0 0
        %4200 = vmatprep.subr.bf16.mxu0 0
        %4201 = vmatpush1.bf16.msra.mxu0 0
        %4202 = vmatprep.subr.bf16.mxu0 0
        %4203 = vmatpush1.bf16.msra.mxu0 0
        %4204 = vmatprep.subr.bf16.mxu0 0
        %4205 = vmatpush1.bf16.msra.mxu0 0
        %4206 = vmatprep.subr.bf16.mxu0 0
        %4207 = vmatpush1.bf16.msra.mxu0 0
        %4208 = vmatprep.subr.bf16.mxu0 0
        %4209 = vmatpush1.bf16.msra.mxu0 %v4192
        %4210 = vmatprep.subr.bf16.mxu0 0
        %4211 = vmatpush2.bf16.msra.mxu0 0
        %4212 = vmatprep.subr.bf16.mxu0 0
        %4213 = vmatpush2.bf16.msra.mxu0 0
        %4214 = vmatprep.subr.bf16.mxu0 0
        %4215 = vmatpush2.bf16.msra.mxu0 0
        %4216 = vmatprep.subr.bf16.mxu0 0
        %4217 = vmatpush2.bf16.msra.mxu0 0
        %4218 = vmatprep.subr.bf16.mxu0 0
        %4219 = vmatpush2.bf16.msra.mxu0 0
        %4220 = vmatprep.subr.bf16.mxu0 0
        %4221 = vmatpush2.bf16.msra.mxu0 0
        %4222 = vmatprep.subr.bf16.mxu0 0
        %4223 = vmatpush2.bf16.msra.mxu0 0
        %4224 = vmatprep.subr.bf16.mxu0 0
        %4225 = vmatpush2.bf16.msra.mxu0 0
        %4226 = vmatprep.mubr.bf16.mxu0 0
        %4227 = vmatmul.mubr.bf16.gmra.mxu0 %v4189
        %v4228 = vpop.f32.mrf.mxu0
        %v4229 = vadd.f32 0.0, %v4228
        %v4230 = vpop.f32.mrf.mxu0
        %v4231 = vpop.f32.mrf.mxu0
        %v4232 = vpop.f32.mrf.mxu0
        %4233 = vdwg.mxu0
        %v4234 = vpack.c.bf16 %v3935, %v3886
        %v4235 = vpack.c.bf16 %v4033, %v3984
        %v4236 = vpack.c.bf16 %v4131, %v4082
        %v4237 = vpack.c.bf16 %v4229, %v4180
        %v4242 = vunpack.c.l.b16 %v4234
        %v4243 = vunpack.c.h.b16 %v4234
        %v4244 = vunpack.c.l.b16 %v4235
        %v4245 = vunpack.c.h.b16 %v4235
        %v4246 = vunpack.c.l.b16 %v4236
        %v4247 = vunpack.c.h.b16 %v4236
        %v4248 = vunpack.c.l.b16 %v4237
        %v4249 = vunpack.c.h.b16 %v4237
        %v4250 = vpack.c.b16 %v4242, %v4242
        %v4251 = vpack.c.b16 %v4243, %v4243
        %v4252 = vpack.c.b16 %v4244, %v4244
        %v4253 = vpack.c.b16 %v4245, %v4245
        %v4254 = vpack.c.b16 %v4246, %v4246
        %v4255 = vpack.c.b16 %v4247, %v4247
        %v4256 = vpack.c.b16 %v4248, %v4248
        %v4257 = vpack.c.b16 %v4249, %v4249
        %4258 = vrot.lane.b32.xlu0 %v4250, 32
        %v4259 = vpop.permute.xlu0 %4258
        %4260 = vrot.lane.b32.xlu0 %v4251, 32
        %v4261 = vpop.permute.xlu0 %4260
        %4262 = vrot.lane.b32.xlu0 %v4252, 32
        %v4263 = vpop.permute.xlu0 %4262
        %4264 = vrot.lane.b32.xlu0 %v4253, 32
        %v4265 = vpop.permute.xlu0 %4264
        %4266 = vrot.lane.b32.xlu0 %v4254, 32
        %v4267 = vpop.permute.xlu0 %4266
        %4268 = vrot.lane.b32.xlu0 %v4255, 32
        %v4269 = vpop.permute.xlu0 %4268
        %4270 = vrot.lane.b32.xlu0 %v4256, 32
        %v4271 = vpop.permute.xlu0 %4270
        %4272 = vrot.lane.b32.xlu0 %v4257, 32
        %v4273 = vpop.permute.xlu0 %4272
        %vm4282 = vcmask 519424
        %4283 = vst.msk [vmem:[#allocation3] sm:$0xf] %vm4282, %v4259
        %4284 = vst.msk [vmem:[#allocation3 + $0x4] sm:$0xf] %vm4282, %v4261
        %4285 = vst.msk [vmem:[#allocation3 + $0x8] sm:$0xf] %vm4282, %v4263
        %4286 = vst.msk [vmem:[#allocation3 + $0xc] sm:$0xf] %vm4282, %v4265
        %4287 = vst.msk [vmem:[#allocation3 + $0x10] sm:$0xf] %vm4282, %v4267
        %4288 = vst.msk [vmem:[#allocation3 + $0x14] sm:$0xf] %vm4282, %v4269
        %4289 = vst.msk [vmem:[#allocation3 + $0x18] sm:$0xf] %vm4282, %v4271
        %4290 = vst.msk [vmem:[#allocation3 + $0x1c] sm:$0xf] %vm4282, %v4273
        %4291 = vrot.lane.b32.xlu0 %v2426, 64
        %v4292 = vpop.permute.xlu0 %4291
        %4293 = vrot.lane.b32.xlu0 %v2434, 64
        %v4294 = vpop.permute.xlu0 %4293
        %v4296 = vsel %vm2454, %v4292, 0
        %v4299 = vsel %vm2454, %v4294, 0
        %4301 = vmatprep.subr.bf16.mxu0 0
        %4302 = vmatpush1.bf16.xpose.msra.mxu0 0
        %4303 = vmatprep.subr.bf16.mxu0 0
        %4304 = vmatpush1.bf16.xpose.msra.mxu0 0
        %4305 = vmatprep.subr.bf16.mxu0 0
        %4306 = vmatpush1.bf16.xpose.msra.mxu0 0
        %4307 = vmatprep.subr.bf16.mxu0 0
        %4308 = vmatpush1.bf16.xpose.msra.mxu0 0
        %4309 = vmatprep.subr.bf16.mxu0 0
        %4310 = vmatpush1.bf16.xpose.msra.mxu0 0
        %4311 = vmatprep.subr.bf16.mxu0 0
        %4312 = vmatpush1.bf16.xpose.msra.mxu0 0
        %4313 = vmatprep.subr.bf16.mxu0 0
        %4314 = vmatpush1.bf16.xpose.msra.mxu0 0
        %4315 = vmatprep.subr.bf16.mxu0 0
        %4316 = vmatpush1.bf16.xpose.msra.mxu0 %v4299
        %4317 = vmatprep.subr.bf16.mxu0 0
        %4318 = vmatpush2.bf16.xpose.msra.mxu0 0
        %4319 = vmatprep.subr.bf16.mxu0 0
        %4320 = vmatpush2.bf16.xpose.msra.mxu0 0
        %4321 = vmatprep.subr.bf16.mxu0 0
        %4322 = vmatpush2.bf16.xpose.msra.mxu0 0
        %4323 = vmatprep.subr.bf16.mxu0 0
        %4324 = vmatpush2.bf16.xpose.msra.mxu0 0
        %4325 = vmatprep.subr.bf16.mxu0 0
        %4326 = vmatpush2.bf16.xpose.msra.mxu0 0
        %4327 = vmatprep.subr.bf16.mxu0 0
        %4328 = vmatpush2.bf16.xpose.msra.mxu0 0
        %4329 = vmatprep.subr.bf16.mxu0 0
        %4330 = vmatpush2.bf16.xpose.msra.mxu0 0
        %4331 = vmatprep.subr.bf16.mxu0 0
        %4332 = vmatpush2.bf16.xpose.msra.mxu0 0
        %4333 = vmatprep.mubr.bf16.mxu0 0
        %4334 = vmatmul.mubr.bf16.gmra.mxu0 %v4296
        %v4335 = vpop.f32.mrf.mxu0
        %v4336 = vadd.f32 %v2453, %v4335
        %v4337 = vpop.f32.mrf.mxu0
        %v4338 = vpop.f32.mrf.mxu0
        %v4339 = vpop.f32.mrf.mxu0
        %4340 = vdwg.mxu0
        %4341 = vrot.lane.b32.xlu0 %v2427, 64
        %v4342 = vpop.permute.xlu0 %4341
        %4343 = vrot.lane.b32.xlu0 %v2435, 64
        %v4344 = vpop.permute.xlu0 %4343
        %v4346 = vsel %vm2454, %v4342, 0
        %v4349 = vsel %vm2454, %v4344, 0
        %4351 = vmatprep.subr.bf16.mxu0 0
        %4352 = vmatpush1.bf16.xpose.msra.mxu0 0
        %4353 = vmatprep.subr.bf16.mxu0 0
        %4354 = vmatpush1.bf16.xpose.msra.mxu0 0
        %4355 = vmatprep.subr.bf16.mxu0 0
        %4356 = vmatpush1.bf16.xpose.msra.mxu0 0
        %4357 = vmatprep.subr.bf16.mxu0 0
        %4358 = vmatpush1.bf16.xpose.msra.mxu0 0
        %4359 = vmatprep.subr.bf16.mxu0 0
        %4360 = vmatpush1.bf16.xpose.msra.mxu0 0
        %4361 = vmatprep.subr.bf16.mxu0 0
        %4362 = vmatpush1.bf16.xpose.msra.mxu0 0
        %4363 = vmatprep.subr.bf16.mxu0 0
        %4364 = vmatpush1.bf16.xpose.msra.mxu0 0
        %4365 = vmatprep.subr.bf16.mxu0 0
        %4366 = vmatpush1.bf16.xpose.msra.mxu0 %v4349
        %4367 = vmatprep.subr.bf16.mxu0 0
        %4368 = vmatpush2.bf16.xpose.msra.mxu0 0
        %4369 = vmatprep.subr.bf16.mxu0 0
        %4370 = vmatpush2.bf16.xpose.msra.mxu0 0
        %4371 = vmatprep.subr.bf16.mxu0 0
        %4372 = vmatpush2.bf16.xpose.msra.mxu0 0
        %4373 = vmatprep.subr.bf16.mxu0 0
        %4374 = vmatpush2.bf16.xpose.msra.mxu0 0
        %4375 = vmatprep.subr.bf16.mxu0 0
        %4376 = vmatpush2.bf16.xpose.msra.mxu0 0
        %4377 = vmatprep.subr.bf16.mxu0 0
        %4378 = vmatpush2.bf16.xpose.msra.mxu0 0
        %4379 = vmatprep.subr.bf16.mxu0 0
        %4380 = vmatpush2.bf16.xpose.msra.mxu0 0
        %4381 = vmatprep.subr.bf16.mxu0 0
        %4382 = vmatpush2.bf16.xpose.msra.mxu0 0
        %4383 = vmatprep.mubr.bf16.mxu0 0
        %4384 = vmatmul.mubr.bf16.gmra.mxu0 %v4346
        %v4385 = vpop.f32.mrf.mxu0
        %v4386 = vadd.f32 %v2453, %v4385
        %v4387 = vpop.f32.mrf.mxu0
        %v4388 = vpop.f32.mrf.mxu0
        %v4389 = vpop.f32.mrf.mxu0
        %4390 = vdwg.mxu0
        %4391 = vrot.lane.b32.xlu0 %v2428, 64
        %v4392 = vpop.permute.xlu0 %4391
        %4393 = vrot.lane.b32.xlu0 %v2436, 64
        %v4394 = vpop.permute.xlu0 %4393
        %v4396 = vsel %vm2454, %v4392, 0
        %v4399 = vsel %vm2454, %v4394, 0
        %4401 = vmatprep.subr.bf16.mxu0 0
        %4402 = vmatpush1.bf16.xpose.msra.mxu0 0
        %4403 = vmatprep.subr.bf16.mxu0 0
        %4404 = vmatpush1.bf16.xpose.msra.mxu0 0
        %4405 = vmatprep.subr.bf16.mxu0 0
        %4406 = vmatpush1.bf16.xpose.msra.mxu0 0
        %4407 = vmatprep.subr.bf16.mxu0 0
        %4408 = vmatpush1.bf16.xpose.msra.mxu0 0
        %4409 = vmatprep.subr.bf16.mxu0 0
        %4410 = vmatpush1.bf16.xpose.msra.mxu0 0
        %4411 = vmatprep.subr.bf16.mxu0 0
        %4412 = vmatpush1.bf16.xpose.msra.mxu0 0
        %4413 = vmatprep.subr.bf16.mxu0 0
        %4414 = vmatpush1.bf16.xpose.msra.mxu0 0
        %4415 = vmatprep.subr.bf16.mxu0 0
        %4416 = vmatpush1.bf16.xpose.msra.mxu0 %v4399
        %4417 = vmatprep.subr.bf16.mxu0 0
        %4418 = vmatpush2.bf16.xpose.msra.mxu0 0
        %4419 = vmatprep.subr.bf16.mxu0 0
        %4420 = vmatpush2.bf16.xpose.msra.mxu0 0
        %4421 = vmatprep.subr.bf16.mxu0 0
        %4422 = vmatpush2.bf16.xpose.msra.mxu0 0
        %4423 = vmatprep.subr.bf16.mxu0 0
        %4424 = vmatpush2.bf16.xpose.msra.mxu0 0
        %4425 = vmatprep.subr.bf16.mxu0 0
        %4426 = vmatpush2.bf16.xpose.msra.mxu0 0
        %4427 = vmatprep.subr.bf16.mxu0 0
        %4428 = vmatpush2.bf16.xpose.msra.mxu0 0
        %4429 = vmatprep.subr.bf16.mxu0 0
        %4430 = vmatpush2.bf16.xpose.msra.mxu0 0
        %4431 = vmatprep.subr.bf16.mxu0 0
        %4432 = vmatpush2.bf16.xpose.msra.mxu0 0
        %4433 = vmatprep.mubr.bf16.mxu0 0
        %4434 = vmatmul.mubr.bf16.gmra.mxu0 %v4396
        %v4435 = vpop.f32.mrf.mxu0
        %v4436 = vadd.f32 %v2453, %v4435
        %v4437 = vpop.f32.mrf.mxu0
        %v4438 = vpop.f32.mrf.mxu0
        %v4439 = vpop.f32.mrf.mxu0
        %4440 = vdwg.mxu0
        %4441 = vrot.lane.b32.xlu0 %v2429, 64
        %v4442 = vpop.permute.xlu0 %4441
        %4443 = vrot.lane.b32.xlu0 %v2437, 64
        %v4444 = vpop.permute.xlu0 %4443
        %v4446 = vsel %vm2454, %v4442, 0
        %v4449 = vsel %vm2454, %v4444, 0
        %4451 = vmatprep.subr.bf16.mxu0 0
        %4452 = vmatpush1.bf16.xpose.msra.mxu0 0
        %4453 = vmatprep.subr.bf16.mxu0 0
        %4454 = vmatpush1.bf16.xpose.msra.mxu0 0
        %4455 = vmatprep.subr.bf16.mxu0 0
        %4456 = vmatpush1.bf16.xpose.msra.mxu0 0
        %4457 = vmatprep.subr.bf16.mxu0 0
        %4458 = vmatpush1.bf16.xpose.msra.mxu0 0
        %4459 = vmatprep.subr.bf16.mxu0 0
        %4460 = vmatpush1.bf16.xpose.msra.mxu0 0
        %4461 = vmatprep.subr.bf16.mxu0 0
        %4462 = vmatpush1.bf16.xpose.msra.mxu0 0
        %4463 = vmatprep.subr.bf16.mxu0 0
        %4464 = vmatpush1.bf16.xpose.msra.mxu0 0
        %4465 = vmatprep.subr.bf16.mxu0 0
        %4466 = vmatpush1.bf16.xpose.msra.mxu0 %v4449
        %4467 = vmatprep.subr.bf16.mxu0 0
        %4468 = vmatpush2.bf16.xpose.msra.mxu0 0
        %4469 = vmatprep.subr.bf16.mxu0 0
        %4470 = vmatpush2.bf16.xpose.msra.mxu0 0
        %4471 = vmatprep.subr.bf16.mxu0 0
        %4472 = vmatpush2.bf16.xpose.msra.mxu0 0
        %4473 = vmatprep.subr.bf16.mxu0 0
        %4474 = vmatpush2.bf16.xpose.msra.mxu0 0
        %4475 = vmatprep.subr.bf16.mxu0 0
        %4476 = vmatpush2.bf16.xpose.msra.mxu0 0
        %4477 = vmatprep.subr.bf16.mxu0 0
        %4478 = vmatpush2.bf16.xpose.msra.mxu0 0
        %4479 = vmatprep.subr.bf16.mxu0 0
        %4480 = vmatpush2.bf16.xpose.msra.mxu0 0
        %4481 = vmatprep.subr.bf16.mxu0 0
        %4482 = vmatpush2.bf16.xpose.msra.mxu0 0
        %4483 = vmatprep.mubr.bf16.mxu0 0
        %4484 = vmatmul.mubr.bf16.gmra.mxu0 %v4446
        %v4485 = vpop.f32.mrf.mxu0
        %v4486 = vadd.f32 %v2453, %v4485
        %v4487 = vpop.f32.mrf.mxu0
        %v4488 = vpop.f32.mrf.mxu0
        %v4489 = vpop.f32.mrf.mxu0
        %4490 = vdwg.mxu0
        %4491 = vrot.lane.b32.xlu0 %v2430, 64
        %v4492 = vpop.permute.xlu0 %4491
        %4493 = vrot.lane.b32.xlu0 %v2438, 64
        %v4494 = vpop.permute.xlu0 %4493
        %v4496 = vsel %vm2454, %v4492, 0
        %v4499 = vsel %vm2454, %v4494, 0
        %4501 = vmatprep.subr.bf16.mxu0 0
        %4502 = vmatpush1.bf16.xpose.msra.mxu0 0
        %4503 = vmatprep.subr.bf16.mxu0 0
        %4504 = vmatpush1.bf16.xpose.msra.mxu0 0
        %4505 = vmatprep.subr.bf16.mxu0 0
        %4506 = vmatpush1.bf16.xpose.msra.mxu0 0
        %4507 = vmatprep.subr.bf16.mxu0 0
        %4508 = vmatpush1.bf16.xpose.msra.mxu0 0
        %4509 = vmatprep.subr.bf16.mxu0 0
        %4510 = vmatpush1.bf16.xpose.msra.mxu0 0
        %4511 = vmatprep.subr.bf16.mxu0 0
        %4512 = vmatpush1.bf16.xpose.msra.mxu0 0
        %4513 = vmatprep.subr.bf16.mxu0 0
        %4514 = vmatpush1.bf16.xpose.msra.mxu0 0
        %4515 = vmatprep.subr.bf16.mxu0 0
        %4516 = vmatpush1.bf16.xpose.msra.mxu0 %v4499
        %4517 = vmatprep.subr.bf16.mxu0 0
        %4518 = vmatpush2.bf16.xpose.msra.mxu0 0
        %4519 = vmatprep.subr.bf16.mxu0 0
        %4520 = vmatpush2.bf16.xpose.msra.mxu0 0
        %4521 = vmatprep.subr.bf16.mxu0 0
        %4522 = vmatpush2.bf16.xpose.msra.mxu0 0
        %4523 = vmatprep.subr.bf16.mxu0 0
        %4524 = vmatpush2.bf16.xpose.msra.mxu0 0
        %4525 = vmatprep.subr.bf16.mxu0 0
        %4526 = vmatpush2.bf16.xpose.msra.mxu0 0
        %4527 = vmatprep.subr.bf16.mxu0 0
        %4528 = vmatpush2.bf16.xpose.msra.mxu0 0
        %4529 = vmatprep.subr.bf16.mxu0 0
        %4530 = vmatpush2.bf16.xpose.msra.mxu0 0
        %4531 = vmatprep.subr.bf16.mxu0 0
        %4532 = vmatpush2.bf16.xpose.msra.mxu0 0
        %4533 = vmatprep.mubr.bf16.mxu0 0
        %4534 = vmatmul.mubr.bf16.gmra.mxu0 %v4496
        %v4535 = vpop.f32.mrf.mxu0
        %v4536 = vadd.f32 %v2453, %v4535
        %v4537 = vpop.f32.mrf.mxu0
        %v4538 = vpop.f32.mrf.mxu0
        %v4539 = vpop.f32.mrf.mxu0
        %4540 = vdwg.mxu0
        %4541 = vrot.lane.b32.xlu0 %v2431, 64
        %v4542 = vpop.permute.xlu0 %4541
        %4543 = vrot.lane.b32.xlu0 %v2439, 64
        %v4544 = vpop.permute.xlu0 %4543
        %v4546 = vsel %vm2454, %v4542, 0
        %v4549 = vsel %vm2454, %v4544, 0
        %4551 = vmatprep.subr.bf16.mxu0 0
        %4552 = vmatpush1.bf16.xpose.msra.mxu0 0
        %4553 = vmatprep.subr.bf16.mxu0 0
        %4554 = vmatpush1.bf16.xpose.msra.mxu0 0
        %4555 = vmatprep.subr.bf16.mxu0 0
        %4556 = vmatpush1.bf16.xpose.msra.mxu0 0
        %4557 = vmatprep.subr.bf16.mxu0 0
        %4558 = vmatpush1.bf16.xpose.msra.mxu0 0
        %4559 = vmatprep.subr.bf16.mxu0 0
        %4560 = vmatpush1.bf16.xpose.msra.mxu0 0
        %4561 = vmatprep.subr.bf16.mxu0 0
        %4562 = vmatpush1.bf16.xpose.msra.mxu0 0
        %4563 = vmatprep.subr.bf16.mxu0 0
        %4564 = vmatpush1.bf16.xpose.msra.mxu0 0
        %4565 = vmatprep.subr.bf16.mxu0 0
        %4566 = vmatpush1.bf16.xpose.msra.mxu0 %v4549
        %4567 = vmatprep.subr.bf16.mxu0 0
        %4568 = vmatpush2.bf16.xpose.msra.mxu0 0
        %4569 = vmatprep.subr.bf16.mxu0 0
        %4570 = vmatpush2.bf16.xpose.msra.mxu0 0
        %4571 = vmatprep.subr.bf16.mxu0 0
        %4572 = vmatpush2.bf16.xpose.msra.mxu0 0
        %4573 = vmatprep.subr.bf16.mxu0 0
        %4574 = vmatpush2.bf16.xpose.msra.mxu0 0
        %4575 = vmatprep.subr.bf16.mxu0 0
        %4576 = vmatpush2.bf16.xpose.msra.mxu0 0
        %4577 = vmatprep.subr.bf16.mxu0 0
        %4578 = vmatpush2.bf16.xpose.msra.mxu0 0
        %4579 = vmatprep.subr.bf16.mxu0 0
        %4580 = vmatpush2.bf16.xpose.msra.mxu0 0
        %4581 = vmatprep.subr.bf16.mxu0 0
        %4582 = vmatpush2.bf16.xpose.msra.mxu0 0
        %4583 = vmatprep.mubr.bf16.mxu0 0
        %4584 = vmatmul.mubr.bf16.gmra.mxu0 %v4546
        %v4585 = vpop.f32.mrf.mxu0
        %v4586 = vadd.f32 %v2453, %v4585
        %v4587 = vpop.f32.mrf.mxu0
        %v4588 = vpop.f32.mrf.mxu0
        %v4589 = vpop.f32.mrf.mxu0
        %4590 = vdwg.mxu0
        %4591 = vrot.lane.b32.xlu0 %v2432, 64
        %v4592 = vpop.permute.xlu0 %4591
        %4593 = vrot.lane.b32.xlu0 %v2440, 64
        %v4594 = vpop.permute.xlu0 %4593
        %v4596 = vsel %vm2454, %v4592, 0
        %v4599 = vsel %vm2454, %v4594, 0
        %4601 = vmatprep.subr.bf16.mxu0 0
        %4602 = vmatpush1.bf16.xpose.msra.mxu0 0
        %4603 = vmatprep.subr.bf16.mxu0 0
        %4604 = vmatpush1.bf16.xpose.msra.mxu0 0
        %4605 = vmatprep.subr.bf16.mxu0 0
        %4606 = vmatpush1.bf16.xpose.msra.mxu0 0
        %4607 = vmatprep.subr.bf16.mxu0 0
        %4608 = vmatpush1.bf16.xpose.msra.mxu0 0
        %4609 = vmatprep.subr.bf16.mxu0 0
        %4610 = vmatpush1.bf16.xpose.msra.mxu0 0
        %4611 = vmatprep.subr.bf16.mxu0 0
        %4612 = vmatpush1.bf16.xpose.msra.mxu0 0
        %4613 = vmatprep.subr.bf16.mxu0 0
        %4614 = vmatpush1.bf16.xpose.msra.mxu0 0
        %4615 = vmatprep.subr.bf16.mxu0 0
        %4616 = vmatpush1.bf16.xpose.msra.mxu0 %v4599
        %4617 = vmatprep.subr.bf16.mxu0 0
        %4618 = vmatpush2.bf16.xpose.msra.mxu0 0
        %4619 = vmatprep.subr.bf16.mxu0 0
        %4620 = vmatpush2.bf16.xpose.msra.mxu0 0
        %4621 = vmatprep.subr.bf16.mxu0 0
        %4622 = vmatpush2.bf16.xpose.msra.mxu0 0
        %4623 = vmatprep.subr.bf16.mxu0 0
        %4624 = vmatpush2.bf16.xpose.msra.mxu0 0
        %4625 = vmatprep.subr.bf16.mxu0 0
        %4626 = vmatpush2.bf16.xpose.msra.mxu0 0
        %4627 = vmatprep.subr.bf16.mxu0 0
        %4628 = vmatpush2.bf16.xpose.msra.mxu0 0
        %4629 = vmatprep.subr.bf16.mxu0 0
        %4630 = vmatpush2.bf16.xpose.msra.mxu0 0
        %4631 = vmatprep.subr.bf16.mxu0 0
        %4632 = vmatpush2.bf16.xpose.msra.mxu0 0
        %4633 = vmatprep.mubr.bf16.mxu0 0
        %4634 = vmatmul.mubr.bf16.gmra.mxu0 %v4596
        %v4635 = vpop.f32.mrf.mxu0
        %v4636 = vadd.f32 %v2453, %v4635
        %v4637 = vpop.f32.mrf.mxu0
        %v4638 = vpop.f32.mrf.mxu0
        %v4639 = vpop.f32.mrf.mxu0
        %4640 = vdwg.mxu0
        %4641 = vrot.lane.b32.xlu0 %v2433, 64
        %v4642 = vpop.permute.xlu0 %4641
        %4643 = vrot.lane.b32.xlu0 %v2441, 64
        %v4644 = vpop.permute.xlu0 %4643
        %v4646 = vsel %vm2454, %v4642, 0
        %v4649 = vsel %vm2454, %v4644, 0
        %4651 = vmatprep.subr.bf16.mxu0 0
        %4652 = vmatpush1.bf16.xpose.msra.mxu0 0
        %4653 = vmatprep.subr.bf16.mxu0 0
        %4654 = vmatpush1.bf16.xpose.msra.mxu0 0
        %4655 = vmatprep.subr.bf16.mxu0 0
        %4656 = vmatpush1.bf16.xpose.msra.mxu0 0
        %4657 = vmatprep.subr.bf16.mxu0 0
        %4658 = vmatpush1.bf16.xpose.msra.mxu0 0
        %4659 = vmatprep.subr.bf16.mxu0 0
        %4660 = vmatpush1.bf16.xpose.msra.mxu0 0
        %4661 = vmatprep.subr.bf16.mxu0 0
        %4662 = vmatpush1.bf16.xpose.msra.mxu0 0
        %4663 = vmatprep.subr.bf16.mxu0 0
        %4664 = vmatpush1.bf16.xpose.msra.mxu0 0
        %4665 = vmatprep.subr.bf16.mxu0 0
        %4666 = vmatpush1.bf16.xpose.msra.mxu0 %v4649
        %4667 = vmatprep.subr.bf16.mxu0 0
        %4668 = vmatpush2.bf16.xpose.msra.mxu0 0
        %4669 = vmatprep.subr.bf16.mxu0 0
        %4670 = vmatpush2.bf16.xpose.msra.mxu0 0
        %4671 = vmatprep.subr.bf16.mxu0 0
        %4672 = vmatpush2.bf16.xpose.msra.mxu0 0
        %4673 = vmatprep.subr.bf16.mxu0 0
        %4674 = vmatpush2.bf16.xpose.msra.mxu0 0
        %4675 = vmatprep.subr.bf16.mxu0 0
        %4676 = vmatpush2.bf16.xpose.msra.mxu0 0
        %4677 = vmatprep.subr.bf16.mxu0 0
        %4678 = vmatpush2.bf16.xpose.msra.mxu0 0
        %4679 = vmatprep.subr.bf16.mxu0 0
        %4680 = vmatpush2.bf16.xpose.msra.mxu0 0
        %4681 = vmatprep.subr.bf16.mxu0 0
        %4682 = vmatpush2.bf16.xpose.msra.mxu0 0
        %4683 = vmatprep.mubr.bf16.mxu0 0
        %4684 = vmatmul.mubr.bf16.gmra.mxu0 %v4646
        %v4685 = vpop.f32.mrf.mxu0
        %v4686 = vadd.f32 %v2453, %v4685
        %v4687 = vpop.f32.mrf.mxu0
        %v4688 = vpop.f32.mrf.mxu0
        %v4689 = vpop.f32.mrf.mxu0
        %4690 = vdwg.mxu0
        %v4691 = vsel %vm2823, %v4336, -inf
        %4692 = vmax.xlane.f32.xlu0 %v4691
        %v4693 = vpop.xlane.xlu0 %4692
        %v4694 = vsel %vm2823, %v4386, -inf
        %4695 = vmax.xlane.f32.xlu0 %v4694
        %v4696 = vpop.xlane.xlu0 %4695
        %v4697 = vsel %vm2823, %v4436, -inf
        %4698 = vmax.xlane.f32.xlu0 %v4697
        %v4699 = vpop.xlane.xlu0 %4698
        %v4700 = vsel %vm2823, %v4486, -inf
        %4701 = vmax.xlane.f32.xlu0 %v4700
        %v4702 = vpop.xlane.xlu0 %4701
        %v4703 = vsel %vm2823, %v4536, -inf
        %4704 = vmax.xlane.f32.xlu0 %v4703
        %v4705 = vpop.xlane.xlu0 %4704
        %v4706 = vsel %vm2823, %v4586, -inf
        %4707 = vmax.xlane.f32.xlu0 %v4706
        %v4708 = vpop.xlane.xlu0 %4707
        %v4709 = vsel %vm2823, %v4636, -inf
        %4710 = vmax.xlane.f32.xlu0 %v4709
        %v4711 = vpop.xlane.xlu0 %4710
        %v4712 = vsel %vm2823, %v4686, -inf
        %4713 = vmax.xlane.f32.xlu0 %v4712
        %v4714 = vpop.xlane.xlu0 %4713
        %v4715 = vsub.f32 %v4336, %v4693
        %v4716 = vsub.f32 %v4386, %v4696
        %v4717 = vsub.f32 %v4436, %v4699
        %v4718 = vsub.f32 %v4486, %v4702
        %v4719 = vsub.f32 %v4536, %v4705
        %v4720 = vsub.f32 %v4586, %v4708
        %v4721 = vsub.f32 %v4636, %v4711
        %v4722 = vsub.f32 %v4686, %v4714
        %v4723 = vmul.f32 %v4715, 1.442695
        %v4724 = vpow.pop %v4723
        %v4725 = vmul.f32 %v4716, 1.442695
        %v4726 = vpow.pop %v4725
        %v4727 = vmul.f32 %v4717, 1.442695
        %v4728 = vpow.pop %v4727
        %v4729 = vmul.f32 %v4718, 1.442695
        %v4730 = vpow.pop %v4729
        %v4731 = vmul.f32 %v4719, 1.442695
        %v4732 = vpow.pop %v4731
        %v4733 = vmul.f32 %v4720, 1.442695
        %v4734 = vpow.pop %v4733
        %v4735 = vmul.f32 %v4721, 1.442695
        %v4736 = vpow.pop %v4735
        %v4737 = vmul.f32 %v4722, 1.442695
        %v4738 = vpow.pop %v4737
        %v4739 = vsel %vm2823, %v4724, 0.0
        %4740 = vadd.xlane.f32.xlu0 %v4739
        %v4741 = vpop.xlane.xlu0 %4740
        %v4742 = vsel %vm2823, %v4726, 0.0
        %4743 = vadd.xlane.f32.xlu0 %v4742
        %v4744 = vpop.xlane.xlu0 %4743
        %v4745 = vsel %vm2823, %v4728, 0.0
        %4746 = vadd.xlane.f32.xlu0 %v4745
        %v4747 = vpop.xlane.xlu0 %4746
        %v4748 = vsel %vm2823, %v4730, 0.0
        %4749 = vadd.xlane.f32.xlu0 %v4748
        %v4750 = vpop.xlane.xlu0 %4749
        %v4751 = vsel %vm2823, %v4732, 0.0
        %4752 = vadd.xlane.f32.xlu0 %v4751
        %v4753 = vpop.xlane.xlu0 %4752
        %v4754 = vsel %vm2823, %v4734, 0.0
        %4755 = vadd.xlane.f32.xlu0 %v4754
        %v4756 = vpop.xlane.xlu0 %4755
        %v4757 = vsel %vm2823, %v4736, 0.0
        %4758 = vadd.xlane.f32.xlu0 %v4757
        %v4759 = vpop.xlane.xlu0 %4758
        %v4760 = vsel %vm2823, %v4738, 0.0
        %4761 = vadd.xlane.f32.xlu0 %v4760
        %v4762 = vpop.xlane.xlu0 %4761
        %v4763 = vrcp.pop %v4741
        %v4764 = vrcp.pop %v4744
        %v4765 = vrcp.pop %v4747
        %v4766 = vrcp.pop %v4750
        %v4767 = vrcp.pop %v4753
        %v4768 = vrcp.pop %v4756
        %v4769 = vrcp.pop %v4759
        %v4770 = vrcp.pop %v4762
        %v4771 = vmul.f32 %v4724, %v4763
        %v4772 = vmul.f32 %v4726, %v4764
        %v4773 = vmul.f32 %v4728, %v4765
        %v4774 = vmul.f32 %v4730, %v4766
        %v4775 = vmul.f32 %v4732, %v4767
        %v4776 = vmul.f32 %v4734, %v4768
        %v4777 = vmul.f32 %v4736, %v4769
        %v4778 = vmul.f32 %v4738, %v4770
        %v4779 = vpack.c.bf16 %v4771, %v4771
        %v4780 = vpack.c.bf16 %v4772, %v4772
        %v4781 = vpack.c.bf16 %v4773, %v4773
        %v4782 = vpack.c.bf16 %v4774, %v4774
        %v4783 = vpack.c.bf16 %v4775, %v4775
        %v4784 = vpack.c.bf16 %v4776, %v4776
        %v4785 = vpack.c.bf16 %v4777, %v4777
        %v4786 = vpack.c.bf16 %v4778, %v4778
        %4787 = vrot.lane.b32.xlu0 %v2442, 64
        %v4788 = vpop.permute.xlu0 %4787
        %v4790 = vsel %vm2823, %v4779, 0
        %v4793 = vsel %vm2923, %v4788, 0
        %4795 = vmatprep.subr.bf16.mxu0 0
        %4796 = vmatpush1.bf16.msra.mxu0 0
        %4797 = vmatprep.subr.bf16.mxu0 0
        %4798 = vmatpush1.bf16.msra.mxu0 0
        %4799 = vmatprep.subr.bf16.mxu0 0
        %4800 = vmatpush1.bf16.msra.mxu0 0
        %4801 = vmatprep.subr.bf16.mxu0 0
        %4802 = vmatpush1.bf16.msra.mxu0 0
        %4803 = vmatprep.subr.bf16.mxu0 0
        %4804 = vmatpush1.bf16.msra.mxu0 0
        %4805 = vmatprep.subr.bf16.mxu0 0
        %4806 = vmatpush1.bf16.msra.mxu0 0
        %4807 = vmatprep.subr.bf16.mxu0 0
        %4808 = vmatpush1.bf16.msra.mxu0 0
        %4809 = vmatprep.subr.bf16.mxu0 0
        %4810 = vmatpush1.bf16.msra.mxu0 %v4793
        %4811 = vmatprep.subr.bf16.mxu0 0
        %4812 = vmatpush2.bf16.msra.mxu0 0
        %4813 = vmatprep.subr.bf16.mxu0 0
        %4814 = vmatpush2.bf16.msra.mxu0 0
        %4815 = vmatprep.subr.bf16.mxu0 0
        %4816 = vmatpush2.bf16.msra.mxu0 0
        %4817 = vmatprep.subr.bf16.mxu0 0
        %4818 = vmatpush2.bf16.msra.mxu0 0
        %4819 = vmatprep.subr.bf16.mxu0 0
        %4820 = vmatpush2.bf16.msra.mxu0 0
        %4821 = vmatprep.subr.bf16.mxu0 0
        %4822 = vmatpush2.bf16.msra.mxu0 0
        %4823 = vmatprep.subr.bf16.mxu0 0
        %4824 = vmatpush2.bf16.msra.mxu0 0
        %4825 = vmatprep.subr.bf16.mxu0 0
        %4826 = vmatpush2.bf16.msra.mxu0 0
        %4827 = vmatprep.mubr.bf16.mxu0 0
        %4828 = vmatmul.mubr.bf16.gmra.mxu0 %v4790
        %v4829 = vpop.f32.mrf.mxu0
        %v4830 = vadd.f32 0.0, %v4829
        %v4831 = vpop.f32.mrf.mxu0
        %v4832 = vpop.f32.mrf.mxu0
        %v4833 = vpop.f32.mrf.mxu0
        %4834 = vdwg.mxu0
        %4835 = vrot.lane.b32.xlu0 %v2443, 64
        %v4836 = vpop.permute.xlu0 %4835
        %v4838 = vsel %vm2823, %v4780, 0
        %v4841 = vsel %vm2923, %v4836, 0
        %4843 = vmatprep.subr.bf16.mxu0 0
        %4844 = vmatpush1.bf16.msra.mxu0 0
        %4845 = vmatprep.subr.bf16.mxu0 0
        %4846 = vmatpush1.bf16.msra.mxu0 0
        %4847 = vmatprep.subr.bf16.mxu0 0
        %4848 = vmatpush1.bf16.msra.mxu0 0
        %4849 = vmatprep.subr.bf16.mxu0 0
        %4850 = vmatpush1.bf16.msra.mxu0 0
        %4851 = vmatprep.subr.bf16.mxu0 0
        %4852 = vmatpush1.bf16.msra.mxu0 0
        %4853 = vmatprep.subr.bf16.mxu0 0
        %4854 = vmatpush1.bf16.msra.mxu0 0
        %4855 = vmatprep.subr.bf16.mxu0 0
        %4856 = vmatpush1.bf16.msra.mxu0 0
        %4857 = vmatprep.subr.bf16.mxu0 0
        %4858 = vmatpush1.bf16.msra.mxu0 %v4841
        %4859 = vmatprep.subr.bf16.mxu0 0
        %4860 = vmatpush2.bf16.msra.mxu0 0
        %4861 = vmatprep.subr.bf16.mxu0 0
        %4862 = vmatpush2.bf16.msra.mxu0 0
        %4863 = vmatprep.subr.bf16.mxu0 0
        %4864 = vmatpush2.bf16.msra.mxu0 0
        %4865 = vmatprep.subr.bf16.mxu0 0
        %4866 = vmatpush2.bf16.msra.mxu0 0
        %4867 = vmatprep.subr.bf16.mxu0 0
        %4868 = vmatpush2.bf16.msra.mxu0 0
        %4869 = vmatprep.subr.bf16.mxu0 0
        %4870 = vmatpush2.bf16.msra.mxu0 0
        %4871 = vmatprep.subr.bf16.mxu0 0
        %4872 = vmatpush2.bf16.msra.mxu0 0
        %4873 = vmatprep.subr.bf16.mxu0 0
        %4874 = vmatpush2.bf16.msra.mxu0 0
        %4875 = vmatprep.mubr.bf16.mxu0 0
        %4876 = vmatmul.mubr.bf16.gmra.mxu0 %v4838
        %v4877 = vpop.f32.mrf.mxu0
        %v4878 = vadd.f32 0.0, %v4877
        %v4879 = vpop.f32.mrf.mxu0
        %v4880 = vpop.f32.mrf.mxu0
        %v4881 = vpop.f32.mrf.mxu0
        %4882 = vdwg.mxu0
        %4883 = vrot.lane.b32.xlu0 %v2444, 64
        %v4884 = vpop.permute.xlu0 %4883
        %v4886 = vsel %vm2823, %v4781, 0
        %v4889 = vsel %vm2923, %v4884, 0
        %4891 = vmatprep.subr.bf16.mxu0 0
        %4892 = vmatpush1.bf16.msra.mxu0 0
        %4893 = vmatprep.subr.bf16.mxu0 0
        %4894 = vmatpush1.bf16.msra.mxu0 0
        %4895 = vmatprep.subr.bf16.mxu0 0
        %4896 = vmatpush1.bf16.msra.mxu0 0
        %4897 = vmatprep.subr.bf16.mxu0 0
        %4898 = vmatpush1.bf16.msra.mxu0 0
        %4899 = vmatprep.subr.bf16.mxu0 0
        %4900 = vmatpush1.bf16.msra.mxu0 0
        %4901 = vmatprep.subr.bf16.mxu0 0
        %4902 = vmatpush1.bf16.msra.mxu0 0
        %4903 = vmatprep.subr.bf16.mxu0 0
        %4904 = vmatpush1.bf16.msra.mxu0 0
        %4905 = vmatprep.subr.bf16.mxu0 0
        %4906 = vmatpush1.bf16.msra.mxu0 %v4889
        %4907 = vmatprep.subr.bf16.mxu0 0
        %4908 = vmatpush2.bf16.msra.mxu0 0
        %4909 = vmatprep.subr.bf16.mxu0 0
        %4910 = vmatpush2.bf16.msra.mxu0 0
        %4911 = vmatprep.subr.bf16.mxu0 0
        %4912 = vmatpush2.bf16.msra.mxu0 0
        %4913 = vmatprep.subr.bf16.mxu0 0
        %4914 = vmatpush2.bf16.msra.mxu0 0
        %4915 = vmatprep.subr.bf16.mxu0 0
        %4916 = vmatpush2.bf16.msra.mxu0 0
        %4917 = vmatprep.subr.bf16.mxu0 0
        %4918 = vmatpush2.bf16.msra.mxu0 0
        %4919 = vmatprep.subr.bf16.mxu0 0
        %4920 = vmatpush2.bf16.msra.mxu0 0
        %4921 = vmatprep.subr.bf16.mxu0 0
        %4922 = vmatpush2.bf16.msra.mxu0 0
        %4923 = vmatprep.mubr.bf16.mxu0 0
        %4924 = vmatmul.mubr.bf16.gmra.mxu0 %v4886
        %v4925 = vpop.f32.mrf.mxu0
        %v4926 = vadd.f32 0.0, %v4925
        %v4927 = vpop.f32.mrf.mxu0
        %v4928 = vpop.f32.mrf.mxu0
        %v4929 = vpop.f32.mrf.mxu0
        %4930 = vdwg.mxu0
        %4931 = vrot.lane.b32.xlu0 %v2445, 64
        %v4932 = vpop.permute.xlu0 %4931
        %v4934 = vsel %vm2823, %v4782, 0
        %v4937 = vsel %vm2923, %v4932, 0
        %4939 = vmatprep.subr.bf16.mxu0 0
        %4940 = vmatpush1.bf16.msra.mxu0 0
        %4941 = vmatprep.subr.bf16.mxu0 0
        %4942 = vmatpush1.bf16.msra.mxu0 0
        %4943 = vmatprep.subr.bf16.mxu0 0
        %4944 = vmatpush1.bf16.msra.mxu0 0
        %4945 = vmatprep.subr.bf16.mxu0 0
        %4946 = vmatpush1.bf16.msra.mxu0 0
        %4947 = vmatprep.subr.bf16.mxu0 0
        %4948 = vmatpush1.bf16.msra.mxu0 0
        %4949 = vmatprep.subr.bf16.mxu0 0
        %4950 = vmatpush1.bf16.msra.mxu0 0
        %4951 = vmatprep.subr.bf16.mxu0 0
        %4952 = vmatpush1.bf16.msra.mxu0 0
        %4953 = vmatprep.subr.bf16.mxu0 0
        %4954 = vmatpush1.bf16.msra.mxu0 %v4937
        %4955 = vmatprep.subr.bf16.mxu0 0
        %4956 = vmatpush2.bf16.msra.mxu0 0
        %4957 = vmatprep.subr.bf16.mxu0 0
        %4958 = vmatpush2.bf16.msra.mxu0 0
        %4959 = vmatprep.subr.bf16.mxu0 0
        %4960 = vmatpush2.bf16.msra.mxu0 0
        %4961 = vmatprep.subr.bf16.mxu0 0
        %4962 = vmatpush2.bf16.msra.mxu0 0
        %4963 = vmatprep.subr.bf16.mxu0 0
        %4964 = vmatpush2.bf16.msra.mxu0 0
        %4965 = vmatprep.subr.bf16.mxu0 0
        %4966 = vmatpush2.bf16.msra.mxu0 0
        %4967 = vmatprep.subr.bf16.mxu0 0
        %4968 = vmatpush2.bf16.msra.mxu0 0
        %4969 = vmatprep.subr.bf16.mxu0 0
        %4970 = vmatpush2.bf16.msra.mxu0 0
        %4971 = vmatprep.mubr.bf16.mxu0 0
        %4972 = vmatmul.mubr.bf16.gmra.mxu0 %v4934
        %v4973 = vpop.f32.mrf.mxu0
        %v4974 = vadd.f32 0.0, %v4973
        %v4975 = vpop.f32.mrf.mxu0
        %v4976 = vpop.f32.mrf.mxu0
        %v4977 = vpop.f32.mrf.mxu0
        %4978 = vdwg.mxu0
        %4979 = vrot.lane.b32.xlu0 %v2446, 64
        %v4980 = vpop.permute.xlu0 %4979
        %v4982 = vsel %vm2823, %v4783, 0
        %v4985 = vsel %vm2923, %v4980, 0
        %4987 = vmatprep.subr.bf16.mxu0 0
        %4988 = vmatpush1.bf16.msra.mxu0 0
        %4989 = vmatprep.subr.bf16.mxu0 0
        %4990 = vmatpush1.bf16.msra.mxu0 0
        %4991 = vmatprep.subr.bf16.mxu0 0
        %4992 = vmatpush1.bf16.msra.mxu0 0
        %4993 = vmatprep.subr.bf16.mxu0 0
        %4994 = vmatpush1.bf16.msra.mxu0 0
        %4995 = vmatprep.subr.bf16.mxu0 0
        %4996 = vmatpush1.bf16.msra.mxu0 0
        %4997 = vmatprep.subr.bf16.mxu0 0
        %4998 = vmatpush1.bf16.msra.mxu0 0
        %4999 = vmatprep.subr.bf16.mxu0 0
        %5000 = vmatpush1.bf16.msra.mxu0 0
        %5001 = vmatprep.subr.bf16.mxu0 0
        %5002 = vmatpush1.bf16.msra.mxu0 %v4985
        %5003 = vmatprep.subr.bf16.mxu0 0
        %5004 = vmatpush2.bf16.msra.mxu0 0
        %5005 = vmatprep.subr.bf16.mxu0 0
        %5006 = vmatpush2.bf16.msra.mxu0 0
        %5007 = vmatprep.subr.bf16.mxu0 0
        %5008 = vmatpush2.bf16.msra.mxu0 0
        %5009 = vmatprep.subr.bf16.mxu0 0
        %5010 = vmatpush2.bf16.msra.mxu0 0
        %5011 = vmatprep.subr.bf16.mxu0 0
        %5012 = vmatpush2.bf16.msra.mxu0 0
        %5013 = vmatprep.subr.bf16.mxu0 0
        %5014 = vmatpush2.bf16.msra.mxu0 0
        %5015 = vmatprep.subr.bf16.mxu0 0
        %5016 = vmatpush2.bf16.msra.mxu0 0
        %5017 = vmatprep.subr.bf16.mxu0 0
        %5018 = vmatpush2.bf16.msra.mxu0 0
        %5019 = vmatprep.mubr.bf16.mxu0 0
        %5020 = vmatmul.mubr.bf16.gmra.mxu0 %v4982
        %v5021 = vpop.f32.mrf.mxu0
        %v5022 = vadd.f32 0.0, %v5021
        %v5023 = vpop.f32.mrf.mxu0
        %v5024 = vpop.f32.mrf.mxu0
        %v5025 = vpop.f32.mrf.mxu0
        %5026 = vdwg.mxu0
        %5027 = vrot.lane.b32.xlu0 %v2447, 64
        %v5028 = vpop.permute.xlu0 %5027
        %v5030 = vsel %vm2823, %v4784, 0
        %v5033 = vsel %vm2923, %v5028, 0
        %5035 = vmatprep.subr.bf16.mxu0 0
        %5036 = vmatpush1.bf16.msra.mxu0 0
        %5037 = vmatprep.subr.bf16.mxu0 0
        %5038 = vmatpush1.bf16.msra.mxu0 0
        %5039 = vmatprep.subr.bf16.mxu0 0
        %5040 = vmatpush1.bf16.msra.mxu0 0
        %5041 = vmatprep.subr.bf16.mxu0 0
        %5042 = vmatpush1.bf16.msra.mxu0 0
        %5043 = vmatprep.subr.bf16.mxu0 0
        %5044 = vmatpush1.bf16.msra.mxu0 0
        %5045 = vmatprep.subr.bf16.mxu0 0
        %5046 = vmatpush1.bf16.msra.mxu0 0
        %5047 = vmatprep.subr.bf16.mxu0 0
        %5048 = vmatpush1.bf16.msra.mxu0 0
        %5049 = vmatprep.subr.bf16.mxu0 0
        %5050 = vmatpush1.bf16.msra.mxu0 %v5033
        %5051 = vmatprep.subr.bf16.mxu0 0
        %5052 = vmatpush2.bf16.msra.mxu0 0
        %5053 = vmatprep.subr.bf16.mxu0 0
        %5054 = vmatpush2.bf16.msra.mxu0 0
        %5055 = vmatprep.subr.bf16.mxu0 0
        %5056 = vmatpush2.bf16.msra.mxu0 0
        %5057 = vmatprep.subr.bf16.mxu0 0
        %5058 = vmatpush2.bf16.msra.mxu0 0
        %5059 = vmatprep.subr.bf16.mxu0 0
        %5060 = vmatpush2.bf16.msra.mxu0 0
        %5061 = vmatprep.subr.bf16.mxu0 0
        %5062 = vmatpush2.bf16.msra.mxu0 0
        %5063 = vmatprep.subr.bf16.mxu0 0
        %5064 = vmatpush2.bf16.msra.mxu0 0
        %5065 = vmatprep.subr.bf16.mxu0 0
        %5066 = vmatpush2.bf16.msra.mxu0 0
        %5067 = vmatprep.mubr.bf16.mxu0 0
        %5068 = vmatmul.mubr.bf16.gmra.mxu0 %v5030
        %v5069 = vpop.f32.mrf.mxu0
        %v5070 = vadd.f32 0.0, %v5069
        %v5071 = vpop.f32.mrf.mxu0
        %v5072 = vpop.f32.mrf.mxu0
        %v5073 = vpop.f32.mrf.mxu0
        %5074 = vdwg.mxu0
        %5075 = vrot.lane.b32.xlu0 %v2448, 64
        %v5076 = vpop.permute.xlu0 %5075
        %v5078 = vsel %vm2823, %v4785, 0
        %v5081 = vsel %vm2923, %v5076, 0
        %5083 = vmatprep.subr.bf16.mxu0 0
        %5084 = vmatpush1.bf16.msra.mxu0 0
        %5085 = vmatprep.subr.bf16.mxu0 0
        %5086 = vmatpush1.bf16.msra.mxu0 0
        %5087 = vmatprep.subr.bf16.mxu0 0
        %5088 = vmatpush1.bf16.msra.mxu0 0
        %5089 = vmatprep.subr.bf16.mxu0 0
        %5090 = vmatpush1.bf16.msra.mxu0 0
        %5091 = vmatprep.subr.bf16.mxu0 0
        %5092 = vmatpush1.bf16.msra.mxu0 0
        %5093 = vmatprep.subr.bf16.mxu0 0
        %5094 = vmatpush1.bf16.msra.mxu0 0
        %5095 = vmatprep.subr.bf16.mxu0 0
        %5096 = vmatpush1.bf16.msra.mxu0 0
        %5097 = vmatprep.subr.bf16.mxu0 0
        %5098 = vmatpush1.bf16.msra.mxu0 %v5081
        %5099 = vmatprep.subr.bf16.mxu0 0
        %5100 = vmatpush2.bf16.msra.mxu0 0
        %5101 = vmatprep.subr.bf16.mxu0 0
        %5102 = vmatpush2.bf16.msra.mxu0 0
        %5103 = vmatprep.subr.bf16.mxu0 0
        %5104 = vmatpush2.bf16.msra.mxu0 0
        %5105 = vmatprep.subr.bf16.mxu0 0
        %5106 = vmatpush2.bf16.msra.mxu0 0
        %5107 = vmatprep.subr.bf16.mxu0 0
        %5108 = vmatpush2.bf16.msra.mxu0 0
        %5109 = vmatprep.subr.bf16.mxu0 0
        %5110 = vmatpush2.bf16.msra.mxu0 0
        %5111 = vmatprep.subr.bf16.mxu0 0
        %5112 = vmatpush2.bf16.msra.mxu0 0
        %5113 = vmatprep.subr.bf16.mxu0 0
        %5114 = vmatpush2.bf16.msra.mxu0 0
        %5115 = vmatprep.mubr.bf16.mxu0 0
        %5116 = vmatmul.mubr.bf16.gmra.mxu0 %v5078
        %v5117 = vpop.f32.mrf.mxu0
        %v5118 = vadd.f32 0.0, %v5117
        %v5119 = vpop.f32.mrf.mxu0
        %v5120 = vpop.f32.mrf.mxu0
        %v5121 = vpop.f32.mrf.mxu0
        %5122 = vdwg.mxu0
        %5123 = vrot.lane.b32.xlu0 %v2449, 64
        %v5124 = vpop.permute.xlu0 %5123
        %v5126 = vsel %vm2823, %v4786, 0
        %v5129 = vsel %vm2923, %v5124, 0
        %5131 = vmatprep.subr.bf16.mxu0 0
        %5132 = vmatpush1.bf16.msra.mxu0 0
        %5133 = vmatprep.subr.bf16.mxu0 0
        %5134 = vmatpush1.bf16.msra.mxu0 0
        %5135 = vmatprep.subr.bf16.mxu0 0
        %5136 = vmatpush1.bf16.msra.mxu0 0
        %5137 = vmatprep.subr.bf16.mxu0 0
        %5138 = vmatpush1.bf16.msra.mxu0 0
        %5139 = vmatprep.subr.bf16.mxu0 0
        %5140 = vmatpush1.bf16.msra.mxu0 0
        %5141 = vmatprep.subr.bf16.mxu0 0
        %5142 = vmatpush1.bf16.msra.mxu0 0
        %5143 = vmatprep.subr.bf16.mxu0 0
        %5144 = vmatpush1.bf16.msra.mxu0 0
        %5145 = vmatprep.subr.bf16.mxu0 0
        %5146 = vmatpush1.bf16.msra.mxu0 %v5129
        %5147 = vmatprep.subr.bf16.mxu0 0
        %5148 = vmatpush2.bf16.msra.mxu0 0
        %5149 = vmatprep.subr.bf16.mxu0 0
        %5150 = vmatpush2.bf16.msra.mxu0 0
        %5151 = vmatprep.subr.bf16.mxu0 0
        %5152 = vmatpush2.bf16.msra.mxu0 0
        %5153 = vmatprep.subr.bf16.mxu0 0
        %5154 = vmatpush2.bf16.msra.mxu0 0
        %5155 = vmatprep.subr.bf16.mxu0 0
        %5156 = vmatpush2.bf16.msra.mxu0 0
        %5157 = vmatprep.subr.bf16.mxu0 0
        %5158 = vmatpush2.bf16.msra.mxu0 0
        %5159 = vmatprep.subr.bf16.mxu0 0
        %5160 = vmatpush2.bf16.msra.mxu0 0
        %5161 = vmatprep.subr.bf16.mxu0 0
        %5162 = vmatpush2.bf16.msra.mxu0 0
        %5163 = vmatprep.mubr.bf16.mxu0 0
        %5164 = vmatmul.mubr.bf16.gmra.mxu0 %v5126
        %v5165 = vpop.f32.mrf.mxu0
        %v5166 = vadd.f32 0.0, %v5165
        %v5167 = vpop.f32.mrf.mxu0
        %v5168 = vpop.f32.mrf.mxu0
        %v5169 = vpop.f32.mrf.mxu0
        %5170 = vdwg.mxu0
        %v5171 = vpack.c.bf16 %v4878, %v4830
        %v5172 = vpack.c.bf16 %v4974, %v4926
        %v5173 = vpack.c.bf16 %v5070, %v5022
        %v5174 = vpack.c.bf16 %v5166, %v5118
        %v5179 = vunpack.c.l.b16 %v5171
        %v5180 = vunpack.c.h.b16 %v5171
        %v5181 = vunpack.c.l.b16 %v5172
        %v5182 = vunpack.c.h.b16 %v5172
        %v5183 = vunpack.c.l.b16 %v5173
        %v5184 = vunpack.c.h.b16 %v5173
        %v5185 = vunpack.c.l.b16 %v5174
        %v5186 = vunpack.c.h.b16 %v5174
        %v5187 = vpack.c.b16 %v5179, %v5179
        %v5188 = vpack.c.b16 %v5180, %v5180
        %v5189 = vpack.c.b16 %v5181, %v5181
        %v5190 = vpack.c.b16 %v5182, %v5182
        %v5191 = vpack.c.b16 %v5183, %v5183
        %v5192 = vpack.c.b16 %v5184, %v5184
        %v5193 = vpack.c.b16 %v5185, %v5185
        %v5194 = vpack.c.b16 %v5186, %v5186
        %5195 = vrot.lane.b32.xlu0 %v5187, 64
        %v5196 = vpop.permute.xlu0 %5195
        %5197 = vrot.lane.b32.xlu0 %v5188, 64
        %v5198 = vpop.permute.xlu0 %5197
        %5199 = vrot.lane.b32.xlu0 %v5189, 64
        %v5200 = vpop.permute.xlu0 %5199
        %5201 = vrot.lane.b32.xlu0 %v5190, 64
        %v5202 = vpop.permute.xlu0 %5201
        %5203 = vrot.lane.b32.xlu0 %v5191, 64
        %v5204 = vpop.permute.xlu0 %5203
        %5205 = vrot.lane.b32.xlu0 %v5192, 64
        %v5206 = vpop.permute.xlu0 %5205
        %5207 = vrot.lane.b32.xlu0 %v5193, 64
        %v5208 = vpop.permute.xlu0 %5207
        %5209 = vrot.lane.b32.xlu0 %v5194, 64
        %v5210 = vpop.permute.xlu0 %5209
        %vm5219 = vcmask 781824
        %5220 = vst.msk [vmem:[#allocation3] sm:$0xf] %vm5219, %v5196
        %5221 = vst.msk [vmem:[#allocation3 + $0x4] sm:$0xf] %vm5219, %v5198
        %5222 = vst.msk [vmem:[#allocation3 + $0x8] sm:$0xf] %vm5219, %v5200
        %5223 = vst.msk [vmem:[#allocation3 + $0xc] sm:$0xf] %vm5219, %v5202
        %5224 = vst.msk [vmem:[#allocation3 + $0x10] sm:$0xf] %vm5219, %v5204
        %5225 = vst.msk [vmem:[#allocation3 + $0x14] sm:$0xf] %vm5219, %v5206
        %5226 = vst.msk [vmem:[#allocation3 + $0x18] sm:$0xf] %vm5219, %v5208
        %5227 = vst.msk [vmem:[#allocation3 + $0x1c] sm:$0xf] %vm5219, %v5210
        %5228 = vrot.lane.b32.xlu0 %v2426, 32
        %v5229 = vpop.permute.xlu0 %5228
        %5230 = vrot.lane.b32.xlu0 %v2434, 32
        %v5231 = vpop.permute.xlu0 %5230
        %v5233 = vsel %vm2454, %v5229, 0
        %v5236 = vsel %vm2454, %v5231, 0
        %5238 = vmatprep.subr.bf16.mxu0 0
        %5239 = vmatpush1.bf16.xpose.msra.mxu0 0
        %5240 = vmatprep.subr.bf16.mxu0 0
        %5241 = vmatpush1.bf16.xpose.msra.mxu0 0
        %5242 = vmatprep.subr.bf16.mxu0 0
        %5243 = vmatpush1.bf16.xpose.msra.mxu0 0
        %5244 = vmatprep.subr.bf16.mxu0 0
        %5245 = vmatpush1.bf16.xpose.msra.mxu0 0
        %5246 = vmatprep.subr.bf16.mxu0 0
        %5247 = vmatpush1.bf16.xpose.msra.mxu0 0
        %5248 = vmatprep.subr.bf16.mxu0 0
        %5249 = vmatpush1.bf16.xpose.msra.mxu0 0
        %5250 = vmatprep.subr.bf16.mxu0 0
        %5251 = vmatpush1.bf16.xpose.msra.mxu0 0
        %5252 = vmatprep.subr.bf16.mxu0 0
        %5253 = vmatpush1.bf16.xpose.msra.mxu0 %v5236
        %5254 = vmatprep.subr.bf16.mxu0 0
        %5255 = vmatpush2.bf16.xpose.msra.mxu0 0
        %5256 = vmatprep.subr.bf16.mxu0 0
        %5257 = vmatpush2.bf16.xpose.msra.mxu0 0
        %5258 = vmatprep.subr.bf16.mxu0 0
        %5259 = vmatpush2.bf16.xpose.msra.mxu0 0
        %5260 = vmatprep.subr.bf16.mxu0 0
        %5261 = vmatpush2.bf16.xpose.msra.mxu0 0
        %5262 = vmatprep.subr.bf16.mxu0 0
        %5263 = vmatpush2.bf16.xpose.msra.mxu0 0
        %5264 = vmatprep.subr.bf16.mxu0 0
        %5265 = vmatpush2.bf16.xpose.msra.mxu0 0
        %5266 = vmatprep.subr.bf16.mxu0 0
        %5267 = vmatpush2.bf16.xpose.msra.mxu0 0
        %5268 = vmatprep.subr.bf16.mxu0 0
        %5269 = vmatpush2.bf16.xpose.msra.mxu0 0
        %5270 = vmatprep.mubr.bf16.mxu0 0
        %5271 = vmatmul.mubr.bf16.gmra.mxu0 %v5233
        %v5272 = vpop.f32.mrf.mxu0
        %v5273 = vadd.f32 %v2453, %v5272
        %v5274 = vpop.f32.mrf.mxu0
        %v5275 = vpop.f32.mrf.mxu0
        %v5276 = vpop.f32.mrf.mxu0
        %5277 = vdwg.mxu0
        %5278 = vrot.lane.b32.xlu0 %v2427, 32
        %v5279 = vpop.permute.xlu0 %5278
        %5280 = vrot.lane.b32.xlu0 %v2435, 32
        %v5281 = vpop.permute.xlu0 %5280
        %v5283 = vsel %vm2454, %v5279, 0
        %v5286 = vsel %vm2454, %v5281, 0
        %5288 = vmatprep.subr.bf16.mxu0 0
        %5289 = vmatpush1.bf16.xpose.msra.mxu0 0
        %5290 = vmatprep.subr.bf16.mxu0 0
        %5291 = vmatpush1.bf16.xpose.msra.mxu0 0
        %5292 = vmatprep.subr.bf16.mxu0 0
        %5293 = vmatpush1.bf16.xpose.msra.mxu0 0
        %5294 = vmatprep.subr.bf16.mxu0 0
        %5295 = vmatpush1.bf16.xpose.msra.mxu0 0
        %5296 = vmatprep.subr.bf16.mxu0 0
        %5297 = vmatpush1.bf16.xpose.msra.mxu0 0
        %5298 = vmatprep.subr.bf16.mxu0 0
        %5299 = vmatpush1.bf16.xpose.msra.mxu0 0
        %5300 = vmatprep.subr.bf16.mxu0 0
        %5301 = vmatpush1.bf16.xpose.msra.mxu0 0
        %5302 = vmatprep.subr.bf16.mxu0 0
        %5303 = vmatpush1.bf16.xpose.msra.mxu0 %v5286
        %5304 = vmatprep.subr.bf16.mxu0 0
        %5305 = vmatpush2.bf16.xpose.msra.mxu0 0
        %5306 = vmatprep.subr.bf16.mxu0 0
        %5307 = vmatpush2.bf16.xpose.msra.mxu0 0
        %5308 = vmatprep.subr.bf16.mxu0 0
        %5309 = vmatpush2.bf16.xpose.msra.mxu0 0
        %5310 = vmatprep.subr.bf16.mxu0 0
        %5311 = vmatpush2.bf16.xpose.msra.mxu0 0
        %5312 = vmatprep.subr.bf16.mxu0 0
        %5313 = vmatpush2.bf16.xpose.msra.mxu0 0
        %5314 = vmatprep.subr.bf16.mxu0 0
        %5315 = vmatpush2.bf16.xpose.msra.mxu0 0
        %5316 = vmatprep.subr.bf16.mxu0 0
        %5317 = vmatpush2.bf16.xpose.msra.mxu0 0
        %5318 = vmatprep.subr.bf16.mxu0 0
        %5319 = vmatpush2.bf16.xpose.msra.mxu0 0
        %5320 = vmatprep.mubr.bf16.mxu0 0
        %5321 = vmatmul.mubr.bf16.gmra.mxu0 %v5283
        %v5322 = vpop.f32.mrf.mxu0
        %v5323 = vadd.f32 %v2453, %v5322
        %v5324 = vpop.f32.mrf.mxu0
        %v5325 = vpop.f32.mrf.mxu0
        %v5326 = vpop.f32.mrf.mxu0
        %5327 = vdwg.mxu0
        %5328 = vrot.lane.b32.xlu0 %v2428, 32
        %v5329 = vpop.permute.xlu0 %5328
        %5330 = vrot.lane.b32.xlu0 %v2436, 32
        %v5331 = vpop.permute.xlu0 %5330
        %v5333 = vsel %vm2454, %v5329, 0
        %v5336 = vsel %vm2454, %v5331, 0
        %5338 = vmatprep.subr.bf16.mxu0 0
        %5339 = vmatpush1.bf16.xpose.msra.mxu0 0
        %5340 = vmatprep.subr.bf16.mxu0 0
        %5341 = vmatpush1.bf16.xpose.msra.mxu0 0
        %5342 = vmatprep.subr.bf16.mxu0 0
        %5343 = vmatpush1.bf16.xpose.msra.mxu0 0
        %5344 = vmatprep.subr.bf16.mxu0 0
        %5345 = vmatpush1.bf16.xpose.msra.mxu0 0
        %5346 = vmatprep.subr.bf16.mxu0 0
        %5347 = vmatpush1.bf16.xpose.msra.mxu0 0
        %5348 = vmatprep.subr.bf16.mxu0 0
        %5349 = vmatpush1.bf16.xpose.msra.mxu0 0
        %5350 = vmatprep.subr.bf16.mxu0 0
        %5351 = vmatpush1.bf16.xpose.msra.mxu0 0
        %5352 = vmatprep.subr.bf16.mxu0 0
        %5353 = vmatpush1.bf16.xpose.msra.mxu0 %v5336
        %5354 = vmatprep.subr.bf16.mxu0 0
        %5355 = vmatpush2.bf16.xpose.msra.mxu0 0
        %5356 = vmatprep.subr.bf16.mxu0 0
        %5357 = vmatpush2.bf16.xpose.msra.mxu0 0
        %5358 = vmatprep.subr.bf16.mxu0 0
        %5359 = vmatpush2.bf16.xpose.msra.mxu0 0
        %5360 = vmatprep.subr.bf16.mxu0 0
        %5361 = vmatpush2.bf16.xpose.msra.mxu0 0
        %5362 = vmatprep.subr.bf16.mxu0 0
        %5363 = vmatpush2.bf16.xpose.msra.mxu0 0
        %5364 = vmatprep.subr.bf16.mxu0 0
        %5365 = vmatpush2.bf16.xpose.msra.mxu0 0
        %5366 = vmatprep.subr.bf16.mxu0 0
        %5367 = vmatpush2.bf16.xpose.msra.mxu0 0
        %5368 = vmatprep.subr.bf16.mxu0 0
        %5369 = vmatpush2.bf16.xpose.msra.mxu0 0
        %5370 = vmatprep.mubr.bf16.mxu0 0
        %5371 = vmatmul.mubr.bf16.gmra.mxu0 %v5333
        %v5372 = vpop.f32.mrf.mxu0
        %v5373 = vadd.f32 %v2453, %v5372
        %v5374 = vpop.f32.mrf.mxu0
        %v5375 = vpop.f32.mrf.mxu0
        %v5376 = vpop.f32.mrf.mxu0
        %5377 = vdwg.mxu0
        %5378 = vrot.lane.b32.xlu0 %v2429, 32
        %v5379 = vpop.permute.xlu0 %5378
        %5380 = vrot.lane.b32.xlu0 %v2437, 32
        %v5381 = vpop.permute.xlu0 %5380
        %v5383 = vsel %vm2454, %v5379, 0
        %v5386 = vsel %vm2454, %v5381, 0
        %5388 = vmatprep.subr.bf16.mxu0 0
        %5389 = vmatpush1.bf16.xpose.msra.mxu0 0
        %5390 = vmatprep.subr.bf16.mxu0 0
        %5391 = vmatpush1.bf16.xpose.msra.mxu0 0
        %5392 = vmatprep.subr.bf16.mxu0 0
        %5393 = vmatpush1.bf16.xpose.msra.mxu0 0
        %5394 = vmatprep.subr.bf16.mxu0 0
        %5395 = vmatpush1.bf16.xpose.msra.mxu0 0
        %5396 = vmatprep.subr.bf16.mxu0 0
        %5397 = vmatpush1.bf16.xpose.msra.mxu0 0
        %5398 = vmatprep.subr.bf16.mxu0 0
        %5399 = vmatpush1.bf16.xpose.msra.mxu0 0
        %5400 = vmatprep.subr.bf16.mxu0 0
        %5401 = vmatpush1.bf16.xpose.msra.mxu0 0
        %5402 = vmatprep.subr.bf16.mxu0 0
        %5403 = vmatpush1.bf16.xpose.msra.mxu0 %v5386
        %5404 = vmatprep.subr.bf16.mxu0 0
        %5405 = vmatpush2.bf16.xpose.msra.mxu0 0
        %5406 = vmatprep.subr.bf16.mxu0 0
        %5407 = vmatpush2.bf16.xpose.msra.mxu0 0
        %5408 = vmatprep.subr.bf16.mxu0 0
        %5409 = vmatpush2.bf16.xpose.msra.mxu0 0
        %5410 = vmatprep.subr.bf16.mxu0 0
        %5411 = vmatpush2.bf16.xpose.msra.mxu0 0
        %5412 = vmatprep.subr.bf16.mxu0 0
        %5413 = vmatpush2.bf16.xpose.msra.mxu0 0
        %5414 = vmatprep.subr.bf16.mxu0 0
        %5415 = vmatpush2.bf16.xpose.msra.mxu0 0
        %5416 = vmatprep.subr.bf16.mxu0 0
        %5417 = vmatpush2.bf16.xpose.msra.mxu0 0
        %5418 = vmatprep.subr.bf16.mxu0 0
        %5419 = vmatpush2.bf16.xpose.msra.mxu0 0
        %5420 = vmatprep.mubr.bf16.mxu0 0
        %5421 = vmatmul.mubr.bf16.gmra.mxu0 %v5383
        %v5422 = vpop.f32.mrf.mxu0
        %v5423 = vadd.f32 %v2453, %v5422
        %v5424 = vpop.f32.mrf.mxu0
        %v5425 = vpop.f32.mrf.mxu0
        %v5426 = vpop.f32.mrf.mxu0
        %5427 = vdwg.mxu0
        %5428 = vrot.lane.b32.xlu0 %v2430, 32
        %v5429 = vpop.permute.xlu0 %5428
        %5430 = vrot.lane.b32.xlu0 %v2438, 32
        %v5431 = vpop.permute.xlu0 %5430
        %v5433 = vsel %vm2454, %v5429, 0
        %v5436 = vsel %vm2454, %v5431, 0
        %5438 = vmatprep.subr.bf16.mxu0 0
        %5439 = vmatpush1.bf16.xpose.msra.mxu0 0
        %5440 = vmatprep.subr.bf16.mxu0 0
        %5441 = vmatpush1.bf16.xpose.msra.mxu0 0
        %5442 = vmatprep.subr.bf16.mxu0 0
        %5443 = vmatpush1.bf16.xpose.msra.mxu0 0
        %5444 = vmatprep.subr.bf16.mxu0 0
        %5445 = vmatpush1.bf16.xpose.msra.mxu0 0
        %5446 = vmatprep.subr.bf16.mxu0 0
        %5447 = vmatpush1.bf16.xpose.msra.mxu0 0
        %5448 = vmatprep.subr.bf16.mxu0 0
        %5449 = vmatpush1.bf16.xpose.msra.mxu0 0
        %5450 = vmatprep.subr.bf16.mxu0 0
        %5451 = vmatpush1.bf16.xpose.msra.mxu0 0
        %5452 = vmatprep.subr.bf16.mxu0 0
        %5453 = vmatpush1.bf16.xpose.msra.mxu0 %v5436
        %5454 = vmatprep.subr.bf16.mxu0 0
        %5455 = vmatpush2.bf16.xpose.msra.mxu0 0
        %5456 = vmatprep.subr.bf16.mxu0 0
        %5457 = vmatpush2.bf16.xpose.msra.mxu0 0
        %5458 = vmatprep.subr.bf16.mxu0 0
        %5459 = vmatpush2.bf16.xpose.msra.mxu0 0
        %5460 = vmatprep.subr.bf16.mxu0 0
        %5461 = vmatpush2.bf16.xpose.msra.mxu0 0
        %5462 = vmatprep.subr.bf16.mxu0 0
        %5463 = vmatpush2.bf16.xpose.msra.mxu0 0
        %5464 = vmatprep.subr.bf16.mxu0 0
        %5465 = vmatpush2.bf16.xpose.msra.mxu0 0
        %5466 = vmatprep.subr.bf16.mxu0 0
        %5467 = vmatpush2.bf16.xpose.msra.mxu0 0
        %5468 = vmatprep.subr.bf16.mxu0 0
        %5469 = vmatpush2.bf16.xpose.msra.mxu0 0
        %5470 = vmatprep.mubr.bf16.mxu0 0
        %5471 = vmatmul.mubr.bf16.gmra.mxu0 %v5433
        %v5472 = vpop.f32.mrf.mxu0
        %v5473 = vadd.f32 %v2453, %v5472
        %v5474 = vpop.f32.mrf.mxu0
        %v5475 = vpop.f32.mrf.mxu0
        %v5476 = vpop.f32.mrf.mxu0
        %5477 = vdwg.mxu0
        %5478 = vrot.lane.b32.xlu0 %v2431, 32
        %v5479 = vpop.permute.xlu0 %5478
        %5480 = vrot.lane.b32.xlu0 %v2439, 32
        %v5481 = vpop.permute.xlu0 %5480
        %v5483 = vsel %vm2454, %v5479, 0
        %v5486 = vsel %vm2454, %v5481, 0
        %5488 = vmatprep.subr.bf16.mxu0 0
        %5489 = vmatpush1.bf16.xpose.msra.mxu0 0
        %5490 = vmatprep.subr.bf16.mxu0 0
        %5491 = vmatpush1.bf16.xpose.msra.mxu0 0
        %5492 = vmatprep.subr.bf16.mxu0 0
        %5493 = vmatpush1.bf16.xpose.msra.mxu0 0
        %5494 = vmatprep.subr.bf16.mxu0 0
        %5495 = vmatpush1.bf16.xpose.msra.mxu0 0
        %5496 = vmatprep.subr.bf16.mxu0 0
        %5497 = vmatpush1.bf16.xpose.msra.mxu0 0
        %5498 = vmatprep.subr.bf16.mxu0 0
        %5499 = vmatpush1.bf16.xpose.msra.mxu0 0
        %5500 = vmatprep.subr.bf16.mxu0 0
        %5501 = vmatpush1.bf16.xpose.msra.mxu0 0
        %5502 = vmatprep.subr.bf16.mxu0 0
        %5503 = vmatpush1.bf16.xpose.msra.mxu0 %v5486
        %5504 = vmatprep.subr.bf16.mxu0 0
        %5505 = vmatpush2.bf16.xpose.msra.mxu0 0
        %5506 = vmatprep.subr.bf16.mxu0 0
        %5507 = vmatpush2.bf16.xpose.msra.mxu0 0
        %5508 = vmatprep.subr.bf16.mxu0 0
        %5509 = vmatpush2.bf16.xpose.msra.mxu0 0
        %5510 = vmatprep.subr.bf16.mxu0 0
        %5511 = vmatpush2.bf16.xpose.msra.mxu0 0
        %5512 = vmatprep.subr.bf16.mxu0 0
        %5513 = vmatpush2.bf16.xpose.msra.mxu0 0
        %5514 = vmatprep.subr.bf16.mxu0 0
        %5515 = vmatpush2.bf16.xpose.msra.mxu0 0
        %5516 = vmatprep.subr.bf16.mxu0 0
        %5517 = vmatpush2.bf16.xpose.msra.mxu0 0
        %5518 = vmatprep.subr.bf16.mxu0 0
        %5519 = vmatpush2.bf16.xpose.msra.mxu0 0
        %5520 = vmatprep.mubr.bf16.mxu0 0
        %5521 = vmatmul.mubr.bf16.gmra.mxu0 %v5483
        %v5522 = vpop.f32.mrf.mxu0
        %v5523 = vadd.f32 %v2453, %v5522
        %v5524 = vpop.f32.mrf.mxu0
        %v5525 = vpop.f32.mrf.mxu0
        %v5526 = vpop.f32.mrf.mxu0
        %5527 = vdwg.mxu0
        %5528 = vrot.lane.b32.xlu0 %v2432, 32
        %v5529 = vpop.permute.xlu0 %5528
        %5530 = vrot.lane.b32.xlu0 %v2440, 32
        %v5531 = vpop.permute.xlu0 %5530
        %v5533 = vsel %vm2454, %v5529, 0
        %v5536 = vsel %vm2454, %v5531, 0
        %5538 = vmatprep.subr.bf16.mxu0 0
        %5539 = vmatpush1.bf16.xpose.msra.mxu0 0
        %5540 = vmatprep.subr.bf16.mxu0 0
        %5541 = vmatpush1.bf16.xpose.msra.mxu0 0
        %5542 = vmatprep.subr.bf16.mxu0 0
        %5543 = vmatpush1.bf16.xpose.msra.mxu0 0
        %5544 = vmatprep.subr.bf16.mxu0 0
        %5545 = vmatpush1.bf16.xpose.msra.mxu0 0
        %5546 = vmatprep.subr.bf16.mxu0 0
        %5547 = vmatpush1.bf16.xpose.msra.mxu0 0
        %5548 = vmatprep.subr.bf16.mxu0 0
        %5549 = vmatpush1.bf16.xpose.msra.mxu0 0
        %5550 = vmatprep.subr.bf16.mxu0 0
        %5551 = vmatpush1.bf16.xpose.msra.mxu0 0
        %5552 = vmatprep.subr.bf16.mxu0 0
        %5553 = vmatpush1.bf16.xpose.msra.mxu0 %v5536
        %5554 = vmatprep.subr.bf16.mxu0 0
        %5555 = vmatpush2.bf16.xpose.msra.mxu0 0
        %5556 = vmatprep.subr.bf16.mxu0 0
        %5557 = vmatpush2.bf16.xpose.msra.mxu0 0
        %5558 = vmatprep.subr.bf16.mxu0 0
        %5559 = vmatpush2.bf16.xpose.msra.mxu0 0
        %5560 = vmatprep.subr.bf16.mxu0 0
        %5561 = vmatpush2.bf16.xpose.msra.mxu0 0
        %5562 = vmatprep.subr.bf16.mxu0 0
        %5563 = vmatpush2.bf16.xpose.msra.mxu0 0
        %5564 = vmatprep.subr.bf16.mxu0 0
        %5565 = vmatpush2.bf16.xpose.msra.mxu0 0
        %5566 = vmatprep.subr.bf16.mxu0 0
        %5567 = vmatpush2.bf16.xpose.msra.mxu0 0
        %5568 = vmatprep.subr.bf16.mxu0 0
        %5569 = vmatpush2.bf16.xpose.msra.mxu0 0
        %5570 = vmatprep.mubr.bf16.mxu0 0
        %5571 = vmatmul.mubr.bf16.gmra.mxu0 %v5533
        %v5572 = vpop.f32.mrf.mxu0
        %v5573 = vadd.f32 %v2453, %v5572
        %v5574 = vpop.f32.mrf.mxu0
        %v5575 = vpop.f32.mrf.mxu0
        %v5576 = vpop.f32.mrf.mxu0
        %5577 = vdwg.mxu0
        %5578 = vrot.lane.b32.xlu0 %v2433, 32
        %v5579 = vpop.permute.xlu0 %5578
        %5580 = vrot.lane.b32.xlu0 %v2441, 32
        %v5581 = vpop.permute.xlu0 %5580
        %v5583 = vsel %vm2454, %v5579, 0
        %v5586 = vsel %vm2454, %v5581, 0
        %5588 = vmatprep.subr.bf16.mxu0 0
        %5589 = vmatpush1.bf16.xpose.msra.mxu0 0
        %5590 = vmatprep.subr.bf16.mxu0 0
        %5591 = vmatpush1.bf16.xpose.msra.mxu0 0
        %5592 = vmatprep.subr.bf16.mxu0 0
        %5593 = vmatpush1.bf16.xpose.msra.mxu0 0
        %5594 = vmatprep.subr.bf16.mxu0 0
        %5595 = vmatpush1.bf16.xpose.msra.mxu0 0
        %5596 = vmatprep.subr.bf16.mxu0 0
        %5597 = vmatpush1.bf16.xpose.msra.mxu0 0
        %5598 = vmatprep.subr.bf16.mxu0 0
        %5599 = vmatpush1.bf16.xpose.msra.mxu0 0
        %5600 = vmatprep.subr.bf16.mxu0 0
        %5601 = vmatpush1.bf16.xpose.msra.mxu0 0
        %5602 = vmatprep.subr.bf16.mxu0 0
        %5603 = vmatpush1.bf16.xpose.msra.mxu0 %v5586
        %5604 = vmatprep.subr.bf16.mxu0 0
        %5605 = vmatpush2.bf16.xpose.msra.mxu0 0
        %5606 = vmatprep.subr.bf16.mxu0 0
        %5607 = vmatpush2.bf16.xpose.msra.mxu0 0
        %5608 = vmatprep.subr.bf16.mxu0 0
        %5609 = vmatpush2.bf16.xpose.msra.mxu0 0
        %5610 = vmatprep.subr.bf16.mxu0 0
        %5611 = vmatpush2.bf16.xpose.msra.mxu0 0
        %5612 = vmatprep.subr.bf16.mxu0 0
        %5613 = vmatpush2.bf16.xpose.msra.mxu0 0
        %5614 = vmatprep.subr.bf16.mxu0 0
        %5615 = vmatpush2.bf16.xpose.msra.mxu0 0
        %5616 = vmatprep.subr.bf16.mxu0 0
        %5617 = vmatpush2.bf16.xpose.msra.mxu0 0
        %5618 = vmatprep.subr.bf16.mxu0 0
        %5619 = vmatpush2.bf16.xpose.msra.mxu0 0
        %5620 = vmatprep.mubr.bf16.mxu0 0
        %5621 = vmatmul.mubr.bf16.gmra.mxu0 %v5583
        %v5622 = vpop.f32.mrf.mxu0
        %v5623 = vadd.f32 %v2453, %v5622
        %v5624 = vpop.f32.mrf.mxu0
        %v5625 = vpop.f32.mrf.mxu0
        %v5626 = vpop.f32.mrf.mxu0
        %5627 = vdwg.mxu0
        %v5628 = vsel %vm2823, %v5273, -inf
        %5629 = vmax.xlane.f32.xlu0 %v5628
        %v5630 = vpop.xlane.xlu0 %5629
        %v5631 = vsel %vm2823, %v5323, -inf
        %5632 = vmax.xlane.f32.xlu0 %v5631
        %v5633 = vpop.xlane.xlu0 %5632
        %v5634 = vsel %vm2823, %v5373, -inf
        %5635 = vmax.xlane.f32.xlu0 %v5634
        %v5636 = vpop.xlane.xlu0 %5635
        %v5637 = vsel %vm2823, %v5423, -inf
        %5638 = vmax.xlane.f32.xlu0 %v5637
        %v5639 = vpop.xlane.xlu0 %5638
        %v5640 = vsel %vm2823, %v5473, -inf
        %5641 = vmax.xlane.f32.xlu0 %v5640
        %v5642 = vpop.xlane.xlu0 %5641
        %v5643 = vsel %vm2823, %v5523, -inf
        %5644 = vmax.xlane.f32.xlu0 %v5643
        %v5645 = vpop.xlane.xlu0 %5644
        %v5646 = vsel %vm2823, %v5573, -inf
        %5647 = vmax.xlane.f32.xlu0 %v5646
        %v5648 = vpop.xlane.xlu0 %5647
        %v5649 = vsel %vm2823, %v5623, -inf
        %5650 = vmax.xlane.f32.xlu0 %v5649
        %v5651 = vpop.xlane.xlu0 %5650
        %v5652 = vsub.f32 %v5273, %v5630
        %v5653 = vsub.f32 %v5323, %v5633
        %v5654 = vsub.f32 %v5373, %v5636
        %v5655 = vsub.f32 %v5423, %v5639
        %v5656 = vsub.f32 %v5473, %v5642
        %v5657 = vsub.f32 %v5523, %v5645
        %v5658 = vsub.f32 %v5573, %v5648
        %v5659 = vsub.f32 %v5623, %v5651
        %v5660 = vmul.f32 %v5652, 1.442695
        %v5661 = vpow.pop %v5660
        %v5662 = vmul.f32 %v5653, 1.442695
        %v5663 = vpow.pop %v5662
        %v5664 = vmul.f32 %v5654, 1.442695
        %v5665 = vpow.pop %v5664
        %v5666 = vmul.f32 %v5655, 1.442695
        %v5667 = vpow.pop %v5666
        %v5668 = vmul.f32 %v5656, 1.442695
        %v5669 = vpow.pop %v5668
        %v5670 = vmul.f32 %v5657, 1.442695
        %v5671 = vpow.pop %v5670
        %v5672 = vmul.f32 %v5658, 1.442695
        %v5673 = vpow.pop %v5672
        %v5674 = vmul.f32 %v5659, 1.442695
        %v5675 = vpow.pop %v5674
        %v5676 = vsel %vm2823, %v5661, 0.0
        %5677 = vadd.xlane.f32.xlu0 %v5676
        %v5678 = vpop.xlane.xlu0 %5677
        %v5679 = vsel %vm2823, %v5663, 0.0
        %5680 = vadd.xlane.f32.xlu0 %v5679
        %v5681 = vpop.xlane.xlu0 %5680
        %v5682 = vsel %vm2823, %v5665, 0.0
        %5683 = vadd.xlane.f32.xlu0 %v5682
        %v5684 = vpop.xlane.xlu0 %5683
        %v5685 = vsel %vm2823, %v5667, 0.0
        %5686 = vadd.xlane.f32.xlu0 %v5685
        %v5687 = vpop.xlane.xlu0 %5686
        %v5688 = vsel %vm2823, %v5669, 0.0
        %5689 = vadd.xlane.f32.xlu0 %v5688
        %v5690 = vpop.xlane.xlu0 %5689
        %v5691 = vsel %vm2823, %v5671, 0.0
        %5692 = vadd.xlane.f32.xlu0 %v5691
        %v5693 = vpop.xlane.xlu0 %5692
        %v5694 = vsel %vm2823, %v5673, 0.0
        %5695 = vadd.xlane.f32.xlu0 %v5694
        %v5696 = vpop.xlane.xlu0 %5695
        %v5697 = vsel %vm2823, %v5675, 0.0
        %5698 = vadd.xlane.f32.xlu0 %v5697
        %v5699 = vpop.xlane.xlu0 %5698
        %v5700 = vrcp.pop %v5678
        %v5701 = vrcp.pop %v5681
        %v5702 = vrcp.pop %v5684
        %v5703 = vrcp.pop %v5687
        %v5704 = vrcp.pop %v5690
        %v5705 = vrcp.pop %v5693
        %v5706 = vrcp.pop %v5696
        %v5707 = vrcp.pop %v5699
        %v5708 = vmul.f32 %v5661, %v5700
        %v5709 = vmul.f32 %v5663, %v5701
        %v5710 = vmul.f32 %v5665, %v5702
        %v5711 = vmul.f32 %v5667, %v5703
        %v5712 = vmul.f32 %v5669, %v5704
        %v5713 = vmul.f32 %v5671, %v5705
        %v5714 = vmul.f32 %v5673, %v5706
        %v5715 = vmul.f32 %v5675, %v5707
        %v5716 = vpack.c.bf16 %v5708, %v5708
        %v5717 = vpack.c.bf16 %v5709, %v5709
        %v5718 = vpack.c.bf16 %v5710, %v5710
        %v5719 = vpack.c.bf16 %v5711, %v5711
        %v5720 = vpack.c.bf16 %v5712, %v5712
        %v5721 = vpack.c.bf16 %v5713, %v5713
        %v5722 = vpack.c.bf16 %v5714, %v5714
        %v5723 = vpack.c.bf16 %v5715, %v5715
        %5724 = vrot.lane.b32.xlu0 %v2442, 32
        %v5725 = vpop.permute.xlu0 %5724
        %v5727 = vsel %vm2823, %v5716, 0
        %v5730 = vsel %vm2923, %v5725, 0
        %5732 = vmatprep.subr.bf16.mxu0 0
        %5733 = vmatpush1.bf16.msra.mxu0 0
        %5734 = vmatprep.subr.bf16.mxu0 0
        %5735 = vmatpush1.bf16.msra.mxu0 0
        %5736 = vmatprep.subr.bf16.mxu0 0
        %5737 = vmatpush1.bf16.msra.mxu0 0
        %5738 = vmatprep.subr.bf16.mxu0 0
        %5739 = vmatpush1.bf16.msra.mxu0 0
        %5740 = vmatprep.subr.bf16.mxu0 0
        %5741 = vmatpush1.bf16.msra.mxu0 0
        %5742 = vmatprep.subr.bf16.mxu0 0
        %5743 = vmatpush1.bf16.msra.mxu0 0
        %5744 = vmatprep.subr.bf16.mxu0 0
        %5745 = vmatpush1.bf16.msra.mxu0 0
        %5746 = vmatprep.subr.bf16.mxu0 0
        %5747 = vmatpush1.bf16.msra.mxu0 %v5730
        %5748 = vmatprep.subr.bf16.mxu0 0
        %5749 = vmatpush2.bf16.msra.mxu0 0
        %5750 = vmatprep.subr.bf16.mxu0 0
        %5751 = vmatpush2.bf16.msra.mxu0 0
        %5752 = vmatprep.subr.bf16.mxu0 0
        %5753 = vmatpush2.bf16.msra.mxu0 0
        %5754 = vmatprep.subr.bf16.mxu0 0
        %5755 = vmatpush2.bf16.msra.mxu0 0
        %5756 = vmatprep.subr.bf16.mxu0 0
        %5757 = vmatpush2.bf16.msra.mxu0 0
        %5758 = vmatprep.subr.bf16.mxu0 0
        %5759 = vmatpush2.bf16.msra.mxu0 0
        %5760 = vmatprep.subr.bf16.mxu0 0
        %5761 = vmatpush2.bf16.msra.mxu0 0
        %5762 = vmatprep.subr.bf16.mxu0 0
        %5763 = vmatpush2.bf16.msra.mxu0 0
        %5764 = vmatprep.mubr.bf16.mxu0 0
        %5765 = vmatmul.mubr.bf16.gmra.mxu0 %v5727
        %v5766 = vpop.f32.mrf.mxu0
        %v5767 = vadd.f32 0.0, %v5766
        %v5768 = vpop.f32.mrf.mxu0
        %v5769 = vpop.f32.mrf.mxu0
        %v5770 = vpop.f32.mrf.mxu0
        %5771 = vdwg.mxu0
        %5772 = vrot.lane.b32.xlu0 %v2443, 32
        %v5773 = vpop.permute.xlu0 %5772
        %v5775 = vsel %vm2823, %v5717, 0
        %v5778 = vsel %vm2923, %v5773, 0
        %5780 = vmatprep.subr.bf16.mxu0 0
        %5781 = vmatpush1.bf16.msra.mxu0 0
        %5782 = vmatprep.subr.bf16.mxu0 0
        %5783 = vmatpush1.bf16.msra.mxu0 0
        %5784 = vmatprep.subr.bf16.mxu0 0
        %5785 = vmatpush1.bf16.msra.mxu0 0
        %5786 = vmatprep.subr.bf16.mxu0 0
        %5787 = vmatpush1.bf16.msra.mxu0 0
        %5788 = vmatprep.subr.bf16.mxu0 0
        %5789 = vmatpush1.bf16.msra.mxu0 0
        %5790 = vmatprep.subr.bf16.mxu0 0
        %5791 = vmatpush1.bf16.msra.mxu0 0
        %5792 = vmatprep.subr.bf16.mxu0 0
        %5793 = vmatpush1.bf16.msra.mxu0 0
        %5794 = vmatprep.subr.bf16.mxu0 0
        %5795 = vmatpush1.bf16.msra.mxu0 %v5778
        %5796 = vmatprep.subr.bf16.mxu0 0
        %5797 = vmatpush2.bf16.msra.mxu0 0
        %5798 = vmatprep.subr.bf16.mxu0 0
        %5799 = vmatpush2.bf16.msra.mxu0 0
        %5800 = vmatprep.subr.bf16.mxu0 0
        %5801 = vmatpush2.bf16.msra.mxu0 0
        %5802 = vmatprep.subr.bf16.mxu0 0
        %5803 = vmatpush2.bf16.msra.mxu0 0
        %5804 = vmatprep.subr.bf16.mxu0 0
        %5805 = vmatpush2.bf16.msra.mxu0 0
        %5806 = vmatprep.subr.bf16.mxu0 0
        %5807 = vmatpush2.bf16.msra.mxu0 0
        %5808 = vmatprep.subr.bf16.mxu0 0
        %5809 = vmatpush2.bf16.msra.mxu0 0
        %5810 = vmatprep.subr.bf16.mxu0 0
        %5811 = vmatpush2.bf16.msra.mxu0 0
        %5812 = vmatprep.mubr.bf16.mxu0 0
        %5813 = vmatmul.mubr.bf16.gmra.mxu0 %v5775
        %v5814 = vpop.f32.mrf.mxu0
        %v5815 = vadd.f32 0.0, %v5814
        %v5816 = vpop.f32.mrf.mxu0
        %v5817 = vpop.f32.mrf.mxu0
        %v5818 = vpop.f32.mrf.mxu0
        %5819 = vdwg.mxu0
        %5820 = vrot.lane.b32.xlu0 %v2444, 32
        %v5821 = vpop.permute.xlu0 %5820
        %v5823 = vsel %vm2823, %v5718, 0
        %v5826 = vsel %vm2923, %v5821, 0
        %5828 = vmatprep.subr.bf16.mxu0 0
        %5829 = vmatpush1.bf16.msra.mxu0 0
        %5830 = vmatprep.subr.bf16.mxu0 0
        %5831 = vmatpush1.bf16.msra.mxu0 0
        %5832 = vmatprep.subr.bf16.mxu0 0
        %5833 = vmatpush1.bf16.msra.mxu0 0
        %5834 = vmatprep.subr.bf16.mxu0 0
        %5835 = vmatpush1.bf16.msra.mxu0 0
        %5836 = vmatprep.subr.bf16.mxu0 0
        %5837 = vmatpush1.bf16.msra.mxu0 0
        %5838 = vmatprep.subr.bf16.mxu0 0
        %5839 = vmatpush1.bf16.msra.mxu0 0
        %5840 = vmatprep.subr.bf16.mxu0 0
        %5841 = vmatpush1.bf16.msra.mxu0 0
        %5842 = vmatprep.subr.bf16.mxu0 0
        %5843 = vmatpush1.bf16.msra.mxu0 %v5826
        %5844 = vmatprep.subr.bf16.mxu0 0
        %5845 = vmatpush2.bf16.msra.mxu0 0
        %5846 = vmatprep.subr.bf16.mxu0 0
        %5847 = vmatpush2.bf16.msra.mxu0 0
        %5848 = vmatprep.subr.bf16.mxu0 0
        %5849 = vmatpush2.bf16.msra.mxu0 0
        %5850 = vmatprep.subr.bf16.mxu0 0
        %5851 = vmatpush2.bf16.msra.mxu0 0
        %5852 = vmatprep.subr.bf16.mxu0 0
        %5853 = vmatpush2.bf16.msra.mxu0 0
        %5854 = vmatprep.subr.bf16.mxu0 0
        %5855 = vmatpush2.bf16.msra.mxu0 0
        %5856 = vmatprep.subr.bf16.mxu0 0
        %5857 = vmatpush2.bf16.msra.mxu0 0
        %5858 = vmatprep.subr.bf16.mxu0 0
        %5859 = vmatpush2.bf16.msra.mxu0 0
        %5860 = vmatprep.mubr.bf16.mxu0 0
        %5861 = vmatmul.mubr.bf16.gmra.mxu0 %v5823
        %v5862 = vpop.f32.mrf.mxu0
        %v5863 = vadd.f32 0.0, %v5862
        %v5864 = vpop.f32.mrf.mxu0
        %v5865 = vpop.f32.mrf.mxu0
        %v5866 = vpop.f32.mrf.mxu0
        %5867 = vdwg.mxu0
        %5868 = vrot.lane.b32.xlu0 %v2445, 32
        %v5869 = vpop.permute.xlu0 %5868
        %v5871 = vsel %vm2823, %v5719, 0
        %v5874 = vsel %vm2923, %v5869, 0
        %5876 = vmatprep.subr.bf16.mxu0 0
        %5877 = vmatpush1.bf16.msra.mxu0 0
        %5878 = vmatprep.subr.bf16.mxu0 0
        %5879 = vmatpush1.bf16.msra.mxu0 0
        %5880 = vmatprep.subr.bf16.mxu0 0
        %5881 = vmatpush1.bf16.msra.mxu0 0
        %5882 = vmatprep.subr.bf16.mxu0 0
        %5883 = vmatpush1.bf16.msra.mxu0 0
        %5884 = vmatprep.subr.bf16.mxu0 0
        %5885 = vmatpush1.bf16.msra.mxu0 0
        %5886 = vmatprep.subr.bf16.mxu0 0
        %5887 = vmatpush1.bf16.msra.mxu0 0
        %5888 = vmatprep.subr.bf16.mxu0 0
        %5889 = vmatpush1.bf16.msra.mxu0 0
        %5890 = vmatprep.subr.bf16.mxu0 0
        %5891 = vmatpush1.bf16.msra.mxu0 %v5874
        %5892 = vmatprep.subr.bf16.mxu0 0
        %5893 = vmatpush2.bf16.msra.mxu0 0
        %5894 = vmatprep.subr.bf16.mxu0 0
        %5895 = vmatpush2.bf16.msra.mxu0 0
        %5896 = vmatprep.subr.bf16.mxu0 0
        %5897 = vmatpush2.bf16.msra.mxu0 0
        %5898 = vmatprep.subr.bf16.mxu0 0
        %5899 = vmatpush2.bf16.msra.mxu0 0
        %5900 = vmatprep.subr.bf16.mxu0 0
        %5901 = vmatpush2.bf16.msra.mxu0 0
        %5902 = vmatprep.subr.bf16.mxu0 0
        %5903 = vmatpush2.bf16.msra.mxu0 0
        %5904 = vmatprep.subr.bf16.mxu0 0
        %5905 = vmatpush2.bf16.msra.mxu0 0
        %5906 = vmatprep.subr.bf16.mxu0 0
        %5907 = vmatpush2.bf16.msra.mxu0 0
        %5908 = vmatprep.mubr.bf16.mxu0 0
        %5909 = vmatmul.mubr.bf16.gmra.mxu0 %v5871
        %v5910 = vpop.f32.mrf.mxu0
        %v5911 = vadd.f32 0.0, %v5910
        %v5912 = vpop.f32.mrf.mxu0
        %v5913 = vpop.f32.mrf.mxu0
        %v5914 = vpop.f32.mrf.mxu0
        %5915 = vdwg.mxu0
        %5916 = vrot.lane.b32.xlu0 %v2446, 32
        %v5917 = vpop.permute.xlu0 %5916
        %v5919 = vsel %vm2823, %v5720, 0
        %v5922 = vsel %vm2923, %v5917, 0
        %5924 = vmatprep.subr.bf16.mxu0 0
        %5925 = vmatpush1.bf16.msra.mxu0 0
        %5926 = vmatprep.subr.bf16.mxu0 0
        %5927 = vmatpush1.bf16.msra.mxu0 0
        %5928 = vmatprep.subr.bf16.mxu0 0
        %5929 = vmatpush1.bf16.msra.mxu0 0
        %5930 = vmatprep.subr.bf16.mxu0 0
        %5931 = vmatpush1.bf16.msra.mxu0 0
        %5932 = vmatprep.subr.bf16.mxu0 0
        %5933 = vmatpush1.bf16.msra.mxu0 0
        %5934 = vmatprep.subr.bf16.mxu0 0
        %5935 = vmatpush1.bf16.msra.mxu0 0
        %5936 = vmatprep.subr.bf16.mxu0 0
        %5937 = vmatpush1.bf16.msra.mxu0 0
        %5938 = vmatprep.subr.bf16.mxu0 0
        %5939 = vmatpush1.bf16.msra.mxu0 %v5922
        %5940 = vmatprep.subr.bf16.mxu0 0
        %5941 = vmatpush2.bf16.msra.mxu0 0
        %5942 = vmatprep.subr.bf16.mxu0 0
        %5943 = vmatpush2.bf16.msra.mxu0 0
        %5944 = vmatprep.subr.bf16.mxu0 0
        %5945 = vmatpush2.bf16.msra.mxu0 0
        %5946 = vmatprep.subr.bf16.mxu0 0
        %5947 = vmatpush2.bf16.msra.mxu0 0
        %5948 = vmatprep.subr.bf16.mxu0 0
        %5949 = vmatpush2.bf16.msra.mxu0 0
        %5950 = vmatprep.subr.bf16.mxu0 0
        %5951 = vmatpush2.bf16.msra.mxu0 0
        %5952 = vmatprep.subr.bf16.mxu0 0
        %5953 = vmatpush2.bf16.msra.mxu0 0
        %5954 = vmatprep.subr.bf16.mxu0 0
        %5955 = vmatpush2.bf16.msra.mxu0 0
        %5956 = vmatprep.mubr.bf16.mxu0 0
        %5957 = vmatmul.mubr.bf16.gmra.mxu0 %v5919
        %v5958 = vpop.f32.mrf.mxu0
        %v5959 = vadd.f32 0.0, %v5958
        %v5960 = vpop.f32.mrf.mxu0
        %v5961 = vpop.f32.mrf.mxu0
        %v5962 = vpop.f32.mrf.mxu0
        %5963 = vdwg.mxu0
        %5964 = vrot.lane.b32.xlu0 %v2447, 32
        %v5965 = vpop.permute.xlu0 %5964
        %v5967 = vsel %vm2823, %v5721, 0
        %v5970 = vsel %vm2923, %v5965, 0
        %5972 = vmatprep.subr.bf16.mxu0 0
        %5973 = vmatpush1.bf16.msra.mxu0 0
        %5974 = vmatprep.subr.bf16.mxu0 0
        %5975 = vmatpush1.bf16.msra.mxu0 0
        %5976 = vmatprep.subr.bf16.mxu0 0
        %5977 = vmatpush1.bf16.msra.mxu0 0
        %5978 = vmatprep.subr.bf16.mxu0 0
        %5979 = vmatpush1.bf16.msra.mxu0 0
        %5980 = vmatprep.subr.bf16.mxu0 0
        %5981 = vmatpush1.bf16.msra.mxu0 0
        %5982 = vmatprep.subr.bf16.mxu0 0
        %5983 = vmatpush1.bf16.msra.mxu0 0
        %5984 = vmatprep.subr.bf16.mxu0 0
        %5985 = vmatpush1.bf16.msra.mxu0 0
        %5986 = vmatprep.subr.bf16.mxu0 0
        %5987 = vmatpush1.bf16.msra.mxu0 %v5970
        %5988 = vmatprep.subr.bf16.mxu0 0
        %5989 = vmatpush2.bf16.msra.mxu0 0
        %5990 = vmatprep.subr.bf16.mxu0 0
        %5991 = vmatpush2.bf16.msra.mxu0 0
        %5992 = vmatprep.subr.bf16.mxu0 0
        %5993 = vmatpush2.bf16.msra.mxu0 0
        %5994 = vmatprep.subr.bf16.mxu0 0
        %5995 = vmatpush2.bf16.msra.mxu0 0
        %5996 = vmatprep.subr.bf16.mxu0 0
        %5997 = vmatpush2.bf16.msra.mxu0 0
        %5998 = vmatprep.subr.bf16.mxu0 0
        %5999 = vmatpush2.bf16.msra.mxu0 0
        %6000 = vmatprep.subr.bf16.mxu0 0
        %6001 = vmatpush2.bf16.msra.mxu0 0
        %6002 = vmatprep.subr.bf16.mxu0 0
        %6003 = vmatpush2.bf16.msra.mxu0 0
        %6004 = vmatprep.mubr.bf16.mxu0 0
        %6005 = vmatmul.mubr.bf16.gmra.mxu0 %v5967
        %v6006 = vpop.f32.mrf.mxu0
        %v6007 = vadd.f32 0.0, %v6006
        %v6008 = vpop.f32.mrf.mxu0
        %v6009 = vpop.f32.mrf.mxu0
        %v6010 = vpop.f32.mrf.mxu0
        %6011 = vdwg.mxu0
        %6012 = vrot.lane.b32.xlu0 %v2448, 32
        %v6013 = vpop.permute.xlu0 %6012
        %v6015 = vsel %vm2823, %v5722, 0
        %v6018 = vsel %vm2923, %v6013, 0
        %6020 = vmatprep.subr.bf16.mxu0 0
        %6021 = vmatpush1.bf16.msra.mxu0 0
        %6022 = vmatprep.subr.bf16.mxu0 0
        %6023 = vmatpush1.bf16.msra.mxu0 0
        %6024 = vmatprep.subr.bf16.mxu0 0
        %6025 = vmatpush1.bf16.msra.mxu0 0
        %6026 = vmatprep.subr.bf16.mxu0 0
        %6027 = vmatpush1.bf16.msra.mxu0 0
        %6028 = vmatprep.subr.bf16.mxu0 0
        %6029 = vmatpush1.bf16.msra.mxu0 0
        %6030 = vmatprep.subr.bf16.mxu0 0
        %6031 = vmatpush1.bf16.msra.mxu0 0
        %6032 = vmatprep.subr.bf16.mxu0 0
        %6033 = vmatpush1.bf16.msra.mxu0 0
        %6034 = vmatprep.subr.bf16.mxu0 0
        %6035 = vmatpush1.bf16.msra.mxu0 %v6018
        %6036 = vmatprep.subr.bf16.mxu0 0
        %6037 = vmatpush2.bf16.msra.mxu0 0
        %6038 = vmatprep.subr.bf16.mxu0 0
        %6039 = vmatpush2.bf16.msra.mxu0 0
        %6040 = vmatprep.subr.bf16.mxu0 0
        %6041 = vmatpush2.bf16.msra.mxu0 0
        %6042 = vmatprep.subr.bf16.mxu0 0
        %6043 = vmatpush2.bf16.msra.mxu0 0
        %6044 = vmatprep.subr.bf16.mxu0 0
        %6045 = vmatpush2.bf16.msra.mxu0 0
        %6046 = vmatprep.subr.bf16.mxu0 0
        %6047 = vmatpush2.bf16.msra.mxu0 0
        %6048 = vmatprep.subr.bf16.mxu0 0
        %6049 = vmatpush2.bf16.msra.mxu0 0
        %6050 = vmatprep.subr.bf16.mxu0 0
        %6051 = vmatpush2.bf16.msra.mxu0 0
        %6052 = vmatprep.mubr.bf16.mxu0 0
        %6053 = vmatmul.mubr.bf16.gmra.mxu0 %v6015
        %v6054 = vpop.f32.mrf.mxu0
        %v6055 = vadd.f32 0.0, %v6054
        %v6056 = vpop.f32.mrf.mxu0
        %v6057 = vpop.f32.mrf.mxu0
        %v6058 = vpop.f32.mrf.mxu0
        %6059 = vdwg.mxu0
        %6060 = vrot.lane.b32.xlu0 %v2449, 32
        %v6061 = vpop.permute.xlu0 %6060
        %v6063 = vsel %vm2823, %v5723, 0
        %v6066 = vsel %vm2923, %v6061, 0
        %6068 = vmatprep.subr.bf16.mxu0 0
        %6069 = vmatpush1.bf16.msra.mxu0 0
        %6070 = vmatprep.subr.bf16.mxu0 0
        %6071 = vmatpush1.bf16.msra.mxu0 0
        %6072 = vmatprep.subr.bf16.mxu0 0
        %6073 = vmatpush1.bf16.msra.mxu0 0
        %6074 = vmatprep.subr.bf16.mxu0 0
        %6075 = vmatpush1.bf16.msra.mxu0 0
        %6076 = vmatprep.subr.bf16.mxu0 0
        %6077 = vmatpush1.bf16.msra.mxu0 0
        %6078 = vmatprep.subr.bf16.mxu0 0
        %6079 = vmatpush1.bf16.msra.mxu0 0
        %6080 = vmatprep.subr.bf16.mxu0 0
        %6081 = vmatpush1.bf16.msra.mxu0 0
        %6082 = vmatprep.subr.bf16.mxu0 0
        %6083 = vmatpush1.bf16.msra.mxu0 %v6066
        %6084 = vmatprep.subr.bf16.mxu0 0
        %6085 = vmatpush2.bf16.msra.mxu0 0
        %6086 = vmatprep.subr.bf16.mxu0 0
        %6087 = vmatpush2.bf16.msra.mxu0 0
        %6088 = vmatprep.subr.bf16.mxu0 0
        %6089 = vmatpush2.bf16.msra.mxu0 0
        %6090 = vmatprep.subr.bf16.mxu0 0
        %6091 = vmatpush2.bf16.msra.mxu0 0
        %6092 = vmatprep.subr.bf16.mxu0 0
        %6093 = vmatpush2.bf16.msra.mxu0 0
        %6094 = vmatprep.subr.bf16.mxu0 0
        %6095 = vmatpush2.bf16.msra.mxu0 0
        %6096 = vmatprep.subr.bf16.mxu0 0
        %6097 = vmatpush2.bf16.msra.mxu0 0
        %6098 = vmatprep.subr.bf16.mxu0 0
        %6099 = vmatpush2.bf16.msra.mxu0 0
        %6100 = vmatprep.mubr.bf16.mxu0 0
        %6101 = vmatmul.mubr.bf16.gmra.mxu0 %v6063
        %v6102 = vpop.f32.mrf.mxu0
        %v6103 = vadd.f32 0.0, %v6102
        %v6104 = vpop.f32.mrf.mxu0
        %v6105 = vpop.f32.mrf.mxu0
        %v6106 = vpop.f32.mrf.mxu0
        %6107 = vdwg.mxu0
        %v6108 = vpack.c.bf16 %v5815, %v5767
        %v6109 = vpack.c.bf16 %v5911, %v5863
        %v6110 = vpack.c.bf16 %v6007, %v5959
        %v6111 = vpack.c.bf16 %v6103, %v6055
        %v6116 = vunpack.c.l.b16 %v6108
        %v6117 = vunpack.c.h.b16 %v6108
        %v6118 = vunpack.c.l.b16 %v6109
        %v6119 = vunpack.c.h.b16 %v6109
        %v6120 = vunpack.c.l.b16 %v6110
        %v6121 = vunpack.c.h.b16 %v6110
        %v6122 = vunpack.c.l.b16 %v6111
        %v6123 = vunpack.c.h.b16 %v6111
        %v6124 = vpack.c.b16 %v6116, %v6116
        %v6125 = vpack.c.b16 %v6117, %v6117
        %v6126 = vpack.c.b16 %v6118, %v6118
        %v6127 = vpack.c.b16 %v6119, %v6119
        %v6128 = vpack.c.b16 %v6120, %v6120
        %v6129 = vpack.c.b16 %v6121, %v6121
        %v6130 = vpack.c.b16 %v6122, %v6122
        %v6131 = vpack.c.b16 %v6123, %v6123
        %6132 = vrot.lane.b32.xlu0 %v6124, 96
        %v6133 = vpop.permute.xlu0 %6132
        %6134 = vrot.lane.b32.xlu0 %v6125, 96
        %v6135 = vpop.permute.xlu0 %6134
        %6136 = vrot.lane.b32.xlu0 %v6126, 96
        %v6137 = vpop.permute.xlu0 %6136
        %6138 = vrot.lane.b32.xlu0 %v6127, 96
        %v6139 = vpop.permute.xlu0 %6138
        %6140 = vrot.lane.b32.xlu0 %v6128, 96
        %v6141 = vpop.permute.xlu0 %6140
        %6142 = vrot.lane.b32.xlu0 %v6129, 96
        %v6143 = vpop.permute.xlu0 %6142
        %6144 = vrot.lane.b32.xlu0 %v6130, 96
        %v6145 = vpop.permute.xlu0 %6144
        %6146 = vrot.lane.b32.xlu0 %v6131, 96
        %v6147 = vpop.permute.xlu0 %6146
        %vm6156 = vcmask 1044224
        %6157 = vst.msk [vmem:[#allocation3] sm:$0xf] %vm6156, %v6133
        %6158 = vst.msk [vmem:[#allocation3 + $0x4] sm:$0xf] %vm6156, %v6135
        %6159 = vst.msk [vmem:[#allocation3 + $0x8] sm:$0xf] %vm6156, %v6137
        %6160 = vst.msk [vmem:[#allocation3 + $0xc] sm:$0xf] %vm6156, %v6139
        %6161 = vst.msk [vmem:[#allocation3 + $0x10] sm:$0xf] %vm6156, %v6141
        %6162 = vst.msk [vmem:[#allocation3 + $0x14] sm:$0xf] %vm6156, %v6143
        %6163 = vst.msk [vmem:[#allocation3 + $0x18] sm:$0xf] %vm6156, %v6145
        %6164 = vst.msk [vmem:[#allocation3 + $0x1c] sm:$0xf] %vm6156, %v6147
        %v6165 = vld [vmem:[#allocation3] sm:$0xf]
        %v6166 = vld [vmem:[#allocation3 + $0x4] sm:$0xf]
        %v6167 = vld [vmem:[#allocation3 + $0x8] sm:$0xf]
        %v6168 = vld [vmem:[#allocation3 + $0xc] sm:$0xf]
        %v6169 = vld [vmem:[#allocation3 + $0x10] sm:$0xf]
        %v6170 = vld [vmem:[#allocation3 + $0x14] sm:$0xf]
        %v6171 = vld [vmem:[#allocation3 + $0x18] sm:$0xf]
        %v6172 = vld [vmem:[#allocation3 + $0x1c] sm:$0xf]
        %v6173 = vld [vmem:[%s956] sm:$0xf]
        %v6174 = vld [vmem:[%s956 + $0x4] sm:$0xf]
        %v6175 = vld [vmem:[%s956 + $0x8] sm:$0xf]
        %v6176 = vld [vmem:[%s956 + $0xc] sm:$0xf]
        %v6177 = vld [vmem:[%s956 + $0x10] sm:$0xf]
        %v6178 = vld [vmem:[%s956 + $0x14] sm:$0xf]
        %v6179 = vld [vmem:[%s956 + $0x18] sm:$0xf]
        %v6180 = vld [vmem:[%s956 + $0x1c] sm:$0xf]
        %v6181 = vld [vmem:[%s956 + $0x20] sm:$0xf]
        %v6182 = vld [vmem:[%s956 + $0x24] sm:$0xf]
        %v6183 = vld [vmem:[%s956 + $0x28] sm:$0xf]
        %v6184 = vld [vmem:[%s956 + $0x2c] sm:$0xf]
        %v6185 = vld [vmem:[%s956 + $0x30] sm:$0xf]
        %v6186 = vld [vmem:[%s956 + $0x34] sm:$0xf]
        %v6187 = vld [vmem:[%s956 + $0x38] sm:$0xf]
        %v6188 = vld [vmem:[%s956 + $0x3c] sm:$0xf]
        %v6197 = vunpack.c.l.b16 %v6165
        %v6198 = vunpack.c.l.b16 %v6166
        %v6199 = vunpack.c.l.b16 %v6167
        %v6200 = vunpack.c.l.b16 %v6168
        %v6201 = vunpack.c.l.b16 %v6169
        %v6202 = vunpack.c.l.b16 %v6170
        %v6203 = vunpack.c.l.b16 %v6171
        %v6204 = vunpack.c.l.b16 %v6172
        %v6205 = vpack.c.b16 %v6198, %v6197
        %v6206 = vpack.c.b16 %v6200, %v6199
        %v6207 = vpack.c.b16 %v6202, %v6201
        %v6208 = vpack.c.b16 %v6204, %v6203
        %v6229 = vunpack.c.l.b16 %v6173
        %v6230 = vunpack.c.l.b16 %v6174
        %v6231 = vunpack.c.l.b16 %v6175
        %v6232 = vunpack.c.l.b16 %v6176
        %v6233 = vunpack.c.l.b16 %v6177
        %v6234 = vunpack.c.l.b16 %v6178
        %v6235 = vunpack.c.l.b16 %v6179
        %v6236 = vunpack.c.l.b16 %v6180
        %v6237 = vunpack.c.l.b16 %v6181
        %v6238 = vunpack.c.l.b16 %v6182
        %v6239 = vunpack.c.l.b16 %v6183
        %v6240 = vunpack.c.l.b16 %v6184
        %v6241 = vunpack.c.l.b16 %v6185
        %v6242 = vunpack.c.l.b16 %v6186
        %v6243 = vunpack.c.l.b16 %v6187
        %v6244 = vunpack.c.l.b16 %v6188
        %v6245 = vpack.c.b16 %v6230, %v6229
        %v6246 = vpack.c.b16 %v6232, %v6231
        %v6247 = vpack.c.b16 %v6234, %v6233
        %v6248 = vpack.c.b16 %v6236, %v6235
        %v6249 = vpack.c.b16 %v6238, %v6237
        %v6250 = vpack.c.b16 %v6240, %v6239
        %v6251 = vpack.c.b16 %v6242, %v6241
        %v6252 = vpack.c.b16 %v6244, %v6243
        %6261 = vmatprep.subr.bf16.mxu0 0
        %6262 = vmatpush1.bf16.msra.mxu0 %v6252
        %6263 = vmatprep.subr.bf16.mxu0 0
        %6264 = vmatpush1.bf16.msra.mxu0 %v6251
        %6265 = vmatprep.subr.bf16.mxu0 0
        %6266 = vmatpush1.bf16.msra.mxu0 %v6250
        %6267 = vmatprep.subr.bf16.mxu0 0
        %6268 = vmatpush1.bf16.msra.mxu0 %v6249
        %6269 = vmatprep.subr.bf16.mxu0 0
        %6270 = vmatpush1.bf16.msra.mxu0 %v6248
        %6271 = vmatprep.subr.bf16.mxu0 0
        %6272 = vmatpush1.bf16.msra.mxu0 %v6247
        %6273 = vmatprep.subr.bf16.mxu0 0
        %6274 = vmatpush1.bf16.msra.mxu0 %v6246
        %6275 = vmatprep.subr.bf16.mxu0 0
        %6276 = vmatpush1.bf16.msra.mxu0 %v6245
        %6277 = vmatprep.subr.bf16.mxu0 0
        %6278 = vmatpush2.bf16.msra.mxu0 0
        %6279 = vmatprep.subr.bf16.mxu0 0
        %6280 = vmatpush2.bf16.msra.mxu0 0
        %6281 = vmatprep.subr.bf16.mxu0 0
        %6282 = vmatpush2.bf16.msra.mxu0 0
        %6283 = vmatprep.subr.bf16.mxu0 0
        %6284 = vmatpush2.bf16.msra.mxu0 0
        %6285 = vmatprep.subr.bf16.mxu0 0
        %6286 = vmatpush2.bf16.msra.mxu0 0
        %6287 = vmatprep.subr.bf16.mxu0 0
        %6288 = vmatpush2.bf16.msra.mxu0 0
        %6289 = vmatprep.subr.bf16.mxu0 0
        %6290 = vmatpush2.bf16.msra.mxu0 0
        %6291 = vmatprep.subr.bf16.mxu0 0
        %6292 = vmatpush2.bf16.msra.mxu0 0
        %6293 = vmatprep.mubr.bf16.mxu0 0
        %6294 = vmatmul.mubr.bf16.gmra.mxu0 %v6205
        %v6295 = vpop.f32.mrf.mxu0
        %v6296 = vadd.f32 0.0, %v6295
        %v6297 = vpop.f32.mrf.mxu0
        %v6298 = vpop.f32.mrf.mxu0
        %v6299 = vadd.f32 0.0, %v6298
        %v6300 = vpop.f32.mrf.mxu0
        %6301 = vmatprep.mubr.bf16.mxu0 0
        %6302 = vmatmul.mubr.bf16.gmra.mxu0 %v6206
        %v6303 = vpop.f32.mrf.mxu0
        %v6304 = vadd.f32 0.0, %v6303
        %v6305 = vpop.f32.mrf.mxu0
        %v6306 = vpop.f32.mrf.mxu0
        %v6307 = vadd.f32 0.0, %v6306
        %v6308 = vpop.f32.mrf.mxu0
        %6309 = vmatprep.mubr.bf16.mxu0 0
        %6310 = vmatmul.mubr.bf16.gmra.mxu0 %v6207
        %v6311 = vpop.f32.mrf.mxu0
        %v6312 = vadd.f32 0.0, %v6311
        %v6313 = vpop.f32.mrf.mxu0
        %v6314 = vpop.f32.mrf.mxu0
        %v6315 = vadd.f32 0.0, %v6314
        %v6316 = vpop.f32.mrf.mxu0
        %6317 = vmatprep.mubr.bf16.mxu0 0
        %6318 = vmatmul.mubr.bf16.gmra.mxu0 %v6208
        %v6319 = vpop.f32.mrf.mxu0
        %v6320 = vadd.f32 0.0, %v6319
        %v6321 = vpop.f32.mrf.mxu0
        %v6322 = vpop.f32.mrf.mxu0
        %v6323 = vadd.f32 0.0, %v6322
        %v6324 = vpop.f32.mrf.mxu0
        %6325 = vdwg.mxu0
        %v6326 = vadd.f32 %v1980, %v6296
        %v6327 = vadd.f32 %v1981, %v6299
        %v6328 = vadd.f32 %v1982, %v6304
        %v6329 = vadd.f32 %v1983, %v6307
        %v6330 = vadd.f32 %v1984, %v6312
        %v6331 = vadd.f32 %v1985, %v6315
        %v6332 = vadd.f32 %v1986, %v6320
        %v6333 = vadd.f32 %v1987, %v6323
        %v6334 = vld [vmem:[%s1102] sm:$0x1]
        %v6336 = vlaneseq
        %v6337 = vshrl.u32 %v6336, 7
        %v6338 = vsub.s32 0, %v6337
        %v6339 = vrot.slane %v6334, %v6338
        %v6341 = vadd.f32 %v6326, %v6339
        %v6342 = vadd.f32 %v6327, %v6339
        %v6343 = vadd.f32 %v6328, %v6339
        %v6344 = vadd.f32 %v6329, %v6339
        %v6345 = vadd.f32 %v6330, %v6339
        %v6346 = vadd.f32 %v6331, %v6339
        %v6347 = vadd.f32 %v6332, %v6339
        %v6348 = vadd.f32 %v6333, %v6339
        %v6349 = vld [vmem:[%s1105] sm:$0x1]
        %v6350 = vld [vmem:[%s1108] sm:$0x1]
        %6351 = vadd.xlane.f32.xlu0 %v6341
        %v6352 = vpop.xlane.xlu0 %6351
        %6353 = vadd.xlane.f32.xlu0 %v6342
        %v6354 = vpop.xlane.xlu0 %6353
        %6355 = vadd.xlane.f32.xlu0 %v6343
        %v6356 = vpop.xlane.xlu0 %6355
        %6357 = vadd.xlane.f32.xlu0 %v6344
        %v6358 = vpop.xlane.xlu0 %6357
        %6359 = vadd.xlane.f32.xlu0 %v6345
        %v6360 = vpop.xlane.xlu0 %6359
        %6361 = vadd.xlane.f32.xlu0 %v6346
        %v6362 = vpop.xlane.xlu0 %6361
        %6363 = vadd.xlane.f32.xlu0 %v6347
        %v6364 = vpop.xlane.xlu0 %6363
        %6365 = vadd.xlane.f32.xlu0 %v6348
        %v6366 = vpop.xlane.xlu0 %6365
        %v6367 = vmul.f32 %v6352, %v2006
        %v6368 = vmul.f32 %v6354, %v2006
        %v6369 = vmul.f32 %v6356, %v2006
        %v6370 = vmul.f32 %v6358, %v2006
        %v6371 = vmul.f32 %v6360, %v2006
        %v6372 = vmul.f32 %v6362, %v2006
        %v6373 = vmul.f32 %v6364, %v2006
        %v6374 = vmul.f32 %v6366, %v2006
        %v6375 = vsub.f32 %v6341, %v6367
        %v6376 = vsub.f32 %v6342, %v6368
        %v6377 = vsub.f32 %v6343, %v6369
        %v6378 = vsub.f32 %v6344, %v6370
        %v6379 = vsub.f32 %v6345, %v6371
        %v6380 = vsub.f32 %v6346, %v6372
        %v6381 = vsub.f32 %v6347, %v6373
        %v6382 = vsub.f32 %v6348, %v6374
        %v6383 = vmul.f32 %v6375, %v6375
        %v6384 = vmul.f32 %v6376, %v6376
        %v6385 = vmul.f32 %v6377, %v6377
        %v6386 = vmul.f32 %v6378, %v6378
        %v6387 = vmul.f32 %v6379, %v6379
        %v6388 = vmul.f32 %v6380, %v6380
        %v6389 = vmul.f32 %v6381, %v6381
        %v6390 = vmul.f32 %v6382, %v6382
        %6391 = vadd.xlane.f32.xlu0 %v6383
        %v6392 = vpop.xlane.xlu0 %6391
        %6393 = vadd.xlane.f32.xlu0 %v6384
        %v6394 = vpop.xlane.xlu0 %6393
        %6395 = vadd.xlane.f32.xlu0 %v6385
        %v6396 = vpop.xlane.xlu0 %6395
        %6397 = vadd.xlane.f32.xlu0 %v6386
        %v6398 = vpop.xlane.xlu0 %6397
        %6399 = vadd.xlane.f32.xlu0 %v6387
        %v6400 = vpop.xlane.xlu0 %6399
        %6401 = vadd.xlane.f32.xlu0 %v6388
        %v6402 = vpop.xlane.xlu0 %6401
        %6403 = vadd.xlane.f32.xlu0 %v6389
        %v6404 = vpop.xlane.xlu0 %6403
        %6405 = vadd.xlane.f32.xlu0 %v6390
        %v6406 = vpop.xlane.xlu0 %6405
        %v6407 = vmul.f32 %v6392, %v2006
        %v6408 = vmul.f32 %v6394, %v2006
        %v6409 = vmul.f32 %v6396, %v2006
        %v6410 = vmul.f32 %v6398, %v2006
        %v6411 = vmul.f32 %v6400, %v2006
        %v6412 = vmul.f32 %v6402, %v2006
        %v6413 = vmul.f32 %v6404, %v2006
        %v6414 = vmul.f32 %v6406, %v2006
        %v6415 = vadd.f32 %v6407, 1e-05
        %v6416 = vadd.f32 %v6408, 1e-05
        %v6417 = vadd.f32 %v6409, 1e-05
        %v6418 = vadd.f32 %v6410, 1e-05
        %v6419 = vadd.f32 %v6411, 1e-05
        %v6420 = vadd.f32 %v6412, 1e-05
        %v6421 = vadd.f32 %v6413, 1e-05
        %v6422 = vadd.f32 %v6414, 1e-05
        %v6423 = vrsqrt.pop %v6415
        %v6424 = vrsqrt.pop %v6416
        %v6425 = vrsqrt.pop %v6417
        %v6426 = vrsqrt.pop %v6418
        %v6427 = vrsqrt.pop %v6419
        %v6428 = vrsqrt.pop %v6420
        %v6429 = vrsqrt.pop %v6421
        %v6430 = vrsqrt.pop %v6422
        %v6431 = vmul.f32 %v6375, %v6423
        %v6432 = vmul.f32 %v6376, %v6424
        %v6433 = vmul.f32 %v6377, %v6425
        %v6434 = vmul.f32 %v6378, %v6426
        %v6435 = vmul.f32 %v6379, %v6427
        %v6436 = vmul.f32 %v6380, %v6428
        %v6437 = vmul.f32 %v6381, %v6429
        %v6438 = vmul.f32 %v6382, %v6430
        %v6440 = vlaneseq
        %v6441 = vshrl.u32 %v6440, 7
        %v6442 = vsub.s32 0, %v6441
        %v6443 = vrot.slane %v6349, %v6442
        %v6445 = vmul.f32 %v6431, %v6443
        %v6446 = vmul.f32 %v6432, %v6443
        %v6447 = vmul.f32 %v6433, %v6443
        %v6448 = vmul.f32 %v6434, %v6443
        %v6449 = vmul.f32 %v6435, %v6443
        %v6450 = vmul.f32 %v6436, %v6443
        %v6451 = vmul.f32 %v6437, %v6443
        %v6452 = vmul.f32 %v6438, %v6443
        %v6454 = vlaneseq
        %v6455 = vshrl.u32 %v6454, 7
        %v6456 = vsub.s32 0, %v6455
        %v6457 = vrot.slane %v6350, %v6456
        %v6459 = vadd.f32 %v6445, %v6457
        %v6460 = vadd.f32 %v6446, %v6457
        %v6461 = vadd.f32 %v6447, %v6457
        %v6462 = vadd.f32 %v6448, %v6457
        %v6463 = vadd.f32 %v6449, %v6457
        %v6464 = vadd.f32 %v6450, %v6457
        %v6465 = vadd.f32 %v6451, %v6457
        %v6466 = vadd.f32 %v6452, %v6457
        %v6467 = vpack.c.bf16 %v6460, %v6459
        %v6468 = vpack.c.bf16 %v6462, %v6461
        %v6469 = vpack.c.bf16 %v6464, %v6463
        %v6470 = vpack.c.bf16 %v6466, %v6465
        %v6471 = vld [vmem:[%s965] sm:$0xff]
        %v6472 = vld [vmem:[%s965 + $0x8] sm:$0xff]
        %v6473 = vld [vmem:[%s965 + $0x10] sm:$0xff]
        %v6474 = vld [vmem:[%s965 + $0x18] sm:$0xff]
        %v6475 = vld [vmem:[%s965 + $0x20] sm:$0xff]
        %v6476 = vld [vmem:[%s965 + $0x28] sm:$0xff]
        %v6477 = vld [vmem:[%s965 + $0x30] sm:$0xff]
        %v6478 = vld [vmem:[%s965 + $0x38] sm:$0xff]
        %v6479 = vld [vmem:[%s965 + $0x40] sm:$0xff]
        %v6480 = vld [vmem:[%s965 + $0x48] sm:$0xff]
        %v6481 = vld [vmem:[%s965 + $0x50] sm:$0xff]
        %v6482 = vld [vmem:[%s965 + $0x58] sm:$0xff]
        %v6483 = vld [vmem:[%s965 + $0x60] sm:$0xff]
        %v6484 = vld [vmem:[%s965 + $0x68] sm:$0xff]
        %v6485 = vld [vmem:[%s965 + $0x70] sm:$0xff]
        %v6486 = vld [vmem:[%s965 + $0x78] sm:$0xff]
        %v6487 = vld [vmem:[%s1112] sm:$0x3]
        %v6489 = vlaneseq
        %v6490 = vshrl.u32 %v6489, 7
        %v6491 = vsub.s32 0, %v6490
        %v6492 = vrot.slane %v6487, %v6491
        %v6493 = vlaneseq
        %v6494 = vshrl.u32 %v6493, 7
        %v6495 = vsub.s32 1, %v6494
        %v6496 = vrot.slane %v6487, %v6495
        %v6515 = vunpack.c.l.b16 %v6471
        %v6516 = vunpack.c.h.b16 %v6471
        %v6517 = vunpack.c.l.b16 %v6472
        %v6518 = vunpack.c.h.b16 %v6472
        %v6519 = vunpack.c.l.b16 %v6473
        %v6520 = vunpack.c.h.b16 %v6473
        %v6521 = vunpack.c.l.b16 %v6474
        %v6522 = vunpack.c.h.b16 %v6474
        %v6523 = vunpack.c.l.b16 %v6475
        %v6524 = vunpack.c.h.b16 %v6475
        %v6525 = vunpack.c.l.b16 %v6476
        %v6526 = vunpack.c.h.b16 %v6476
        %v6527 = vunpack.c.l.b16 %v6477
        %v6528 = vunpack.c.h.b16 %v6477
        %v6529 = vunpack.c.l.b16 %v6478
        %v6530 = vunpack.c.h.b16 %v6478
        %v6531 = vunpack.c.l.b16 %v6479
        %v6532 = vunpack.c.h.b16 %v6479
        %v6533 = vunpack.c.l.b16 %v6480
        %v6534 = vunpack.c.h.b16 %v6480
        %v6535 = vunpack.c.l.b16 %v6481
        %v6536 = vunpack.c.h.b16 %v6481
        %v6537 = vunpack.c.l.b16 %v6482
        %v6538 = vunpack.c.h.b16 %v6482
        %v6539 = vunpack.c.l.b16 %v6483
        %v6540 = vunpack.c.h.b16 %v6483
        %v6541 = vunpack.c.l.b16 %v6484
        %v6542 = vunpack.c.h.b16 %v6484
        %v6543 = vunpack.c.l.b16 %v6485
        %v6544 = vunpack.c.h.b16 %v6485
        %v6545 = vunpack.c.l.b16 %v6486
        %v6546 = vunpack.c.h.b16 %v6486
        %v6547 = vpack.c.b16 %v6517, %v6515
        %v6548 = vpack.c.b16 %v6518, %v6516
        %v6549 = vpack.c.b16 %v6521, %v6519
        %v6550 = vpack.c.b16 %v6522, %v6520
        %v6551 = vpack.c.b16 %v6525, %v6523
        %v6552 = vpack.c.b16 %v6526, %v6524
        %v6553 = vpack.c.b16 %v6529, %v6527
        %v6554 = vpack.c.b16 %v6530, %v6528
        %v6555 = vpack.c.b16 %v6533, %v6531
        %v6556 = vpack.c.b16 %v6534, %v6532
        %v6557 = vpack.c.b16 %v6537, %v6535
        %v6558 = vpack.c.b16 %v6538, %v6536
        %v6559 = vpack.c.b16 %v6541, %v6539
        %v6560 = vpack.c.b16 %v6542, %v6540
        %v6561 = vpack.c.b16 %v6545, %v6543
        %v6562 = vpack.c.b16 %v6546, %v6544
        %6579 = vmatprep.subr.bf16.mxu0 %v6562
        %6580 = vmatpush1.bf16.msra.mxu0 %v6561
        %6581 = vmatprep.subr.bf16.mxu0 %v6560
        %6582 = vmatpush1.bf16.msra.mxu0 %v6559
        %6583 = vmatprep.subr.bf16.mxu0 %v6558
        %6584 = vmatpush1.bf16.msra.mxu0 %v6557
        %6585 = vmatprep.subr.bf16.mxu0 %v6556
        %6586 = vmatpush1.bf16.msra.mxu0 %v6555
        %6587 = vmatprep.subr.bf16.mxu0 %v6554
        %6588 = vmatpush1.bf16.msra.mxu0 %v6553
        %6589 = vmatprep.subr.bf16.mxu0 %v6552
        %6590 = vmatpush1.bf16.msra.mxu0 %v6551
        %6591 = vmatprep.subr.bf16.mxu0 %v6550
        %6592 = vmatpush1.bf16.msra.mxu0 %v6549
        %6593 = vmatprep.subr.bf16.mxu0 %v6548
        %6594 = vmatpush1.bf16.msra.mxu0 %v6547
        %6595 = vmatprep.subr.bf16.mxu0 0
        %6596 = vmatpush2.bf16.msra.mxu0 0
        %6597 = vmatprep.subr.bf16.mxu0 0
        %6598 = vmatpush2.bf16.msra.mxu0 0
        %6599 = vmatprep.subr.bf16.mxu0 0
        %6600 = vmatpush2.bf16.msra.mxu0 0
        %6601 = vmatprep.subr.bf16.mxu0 0
        %6602 = vmatpush2.bf16.msra.mxu0 0
        %6603 = vmatprep.subr.bf16.mxu0 0
        %6604 = vmatpush2.bf16.msra.mxu0 0
        %6605 = vmatprep.subr.bf16.mxu0 0
        %6606 = vmatpush2.bf16.msra.mxu0 0
        %6607 = vmatprep.subr.bf16.mxu0 0
        %6608 = vmatpush2.bf16.msra.mxu0 0
        %6609 = vmatprep.subr.bf16.mxu0 0
        %6610 = vmatpush2.bf16.msra.mxu0 0
        %6611 = vmatprep.mubr.bf16.mxu0 0
        %6612 = vmatmul.mubr.bf16.gmra.mxu0 %v6467
        %v6613 = vpop.f32.mrf.mxu0
        %v6614 = vadd.f32 %v6492, %v6613
        %v6615 = vpop.f32.mrf.mxu0
        %v6616 = vadd.f32 %v6496, %v6615
        %v6617 = vpop.f32.mrf.mxu0
        %v6618 = vadd.f32 %v6492, %v6617
        %v6619 = vpop.f32.mrf.mxu0
        %v6620 = vadd.f32 %v6496, %v6619
        %6621 = vmatprep.mubr.bf16.mxu0 0
        %6622 = vmatmul.mubr.bf16.gmra.mxu0 %v6468
        %v6623 = vpop.f32.mrf.mxu0
        %v6624 = vadd.f32 %v6492, %v6623
        %v6625 = vpop.f32.mrf.mxu0
        %v6626 = vadd.f32 %v6496, %v6625
        %v6627 = vpop.f32.mrf.mxu0
        %v6628 = vadd.f32 %v6492, %v6627
        %v6629 = vpop.f32.mrf.mxu0
        %v6630 = vadd.f32 %v6496, %v6629
        %6631 = vmatprep.mubr.bf16.mxu0 0
        %6632 = vmatmul.mubr.bf16.gmra.mxu0 %v6469
        %v6633 = vpop.f32.mrf.mxu0
        %v6634 = vadd.f32 %v6492, %v6633
        %v6635 = vpop.f32.mrf.mxu0
        %v6636 = vadd.f32 %v6496, %v6635
        %v6637 = vpop.f32.mrf.mxu0
        %v6638 = vadd.f32 %v6492, %v6637
        %v6639 = vpop.f32.mrf.mxu0
        %v6640 = vadd.f32 %v6496, %v6639
        %6641 = vmatprep.mubr.bf16.mxu0 0
        %6642 = vmatmul.mubr.bf16.gmra.mxu0 %v6470
        %v6643 = vpop.f32.mrf.mxu0
        %v6644 = vadd.f32 %v6492, %v6643
        %v6645 = vpop.f32.mrf.mxu0
        %v6646 = vadd.f32 %v6496, %v6645
        %v6647 = vpop.f32.mrf.mxu0
        %v6648 = vadd.f32 %v6492, %v6647
        %v6649 = vpop.f32.mrf.mxu0
        %v6650 = vadd.f32 %v6496, %v6649
        %6651 = vdwg.mxu0
        %v6652 = vmul.f32 %v6614, 0.5
        %v6653 = vmul.f32 %v6616, 0.5
        %v6654 = vmul.f32 %v6618, 0.5
        %v6655 = vmul.f32 %v6620, 0.5
        %v6656 = vmul.f32 %v6624, 0.5
        %v6657 = vmul.f32 %v6626, 0.5
        %v6658 = vmul.f32 %v6628, 0.5
        %v6659 = vmul.f32 %v6630, 0.5
        %v6660 = vmul.f32 %v6634, 0.5
        %v6661 = vmul.f32 %v6636, 0.5
        %v6662 = vmul.f32 %v6638, 0.5
        %v6663 = vmul.f32 %v6640, 0.5
        %v6664 = vmul.f32 %v6644, 0.5
        %v6665 = vmul.f32 %v6646, 0.5
        %v6666 = vmul.f32 %v6648, 0.5
        %v6667 = vmul.f32 %v6650, 0.5
        %v6668 = vmul.f32 %v6614, 0.70710677
        %v6669 = vmul.f32 %v6616, 0.70710677
        %v6670 = vmul.f32 %v6618, 0.70710677
        %v6671 = vmul.f32 %v6620, 0.70710677
        %v6672 = vmul.f32 %v6624, 0.70710677
        %v6673 = vmul.f32 %v6626, 0.70710677
        %v6674 = vmul.f32 %v6628, 0.70710677
        %v6675 = vmul.f32 %v6630, 0.70710677
        %v6676 = vmul.f32 %v6634, 0.70710677
        %v6677 = vmul.f32 %v6636, 0.70710677
        %v6678 = vmul.f32 %v6638, 0.70710677
        %v6679 = vmul.f32 %v6640, 0.70710677
        %v6680 = vmul.f32 %v6644, 0.70710677
        %v6681 = vmul.f32 %v6646, 0.70710677
        %v6682 = vmul.f32 %v6648, 0.70710677
        %v6683 = vmul.f32 %v6650, 0.70710677
        %v6684 = verf.f32.pop %v6668
        %v6685 = verf.f32.pop %v6669
        %v6686 = verf.f32.pop %v6670
        %v6687 = verf.f32.pop %v6671
        %v6688 = verf.f32.pop %v6672
        %v6689 = verf.f32.pop %v6673
        %v6690 = verf.f32.pop %v6674
        %v6691 = verf.f32.pop %v6675
        %v6692 = verf.f32.pop %v6676
        %v6693 = verf.f32.pop %v6677
        %v6694 = verf.f32.pop %v6678
        %v6695 = verf.f32.pop %v6679
        %v6696 = verf.f32.pop %v6680
        %v6697 = verf.f32.pop %v6681
        %v6698 = verf.f32.pop %v6682
        %v6699 = verf.f32.pop %v6683
        %v6700 = vadd.f32 %v6684, 1.0
        %v6701 = vadd.f32 %v6685, 1.0
        %v6702 = vadd.f32 %v6686, 1.0
        %v6703 = vadd.f32 %v6687, 1.0
        %v6704 = vadd.f32 %v6688, 1.0
        %v6705 = vadd.f32 %v6689, 1.0
        %v6706 = vadd.f32 %v6690, 1.0
        %v6707 = vadd.f32 %v6691, 1.0
        %v6708 = vadd.f32 %v6692, 1.0
        %v6709 = vadd.f32 %v6693, 1.0
        %v6710 = vadd.f32 %v6694, 1.0
        %v6711 = vadd.f32 %v6695, 1.0
        %v6712 = vadd.f32 %v6696, 1.0
        %v6713 = vadd.f32 %v6697, 1.0
        %v6714 = vadd.f32 %v6698, 1.0
        %v6715 = vadd.f32 %v6699, 1.0
        %v6716 = vmul.f32 %v6652, %v6700
        %v6717 = vmul.f32 %v6653, %v6701
        %v6718 = vmul.f32 %v6654, %v6702
        %v6719 = vmul.f32 %v6655, %v6703
        %v6720 = vmul.f32 %v6656, %v6704
        %v6721 = vmul.f32 %v6657, %v6705
        %v6722 = vmul.f32 %v6658, %v6706
        %v6723 = vmul.f32 %v6659, %v6707
        %v6724 = vmul.f32 %v6660, %v6708
        %v6725 = vmul.f32 %v6661, %v6709
        %v6726 = vmul.f32 %v6662, %v6710
        %v6727 = vmul.f32 %v6663, %v6711
        %v6728 = vmul.f32 %v6664, %v6712
        %v6729 = vmul.f32 %v6665, %v6713
        %v6730 = vmul.f32 %v6666, %v6714
        %v6731 = vmul.f32 %v6667, %v6715
        %v6732 = vpack.c.bf16 %v6718, %v6716
        %v6733 = vpack.c.bf16 %v6719, %v6717
        %v6734 = vpack.c.bf16 %v6722, %v6720
        %v6735 = vpack.c.bf16 %v6723, %v6721
        %v6736 = vpack.c.bf16 %v6726, %v6724
        %v6737 = vpack.c.bf16 %v6727, %v6725
        %v6738 = vpack.c.bf16 %v6730, %v6728
        %v6739 = vpack.c.bf16 %v6731, %v6729
        %v6740 = vld [vmem:[%s974] sm:$0xf]
        %v6741 = vld [vmem:[%s974 + $0x4] sm:$0xf]
        %v6742 = vld [vmem:[%s974 + $0x8] sm:$0xf]
        %v6743 = vld [vmem:[%s974 + $0xc] sm:$0xf]
        %v6744 = vld [vmem:[%s974 + $0x10] sm:$0xf]
        %v6745 = vld [vmem:[%s974 + $0x14] sm:$0xf]
        %v6746 = vld [vmem:[%s974 + $0x18] sm:$0xf]
        %v6747 = vld [vmem:[%s974 + $0x1c] sm:$0xf]
        %v6748 = vld [vmem:[%s974 + $0x20] sm:$0xf]
        %v6749 = vld [vmem:[%s974 + $0x24] sm:$0xf]
        %v6750 = vld [vmem:[%s974 + $0x28] sm:$0xf]
        %v6751 = vld [vmem:[%s974 + $0x2c] sm:$0xf]
        %v6752 = vld [vmem:[%s974 + $0x30] sm:$0xf]
        %v6753 = vld [vmem:[%s974 + $0x34] sm:$0xf]
        %v6754 = vld [vmem:[%s974 + $0x38] sm:$0xf]
        %v6755 = vld [vmem:[%s974 + $0x3c] sm:$0xf]
        %v6756 = vld [vmem:[%s974 + $0x40] sm:$0xf]
        %v6757 = vld [vmem:[%s974 + $0x44] sm:$0xf]
        %v6758 = vld [vmem:[%s974 + $0x48] sm:$0xf]
        %v6759 = vld [vmem:[%s974 + $0x4c] sm:$0xf]
        %v6760 = vld [vmem:[%s974 + $0x50] sm:$0xf]
        %v6761 = vld [vmem:[%s974 + $0x54] sm:$0xf]
        %v6762 = vld [vmem:[%s974 + $0x58] sm:$0xf]
        %v6763 = vld [vmem:[%s974 + $0x5c] sm:$0xf]
        %v6764 = vld [vmem:[%s974 + $0x60] sm:$0xf]
        %v6765 = vld [vmem:[%s974 + $0x64] sm:$0xf]
        %v6766 = vld [vmem:[%s974 + $0x68] sm:$0xf]
        %v6767 = vld [vmem:[%s974 + $0x6c] sm:$0xf]
        %v6768 = vld [vmem:[%s974 + $0x70] sm:$0xf]
        %v6769 = vld [vmem:[%s974 + $0x74] sm:$0xf]
        %v6770 = vld [vmem:[%s974 + $0x78] sm:$0xf]
        %v6771 = vld [vmem:[%s974 + $0x7c] sm:$0xf]
        %v6804 = vunpack.c.l.b16 %v6740
        %v6805 = vunpack.c.l.b16 %v6741
        %v6806 = vunpack.c.l.b16 %v6742
        %v6807 = vunpack.c.l.b16 %v6743
        %v6808 = vunpack.c.l.b16 %v6744
        %v6809 = vunpack.c.l.b16 %v6745
        %v6810 = vunpack.c.l.b16 %v6746
        %v6811 = vunpack.c.l.b16 %v6747
        %v6812 = vunpack.c.l.b16 %v6748
        %v6813 = vunpack.c.l.b16 %v6749
        %v6814 = vunpack.c.l.b16 %v6750
        %v6815 = vunpack.c.l.b16 %v6751
        %v6816 = vunpack.c.l.b16 %v6752
        %v6817 = vunpack.c.l.b16 %v6753
        %v6818 = vunpack.c.l.b16 %v6754
        %v6819 = vunpack.c.l.b16 %v6755
        %v6820 = vunpack.c.l.b16 %v6756
        %v6821 = vunpack.c.l.b16 %v6757
        %v6822 = vunpack.c.l.b16 %v6758
        %v6823 = vunpack.c.l.b16 %v6759
        %v6824 = vunpack.c.l.b16 %v6760
        %v6825 = vunpack.c.l.b16 %v6761
        %v6826 = vunpack.c.l.b16 %v6762
        %v6827 = vunpack.c.l.b16 %v6763
        %v6828 = vunpack.c.l.b16 %v6764
        %v6829 = vunpack.c.l.b16 %v6765
        %v6830 = vunpack.c.l.b16 %v6766
        %v6831 = vunpack.c.l.b16 %v6767
        %v6832 = vunpack.c.l.b16 %v6768
        %v6833 = vunpack.c.l.b16 %v6769
        %v6834 = vunpack.c.l.b16 %v6770
        %v6835 = vunpack.c.l.b16 %v6771
        %v6836 = vpack.c.b16 %v6805, %v6804
        %v6837 = vpack.c.b16 %v6807, %v6806
        %v6838 = vpack.c.b16 %v6809, %v6808
        %v6839 = vpack.c.b16 %v6811, %v6810
        %v6840 = vpack.c.b16 %v6813, %v6812
        %v6841 = vpack.c.b16 %v6815, %v6814
        %v6842 = vpack.c.b16 %v6817, %v6816
        %v6843 = vpack.c.b16 %v6819, %v6818
        %v6844 = vpack.c.b16 %v6821, %v6820
        %v6845 = vpack.c.b16 %v6823, %v6822
        %v6846 = vpack.c.b16 %v6825, %v6824
        %v6847 = vpack.c.b16 %v6827, %v6826
        %v6848 = vpack.c.b16 %v6829, %v6828
        %v6849 = vpack.c.b16 %v6831, %v6830
        %v6850 = vpack.c.b16 %v6833, %v6832
        %v6851 = vpack.c.b16 %v6835, %v6834
        %6868 = vmatprep.subr.bf16.mxu0 0
        %6869 = vmatpush1.bf16.msra.mxu0 %v6843
        %6870 = vmatprep.subr.bf16.mxu0 0
        %6871 = vmatpush1.bf16.msra.mxu0 %v6842
        %6872 = vmatprep.subr.bf16.mxu0 0
        %6873 = vmatpush1.bf16.msra.mxu0 %v6841
        %6874 = vmatprep.subr.bf16.mxu0 0
        %6875 = vmatpush1.bf16.msra.mxu0 %v6840
        %6876 = vmatprep.subr.bf16.mxu0 0
        %6877 = vmatpush1.bf16.msra.mxu0 %v6839
        %6878 = vmatprep.subr.bf16.mxu0 0
        %6879 = vmatpush1.bf16.msra.mxu0 %v6838
        %6880 = vmatprep.subr.bf16.mxu0 0
        %6881 = vmatpush1.bf16.msra.mxu0 %v6837
        %6882 = vmatprep.subr.bf16.mxu0 0
        %6883 = vmatpush1.bf16.msra.mxu0 %v6836
        %6884 = vmatprep.subr.bf16.mxu0 0
        %6885 = vmatpush2.bf16.msra.mxu0 %v6851
        %6886 = vmatprep.subr.bf16.mxu0 0
        %6887 = vmatpush2.bf16.msra.mxu0 %v6850
        %6888 = vmatprep.subr.bf16.mxu0 0
        %6889 = vmatpush2.bf16.msra.mxu0 %v6849
        %6890 = vmatprep.subr.bf16.mxu0 0
        %6891 = vmatpush2.bf16.msra.mxu0 %v6848
        %6892 = vmatprep.subr.bf16.mxu0 0
        %6893 = vmatpush2.bf16.msra.mxu0 %v6847
        %6894 = vmatprep.subr.bf16.mxu0 0
        %6895 = vmatpush2.bf16.msra.mxu0 %v6846
        %6896 = vmatprep.subr.bf16.mxu0 0
        %6897 = vmatpush2.bf16.msra.mxu0 %v6845
        %6898 = vmatprep.subr.bf16.mxu0 0
        %6899 = vmatpush2.bf16.msra.mxu0 %v6844
        %6900 = vmatprep.mubr.bf16.mxu0 %v6733
        %6901 = vmatmul.mubr.bf16.gmra.mxu0 %v6732
        %v6902 = vpop.f32.mrf.mxu0
        %v6903 = vadd.f32 0.0, %v6902
        %v6904 = vpop.f32.mrf.mxu0
        %v6905 = vpop.f32.mrf.mxu0
        %v6906 = vadd.f32 0.0, %v6905
        %v6907 = vpop.f32.mrf.mxu0
        %6908 = vmatprep.mubr.bf16.mxu0 %v6735
        %6909 = vmatmul.mubr.bf16.gmra.mxu0 %v6734
        %v6910 = vpop.f32.mrf.mxu0
        %v6911 = vadd.f32 0.0, %v6910
        %v6912 = vpop.f32.mrf.mxu0
        %v6913 = vpop.f32.mrf.mxu0
        %v6914 = vadd.f32 0.0, %v6913
        %v6915 = vpop.f32.mrf.mxu0
        %6916 = vmatprep.mubr.bf16.mxu0 %v6737
        %6917 = vmatmul.mubr.bf16.gmra.mxu0 %v6736
        %v6918 = vpop.f32.mrf.mxu0
        %v6919 = vadd.f32 0.0, %v6918
        %v6920 = vpop.f32.mrf.mxu0
        %v6921 = vpop.f32.mrf.mxu0
        %v6922 = vadd.f32 0.0, %v6921
        %v6923 = vpop.f32.mrf.mxu0
        %6924 = vmatprep.mubr.bf16.mxu0 %v6739
        %6925 = vmatmul.mubr.bf16.gmra.mxu0 %v6738
        %v6926 = vpop.f32.mrf.mxu0
        %v6927 = vadd.f32 0.0, %v6926
        %v6928 = vpop.f32.mrf.mxu0
        %v6929 = vpop.f32.mrf.mxu0
        %v6930 = vadd.f32 0.0, %v6929
        %v6931 = vpop.f32.mrf.mxu0
        %6932 = vdwg.mxu0
        %v6933 = vadd.f32 %v6341, %v6903
        %v6934 = vadd.f32 %v6342, %v6906
        %v6935 = vadd.f32 %v6343, %v6911
        %v6936 = vadd.f32 %v6344, %v6914
        %v6937 = vadd.f32 %v6345, %v6919
        %v6938 = vadd.f32 %v6346, %v6922
        %v6939 = vadd.f32 %v6347, %v6927
        %v6940 = vadd.f32 %v6348, %v6930
        %v6941 = vld [vmem:[%s1115] sm:$0x1]
        %v6943 = vlaneseq
        %v6944 = vshrl.u32 %v6943, 7
        %v6945 = vsub.s32 0, %v6944
        %v6946 = vrot.slane %v6941, %v6945
        %v6948 = vadd.f32 %v6933, %v6946
        %v6949 = vadd.f32 %v6934, %v6946
        %v6950 = vadd.f32 %v6935, %v6946
        %v6951 = vadd.f32 %v6936, %v6946
        %v6952 = vadd.f32 %v6937, %v6946
        %v6953 = vadd.f32 %v6938, %v6946
        %v6954 = vadd.f32 %v6939, %v6946
        %v6955 = vadd.f32 %v6940, %v6946
        %6956 = vst [vmem:[#allocation2] sm:$0xff] %v6948
        %6957 = vst [vmem:[#allocation2 + $0x8] sm:$0xff] %v6949
        %6958 = vst [vmem:[#allocation2 + $0x10] sm:$0xff] %v6950
        %6959 = vst [vmem:[#allocation2 + $0x18] sm:$0xff] %v6951
        %6960 = vst [vmem:[#allocation2 + $0x20] sm:$0xff] %v6952
        %6961 = vst [vmem:[#allocation2 + $0x28] sm:$0xff] %v6953
        %6962 = vst [vmem:[#allocation2 + $0x30] sm:$0xff] %v6954
        %6963 = vst [vmem:[#allocation2 + $0x38] sm:$0xff] %v6955
        %p6964 = scmp.eq.s32.totalorder %s57, 1
        // Predicated region
        $region165: #{tpu_custom_call.1} parent=111 // pred_check
          %p6965 = pneg %p6964
        $region166: #{tpu_custom_call.1} parent=111 // pred_check_branch
          %6967 = sbr.rel (%p6965) target = $region168
        $region167: #{tpu_custom_call.1} parent=111 // pred_region
          %v6968 = vld [vmem:[#allocation2] sm:$0x1]
          %v6969 = vld [vmem:[#allocation2 + $0x8] sm:$0x1]
          %v6970 = vld [vmem:[#allocation2 + $0x10] sm:$0x1]
          %v6971 = vld [vmem:[#allocation2 + $0x18] sm:$0x1]
          %v6972 = vld [vmem:[#allocation2 + $0x20] sm:$0x1]
          %v6973 = vld [vmem:[#allocation2 + $0x28] sm:$0x1]
          %v6974 = vld [vmem:[#allocation2 + $0x30] sm:$0x1]
          %v6975 = vld [vmem:[#allocation2 + $0x38] sm:$0x1]
          %v6976 = vld [vmem:[%s17] sm:$0x1]
          %v6977 = vld [vmem:[%s18] sm:$0x1]
          %v6986 = vrot.slane %v6969, 7
          %vm6987 = vcmask 1041409
          %v6988 = vsel %vm6987, %v6986, %v6968
          %v6989 = vrot.slane %v6970, 6
          %vm6990 = vcmask 1042434
          %v6991 = vsel %vm6990, %v6989, %v6988
          %v6992 = vrot.slane %v6971, 5
          %vm6993 = vcmask 1043459
          %v6994 = vsel %vm6993, %v6992, %v6991
          %v6995 = vrot.slane %v6972, 4
          %vm6996 = vcmask 1044484
          %v6997 = vsel %vm6996, %v6995, %v6994
          %v6998 = vrot.slane %v6973, 3
          %vm6999 = vcmask 1045509
          %v7000 = vsel %vm6999, %v6998, %v6997
          %v7001 = vrot.slane %v6974, 2
          %vm7002 = vcmask 1046534
          %v7003 = vsel %vm7002, %v7001, %v7000
          %v7004 = vrot.slane %v6975, 1
          %vm7005 = vcmask 1047559
          %v7006 = vsel %vm7005, %v7004, %v7003
          %7008 = vadd.xlane.f32.xlu0 %v7006
          %v7009 = vpop.xlane.xlu0 %7008
          %v7010 = vmul.f32 %v7009, %v2006
          %v7012 = vrot.slane %v7010, 1
          %v7013 = vrot.slane %v7010, 2
          %v7014 = vrot.slane %v7010, 3
          %v7015 = vrot.slane %v7010, 4
          %v7016 = vrot.slane %v7010, 5
          %v7017 = vrot.slane %v7010, 6
          %v7018 = vrot.slane %v7010, 7
          %v7027 = vsub.f32 %v6968, %v7010
          %v7028 = vsub.f32 %v6969, %v7012
          %v7029 = vsub.f32 %v6970, %v7013
          %v7030 = vsub.f32 %v6971, %v7014
          %v7031 = vsub.f32 %v6972, %v7015
          %v7032 = vsub.f32 %v6973, %v7016
          %v7033 = vsub.f32 %v6974, %v7017
          %v7034 = vsub.f32 %v6975, %v7018
          %v7035 = vmul.f32 %v7027, %v7027
          %v7036 = vmul.f32 %v7028, %v7028
          %v7037 = vmul.f32 %v7029, %v7029
          %v7038 = vmul.f32 %v7030, %v7030
          %v7039 = vmul.f32 %v7031, %v7031
          %v7040 = vmul.f32 %v7032, %v7032
          %v7041 = vmul.f32 %v7033, %v7033
          %v7042 = vmul.f32 %v7034, %v7034
          %v7051 = vrot.slane %v7036, 7
          %v7052 = vsel %vm6987, %v7051, %v7035
          %v7053 = vrot.slane %v7037, 6
          %v7054 = vsel %vm6990, %v7053, %v7052
          %v7055 = vrot.slane %v7038, 5
          %v7056 = vsel %vm6993, %v7055, %v7054
          %v7057 = vrot.slane %v7039, 4
          %v7058 = vsel %vm6996, %v7057, %v7056
          %v7059 = vrot.slane %v7040, 3
          %v7060 = vsel %vm6999, %v7059, %v7058
          %v7061 = vrot.slane %v7041, 2
          %v7062 = vsel %vm7002, %v7061, %v7060
          %v7063 = vrot.slane %v7042, 1
          %v7064 = vsel %vm7005, %v7063, %v7062
          %7066 = vadd.xlane.f32.xlu0 %v7064
          %v7067 = vpop.xlane.xlu0 %7066
          %v7068 = vmul.f32 %v7067, %v2006
          %v7069 = vadd.f32 %v7068, 1e-05
          %v7070 = vrsqrt.pop %v7069
          %v7072 = vrot.slane %v7070, 1
          %v7073 = vrot.slane %v7070, 2
          %v7074 = vrot.slane %v7070, 3
          %v7075 = vrot.slane %v7070, 4
          %v7076 = vrot.slane %v7070, 5
          %v7077 = vrot.slane %v7070, 6
          %v7078 = vrot.slane %v7070, 7
          %v7087 = vmul.f32 %v7027, %v7070
          %v7088 = vmul.f32 %v7028, %v7072
          %v7089 = vmul.f32 %v7029, %v7073
          %v7090 = vmul.f32 %v7030, %v7074
          %v7091 = vmul.f32 %v7031, %v7075
          %v7092 = vmul.f32 %v7032, %v7076
          %v7093 = vmul.f32 %v7033, %v7077
          %v7094 = vmul.f32 %v7034, %v7078
          %v7096 = vlaneseq
          %v7097 = vshrl.u32 %v7096, 7
          %v7098 = vsub.s32 0, %v7097
          %v7099 = vrot.slane %v6976, %v7098
          %v7101 = vmul.f32 %v7087, %v7099
          %v7102 = vmul.f32 %v7088, %v7099
          %v7103 = vmul.f32 %v7089, %v7099
          %v7104 = vmul.f32 %v7090, %v7099
          %v7105 = vmul.f32 %v7091, %v7099
          %v7106 = vmul.f32 %v7092, %v7099
          %v7107 = vmul.f32 %v7093, %v7099
          %v7108 = vmul.f32 %v7094, %v7099
          %v7110 = vlaneseq
          %v7111 = vshrl.u32 %v7110, 7
          %v7112 = vsub.s32 0, %v7111
          %v7113 = vrot.slane %v6977, %v7112
          %v7115 = vadd.f32 %v7101, %v7113
          %v7116 = vadd.f32 %v7102, %v7113
          %v7117 = vadd.f32 %v7103, %v7113
          %v7118 = vadd.f32 %v7104, %v7113
          %v7119 = vadd.f32 %v7105, %v7113
          %v7120 = vadd.f32 %v7106, %v7113
          %v7121 = vadd.f32 %v7107, %v7113
          %v7122 = vadd.f32 %v7108, %v7113
          %v7123 = vpack.c.bf16 %v7115, %v7115
          %v7124 = vpack.c.bf16 %v7116, %v7116
          %v7125 = vpack.c.bf16 %v7117, %v7117
          %v7126 = vpack.c.bf16 %v7118, %v7118
          %v7127 = vpack.c.bf16 %v7119, %v7119
          %v7128 = vpack.c.bf16 %v7120, %v7120
          %v7129 = vpack.c.bf16 %v7121, %v7121
          %v7130 = vpack.c.bf16 %v7122, %v7122
          %v7131 = vld [vmem:[#allocation21] sm:$0xff]
          %v7132 = vld [vmem:[#allocation21 + $0x8] sm:$0xff]
          %v7133 = vld [vmem:[#allocation21 + $0x10] sm:$0xff]
          %v7134 = vld [vmem:[#allocation21 + $0x18] sm:$0xff]
          %v7135 = vld [vmem:[#allocation21 + $0x20] sm:$0xff]
          %v7136 = vld [vmem:[#allocation21 + $0x28] sm:$0xff]
          %v7137 = vld [vmem:[#allocation21 + $0x30] sm:$0xff]
          %v7138 = vld [vmem:[#allocation21 + $0x38] sm:$0xff]
          %v7139 = vld [vmem:[#allocation21 + $0x40] sm:$0xff]
          %v7140 = vld [vmem:[#allocation21 + $0x48] sm:$0xff]
          %v7141 = vld [vmem:[#allocation21 + $0x50] sm:$0xff]
          %v7142 = vld [vmem:[#allocation21 + $0x58] sm:$0xff]
          %v7143 = vld [vmem:[#allocation21 + $0x60] sm:$0xff]
          %v7144 = vld [vmem:[#allocation21 + $0x68] sm:$0xff]
          %v7145 = vld [vmem:[#allocation21 + $0x70] sm:$0xff]
          %v7146 = vld [vmem:[#allocation21 + $0x78] sm:$0xff]
          %v7147 = vld [vmem:[%s20] sm:$0x3]
          %v7149 = vlaneseq
          %v7150 = vshrl.u32 %v7149, 7
          %v7151 = vsub.s32 0, %v7150
          %v7152 = vrot.slane %v7147, %v7151
          %v7153 = vlaneseq
          %v7154 = vshrl.u32 %v7153, 7
          %v7155 = vsub.s32 1, %v7154
          %v7156 = vrot.slane %v7147, %v7155
          %v7167 = vunpack.c.l.b16 %v7123
          %v7168 = vunpack.c.l.b16 %v7124
          %v7169 = vunpack.c.l.b16 %v7125
          %v7170 = vunpack.c.l.b16 %v7126
          %v7171 = vunpack.c.l.b16 %v7127
          %v7172 = vunpack.c.l.b16 %v7128
          %v7173 = vunpack.c.l.b16 %v7129
          %v7174 = vunpack.c.l.b16 %v7130
          %v7175 = vrot.slane %v7168, 7
          %v7176 = vsel %vm6987, %v7175, %v7167
          %v7177 = vrot.slane %v7169, 6
          %v7178 = vsel %vm6990, %v7177, %v7176
          %v7179 = vrot.slane %v7170, 5
          %v7180 = vsel %vm6993, %v7179, %v7178
          %v7181 = vrot.slane %v7171, 4
          %v7182 = vsel %vm6996, %v7181, %v7180
          %v7183 = vrot.slane %v7172, 3
          %v7184 = vsel %vm6999, %v7183, %v7182
          %v7185 = vrot.slane %v7173, 2
          %v7186 = vsel %vm7002, %v7185, %v7184
          %v7187 = vrot.slane %v7174, 1
          %v7188 = vsel %vm7005, %v7187, %v7186
          %v7189 = vpack.c.b16 %v7188, %v7188
          %v7207 = vunpack.c.l.b16 %v7131
          %v7208 = vunpack.c.h.b16 %v7131
          %v7209 = vunpack.c.l.b16 %v7132
          %v7210 = vunpack.c.h.b16 %v7132
          %v7211 = vunpack.c.l.b16 %v7133
          %v7212 = vunpack.c.h.b16 %v7133
          %v7213 = vunpack.c.l.b16 %v7134
          %v7214 = vunpack.c.h.b16 %v7134
          %v7215 = vunpack.c.l.b16 %v7135
          %v7216 = vunpack.c.h.b16 %v7135
          %v7217 = vunpack.c.l.b16 %v7136
          %v7218 = vunpack.c.h.b16 %v7136
          %v7219 = vunpack.c.l.b16 %v7137
          %v7220 = vunpack.c.h.b16 %v7137
          %v7221 = vunpack.c.l.b16 %v7138
          %v7222 = vunpack.c.h.b16 %v7138
          %v7223 = vunpack.c.l.b16 %v7139
          %v7224 = vunpack.c.h.b16 %v7139
          %v7225 = vunpack.c.l.b16 %v7140
          %v7226 = vunpack.c.h.b16 %v7140
          %v7227 = vunpack.c.l.b16 %v7141
          %v7228 = vunpack.c.h.b16 %v7141
          %v7229 = vunpack.c.l.b16 %v7142
          %v7230 = vunpack.c.h.b16 %v7142
          %v7231 = vunpack.c.l.b16 %v7143
          %v7232 = vunpack.c.h.b16 %v7143
          %v7233 = vunpack.c.l.b16 %v7144
          %v7234 = vunpack.c.h.b16 %v7144
          %v7235 = vunpack.c.l.b16 %v7145
          %v7236 = vunpack.c.h.b16 %v7145
          %v7237 = vunpack.c.l.b16 %v7146
          %v7238 = vunpack.c.h.b16 %v7146
          %v7239 = vpack.c.b16 %v7209, %v7207
          %v7240 = vpack.c.b16 %v7210, %v7208
          %v7241 = vpack.c.b16 %v7213, %v7211
          %v7242 = vpack.c.b16 %v7214, %v7212
          %v7243 = vpack.c.b16 %v7217, %v7215
          %v7244 = vpack.c.b16 %v7218, %v7216
          %v7245 = vpack.c.b16 %v7221, %v7219
          %v7246 = vpack.c.b16 %v7222, %v7220
          %v7247 = vpack.c.b16 %v7225, %v7223
          %v7248 = vpack.c.b16 %v7226, %v7224
          %v7249 = vpack.c.b16 %v7229, %v7227
          %v7250 = vpack.c.b16 %v7230, %v7228
          %v7251 = vpack.c.b16 %v7233, %v7231
          %v7252 = vpack.c.b16 %v7234, %v7232
          %v7253 = vpack.c.b16 %v7237, %v7235
          %v7254 = vpack.c.b16 %v7238, %v7236
          %7271 = vmatprep.subr.bf16.mxu0 %v7254
          %7272 = vmatpush1.bf16.msra.mxu0 %v7253
          %7273 = vmatprep.subr.bf16.mxu0 %v7252
          %7274 = vmatpush1.bf16.msra.mxu0 %v7251
          %7275 = vmatprep.subr.bf16.mxu0 %v7250
          %7276 = vmatpush1.bf16.msra.mxu0 %v7249
          %7277 = vmatprep.subr.bf16.mxu0 %v7248
          %7278 = vmatpush1.bf16.msra.mxu0 %v7247
          %7279 = vmatprep.subr.bf16.mxu0 %v7246
          %7280 = vmatpush1.bf16.msra.mxu0 %v7245
          %7281 = vmatprep.subr.bf16.mxu0 %v7244
          %7282 = vmatpush1.bf16.msra.mxu0 %v7243
          %7283 = vmatprep.subr.bf16.mxu0 %v7242
          %7284 = vmatpush1.bf16.msra.mxu0 %v7241
          %7285 = vmatprep.subr.bf16.mxu0 %v7240
          %7286 = vmatpush1.bf16.msra.mxu0 %v7239
          %7287 = vmatprep.subr.bf16.mxu0 0
          %7288 = vmatpush2.bf16.msra.mxu0 0
          %7289 = vmatprep.subr.bf16.mxu0 0
          %7290 = vmatpush2.bf16.msra.mxu0 0
          %7291 = vmatprep.subr.bf16.mxu0 0
          %7292 = vmatpush2.bf16.msra.mxu0 0
          %7293 = vmatprep.subr.bf16.mxu0 0
          %7294 = vmatpush2.bf16.msra.mxu0 0
          %7295 = vmatprep.subr.bf16.mxu0 0
          %7296 = vmatpush2.bf16.msra.mxu0 0
          %7297 = vmatprep.subr.bf16.mxu0 0
          %7298 = vmatpush2.bf16.msra.mxu0 0
          %7299 = vmatprep.subr.bf16.mxu0 0
          %7300 = vmatpush2.bf16.msra.mxu0 0
          %7301 = vmatprep.subr.bf16.mxu0 0
          %7302 = vmatpush2.bf16.msra.mxu0 0
          %7303 = vmatprep.mubr.bf16.mxu0 0
          %7304 = vmatmul.mubr.bf16.gmra.mxu0 %v7189
          %v7305 = vpop.f32.mrf.mxu0
          %v7306 = vadd.f32 %v7152, %v7305
          %v7307 = vpop.f32.mrf.mxu0
          %v7308 = vadd.f32 %v7156, %v7307
          %v7309 = vpop.f32.mrf.mxu0
          %v7310 = vpop.f32.mrf.mxu0
          %7311 = vdwg.mxu0
          %v7312 = vpack.c.bf16 %v7306, %v7306
          %v7313 = vpack.c.bf16 %v7308, %v7308
          %v7314 = vld [vmem:[#allocation22] sm:$0xf]
          %v7315 = vld [vmem:[#allocation22 + $0x4] sm:$0xf]
          %v7316 = vld [vmem:[#allocation22 + $0x8] sm:$0xf]
          %v7317 = vld [vmem:[#allocation22 + $0xc] sm:$0xf]
          %v7318 = vld [vmem:[#allocation22 + $0x10] sm:$0xf]
          %v7319 = vld [vmem:[#allocation22 + $0x14] sm:$0xf]
          %v7320 = vld [vmem:[#allocation22 + $0x18] sm:$0xf]
          %v7321 = vld [vmem:[#allocation22 + $0x1c] sm:$0xf]
          %v7322 = vld [vmem:[#allocation22 + $0x20] sm:$0xf]
          %v7323 = vld [vmem:[#allocation22 + $0x24] sm:$0xf]
          %v7324 = vld [vmem:[#allocation22 + $0x28] sm:$0xf]
          %v7325 = vld [vmem:[#allocation22 + $0x2c] sm:$0xf]
          %v7326 = vld [vmem:[#allocation22 + $0x30] sm:$0xf]
          %v7327 = vld [vmem:[#allocation22 + $0x34] sm:$0xf]
          %v7328 = vld [vmem:[#allocation22 + $0x38] sm:$0xf]
          %v7329 = vld [vmem:[#allocation22 + $0x3c] sm:$0xf]
          %v7330 = vld [vmem:[#allocation22 + $0x40] sm:$0xf]
          %v7331 = vld [vmem:[#allocation22 + $0x44] sm:$0xf]
          %v7332 = vld [vmem:[#allocation22 + $0x48] sm:$0xf]
          %v7333 = vld [vmem:[#allocation22 + $0x4c] sm:$0xf]
          %v7334 = vld [vmem:[#allocation22 + $0x50] sm:$0xf]
          %v7335 = vld [vmem:[#allocation22 + $0x54] sm:$0xf]
          %v7336 = vld [vmem:[#allocation22 + $0x58] sm:$0xf]
          %v7337 = vld [vmem:[#allocation22 + $0x5c] sm:$0xf]
          %v7338 = vld [vmem:[#allocation22 + $0x60] sm:$0xf]
          %v7339 = vld [vmem:[#allocation22 + $0x64] sm:$0xf]
          %v7340 = vld [vmem:[#allocation22 + $0x68] sm:$0xf]
          %v7341 = vld [vmem:[#allocation22 + $0x6c] sm:$0xf]
          %v7342 = vld [vmem:[#allocation22 + $0x70] sm:$0xf]
          %v7343 = vld [vmem:[#allocation22 + $0x74] sm:$0xf]
          %v7344 = vld [vmem:[#allocation22 + $0x78] sm:$0xf]
          %v7345 = vld [vmem:[#allocation22 + $0x7c] sm:$0xf]
          %v7346 = vld [vmem:[%s22] sm:$0x1]
          %v7348 = vlaneseq
          %v7349 = vshrl.u32 %v7348, 7
          %v7350 = vsub.s32 0, %v7349
          %v7351 = vrot.slane %v7346, %v7350
          %v7385 = vunpack.c.l.b16 %v7314
          %v7386 = vunpack.c.l.b16 %v7315
          %v7387 = vunpack.c.l.b16 %v7316
          %v7388 = vunpack.c.l.b16 %v7317
          %v7389 = vunpack.c.l.b16 %v7318
          %v7390 = vunpack.c.l.b16 %v7319
          %v7391 = vunpack.c.l.b16 %v7320
          %v7392 = vunpack.c.l.b16 %v7321
          %v7393 = vunpack.c.l.b16 %v7322
          %v7394 = vunpack.c.l.b16 %v7323
          %v7395 = vunpack.c.l.b16 %v7324
          %v7396 = vunpack.c.l.b16 %v7325
          %v7397 = vunpack.c.l.b16 %v7326
          %v7398 = vunpack.c.l.b16 %v7327
          %v7399 = vunpack.c.l.b16 %v7328
          %v7400 = vunpack.c.l.b16 %v7329
          %v7401 = vunpack.c.l.b16 %v7330
          %v7402 = vunpack.c.l.b16 %v7331
          %v7403 = vunpack.c.l.b16 %v7332
          %v7404 = vunpack.c.l.b16 %v7333
          %v7405 = vunpack.c.l.b16 %v7334
          %v7406 = vunpack.c.l.b16 %v7335
          %v7407 = vunpack.c.l.b16 %v7336
          %v7408 = vunpack.c.l.b16 %v7337
          %v7409 = vunpack.c.l.b16 %v7338
          %v7410 = vunpack.c.l.b16 %v7339
          %v7411 = vunpack.c.l.b16 %v7340
          %v7412 = vunpack.c.l.b16 %v7341
          %v7413 = vunpack.c.l.b16 %v7342
          %v7414 = vunpack.c.l.b16 %v7343
          %v7415 = vunpack.c.l.b16 %v7344
          %v7416 = vunpack.c.l.b16 %v7345
          %v7417 = vpack.c.b16 %v7386, %v7385
          %v7418 = vpack.c.b16 %v7388, %v7387
          %v7419 = vpack.c.b16 %v7390, %v7389
          %v7420 = vpack.c.b16 %v7392, %v7391
          %v7421 = vpack.c.b16 %v7394, %v7393
          %v7422 = vpack.c.b16 %v7396, %v7395
          %v7423 = vpack.c.b16 %v7398, %v7397
          %v7424 = vpack.c.b16 %v7400, %v7399
          %v7425 = vpack.c.b16 %v7402, %v7401
          %v7426 = vpack.c.b16 %v7404, %v7403
          %v7427 = vpack.c.b16 %v7406, %v7405
          %v7428 = vpack.c.b16 %v7408, %v7407
          %v7429 = vpack.c.b16 %v7410, %v7409
          %v7430 = vpack.c.b16 %v7412, %v7411
          %v7431 = vpack.c.b16 %v7414, %v7413
          %v7432 = vpack.c.b16 %v7416, %v7415
          %7449 = vmatprep.subr.bf16.mxu0 0
          %7450 = vmatpush1.bf16.msra.mxu0 %v7424
          %7451 = vmatprep.subr.bf16.mxu0 0
          %7452 = vmatpush1.bf16.msra.mxu0 %v7423
          %7453 = vmatprep.subr.bf16.mxu0 0
          %7454 = vmatpush1.bf16.msra.mxu0 %v7422
          %7455 = vmatprep.subr.bf16.mxu0 0
          %7456 = vmatpush1.bf16.msra.mxu0 %v7421
          %7457 = vmatprep.subr.bf16.mxu0 0
          %7458 = vmatpush1.bf16.msra.mxu0 %v7420
          %7459 = vmatprep.subr.bf16.mxu0 0
          %7460 = vmatpush1.bf16.msra.mxu0 %v7419
          %7461 = vmatprep.subr.bf16.mxu0 0
          %7462 = vmatpush1.bf16.msra.mxu0 %v7418
          %7463 = vmatprep.subr.bf16.mxu0 0
          %7464 = vmatpush1.bf16.msra.mxu0 %v7417
          %7465 = vmatprep.subr.bf16.mxu0 0
          %7466 = vmatpush2.bf16.msra.mxu0 %v7432
          %7467 = vmatprep.subr.bf16.mxu0 0
          %7468 = vmatpush2.bf16.msra.mxu0 %v7431
          %7469 = vmatprep.subr.bf16.mxu0 0
          %7470 = vmatpush2.bf16.msra.mxu0 %v7430
          %7471 = vmatprep.subr.bf16.mxu0 0
          %7472 = vmatpush2.bf16.msra.mxu0 %v7429
          %7473 = vmatprep.subr.bf16.mxu0 0
          %7474 = vmatpush2.bf16.msra.mxu0 %v7428
          %7475 = vmatprep.subr.bf16.mxu0 0
          %7476 = vmatpush2.bf16.msra.mxu0 %v7427
          %7477 = vmatprep.subr.bf16.mxu0 0
          %7478 = vmatpush2.bf16.msra.mxu0 %v7426
          %7479 = vmatprep.subr.bf16.mxu0 0
          %7480 = vmatpush2.bf16.msra.mxu0 %v7425
          %7481 = vmatprep.mubr.bf16.mxu0 %v7313
          %7482 = vmatmul.mubr.bf16.gmra.mxu0 %v7312
          %v7483 = vpop.f32.mrf.mxu0
          %v7484 = vadd.f32 %v7351, %v7483
          %v7485 = vpop.f32.mrf.mxu0
          %v7486 = vpop.f32.mrf.mxu0
          %v7487 = vpop.f32.mrf.mxu0
          %7488 = vdwg.mxu0
          %7489 = vst [vmem:[%s1091] sm:$0xff] %v7484
        $region168: #{tpu_custom_call.1} parent=111 // pred_fallthru
          _
        %s7490 = sand.u32 %s620, 1
        %s7491 = scalar_lea.sflag [#allocation6], %s7490
        %s7492 = sand.u32 %s620, 1
        %s7493 = smul.addr %s7492, 8
        %s7494 = scalar_lea.vmem [#allocation24], %s7493
        // Predicated region
        $region169: #{tpu_custom_call.1} parent=111 // pred_check
          %p7495 = pneg %p630
        $region170: #{tpu_custom_call.1} parent=111 // pred_check_branch
          %7497 = sbr.rel (%p7495) target = $region172
        $region171: #{tpu_custom_call.1} parent=111 // pred_region
          %s7499 = ssub.s32 128, 128
          %7500 = vsyncadd %s7491, %s7499
          %s7501 = smul.addr %s56, 128
          %s7502 = scalar_lea.hbm %s23, %s7501
          %s7504 = sshll.u32 %s7494, 4
          %s7505 = int_to_ptr.vmem [resolvable:$true] %s7504
          %7507 = dma.vmem_to_hbm [thread:$0]  %s7505, 128, %s7502, %s7491
        $region172: #{tpu_custom_call.1} parent=111 // pred_fallthru
          _
      $region112: #{tpu_custom_call.1} parent=5 // pred_fallthru
        _
      %p7508 = scmp.le.s32.totalorder 2, %s47
      // Predicated region
      $region173: #{tpu_custom_call.1} parent=5 // pred_check
        %p7509 = pneg %p7508
      $region174: #{tpu_custom_call.1} parent=5 // pred_check_branch
        %7511 = sbr.rel (%p7509) target = $region176
      $region175: #{tpu_custom_call.1} parent=5 // pred_region
        %s7512 = ssub.s32 %s47, 2
        // Predicated region
        $region177: #{tpu_custom_call.1} parent=175 // pred_check
          %p7513 = pneg %p636
        $region178: #{tpu_custom_call.1} parent=175 // pred_check_branch
          %7515 = sbr.rel (%p7513) target = $region180
        $region179: #{tpu_custom_call.1} parent=175 // pred_region
          %s7516 = sand.u32 %s621, 1
          %s7517 = scalar_lea.sflag [#allocation6], %s7516
          %s7518 = sand.u32 %s621, 1
          %s7519 = smul.addr %s7518, 8
          %s7520 = scalar_lea.vmem [#allocation24], %s7519
          %7521 = dma.done %s7517, 128
        $region180: #{tpu_custom_call.1} parent=175 // pred_fallthru
          _
      $region176: #{tpu_custom_call.1} parent=5 // pred_fallthru
        _
    $region6: #{tpu_custom_call.1} parent=1 // loop_footer
      %s51 = sadd.s32 1, %s47
    $region7: #{tpu_custom_call.1} parent=1 // loop_footer_branch
      %46 = sbr.rel target = $region3
    $region8: #{tpu_custom_call.1} parent=1 // loop_exit
      _
    %7522 = vsyncpa [#allocation5], 1
    %s7523 = scalar_lea.sflag [#allocation5], 1
    %7524 = vsyncpa %s7523, 1
    %7525 = vsyncpa [#allocation8], 1
    %7526 = vsyncpa [#allocation11], 1
    %7527 = vsyncpa [#allocation14], 1
    %s7528 = scalar_lea.sflag [#allocation14], 1
    %7529 = vsyncpa %s7528, 1
    %7530 = vsyncpa [#allocation17], 1
    %s7531 = scalar_lea.sflag [#allocation17], 1
    %7532 = vsyncpa %s7531, 1
    %7533 = vsyncpa [#allocation20], 1
    %s7534 = scalar_lea.sflag [#allocation20], 1
    %7535 = vsyncpa %s7534, 1
    %7536 = vsyncpa [#allocation23], 1
    %7537 = vsyncpa [#allocation6], 1
    %s7538 = scalar_lea.sflag [#allocation6], 1
    %7539 = vsyncpa %s7538, 1

</llo_original>
